<compile_context>
chip_gen: v7x
topology: tpu7x:2x2x1
jax: 0.10.0
libtpu: 0.0.40
codegen_flags: <defaults>
</compile_context>

<pallas_src>
import functools
import math

import jax
import jax.numpy as jnp
from jax import lax
from jax.experimental import pallas as pl
from jax.experimental.pallas import tpu as pltpu


# ---------------------------------------------------------------------------
# In-kernel building blocks.
# ---------------------------------------------------------------------------
def _maxpool2x2(a_flat, B, H, W):
    """2x2 / stride-2 max pool.

    a_flat: (B*H*W, C) f32, rows ordered (b, y, x)  ->  (B, H//2, W//2, C) f32.
    Row pooling is a major-axis slab max; column pooling pairs adjacent
    sublanes via a reshape (unit-stride slices only).
    """
    C = a_flat.shape[-1]
    a = a_flat.reshape(B, H // 2, 2, W, C)            # split y -> (yo, yp); layout-clean
    a = jnp.maximum(a[:, :, 0], a[:, :, 1])           # (B, H//2, W, C)
    a = a.reshape(B, H // 2, W // 2, 2, C)            # split x -> (xo, xp)
    return jnp.maximum(a[..., 0, :], a[..., 1, :])    # (B, H//2, W//2, C)


def _conv3x3_relu(x, w_ref, b_ref):
    """SAME 3x3 conv + bias + ReLU as ONE K-folded MXU matmul.

    x:     (B, H, W, Cin) bf16 activations.
    w_ref: (9*Cin, Cout) bf16 weights, K ordered (ky, kx, ci).
    b_ref: (1, Cout) f32 bias.
    Returns (B*H*W, Cout) f32.
    """
    B, H, W, Cin = x.shape

    # H halo: concatenate zero border rows (whole-slab placement, no scratch).
    zrow = jnp.zeros((B, 1, W, Cin), x.dtype)
    xh = jnp.concatenate([zrow, x, zrow], axis=1)                  # (B, H+2, W, Cin)

    # W halo: the three kx shifts, unit-stride slices + a zero column.
    zcol = jnp.zeros((B, H + 2, 1, Cin), x.dtype)
    x_m1 = jnp.concatenate([zcol, xh[:, :, :W - 1, :]], axis=2)    # dx = -1
    x_p1 = jnp.concatenate([xh[:, :, 1:, :], zcol], axis=2)        # dx = +1
    variants = (x_m1, xh, x_p1)                                    # kx = 0, 1, 2

    # Fold the 9 taps into the contraction dim: (B*H*W, 9*Cin) bf16 LHS.
    taps = [variants[kx][:, ky:ky + H] for ky in range(3) for kx in range(3)]
    lhs = jnp.concatenate(taps, axis=-1).reshape(B * H * W, 9 * Cin)

    acc = jnp.dot(lhs, w_ref[...], preferred_element_type=jnp.float32)
    return jnp.maximum(acc + b_ref[...], 0.0)


def _make_vgg_kernel(B_blk, H1, W1):
    H2, W2 = H1 // 2, W1 // 2
    H3, W3 = H2 // 2, W2 // 2

    def kernel(p1_ref, w1_ref, b1_ref, w2_ref, b2_ref, w3_ref, b3_ref,
               f1w_ref, f1b_ref, f2w_ref, f2b_ref, f3w_ref, f3b_ref,
               feat_ref, out_ref):
        # conv1 + ReLU: pre-packed im2col patches -> one dense K=27 MXU matmul.
        p1 = p1_ref[...].reshape(B_blk * H1 * W1, -1)              # bf16
        a1 = jnp.dot(p1, w1_ref[...], preferred_element_type=jnp.float32)
        a1 = jnp.maximum(a1 + b1_ref[...], 0.0)                    # (B*H1*W1, 64) f32
        x2 = _maxpool2x2(a1, B_blk, H1, W1).astype(jnp.bfloat16)   # cast once

        # conv2 + ReLU + pool (single matmul, K = 9*64 = 576).
        a2 = _conv3x3_relu(x2, w2_ref, b2_ref)                     # (B*H2*W2, 128) f32
        x3 = _maxpool2x2(a2, B_blk, H2, W2).astype(jnp.bfloat16)   # cast once

        # conv3 + ReLU (single matmul, K = 9*128 = 1152) + global average pool.
        a3 = _conv3x3_relu(x3, w3_ref, b3_ref)                     # (B*H3*W3, 512) f32
        feat = jnp.mean(a3.reshape(B_blk, H3 * W3, -1), axis=1)    # (B, 512) f32
        feat_ref[...] = feat.reshape(1, B_blk, -1)

        # Classifier epilogue: Dropout -> FC -> ReLU -> Dropout -> FC -> ReLU -> FC.
        # TODO(synk): nn.Dropout is identity here (inference semantics, no RNG).
        h = feat.astype(jnp.bfloat16)
        h = jnp.dot(h, f1w_ref[...], preferred_element_type=jnp.float32) + f1b_ref[...]
        h = jnp.maximum(h, 0.0).astype(jnp.bfloat16)
        h = jnp.dot(h, f2w_ref[...], preferred_element_type=jnp.float32) + f2b_ref[...]
        h = jnp.maximum(h, 0.0).astype(jnp.bfloat16)
        logits = (jnp.dot(h, f3w_ref[...], preferred_element_type=jnp.float32)
                  + f3b_ref[...])                                  # (B, 128) f32, lane-padded
        out_ref[...] = logits.reshape(1, B_blk, -1)

    return kernel


# ---------------------------------------------------------------------------
# Wrapper.
# ---------------------------------------------------------------------------
def _im2col_3x3(x):
    """(N, H, W, C) f32 -> (N, H*W, 9*C) bf16, K ordered (ky, kx, ci)."""
    N, H, W, C = x.shape
    xp = jnp.pad(x, ((0, 0), (1, 1), (1, 1), (0, 0)))
    cols = [xp[:, ky:ky + H, kx:kx + W, :] for ky in range(3) for kx in range(3)]
    patches = jnp.concatenate(cols, axis=-1)                       # (N, H, W, 9*C)
    return patches.reshape(N, H * W, 9 * C).astype(jnp.bfloat16)


def _pick_batch_block(N):
    """Several images per grid step (fat matmul M) while keeping >= 2 grid
    steps so v7x's two TensorCores both get work."""
    for b in (8, 4, 2):
        if N % b == 0 and N // b >= 2:
            return b
    return 1


def vgg_forward(x_nchw, params, num_classes=10):
    x = jnp.transpose(x_nchw, (0, 2, 3, 1)).astype(jnp.float32)    # NCHW -> NHWC
    N, H1, W1, _ = x.shape
    assert H1 % 4 == 0 and W1 % 4 == 0

    (w1, b1), (w2, b2), (w3, b3) = params["conv"]
    (f1w, f1b), (f2w, f2b), (f3w, f3b) = params["fc"]
    C3 = w3.shape[-1]
    NCP = f3w.shape[-1]                       # lane-padded class count (128)

    B_blk = _pick_batch_block(N)
    G = N // B_blk
    patches = _im2col_3x3(x)                  # (N, H1*W1, 27) bf16

    def const_spec(shape):
        return pl.BlockSpec(shape, lambda n: (0,) * len(shape))

    feat, logits = pl.pallas_call(
        _make_vgg_kernel(B_blk, H1, W1),
        grid=(G,),
        out_shape=(jax.ShapeDtypeStruct((G, B_blk, C3), jnp.float32),
                   jax.ShapeDtypeStruct((G, B_blk, NCP), jnp.float32)),
        in_specs=[
            pl.BlockSpec((B_blk, H1 * W1, patches.shape[-1]), lambda n: (n, 0, 0)),
            const_spec(w1.shape), const_spec(b1.shape),
            const_spec(w2.shape), const_spec(b2.shape),
            const_spec(w3.shape), const_spec(b3.shape),
            const_spec(f1w.shape), const_spec(f1b.shape),
            const_spec(f2w.shape), const_spec(f2b.shape),
            const_spec(f3w.shape), const_spec(f3b.shape),
        ],
        out_specs=(
            pl.BlockSpec((1, B_blk, C3), lambda n: (n, 0, 0)),
            pl.BlockSpec((1, B_blk, NCP), lambda n: (n, 0, 0)),
        ),
        compiler_params=pltpu.CompilerParams(
            dimension_semantics=("parallel",),        # batch blocks over v7x's 2 TCs
            vmem_limit_bytes=32 * 1024 * 1024,        # fits v5e/v6e/v7x
        ),
    )(patches, w1, b1, w2, b2, w3, b3, f1w, f1b, f2w, f2b, f3w, f3b)

    feature = feat.reshape(N, C3)
    output = logits.reshape(N, NCP)[:, :num_classes]
    return {"output": output, "feature": feature}


# ---------------------------------------------------------------------------
# Parameter init (PyTorch conventions) + packing into kernel layouts.
# ---------------------------------------------------------------------------
def init_params(key, num_classes=10):
    conv_cfg = [(3, 64), (64, 128), (128, 512)]
    convs = []
    for cin, cout in conv_cfg:
        key, k = jax.random.split(key)
        n = 3 * 3 * cout
        w = jax.random.normal(k, (3, 3, cin, cout), jnp.float32) * math.sqrt(2.0 / n)
        b = jnp.zeros((cout,), jnp.float32)
        convs.append((w, b))

    lin_cfg = [(512, 512), (512, 512), (512, num_classes)]
    fcs = []
    for fin, fout in lin_cfg:
        key, k1, k2 = jax.random.split(key, 3)
        bound = 1.0 / math.sqrt(fin)
        w = jax.random.uniform(k1, (fin, fout), jnp.float32, -bound, bound)
        b = jax.random.uniform(k2, (fout,), jnp.float32, -bound, bound)
        fcs.append((w, b))
    return {"conv": convs, "fc": fcs}


def pack_params(params, lane_pad=128):
    packed_conv = []
    for w, b in params["conv"]:
        kh, kw, cin, cout = w.shape
        wk = w.reshape(kh * kw * cin, cout).astype(jnp.bfloat16)   # K ordered (ky, kx, ci)
        packed_conv.append((wk, b.reshape(1, -1)))

    packed_fc = []
    last = len(params["fc"]) - 1
    for i, (w, b) in enumerate(params["fc"]):
        if i == last:
            # Pad the class dim to a lane-dense 128 so the logits store is unmasked.
            pad = (-w.shape[-1]) % lane_pad
            w = jnp.pad(w, ((0, 0), (0, pad)))
            b = jnp.pad(b, ((0, pad),))
        packed_fc.append((w.astype(jnp.bfloat16), b.reshape(1, -1)))
    return {"conv": packed_conv, "fc": packed_fc}


# ---------------------------------------------------------------------------
# Pure-JAX reference (same bf16-matmul / f32-accumulate recipe) for validation.
# ---------------------------------------------------------------------------
def reference_forward(x_nchw, params):
    x = jnp.transpose(x_nchw, (0, 2, 3, 1)).astype(jnp.float32)

    def conv(x, w, b):
        y = lax.conv_general_dilated(
            x.astype(jnp.bfloat16), w.astype(jnp.bfloat16),
            window_strides=(1, 1), padding="SAME",
            dimension_numbers=("NHWC", "HWIO", "NHWC"),
            preferred_element_type=jnp.float32)
        return jnp.maximum(y + b.reshape(1, 1, 1, -1), 0.0)

    def pool(x):
        return lax.reduce_window(x, -jnp.inf, lax.max,
                                 (1, 2, 2, 1), (1, 2, 2, 1), "VALID")

    (w1, b1), (w2, b2), (w3, b3) = params["conv"]
    x = pool(conv(x, w1, b1))
    x = pool(conv(x, w2, b2))
    x = conv(x, w3, b3)
    feat = jnp.mean(x, axis=(1, 2))

    def lin(h, w, b):
        return jnp.dot(h.astype(jnp.bfloat16), w.astype(jnp.bfloat16),
                       preferred_element_type=jnp.float32) + b

    (f1w, f1b), (f2w, f2b), (f3w, f3b) = params["fc"]
    h = jnp.maximum(lin(feat, f1w, f1b), 0.0)
    h = jnp.maximum(lin(h, f2w, f2b), 0.0)
    out = lin(h, f3w, f3b)
    return {"output": out, "feature": feat}


if __name__ == "__main__":
    key = jax.random.PRNGKey(0)
    kx, kp = jax.random.split(key)

    # Small NCHW input consistent with the module: batch=4, 3 channels, 16x16.
    N, C, H, W = 4, 3, 16, 16
    num_classes = 10
    x = jax.random.normal(kx, (N, C, H, W), jnp.float32)
    params = init_params(kp, num_classes=num_classes)
    packed = pack_params(params)

    fwd = jax.jit(functools.partial(vgg_forward, num_classes=num_classes))
    result = fwd(x, packed)
    jax.block_until_ready(result)

    assert result["output"].shape == (N, num_classes)
    assert result["feature"].shape == (N, 512)

    # Correctness vs. a pure-JAX reference using the same precision recipe.
    ref = jax.jit(reference_forward)(x, params)
    out_err = float(jnp.max(jnp.abs(result["output"] - ref["output"])))
    feat_err = float(jnp.max(jnp.abs(result["feature"] - ref["feature"])))
    assert out_err < 1e-2 and feat_err < 1e-2, (out_err, feat_err)

    print("KERNEL_OK")
</pallas_src>

<mosaic_0001>
module attributes {stable_mosaic.version = 11 : i64} {
  func.func @kernel(%arg0: i32, %arg1: memref<2x256x27xbf16, #tpu.memory_space<vmem>>, %arg2: memref<27x64xbf16, #tpu.memory_space<vmem>>, %arg3: memref<1x64xf32, #tpu.memory_space<vmem>>, %arg4: memref<576x128xbf16, #tpu.memory_space<vmem>>, %arg5: memref<1x128xf32, #tpu.memory_space<vmem>>, %arg6: memref<1152x512xbf16, #tpu.memory_space<vmem>>, %arg7: memref<1x512xf32, #tpu.memory_space<vmem>>, %arg8: memref<512x512xbf16, #tpu.memory_space<vmem>>, %arg9: memref<1x512xf32, #tpu.memory_space<vmem>>, %arg10: memref<512x512xbf16, #tpu.memory_space<vmem>>, %arg11: memref<1x512xf32, #tpu.memory_space<vmem>>, %arg12: memref<512x128xbf16, #tpu.memory_space<vmem>>, %arg13: memref<1x128xf32, #tpu.memory_space<vmem>>, %arg14: memref<1x2x512xf32, #tpu.memory_space<vmem>>, %arg15: memref<1x2x128xf32, #tpu.memory_space<vmem>>) attributes {dimension_semantics = [#tpu.dimension_semantics<parallel>], iteration_bounds = array<i64: 2>, scalar_prefetch = 0 : i64, scratch_operands = 0 : i64, tpu.core_type = #tpu.core_type<tc>, window_params = [{transform_indices = @transform_0, window_bounds = array<i64: 2, 256, 27>}, {pipeline_mode = #tpu.pipeline_mode<synchronous>, transform_indices = @transform_1, window_bounds = array<i64: 27, 64>}, {pipeline_mode = #tpu.pipeline_mode<synchronous>, transform_indices = @transform_2, window_bounds = array<i64: 1, 64>}, {pipeline_mode = #tpu.pipeline_mode<synchronous>, transform_indices = @transform_3, window_bounds = array<i64: 576, 128>}, {pipeline_mode = #tpu.pipeline_mode<synchronous>, transform_indices = @transform_4, window_bounds = array<i64: 1, 128>}, {pipeline_mode = #tpu.pipeline_mode<synchronous>, transform_indices = @transform_5, window_bounds = array<i64: 1152, 512>}, {pipeline_mode = #tpu.pipeline_mode<synchronous>, transform_indices = @transform_6, window_bounds = array<i64: 1, 512>}, {pipeline_mode = #tpu.pipeline_mode<synchronous>, transform_indices = @transform_7, window_bounds = array<i64: 512, 512>}, {pipeline_mode = #tpu.pipeline_mode<synchronous>, transform_indices = @transform_8, window_bounds = array<i64: 1, 512>}, {pipeline_mode = #tpu.pipeline_mode<synchronous>, transform_indices = @transform_9, window_bounds = array<i64: 512, 512>}, {pipeline_mode = #tpu.pipeline_mode<synchronous>, transform_indices = @transform_10, window_bounds = array<i64: 1, 512>}, {pipeline_mode = #tpu.pipeline_mode<synchronous>, transform_indices = @transform_11, window_bounds = array<i64: 512, 128>}, {pipeline_mode = #tpu.pipeline_mode<synchronous>, transform_indices = @transform_12, window_bounds = array<i64: 1, 128>}, {transform_indices = @transform_13, window_bounds = array<i64: 1, 2, 512>}, {transform_indices = @transform_14, window_bounds = array<i64: 1, 2, 128>}]} {
    %c0 = arith.constant 0 : index
    %c0_0 = arith.constant 0 : index
    %c0_1 = arith.constant 0 : index
    %0 = vector.load %arg1[%c0, %c0_0, %c0_1] : memref<2x256x27xbf16, #tpu.memory_space<vmem>>, vector<2x256x27xbf16>
    %1 = vector.shape_cast %0 : vector<2x256x27xbf16> to vector<512x27xbf16>
    %c0_2 = arith.constant 0 : index
    %c0_3 = arith.constant 0 : index
    %2 = vector.load %arg2[%c0_2, %c0_3] : memref<27x64xbf16, #tpu.memory_space<vmem>>, vector<27x64xbf16>
    %cst = arith.constant dense<0.000000e+00> : vector<512x64xf32>
    %3 = tpu.matmul %1, %2, %cst {dimension_numbers = #tpu.dot_dimension_numbers<[1], [0], [0], [1], [0, 0, 1, 1], [], []>} : vector<512x27xbf16>, vector<27x64xbf16>, vector<512x64xf32> -> vector<512x64xf32>
    %c0_4 = arith.constant 0 : index
    %c0_5 = arith.constant 0 : index
    %4 = vector.load %arg3[%c0_4, %c0_5] : memref<1x64xf32, #tpu.memory_space<vmem>>, vector<1x64xf32>
    %5 = vector.broadcast %4 : vector<1x64xf32> to vector<512x64xf32>
    %6 = arith.addf %3, %5 : vector<512x64xf32>
    %cst_6 = arith.constant 0.000000e+00 : f32
    %7 = vector.broadcast %cst_6 : f32 to vector<512x64xf32>
    %8 = arith.maximumf %6, %7 : vector<512x64xf32>
    %9 = vector.shape_cast %8 : vector<512x64xf32> to vector<2x8x2x16x64xf32>
    %10 = vector.extract_strided_slice %9 {offsets = [0, 0, 0, 0, 0], sizes = [2, 8, 1, 16, 64], strides = [1, 1, 1, 1, 1]} : vector<2x8x2x16x64xf32> to vector<2x8x1x16x64xf32>
    %11 = vector.shape_cast %10 : vector<2x8x1x16x64xf32> to vector<2x8x16x64xf32>
    %12 = vector.extract_strided_slice %9 {offsets = [0, 0, 1, 0, 0], sizes = [2, 8, 1, 16, 64], strides = [1, 1, 1, 1, 1]} : vector<2x8x2x16x64xf32> to vector<2x8x1x16x64xf32>
    %13 = vector.shape_cast %12 : vector<2x8x1x16x64xf32> to vector<2x8x16x64xf32>
    %14 = arith.maximumf %11, %13 : vector<2x8x16x64xf32>
    %15 = vector.shape_cast %14 : vector<2x8x16x64xf32> to vector<2x8x8x2x64xf32>
    %16 = vector.extract_strided_slice %15 {offsets = [0, 0, 0, 0, 0], sizes = [2, 8, 8, 1, 64], strides = [1, 1, 1, 1, 1]} : vector<2x8x8x2x64xf32> to vector<2x8x8x1x64xf32>
    %17 = vector.shape_cast %16 : vector<2x8x8x1x64xf32> to vector<2x8x8x64xf32>
    %18 = vector.extract_strided_slice %15 {offsets = [0, 0, 0, 1, 0], sizes = [2, 8, 8, 1, 64], strides = [1, 1, 1, 1, 1]} : vector<2x8x8x2x64xf32> to vector<2x8x8x1x64xf32>
    %19 = vector.shape_cast %18 : vector<2x8x8x1x64xf32> to vector<2x8x8x64xf32>
    %20 = arith.maximumf %17, %19 : vector<2x8x8x64xf32>
    %21 = arith.truncf %20 : vector<2x8x8x64xf32> to vector<2x8x8x64xbf16>
    %cst_7 = arith.constant 0.000000e+00 : bf16
    %22 = vector.broadcast %cst_7 : bf16 to vector<2x1x8x64xbf16>
    %23 = tpu.concatenate %22, %21, %22 in 1 : vector<2x1x8x64xbf16>, vector<2x8x8x64xbf16>, vector<2x1x8x64xbf16> -> vector<2x10x8x64xbf16>
    %cst_8 = arith.constant 0.000000e+00 : bf16
    %24 = vector.broadcast %cst_8 : bf16 to vector<2x10x1x64xbf16>
    %25 = vector.extract_strided_slice %23 {offsets = [0, 0, 0, 0], sizes = [2, 10, 7, 64], strides = [1, 1, 1, 1]} : vector<2x10x8x64xbf16> to vector<2x10x7x64xbf16>
    %26 = tpu.concatenate %24, %25 in 2 : vector<2x10x1x64xbf16>, vector<2x10x7x64xbf16> -> vector<2x10x8x64xbf16>
    %27 = vector.extract_strided_slice %23 {offsets = [0, 0, 1, 0], sizes = [2, 10, 7, 64], strides = [1, 1, 1, 1]} : vector<2x10x8x64xbf16> to vector<2x10x7x64xbf16>
    %28 = tpu.concatenate %27, %24 in 2 : vector<2x10x7x64xbf16>, vector<2x10x1x64xbf16> -> vector<2x10x8x64xbf16>
    %29 = vector.extract_strided_slice %26 {offsets = [0, 0, 0, 0], sizes = [2, 8, 8, 64], strides = [1, 1, 1, 1]} : vector<2x10x8x64xbf16> to vector<2x8x8x64xbf16>
    %30 = vector.extract_strided_slice %23 {offsets = [0, 0, 0, 0], sizes = [2, 8, 8, 64], strides = [1, 1, 1, 1]} : vector<2x10x8x64xbf16> to vector<2x8x8x64xbf16>
    %31 = vector.extract_strided_slice %28 {offsets = [0, 0, 0, 0], sizes = [2, 8, 8, 64], strides = [1, 1, 1, 1]} : vector<2x10x8x64xbf16> to vector<2x8x8x64xbf16>
    %32 = vector.extract_strided_slice %26 {offsets = [0, 1, 0, 0], sizes = [2, 8, 8, 64], strides = [1, 1, 1, 1]} : vector<2x10x8x64xbf16> to vector<2x8x8x64xbf16>
    %33 = vector.extract_strided_slice %23 {offsets = [0, 1, 0, 0], sizes = [2, 8, 8, 64], strides = [1, 1, 1, 1]} : vector<2x10x8x64xbf16> to vector<2x8x8x64xbf16>
    %34 = vector.extract_strided_slice %28 {offsets = [0, 1, 0, 0], sizes = [2, 8, 8, 64], strides = [1, 1, 1, 1]} : vector<2x10x8x64xbf16> to vector<2x8x8x64xbf16>
    %35 = vector.extract_strided_slice %26 {offsets = [0, 2, 0, 0], sizes = [2, 8, 8, 64], strides = [1, 1, 1, 1]} : vector<2x10x8x64xbf16> to vector<2x8x8x64xbf16>
    %36 = vector.extract_strided_slice %23 {offsets = [0, 2, 0, 0], sizes = [2, 8, 8, 64], strides = [1, 1, 1, 1]} : vector<2x10x8x64xbf16> to vector<2x8x8x64xbf16>
    %37 = vector.extract_strided_slice %28 {offsets = [0, 2, 0, 0], sizes = [2, 8, 8, 64], strides = [1, 1, 1, 1]} : vector<2x10x8x64xbf16> to vector<2x8x8x64xbf16>
    %38 = tpu.concatenate %29, %30, %31, %32, %33, %34, %35, %36, %37 in 3 : vector<2x8x8x64xbf16>, vector<2x8x8x64xbf16>, vector<2x8x8x64xbf16>, vector<2x8x8x64xbf16>, vector<2x8x8x64xbf16>, vector<2x8x8x64xbf16>, vector<2x8x8x64xbf16>, vector<2x8x8x64xbf16>, vector<2x8x8x64xbf16> -> vector<2x8x8x576xbf16>
    %39 = vector.shape_cast %38 : vector<2x8x8x576xbf16> to vector<128x576xbf16>
    %c0_9 = arith.constant 0 : index
    %c0_10 = arith.constant 0 : index
    %40 = vector.load %arg4[%c0_9, %c0_10] : memref<576x128xbf16, #tpu.memory_space<vmem>>, vector<576x128xbf16>
    %cst_11 = arith.constant dense<0.000000e+00> : vector<128x128xf32>
    %41 = tpu.matmul %39, %40, %cst_11 {dimension_numbers = #tpu.dot_dimension_numbers<[1], [0], [0], [1], [0, 0, 1, 1], [], []>} : vector<128x576xbf16>, vector<576x128xbf16>, vector<128x128xf32> -> vector<128x128xf32>
    %c0_12 = arith.constant 0 : index
    %c0_13 = arith.constant 0 : index
    %42 = vector.load %arg5[%c0_12, %c0_13] : memref<1x128xf32, #tpu.memory_space<vmem>>, vector<1x128xf32>
    %43 = vector.broadcast %42 : vector<1x128xf32> to vector<128x128xf32>
    %44 = arith.addf %41, %43 : vector<128x128xf32>
    %cst_14 = arith.constant 0.000000e+00 : f32
    %45 = vector.broadcast %cst_14 : f32 to vector<128x128xf32>
    %46 = arith.maximumf %44, %45 : vector<128x128xf32>
    %47 = vector.shape_cast %46 : vector<128x128xf32> to vector<2x4x2x8x128xf32>
    %48 = vector.extract_strided_slice %47 {offsets = [0, 0, 0, 0, 0], sizes = [2, 4, 1, 8, 128], strides = [1, 1, 1, 1, 1]} : vector<2x4x2x8x128xf32> to vector<2x4x1x8x128xf32>
    %49 = vector.shape_cast %48 : vector<2x4x1x8x128xf32> to vector<2x4x8x128xf32>
    %50 = vector.extract_strided_slice %47 {offsets = [0, 0, 1, 0, 0], sizes = [2, 4, 1, 8, 128], strides = [1, 1, 1, 1, 1]} : vector<2x4x2x8x128xf32> to vector<2x4x1x8x128xf32>
    %51 = vector.shape_cast %50 : vector<2x4x1x8x128xf32> to vector<2x4x8x128xf32>
    %52 = arith.maximumf %49, %51 : vector<2x4x8x128xf32>
    %53 = vector.shape_cast %52 : vector<2x4x8x128xf32> to vector<2x4x4x2x128xf32>
    %54 = vector.extract_strided_slice %53 {offsets = [0, 0, 0, 0, 0], sizes = [2, 4, 4, 1, 128], strides = [1, 1, 1, 1, 1]} : vector<2x4x4x2x128xf32> to vector<2x4x4x1x128xf32>
    %55 = vector.shape_cast %54 : vector<2x4x4x1x128xf32> to vector<2x4x4x128xf32>
    %56 = vector.extract_strided_slice %53 {offsets = [0, 0, 0, 1, 0], sizes = [2, 4, 4, 1, 128], strides = [1, 1, 1, 1, 1]} : vector<2x4x4x2x128xf32> to vector<2x4x4x1x128xf32>
    %57 = vector.shape_cast %56 : vector<2x4x4x1x128xf32> to vector<2x4x4x128xf32>
    %58 = arith.maximumf %55, %57 : vector<2x4x4x128xf32>
    %59 = arith.truncf %58 : vector<2x4x4x128xf32> to vector<2x4x4x128xbf16>
    %cst_15 = arith.constant 0.000000e+00 : bf16
    %60 = vector.broadcast %cst_15 : bf16 to vector<2x1x4x128xbf16>
    %61 = tpu.concatenate %60, %59, %60 in 1 : vector<2x1x4x128xbf16>, vector<2x4x4x128xbf16>, vector<2x1x4x128xbf16> -> vector<2x6x4x128xbf16>
    %cst_16 = arith.constant 0.000000e+00 : bf16
    %62 = vector.broadcast %cst_16 : bf16 to vector<2x6x1x128xbf16>
    %63 = vector.extract_strided_slice %61 {offsets = [0, 0, 0, 0], sizes = [2, 6, 3, 128], strides = [1, 1, 1, 1]} : vector<2x6x4x128xbf16> to vector<2x6x3x128xbf16>
    %64 = tpu.concatenate %62, %63 in 2 : vector<2x6x1x128xbf16>, vector<2x6x3x128xbf16> -> vector<2x6x4x128xbf16>
    %65 = vector.extract_strided_slice %61 {offsets = [0, 0, 1, 0], sizes = [2, 6, 3, 128], strides = [1, 1, 1, 1]} : vector<2x6x4x128xbf16> to vector<2x6x3x128xbf16>
    %66 = tpu.concatenate %65, %62 in 2 : vector<2x6x3x128xbf16>, vector<2x6x1x128xbf16> -> vector<2x6x4x128xbf16>
    %67 = vector.extract_strided_slice %64 {offsets = [0, 0, 0, 0], sizes = [2, 4, 4, 128], strides = [1, 1, 1, 1]} : vector<2x6x4x128xbf16> to vector<2x4x4x128xbf16>
    %68 = vector.extract_strided_slice %61 {offsets = [0, 0, 0, 0], sizes = [2, 4, 4, 128], strides = [1, 1, 1, 1]} : vector<2x6x4x128xbf16> to vector<2x4x4x128xbf16>
    %69 = vector.extract_strided_slice %66 {offsets = [0, 0, 0, 0], sizes = [2, 4, 4, 128], strides = [1, 1, 1, 1]} : vector<2x6x4x128xbf16> to vector<2x4x4x128xbf16>
    %70 = vector.extract_strided_slice %64 {offsets = [0, 1, 0, 0], sizes = [2, 4, 4, 128], strides = [1, 1, 1, 1]} : vector<2x6x4x128xbf16> to vector<2x4x4x128xbf16>
    %71 = vector.extract_strided_slice %61 {offsets = [0, 1, 0, 0], sizes = [2, 4, 4, 128], strides = [1, 1, 1, 1]} : vector<2x6x4x128xbf16> to vector<2x4x4x128xbf16>
    %72 = vector.extract_strided_slice %66 {offsets = [0, 1, 0, 0], sizes = [2, 4, 4, 128], strides = [1, 1, 1, 1]} : vector<2x6x4x128xbf16> to vector<2x4x4x128xbf16>
    %73 = vector.extract_strided_slice %64 {offsets = [0, 2, 0, 0], sizes = [2, 4, 4, 128], strides = [1, 1, 1, 1]} : vector<2x6x4x128xbf16> to vector<2x4x4x128xbf16>
    %74 = vector.extract_strided_slice %61 {offsets = [0, 2, 0, 0], sizes = [2, 4, 4, 128], strides = [1, 1, 1, 1]} : vector<2x6x4x128xbf16> to vector<2x4x4x128xbf16>
    %75 = vector.extract_strided_slice %66 {offsets = [0, 2, 0, 0], sizes = [2, 4, 4, 128], strides = [1, 1, 1, 1]} : vector<2x6x4x128xbf16> to vector<2x4x4x128xbf16>
    %76 = tpu.concatenate %67, %68, %69, %70, %71, %72, %73, %74, %75 in 3 : vector<2x4x4x128xbf16>, vector<2x4x4x128xbf16>, vector<2x4x4x128xbf16>, vector<2x4x4x128xbf16>, vector<2x4x4x128xbf16>, vector<2x4x4x128xbf16>, vector<2x4x4x128xbf16>, vector<2x4x4x128xbf16>, vector<2x4x4x128xbf16> -> vector<2x4x4x1152xbf16>
    %77 = vector.shape_cast %76 : vector<2x4x4x1152xbf16> to vector<32x1152xbf16>
    %c0_17 = arith.constant 0 : index
    %c0_18 = arith.constant 0 : index
    %78 = vector.load %arg6[%c0_17, %c0_18] : memref<1152x512xbf16, #tpu.memory_space<vmem>>, vector<1152x512xbf16>
    %cst_19 = arith.constant dense<0.000000e+00> : vector<32x512xf32>
    %79 = tpu.matmul %77, %78, %cst_19 {dimension_numbers = #tpu.dot_dimension_numbers<[1], [0], [0], [1], [0, 0, 1, 1], [], []>} : vector<32x1152xbf16>, vector<1152x512xbf16>, vector<32x512xf32> -> vector<32x512xf32>
    %c0_20 = arith.constant 0 : index
    %c0_21 = arith.constant 0 : index
    %80 = vector.load %arg7[%c0_20, %c0_21] : memref<1x512xf32, #tpu.memory_space<vmem>>, vector<1x512xf32>
    %81 = vector.broadcast %80 : vector<1x512xf32> to vector<32x512xf32>
    %82 = arith.addf %79, %81 : vector<32x512xf32>
    %cst_22 = arith.constant 0.000000e+00 : f32
    %83 = vector.broadcast %cst_22 : f32 to vector<32x512xf32>
    %84 = arith.maximumf %82, %83 : vector<32x512xf32>
    %85 = vector.shape_cast %84 : vector<32x512xf32> to vector<2x16x512xf32>
    %cst_23 = arith.constant dense<0.000000e+00> : vector<2x512xf32>
    %86 = vector.multi_reduction <add>, %85, %cst_23 [1] : vector<2x16x512xf32> to vector<2x512xf32>
    %cst_24 = arith.constant 1.600000e+01 : f32
    %87 = vector.broadcast %cst_24 : f32 to vector<2x512xf32>
    %88 = arith.divf %86, %87 : vector<2x512xf32>
    %89 = vector.shape_cast %88 : vector<2x512xf32> to vector<1x2x512xf32>
    %c0_25 = arith.constant 0 : index
    %c0_26 = arith.constant 0 : index
    %c0_27 = arith.constant 0 : index
    %90 = vector.load %arg14[%c0_25, %c0_26, %c0_27] : memref<1x2x512xf32, #tpu.memory_space<vmem>>, vector<1x2x512xf32>
    tpu.vector_store %arg14[%c0_25, %c0_26, %c0_27], %89 {strides = array<i32>} : memref<1x2x512xf32, #tpu.memory_space<vmem>>, vector<1x2x512xf32>,
    %91 = arith.truncf %88 : vector<2x512xf32> to vector<2x512xbf16>
    %c0_28 = arith.constant 0 : index
    %c0_29 = arith.constant 0 : index
    %92 = vector.load %arg8[%c0_28, %c0_29] : memref<512x512xbf16, #tpu.memory_space<vmem>>, vector<512x512xbf16>
    %cst_30 = arith.constant dense<0.000000e+00> : vector<2x512xf32>
    %93 = tpu.matmul %91, %92, %cst_30 {dimension_numbers = #tpu.dot_dimension_numbers<[1], [0], [0], [1], [0, 0, 1, 1], [], []>} : vector<2x512xbf16>, vector<512x512xbf16>, vector<2x512xf32> -> vector<2x512xf32>
    %c0_31 = arith.constant 0 : index
    %c0_32 = arith.constant 0 : index
    %94 = vector.load %arg9[%c0_31, %c0_32] : memref<1x512xf32, #tpu.memory_space<vmem>>, vector<1x512xf32>
    %95 = vector.broadcast %94 : vector<1x512xf32> to vector<2x512xf32>
    %96 = arith.addf %93, %95 : vector<2x512xf32>
    %cst_33 = arith.constant 0.000000e+00 : f32
    %97 = vector.broadcast %cst_33 : f32 to vector<2x512xf32>
    %98 = arith.maximumf %96, %97 : vector<2x512xf32>
    %99 = arith.truncf %98 : vector<2x512xf32> to vector<2x512xbf16>
    %c0_34 = arith.constant 0 : index
    %c0_35 = arith.constant 0 : index
    %100 = vector.load %arg10[%c0_34, %c0_35] : memref<512x512xbf16, #tpu.memory_space<vmem>>, vector<512x512xbf16>
    %cst_36 = arith.constant dense<0.000000e+00> : vector<2x512xf32>
    %101 = tpu.matmul %99, %100, %cst_36 {dimension_numbers = #tpu.dot_dimension_numbers<[1], [0], [0], [1], [0, 0, 1, 1], [], []>} : vector<2x512xbf16>, vector<512x512xbf16>, vector<2x512xf32> -> vector<2x512xf32>
    %c0_37 = arith.constant 0 : index
    %c0_38 = arith.constant 0 : index
    %102 = vector.load %arg11[%c0_37, %c0_38] : memref<1x512xf32, #tpu.memory_space<vmem>>, vector<1x512xf32>
    %103 = vector.broadcast %102 : vector<1x512xf32> to vector<2x512xf32>
    %104 = arith.addf %101, %103 : vector<2x512xf32>
    %cst_39 = arith.constant 0.000000e+00 : f32
    %105 = vector.broadcast %cst_39 : f32 to vector<2x512xf32>
    %106 = arith.maximumf %104, %105 : vector<2x512xf32>
    %107 = arith.truncf %106 : vector<2x512xf32> to vector<2x512xbf16>
    %c0_40 = arith.constant 0 : index
    %c0_41 = arith.constant 0 : index
    %108 = vector.load %arg12[%c0_40, %c0_41] : memref<512x128xbf16, #tpu.memory_space<vmem>>, vector<512x128xbf16>
    %cst_42 = arith.constant dense<0.000000e+00> : vector<2x128xf32>
    %109 = tpu.matmul %107, %108, %cst_42 {dimension_numbers = #tpu.dot_dimension_numbers<[1], [0], [0], [1], [0, 0, 1, 1], [], []>} : vector<2x512xbf16>, vector<512x128xbf16>, vector<2x128xf32> -> vector<2x128xf32>
    %c0_43 = arith.constant 0 : index
    %c0_44 = arith.constant 0 : index
    %110 = vector.load %arg13[%c0_43, %c0_44] : memref<1x128xf32, #tpu.memory_space<vmem>>, vector<1x128xf32>
    %111 = vector.broadcast %110 : vector<1x128xf32> to vector<2x128xf32>
    %112 = arith.addf %109, %111 : vector<2x128xf32>
    %113 = vector.shape_cast %112 : vector<2x128xf32> to vector<1x2x128xf32>
    %c0_45 = arith.constant 0 : index
    %c0_46 = arith.constant 0 : index
    %c0_47 = arith.constant 0 : index
    %114 = vector.load %arg15[%c0_45, %c0_46, %c0_47] : memref<1x2x128xf32, #tpu.memory_space<vmem>>, vector<1x2x128xf32>
    tpu.vector_store %arg15[%c0_45, %c0_46, %c0_47], %113 {strides = array<i32>} : memref<1x2x128xf32, #tpu.memory_space<vmem>>, vector<1x2x128xf32>,
    return
  }
  func.func @transform_0(%arg0: i32) -> (i32, i32, i32) {
    %c0_i32 = arith.constant 0 : i32
    %c0_i32_0 = arith.constant 0 : i32
    %c0_i32_1 = arith.constant 0 : i32
    return %arg0, %c0_i32, %c0_i32_0 : i32, i32, i32
  }
  func.func @transform_1(%arg0: i32) -> (i32, i32) {
    %c0_i32 = arith.constant 0 : i32
    %c0_i32_0 = arith.constant 0 : i32
    %c0_i32_1 = arith.constant 0 : i32
    return %c0_i32, %c0_i32_0 : i32, i32
  }
  func.func @transform_2(%arg0: i32) -> (i32, i32) {
    %c0_i32 = arith.constant 0 : i32
    %c0_i32_0 = arith.constant 0 : i32
    %c0_i32_1 = arith.constant 0 : i32
    return %c0_i32, %c0_i32_0 : i32, i32
  }
  func.func @transform_3(%arg0: i32) -> (i32, i32) {
    %c0_i32 = arith.constant 0 : i32
    %c0_i32_0 = arith.constant 0 : i32
    %c0_i32_1 = arith.constant 0 : i32
    return %c0_i32, %c0_i32_0 : i32, i32
  }
  func.func @transform_4(%arg0: i32) -> (i32, i32) {
    %c0_i32 = arith.constant 0 : i32
    %c0_i32_0 = arith.constant 0 : i32
    %c0_i32_1 = arith.constant 0 : i32
    return %c0_i32, %c0_i32_0 : i32, i32
  }
  func.func @transform_5(%arg0: i32) -> (i32, i32) {
    %c0_i32 = arith.constant 0 : i32
    %c0_i32_0 = arith.constant 0 : i32
    %c0_i32_1 = arith.constant 0 : i32
    return %c0_i32, %c0_i32_0 : i32, i32
  }
  func.func @transform_6(%arg0: i32) -> (i32, i32) {
    %c0_i32 = arith.constant 0 : i32
    %c0_i32_0 = arith.constant 0 : i32
    %c0_i32_1 = arith.constant 0 : i32
    return %c0_i32, %c0_i32_0 : i32, i32
  }
  func.func @transform_7(%arg0: i32) -> (i32, i32) {
    %c0_i32 = arith.constant 0 : i32
    %c0_i32_0 = arith.constant 0 : i32
    %c0_i32_1 = arith.constant 0 : i32
    return %c0_i32, %c0_i32_0 : i32, i32
  }
  func.func @transform_8(%arg0: i32) -> (i32, i32) {
    %c0_i32 = arith.constant 0 : i32
    %c0_i32_0 = arith.constant 0 : i32
    %c0_i32_1 = arith.constant 0 : i32
    return %c0_i32, %c0_i32_0 : i32, i32
  }
  func.func @transform_9(%arg0: i32) -> (i32, i32) {
    %c0_i32 = arith.constant 0 : i32
    %c0_i32_0 = arith.constant 0 : i32
    %c0_i32_1 = arith.constant 0 : i32
    return %c0_i32, %c0_i32_0 : i32, i32
  }
  func.func @transform_10(%arg0: i32) -> (i32, i32) {
    %c0_i32 = arith.constant 0 : i32
    %c0_i32_0 = arith.constant 0 : i32
    %c0_i32_1 = arith.constant 0 : i32
    return %c0_i32, %c0_i32_0 : i32, i32
  }
  func.func @transform_11(%arg0: i32) -> (i32, i32) {
    %c0_i32 = arith.constant 0 : i32
    %c0_i32_0 = arith.constant 0 : i32
    %c0_i32_1 = arith.constant 0 : i32
    return %c0_i32, %c0_i32_0 : i32, i32
  }
  func.func @transform_12(%arg0: i32) -> (i32, i32) {
    %c0_i32 = arith.constant 0 : i32
    %c0_i32_0 = arith.constant 0 : i32
    %c0_i32_1 = arith.constant 0 : i32
    return %c0_i32, %c0_i32_0 : i32, i32
  }
  func.func @transform_13(%arg0: i32) -> (i32, i32, i32) {
    %c0_i32 = arith.constant 0 : i32
    %c0_i32_0 = arith.constant 0 : i32
    %c0_i32_1 = arith.constant 0 : i32
    return %arg0, %c0_i32, %c0_i32_0 : i32, i32, i32
  }
  func.func @transform_14(%arg0: i32) -> (i32, i32, i32) {
    %c0_i32 = arith.constant 0 : i32
    %c0_i32_0 = arith.constant 0 : i32
    %c0_i32_1 = arith.constant 0 : i32
    return %arg0, %c0_i32, %c0_i32_0 : i32, i32, i32
  }
}

</mosaic_0001>

<llo_original>
// kernel: vgg_forward.1
$region0: #{vgg_forward.1}
  #allocation0 [shape = 'u32[]', space=smem, size = 0x4, offset = 0x4, fixed_abs, tag = 'smem constant byte address 0x4 - core index']
  #allocation1 [shape = 'u32[144,128]{1,0:T(1,128)}', space=vmem, size = 0x12000, scoped, tag = 'internal scratch']
  %s0 = inlined_call_operand.vmem [shape: bf16[4,256,27], index: 0, kind: input, shape index: {}]
  %s1 = inlined_call_operand.vmem [shape: bf16[27,64], index: 1, kind: input, shape index: {}]
  %s2 = inlined_call_operand.vmem [shape: f32[1,64], index: 2, kind: input, shape index: {}]
  %s3 = inlined_call_operand.hbm [shape: bf16[576,128], index: 3, kind: input, shape index: {}]
  %s4 = inlined_call_operand.vmem [shape: f32[1,128], index: 4, kind: input, shape index: {}]
  %s5 = inlined_call_operand.vmem [shape: bf16[1152,512], index: 5, kind: input, shape index: {}]
  %s6 = inlined_call_operand.vmem [shape: f32[1,512], index: 6, kind: input, shape index: {}]
  %s7 = inlined_call_operand.vmem [shape: bf16[512,512], index: 7, kind: input, shape index: {}]
  %s8 = inlined_call_operand.vmem [shape: f32[1,512], index: 8, kind: input, shape index: {}]
  %s9 = inlined_call_operand.hbm [shape: bf16[512,512], index: 9, kind: input, shape index: {}]
  %s10 = inlined_call_operand.vmem [shape: f32[1,512], index: 10, kind: input, shape index: {}]
  %s11 = inlined_call_operand.hbm [shape: bf16[512,128], index: 11, kind: input, shape index: {}]
  %s12 = inlined_call_operand.vmem [shape: f32[1,128], index: 12, kind: input, shape index: {}]
  %s13 = inlined_call_operand.vmem [shape: f32[2,2,512], index: 13, kind: output, shape index: {0}]
  %s14 = inlined_call_operand.hbm [shape: f32[2,2,128], index: 14, kind: output, shape index: {1}]
  %15 = xla_tuple %s13, %s14
  %s16 = sld [smem:[#allocation0]]
  $region105: #{vgg_forward.1} parent=0
    _
  %s18 = ssub.s32 1, %s16
  %s19 = scalar_select 0, %s18, %s16
  $region1: #{vgg_forward.1} parent=0
    #allocation2 [shape = 'u8[147456]{0}', space=vmem, size = 0x24000, scoped, tag = 'input window, operand 3, single buffered']
    #allocation3 [shape = 's32[2]{0}', space=sflag, size = 0x8, scoped, tag = 'scoped memory for vgg_forward.1']
    #allocation4 [shape = 's32[2]{0}', space=sflag, size = 0x8, scoped, tag = 'scoped memory for vgg_forward.1']
    #allocation5 [shape = 'u8[524288]{0}', space=vmem, size = 0x80000, scoped, tag = 'input window, operand 9, single buffered']
    #allocation6 [shape = 's32[1]{0}', space=sflag, size = 0x4, scoped, tag = 'scoped memory for vgg_forward.1']
    #allocation7 [shape = 'u8[131072]{0}', space=vmem, size = 0x20000, scoped, tag = 'input window, operand 11, single buffered']
    #allocation8 [shape = 'u8[2048]{0}', space=vmem, size = 0x800, scoped, tag = 'output window, operand 1']
    %20 = vsyncpa [#allocation3], 0
    %21 = vsyncpa [#allocation6], 0
    %22 = vsyncpa [#allocation4], 0
    %s23 = scalar_lea.sflag [#allocation4], 1
    %24 = vsyncpa %s23, 0
    loop: start=0, step=1, limit=4
    $region2: #{vgg_forward.1} parent=1 // loop_pre_header
      _
    $region3: #{vgg_forward.1} parent=1 // loop_header
      %s26 = sphi 0, %s30
      %p27 = scmp.ge.s32.totalorder %s26, 4
      %s36 = sphi 0, %s38
      %s39 = sphi 0, %s36
      %s40 = sphi 0, %s39
      %s56 = sphi 0, %s40
      %s60 = sphi 0, %s60
      %s62 = sphi 0, %s60
      %s63 = sphi 0, %s62
      %s77 = sphi 0, %s63
      %s81 = sphi 0, %s81
      %s83 = sphi 0, %s81
      %s84 = sphi 0, %s83
      %s98 = sphi 0, %s84
      %s102 = sphi 0, %s102
      %s104 = sphi 0, %s102
      %s105 = sphi 0, %s104
      %s119 = sphi 0, %s105
      %s123 = sphi 0, %s123
      %s125 = sphi 0, %s123
      %s126 = sphi 0, %s125
      %s140 = sphi 0, %s126
      %s144 = sphi 0, %s144
      %s146 = sphi 0, %s144
      %s147 = sphi 0, %s146
      %s161 = sphi 0, %s147
      %s165 = sphi 0, %s165
      %s167 = sphi 0, %s165
      %s168 = sphi 0, %s167
      %s182 = sphi 0, %s168
      %s186 = sphi 0, %s186
      %s188 = sphi 0, %s186
      %s189 = sphi 0, %s188
      %s203 = sphi 0, %s189
      %s207 = sphi 0, %s207
      %s209 = sphi 0, %s207
      %s210 = sphi 0, %s209
      %s224 = sphi 0, %s210
      %s228 = sphi 0, %s228
      %s230 = sphi 0, %s228
      %s231 = sphi 0, %s230
      %s245 = sphi 0, %s231
      %s249 = sphi 0, %s249
      %s251 = sphi 0, %s249
      %s252 = sphi 0, %s251
      %s266 = sphi 0, %s252
      %s270 = sphi 0, %s270
      %s272 = sphi 0, %s270
      %s273 = sphi 0, %s272
      %s287 = sphi 0, %s273
      %s291 = sphi 0, %s291
      %s293 = sphi 0, %s291
      %s294 = sphi 0, %s293
      %s308 = sphi 0, %s294
      %s314 = sphi 0, %s316
      %s317 = sphi 0, %s314
      %s318 = sphi 0, %s317
      %s334 = sphi 0, %s318
      %s340 = sphi 0, %s342
      %s343 = sphi 0, %s340
      %s344 = sphi 0, %s343
      %s360 = sphi 0, %s344
    $region4: #{vgg_forward.1} parent=1 // loop_header_branch
      %29 = sbr.rel (%p27) target = $region8
    $region5: #{vgg_forward.1} parent=1 // loop_body
      %s31 = ssub.s32 %s26, 1
      %s32 = ssub.s32 %s26, 2
      %s33 = sadd.s32 %s26, 1
      %s34 = ssub.s32 %s26, %s33
      %p35 = scmp.eq.s32.totalorder %s34, 0
      %s37 = sadd.s32 %s36, 1
      %s38 = scalar_select %p35, %s36, %s37
      %p41 = pneg %p35
      %p42 = scmp.eq.s32.totalorder %s26, 1
      %p43 = por %p41, %p42
      %p44 = scmp.ne.s32.totalorder %s36, %s39
      %p45 = scmp.eq.s32.totalorder %s26, 0
      %p46 = por %p44, %p45
      %p47 = scmp.ne.s32.totalorder %s36, %s39
      %p48 = scmp.eq.s32.totalorder %s31, 1
      %p49 = por %p47, %p48
      %p50 = scmp.ne.s32.totalorder %s39, %s40
      %p51 = scmp.eq.s32.totalorder %s31, 0
      %p52 = por %p50, %p51
      %p53 = scmp.ne.s32.totalorder %s39, %s40
      %p54 = scmp.eq.s32.totalorder %s32, 1
      %p55 = por %p53, %p54
      %p57 = scmp.ne.s32.totalorder %s40, %s56
      %p58 = scmp.eq.s32.totalorder %s32, 0
      %p59 = por %p57, %p58
      %s61 = sadd.s32 %s60, 1
      %p64 = scmp.eq.s32.totalorder %s26, 1
      %p65 = scmp.ne.s32.totalorder %s60, %s62
      %p66 = scmp.eq.s32.totalorder %s26, 0
      %p67 = por %p65, %p66
      %p68 = scmp.ne.s32.totalorder %s60, %s62
      %p69 = scmp.eq.s32.totalorder %s31, 1
      %p70 = por %p68, %p69
      %p71 = scmp.ne.s32.totalorder %s62, %s63
      %p72 = scmp.eq.s32.totalorder %s31, 0
      %p73 = por %p71, %p72
      %p74 = scmp.ne.s32.totalorder %s62, %s63
      %p75 = scmp.eq.s32.totalorder %s32, 1
      %p76 = por %p74, %p75
      %p78 = scmp.ne.s32.totalorder %s63, %s77
      %p79 = scmp.eq.s32.totalorder %s32, 0
      %p80 = por %p78, %p79
      %s82 = sadd.s32 %s81, 1
      %p85 = scmp.eq.s32.totalorder %s26, 1
      %p86 = scmp.ne.s32.totalorder %s81, %s83
      %p87 = scmp.eq.s32.totalorder %s26, 0
      %p88 = por %p86, %p87
      %p89 = scmp.ne.s32.totalorder %s81, %s83
      %p90 = scmp.eq.s32.totalorder %s31, 1
      %p91 = por %p89, %p90
      %p92 = scmp.ne.s32.totalorder %s83, %s84
      %p93 = scmp.eq.s32.totalorder %s31, 0
      %p94 = por %p92, %p93
      %p95 = scmp.ne.s32.totalorder %s83, %s84
      %p96 = scmp.eq.s32.totalorder %s32, 1
      %p97 = por %p95, %p96
      %p99 = scmp.ne.s32.totalorder %s84, %s98
      %p100 = scmp.eq.s32.totalorder %s32, 0
      %p101 = por %p99, %p100
      %s103 = sadd.s32 %s102, 1
      %p106 = scmp.eq.s32.totalorder %s26, 1
      %p107 = scmp.ne.s32.totalorder %s102, %s104
      %p108 = scmp.eq.s32.totalorder %s26, 0
      %p109 = por %p107, %p108
      %p110 = scmp.ne.s32.totalorder %s102, %s104
      %p111 = scmp.eq.s32.totalorder %s31, 1
      %p112 = por %p110, %p111
      %p113 = scmp.ne.s32.totalorder %s104, %s105
      %p114 = scmp.eq.s32.totalorder %s31, 0
      %p115 = por %p113, %p114
      %p116 = scmp.ne.s32.totalorder %s104, %s105
      %p117 = scmp.eq.s32.totalorder %s32, 1
      %p118 = por %p116, %p117
      %p120 = scmp.ne.s32.totalorder %s105, %s119
      %p121 = scmp.eq.s32.totalorder %s32, 0
      %p122 = por %p120, %p121
      %s124 = sadd.s32 %s123, 1
      %p127 = scmp.eq.s32.totalorder %s26, 1
      %p128 = scmp.ne.s32.totalorder %s123, %s125
      %p129 = scmp.eq.s32.totalorder %s26, 0
      %p130 = por %p128, %p129
      %p131 = scmp.ne.s32.totalorder %s123, %s125
      %p132 = scmp.eq.s32.totalorder %s31, 1
      %p133 = por %p131, %p132
      %p134 = scmp.ne.s32.totalorder %s125, %s126
      %p135 = scmp.eq.s32.totalorder %s31, 0
      %p136 = por %p134, %p135
      %p137 = scmp.ne.s32.totalorder %s125, %s126
      %p138 = scmp.eq.s32.totalorder %s32, 1
      %p139 = por %p137, %p138
      %p141 = scmp.ne.s32.totalorder %s126, %s140
      %p142 = scmp.eq.s32.totalorder %s32, 0
      %p143 = por %p141, %p142
      %s145 = sadd.s32 %s144, 1
      %p148 = scmp.eq.s32.totalorder %s26, 1
      %p149 = scmp.ne.s32.totalorder %s144, %s146
      %p150 = scmp.eq.s32.totalorder %s26, 0
      %p151 = por %p149, %p150
      %p152 = scmp.ne.s32.totalorder %s144, %s146
      %p153 = scmp.eq.s32.totalorder %s31, 1
      %p154 = por %p152, %p153
      %p155 = scmp.ne.s32.totalorder %s146, %s147
      %p156 = scmp.eq.s32.totalorder %s31, 0
      %p157 = por %p155, %p156
      %p158 = scmp.ne.s32.totalorder %s146, %s147
      %p159 = scmp.eq.s32.totalorder %s32, 1
      %p160 = por %p158, %p159
      %p162 = scmp.ne.s32.totalorder %s147, %s161
      %p163 = scmp.eq.s32.totalorder %s32, 0
      %p164 = por %p162, %p163
      %s166 = sadd.s32 %s165, 1
      %p169 = scmp.eq.s32.totalorder %s26, 1
      %p170 = scmp.ne.s32.totalorder %s165, %s167
      %p171 = scmp.eq.s32.totalorder %s26, 0
      %p172 = por %p170, %p171
      %p173 = scmp.ne.s32.totalorder %s165, %s167
      %p174 = scmp.eq.s32.totalorder %s31, 1
      %p175 = por %p173, %p174
      %p176 = scmp.ne.s32.totalorder %s167, %s168
      %p177 = scmp.eq.s32.totalorder %s31, 0
      %p178 = por %p176, %p177
      %p179 = scmp.ne.s32.totalorder %s167, %s168
      %p180 = scmp.eq.s32.totalorder %s32, 1
      %p181 = por %p179, %p180
      %p183 = scmp.ne.s32.totalorder %s168, %s182
      %p184 = scmp.eq.s32.totalorder %s32, 0
      %p185 = por %p183, %p184
      %s187 = sadd.s32 %s186, 1
      %p190 = scmp.eq.s32.totalorder %s26, 1
      %p191 = scmp.ne.s32.totalorder %s186, %s188
      %p192 = scmp.eq.s32.totalorder %s26, 0
      %p193 = por %p191, %p192
      %p194 = scmp.ne.s32.totalorder %s186, %s188
      %p195 = scmp.eq.s32.totalorder %s31, 1
      %p196 = por %p194, %p195
      %p197 = scmp.ne.s32.totalorder %s188, %s189
      %p198 = scmp.eq.s32.totalorder %s31, 0
      %p199 = por %p197, %p198
      %p200 = scmp.ne.s32.totalorder %s188, %s189
      %p201 = scmp.eq.s32.totalorder %s32, 1
      %p202 = por %p200, %p201
      %p204 = scmp.ne.s32.totalorder %s189, %s203
      %p205 = scmp.eq.s32.totalorder %s32, 0
      %p206 = por %p204, %p205
      %s208 = sadd.s32 %s207, 1
      %p211 = scmp.eq.s32.totalorder %s26, 1
      %p212 = scmp.ne.s32.totalorder %s207, %s209
      %p213 = scmp.eq.s32.totalorder %s26, 0
      %p214 = por %p212, %p213
      %p215 = scmp.ne.s32.totalorder %s207, %s209
      %p216 = scmp.eq.s32.totalorder %s31, 1
      %p217 = por %p215, %p216
      %p218 = scmp.ne.s32.totalorder %s209, %s210
      %p219 = scmp.eq.s32.totalorder %s31, 0
      %p220 = por %p218, %p219
      %p221 = scmp.ne.s32.totalorder %s209, %s210
      %p222 = scmp.eq.s32.totalorder %s32, 1
      %p223 = por %p221, %p222
      %p225 = scmp.ne.s32.totalorder %s210, %s224
      %p226 = scmp.eq.s32.totalorder %s32, 0
      %p227 = por %p225, %p226
      %s229 = sadd.s32 %s228, 1
      %p232 = scmp.eq.s32.totalorder %s26, 1
      %p233 = scmp.ne.s32.totalorder %s228, %s230
      %p234 = scmp.eq.s32.totalorder %s26, 0
      %p235 = por %p233, %p234
      %p236 = scmp.ne.s32.totalorder %s228, %s230
      %p237 = scmp.eq.s32.totalorder %s31, 1
      %p238 = por %p236, %p237
      %p239 = scmp.ne.s32.totalorder %s230, %s231
      %p240 = scmp.eq.s32.totalorder %s31, 0
      %p241 = por %p239, %p240
      %p242 = scmp.ne.s32.totalorder %s230, %s231
      %p243 = scmp.eq.s32.totalorder %s32, 1
      %p244 = por %p242, %p243
      %p246 = scmp.ne.s32.totalorder %s231, %s245
      %p247 = scmp.eq.s32.totalorder %s32, 0
      %p248 = por %p246, %p247
      %s250 = sadd.s32 %s249, 1
      %p253 = scmp.eq.s32.totalorder %s26, 1
      %p254 = scmp.ne.s32.totalorder %s249, %s251
      %p255 = scmp.eq.s32.totalorder %s26, 0
      %p256 = por %p254, %p255
      %p257 = scmp.ne.s32.totalorder %s249, %s251
      %p258 = scmp.eq.s32.totalorder %s31, 1
      %p259 = por %p257, %p258
      %p260 = scmp.ne.s32.totalorder %s251, %s252
      %p261 = scmp.eq.s32.totalorder %s31, 0
      %p262 = por %p260, %p261
      %p263 = scmp.ne.s32.totalorder %s251, %s252
      %p264 = scmp.eq.s32.totalorder %s32, 1
      %p265 = por %p263, %p264
      %p267 = scmp.ne.s32.totalorder %s252, %s266
      %p268 = scmp.eq.s32.totalorder %s32, 0
      %p269 = por %p267, %p268
      %s271 = sadd.s32 %s270, 1
      %p274 = scmp.eq.s32.totalorder %s26, 1
      %p275 = scmp.ne.s32.totalorder %s270, %s272
      %p276 = scmp.eq.s32.totalorder %s26, 0
      %p277 = por %p275, %p276
      %p278 = scmp.ne.s32.totalorder %s270, %s272
      %p279 = scmp.eq.s32.totalorder %s31, 1
      %p280 = por %p278, %p279
      %p281 = scmp.ne.s32.totalorder %s272, %s273
      %p282 = scmp.eq.s32.totalorder %s31, 0
      %p283 = por %p281, %p282
      %p284 = scmp.ne.s32.totalorder %s272, %s273
      %p285 = scmp.eq.s32.totalorder %s32, 1
      %p286 = por %p284, %p285
      %p288 = scmp.ne.s32.totalorder %s273, %s287
      %p289 = scmp.eq.s32.totalorder %s32, 0
      %p290 = por %p288, %p289
      %s292 = sadd.s32 %s291, 1
      %p295 = scmp.eq.s32.totalorder %s26, 1
      %p296 = scmp.ne.s32.totalorder %s291, %s293
      %p297 = scmp.eq.s32.totalorder %s26, 0
      %p298 = por %p296, %p297
      %p299 = scmp.ne.s32.totalorder %s291, %s293
      %p300 = scmp.eq.s32.totalorder %s31, 1
      %p301 = por %p299, %p300
      %p302 = scmp.ne.s32.totalorder %s293, %s294
      %p303 = scmp.eq.s32.totalorder %s31, 0
      %p304 = por %p302, %p303
      %p305 = scmp.ne.s32.totalorder %s293, %s294
      %p306 = scmp.eq.s32.totalorder %s32, 1
      %p307 = por %p305, %p306
      %p309 = scmp.ne.s32.totalorder %s294, %s308
      %p310 = scmp.eq.s32.totalorder %s32, 0
      %p311 = por %p309, %p310
      %s312 = ssub.s32 %s26, %s33
      %p313 = scmp.eq.s32.totalorder %s312, 0
      %s315 = sadd.s32 %s314, 1
      %s316 = scalar_select %p313, %s314, %s315
      %p319 = pneg %p313
      %p320 = scmp.eq.s32.totalorder %s26, 1
      %p321 = por %p319, %p320
      %p322 = scmp.ne.s32.totalorder %s314, %s317
      %p323 = scmp.eq.s32.totalorder %s26, 0
      %p324 = por %p322, %p323
      %p325 = scmp.ne.s32.totalorder %s314, %s317
      %p326 = scmp.eq.s32.totalorder %s31, 1
      %p327 = por %p325, %p326
      %p328 = scmp.ne.s32.totalorder %s317, %s318
      %p329 = scmp.eq.s32.totalorder %s31, 0
      %p330 = por %p328, %p329
      %p331 = scmp.ne.s32.totalorder %s317, %s318
      %p332 = scmp.eq.s32.totalorder %s32, 1
      %p333 = por %p331, %p332
      %p335 = scmp.ne.s32.totalorder %s318, %s334
      %p336 = scmp.eq.s32.totalorder %s32, 0
      %p337 = por %p335, %p336
      %s338 = ssub.s32 %s26, %s33
      %p339 = scmp.eq.s32.totalorder %s338, 0
      %s341 = sadd.s32 %s340, 1
      %s342 = scalar_select %p339, %s340, %s341
      %p345 = pneg %p339
      %p346 = scmp.eq.s32.totalorder %s26, 1
      %p347 = por %p345, %p346
      %p348 = scmp.ne.s32.totalorder %s340, %s343
      %p349 = scmp.eq.s32.totalorder %s26, 0
      %p350 = por %p348, %p349
      %p351 = scmp.ne.s32.totalorder %s340, %s343
      %p352 = scmp.eq.s32.totalorder %s31, 1
      %p353 = por %p351, %p352
      %p354 = scmp.ne.s32.totalorder %s343, %s344
      %p355 = scmp.eq.s32.totalorder %s31, 0
      %p356 = por %p354, %p355
      %p357 = scmp.ne.s32.totalorder %s343, %s344
      %p358 = scmp.eq.s32.totalorder %s32, 1
      %p359 = por %p357, %p358
      %p361 = scmp.ne.s32.totalorder %s344, %s360
      %p362 = scmp.eq.s32.totalorder %s32, 0
      %p363 = por %p361, %p362
      %p364 = scmp.le.s32.totalorder 1, %s26
      %p365 = scmp.lt.s32.totalorder %s26, 3
      %p366 = pnand %p364, %p365
      %p367 = pneg %p366
      // Predicated region
      $region9: #{vgg_forward.1} parent=5 // pred_check
        _
      $region10: #{vgg_forward.1} parent=5 // pred_check_branch
        %369 = sbr.rel (%p366) target = $region12
      $region11: #{vgg_forward.1} parent=5 // pred_region
        %s370 = ssub.s32 %s26, 1
        // Predicated region
        $region13: #{vgg_forward.1} parent=11 // pred_check
          %p371 = pneg %p73
        $region14: #{vgg_forward.1} parent=11 // pred_check_branch
          %373 = sbr.rel (%p371) target = $region16
        $region15: #{vgg_forward.1} parent=11 // pred_region
          _
        $region16: #{vgg_forward.1} parent=11 // pred_fallthru
          _
        // Predicated region
        $region17: #{vgg_forward.1} parent=11 // pred_check
          %p374 = pneg %p94
        $region18: #{vgg_forward.1} parent=11 // pred_check_branch
          %376 = sbr.rel (%p374) target = $region20
        $region19: #{vgg_forward.1} parent=11 // pred_region
          _
        $region20: #{vgg_forward.1} parent=11 // pred_fallthru
          _
        // Predicated region
        $region21: #{vgg_forward.1} parent=11 // pred_check
          %p377 = pneg %p115
        $region22: #{vgg_forward.1} parent=11 // pred_check_branch
          %379 = sbr.rel (%p377) target = $region24
        $region23: #{vgg_forward.1} parent=11 // pred_region
          %s381 = ssub.s32 4608, 4608
          %382 = vsyncadd [#allocation3], %s381
          %s383 = sshll.u32 [#allocation2], 4
          %s384 = int_to_ptr.vmem [resolvable:$true] %s383
          %389 = dma.hbm_to_vmem [thread:$0]  %s3, 4608, %s384, [#allocation3], 64, 64, 4
        $region24: #{vgg_forward.1} parent=11 // pred_fallthru
          _
        // Predicated region
        $region25: #{vgg_forward.1} parent=11 // pred_check
          %p390 = pneg %p136
        $region26: #{vgg_forward.1} parent=11 // pred_check_branch
          %392 = sbr.rel (%p390) target = $region28
        $region27: #{vgg_forward.1} parent=11 // pred_region
          _
        $region28: #{vgg_forward.1} parent=11 // pred_fallthru
          _
        // Predicated region
        $region29: #{vgg_forward.1} parent=11 // pred_check
          %p393 = pneg %p157
        $region30: #{vgg_forward.1} parent=11 // pred_check_branch
          %395 = sbr.rel (%p393) target = $region32
        $region31: #{vgg_forward.1} parent=11 // pred_region
          _
        $region32: #{vgg_forward.1} parent=11 // pred_fallthru
          _
        // Predicated region
        $region33: #{vgg_forward.1} parent=11 // pred_check
          %p396 = pneg %p178
        $region34: #{vgg_forward.1} parent=11 // pred_check_branch
          %398 = sbr.rel (%p396) target = $region36
        $region35: #{vgg_forward.1} parent=11 // pred_region
          _
        $region36: #{vgg_forward.1} parent=11 // pred_fallthru
          _
        // Predicated region
        $region37: #{vgg_forward.1} parent=11 // pred_check
          %p399 = pneg %p199
        $region38: #{vgg_forward.1} parent=11 // pred_check_branch
          %401 = sbr.rel (%p399) target = $region40
        $region39: #{vgg_forward.1} parent=11 // pred_region
          _
        $region40: #{vgg_forward.1} parent=11 // pred_fallthru
          _
        // Predicated region
        $region41: #{vgg_forward.1} parent=11 // pred_check
          %p402 = pneg %p220
        $region42: #{vgg_forward.1} parent=11 // pred_check_branch
          %404 = sbr.rel (%p402) target = $region44
        $region43: #{vgg_forward.1} parent=11 // pred_region
          _
        $region44: #{vgg_forward.1} parent=11 // pred_fallthru
          _
        // Predicated region
        $region45: #{vgg_forward.1} parent=11 // pred_check
          %p405 = pneg %p241
        $region46: #{vgg_forward.1} parent=11 // pred_check_branch
          %407 = sbr.rel (%p405) target = $region48
        $region47: #{vgg_forward.1} parent=11 // pred_region
          %s409 = ssub.s32 16384, 16384
          %410 = vsyncadd [#allocation6], %s409
          %s411 = sshll.u32 [#allocation5], 4
          %s412 = int_to_ptr.vmem [resolvable:$true] %s411
          %417 = dma.hbm_to_vmem [thread:$0]  %s9, 16384, %s412, [#allocation6], 256, 256, 16
        $region48: #{vgg_forward.1} parent=11 // pred_fallthru
          _
        // Predicated region
        $region49: #{vgg_forward.1} parent=11 // pred_check
          %p418 = pneg %p262
        $region50: #{vgg_forward.1} parent=11 // pred_check_branch
          %420 = sbr.rel (%p418) target = $region52
        $region51: #{vgg_forward.1} parent=11 // pred_region
          _
        $region52: #{vgg_forward.1} parent=11 // pred_fallthru
          _
        // Predicated region
        $region53: #{vgg_forward.1} parent=11 // pred_check
          %p421 = pneg %p283
        $region54: #{vgg_forward.1} parent=11 // pred_check_branch
          %423 = sbr.rel (%p421) target = $region56
        $region55: #{vgg_forward.1} parent=11 // pred_region
          %s425 = ssub.s32 4096, 4096
          %426 = vsyncadd [#allocation6], %s425
          %s427 = sshll.u32 [#allocation7], 4
          %s428 = int_to_ptr.vmem [resolvable:$true] %s427
          %433 = dma.hbm_to_vmem [thread:$0]  %s11, 4096, %s428, [#allocation6], 64, 64, 4
        $region56: #{vgg_forward.1} parent=11 // pred_fallthru
          _
        // Predicated region
        $region57: #{vgg_forward.1} parent=11 // pred_check
          %p434 = pneg %p304
        $region58: #{vgg_forward.1} parent=11 // pred_check_branch
          %436 = sbr.rel (%p434) target = $region60
        $region59: #{vgg_forward.1} parent=11 // pred_region
          _
        $region60: #{vgg_forward.1} parent=11 // pred_fallthru
          _
      $region12: #{vgg_forward.1} parent=5 // pred_fallthru
        _
      %p437 = scmp.lt.s32.totalorder %s26, 2
      // Predicated region
      $region61: #{vgg_forward.1} parent=5 // pred_check
        %p438 = pneg %p437
      $region62: #{vgg_forward.1} parent=5 // pred_check_branch
        %440 = sbr.rel (%p438) target = $region64
      $region63: #{vgg_forward.1} parent=5 // pred_region
        // Predicated region
        $region65: #{vgg_forward.1} parent=63 // pred_check
          %p441 = pneg %p46
        $region66: #{vgg_forward.1} parent=63 // pred_check_branch
          %443 = sbr.rel (%p441) target = $region68
        $region67: #{vgg_forward.1} parent=63 // pred_region
          %s444 = smul.u32 2, %s26
          %p445 = scmp.lt.s32.totalorder %s444, 3
          %s446 = scalar_select %p445, %s444, 3
          %s447 = smul.addr %s446, 32
          %s448 = smul.addr %s447, 4
          %s449 = scalar_lea.vmem %s0, %s448
          %s450 = smul.u32 2, %s26
        $region68: #{vgg_forward.1} parent=63 // pred_fallthru
          _
      $region64: #{vgg_forward.1} parent=5 // pred_fallthru
        _
      %p451 = scmp.le.s32.totalorder 1, %s26
      %p452 = scmp.lt.s32.totalorder %s26, 3
      %p453 = pnand %p451, %p452
      %p454 = pneg %p453
      // Predicated region
      $region69: #{vgg_forward.1} parent=5 // pred_check
        _
      $region70: #{vgg_forward.1} parent=5 // pred_check_branch
        %456 = sbr.rel (%p453) target = $region72
      $region71: #{vgg_forward.1} parent=5 // pred_region
        %s457 = ssub.s32 %s26, 1
        // Predicated region
        $region73: #{vgg_forward.1} parent=71 // pred_check
          %p458 = pneg %p115
        $region74: #{vgg_forward.1} parent=71 // pred_check_branch
          %460 = sbr.rel (%p458) target = $region76
        $region75: #{vgg_forward.1} parent=71 // pred_region
          %461 = dma.done [#allocation3], 4608
        $region76: #{vgg_forward.1} parent=71 // pred_fallthru
          _
        // Predicated region
        $region77: #{vgg_forward.1} parent=71 // pred_check
          %p462 = pneg %p241
        $region78: #{vgg_forward.1} parent=71 // pred_check_branch
          %464 = sbr.rel (%p462) target = $region80
        $region79: #{vgg_forward.1} parent=71 // pred_region
          %465 = dma.done [#allocation6], 16384
        $region80: #{vgg_forward.1} parent=71 // pred_fallthru
          _
        // Predicated region
        $region81: #{vgg_forward.1} parent=71 // pred_check
          %p466 = pneg %p283
        $region82: #{vgg_forward.1} parent=71 // pred_check_branch
          %468 = sbr.rel (%p466) target = $region84
        $region83: #{vgg_forward.1} parent=71 // pred_region
          %469 = dma.done [#allocation6], 4096
        $region84: #{vgg_forward.1} parent=71 // pred_fallthru
          _
        %s470 = smul.u32 2, %s31
        %p471 = scmp.lt.s32.totalorder %s470, 3
        %s472 = scalar_select %p471, %s470, 3
        %s473 = smul.addr %s472, 32
        %s474 = smul.addr %s473, 4
        %s475 = scalar_lea.vmem %s0, %s474
        %p476 = pneg %p52
        %p477 = pneg %p49
        %p478 = pneg %p73
        %p479 = pneg %p70
        %p480 = pneg %p94
        %p481 = pneg %p91
        %p482 = pneg %p115
        %p483 = pneg %p112
        %p484 = pneg %p136
        %p485 = pneg %p133
        %p486 = pneg %p157
        %p487 = pneg %p154
        %p488 = pneg %p178
        %p489 = pneg %p175
        %p490 = pneg %p199
        %p491 = pneg %p196
        %p492 = pneg %p220
        %p493 = pneg %p217
        %p494 = pneg %p241
        %p495 = pneg %p238
        %p496 = pneg %p262
        %p497 = pneg %p259
        %p498 = pneg %p283
        %p499 = pneg %p280
        %p500 = pneg %p304
        %p501 = pneg %p301
        %p502 = pneg %p330
        %p503 = pneg %p327
        %p504 = scmp.lt.s32.totalorder %s31, 1
        %s505 = scalar_select %p504, %s31, 1
        %s506 = smul.addr %s505, 4
        %s507 = smul.addr %s506, 2
        %s508 = scalar_lea.vmem %s13, %s507
        %p509 = pneg %p356
        %p510 = pneg %p353
        %s511 = sand.u32 %s343, 1
        %s512 = scalar_lea.sflag [#allocation4], %s511
        %s513 = sand.u32 %s343, 1
        %s514 = smul.addr %s513, 2
        %s515 = scalar_lea.vmem [#allocation8], %s514
        %s516 = smul.u32 2, %s31
        %p517 = scmp.lt.s32.totalorder %s516, 3
        %s518 = scalar_select %p517, %s516, 3
        %s519 = smul.addr %s518, 32
        %s520 = smul.addr %s519, 4
        %s521 = scalar_lea.vmem %s0, %s520
        %s522 = smul.u32 2, %s31
        %p523 = scmp.lt.s32.totalorder %s31, 1
        %s524 = scalar_select %p523, %s31, 1
        %s525 = smul.addr %s524, 4
        %s526 = smul.addr %s525, 2
        %s527 = scalar_lea.vmem %s13, %s526
        %v529 = vld [vmem:[%s521] sm:$0xf]
        %v530 = vld [vmem:[%s521 + $0x4] sm:$0xf]
        %v531 = vld [vmem:[%s521 + $0x8] sm:$0xf]
        %v532 = vld [vmem:[%s521 + $0xc] sm:$0xf]
        %v533 = vld [vmem:[%s521 + $0x10] sm:$0xf]
        %v534 = vld [vmem:[%s521 + $0x14] sm:$0xf]
        %v535 = vld [vmem:[%s521 + $0x18] sm:$0xf]
        %v536 = vld [vmem:[%s521 + $0x1c] sm:$0xf]
        %v537 = vld [vmem:[%s521 + $0x20] sm:$0xf]
        %v538 = vld [vmem:[%s521 + $0x24] sm:$0xf]
        %v539 = vld [vmem:[%s521 + $0x28] sm:$0xf]
        %v540 = vld [vmem:[%s521 + $0x2c] sm:$0xf]
        %v541 = vld [vmem:[%s521 + $0x30] sm:$0xf]
        %v542 = vld [vmem:[%s521 + $0x34] sm:$0xf]
        %v543 = vld [vmem:[%s521 + $0x38] sm:$0xf]
        %v544 = vld [vmem:[%s521 + $0x3c] sm:$0xf]
        %v545 = vld [vmem:[%s521 + $0x40] sm:$0xf]
        %v546 = vld [vmem:[%s521 + $0x44] sm:$0xf]
        %v547 = vld [vmem:[%s521 + $0x48] sm:$0xf]
        %v548 = vld [vmem:[%s521 + $0x4c] sm:$0xf]
        %v549 = vld [vmem:[%s521 + $0x50] sm:$0xf]
        %v550 = vld [vmem:[%s521 + $0x54] sm:$0xf]
        %v551 = vld [vmem:[%s521 + $0x58] sm:$0xf]
        %v552 = vld [vmem:[%s521 + $0x5c] sm:$0xf]
        %v553 = vld [vmem:[%s521 + $0x60] sm:$0xf]
        %v554 = vld [vmem:[%s521 + $0x64] sm:$0xf]
        %v555 = vld [vmem:[%s521 + $0x68] sm:$0xf]
        %v556 = vld [vmem:[%s521 + $0x6c] sm:$0xf]
        %v557 = vld [vmem:[%s521 + $0x70] sm:$0xf]
        %v558 = vld [vmem:[%s521 + $0x74] sm:$0xf]
        %v559 = vld [vmem:[%s521 + $0x78] sm:$0xf]
        %v560 = vld [vmem:[%s521 + $0x7c] sm:$0xf]
        %v561 = vld [vmem:[%s521 + $0x80] sm:$0xf]
        %v562 = vld [vmem:[%s521 + $0x84] sm:$0xf]
        %v563 = vld [vmem:[%s521 + $0x88] sm:$0xf]
        %v564 = vld [vmem:[%s521 + $0x8c] sm:$0xf]
        %v565 = vld [vmem:[%s521 + $0x90] sm:$0xf]
        %v566 = vld [vmem:[%s521 + $0x94] sm:$0xf]
        %v567 = vld [vmem:[%s521 + $0x98] sm:$0xf]
        %v568 = vld [vmem:[%s521 + $0x9c] sm:$0xf]
        %v569 = vld [vmem:[%s521 + $0xa0] sm:$0xf]
        %v570 = vld [vmem:[%s521 + $0xa4] sm:$0xf]
        %v571 = vld [vmem:[%s521 + $0xa8] sm:$0xf]
        %v572 = vld [vmem:[%s521 + $0xac] sm:$0xf]
        %v573 = vld [vmem:[%s521 + $0xb0] sm:$0xf]
        %v574 = vld [vmem:[%s521 + $0xb4] sm:$0xf]
        %v575 = vld [vmem:[%s521 + $0xb8] sm:$0xf]
        %v576 = vld [vmem:[%s521 + $0xbc] sm:$0xf]
        %v577 = vld [vmem:[%s521 + $0xc0] sm:$0xf]
        %v578 = vld [vmem:[%s521 + $0xc4] sm:$0xf]
        %v579 = vld [vmem:[%s521 + $0xc8] sm:$0xf]
        %v580 = vld [vmem:[%s521 + $0xcc] sm:$0xf]
        %v581 = vld [vmem:[%s521 + $0xd0] sm:$0xf]
        %v582 = vld [vmem:[%s521 + $0xd4] sm:$0xf]
        %v583 = vld [vmem:[%s521 + $0xd8] sm:$0xf]
        %v584 = vld [vmem:[%s521 + $0xdc] sm:$0xf]
        %v585 = vld [vmem:[%s521 + $0xe0] sm:$0xf]
        %v586 = vld [vmem:[%s521 + $0xe4] sm:$0xf]
        %v587 = vld [vmem:[%s521 + $0xe8] sm:$0xf]
        %v588 = vld [vmem:[%s521 + $0xec] sm:$0xf]
        %v589 = vld [vmem:[%s521 + $0xf0] sm:$0xf]
        %v590 = vld [vmem:[%s521 + $0xf4] sm:$0xf]
        %v591 = vld [vmem:[%s521 + $0xf8] sm:$0xf]
        %v592 = vld [vmem:[%s521 + $0xfc] sm:$0xf]
        %v593 = vld [vmem:[%s1] sm:$0xf]
        %v594 = vld [vmem:[%s1 + $0x4] sm:$0xf]
        %v595 = vld [vmem:[%s1 + $0x8] sm:$0xf]
        %v596 = vld [vmem:[%s1 + $0xc] sm:$0x3]
        %v597 = vld [vmem:[%s2] sm:$0x1]
        %v599 = vlaneseq
        %v600 = vshrl.u32 %v599, 7
        %v601 = vsub.s32 0, %v600
        %v602 = vrot.slane %v597, %v601
        %v668 = vunpack.c.l.b16 %v529
        %v669 = vunpack.c.l.b16 %v530
        %v670 = vunpack.c.l.b16 %v531
        %v671 = vunpack.c.l.b16 %v532
        %v672 = vunpack.c.l.b16 %v533
        %v673 = vunpack.c.l.b16 %v534
        %v674 = vunpack.c.l.b16 %v535
        %v675 = vunpack.c.l.b16 %v536
        %v676 = vunpack.c.l.b16 %v537
        %v677 = vunpack.c.l.b16 %v538
        %v678 = vunpack.c.l.b16 %v539
        %v679 = vunpack.c.l.b16 %v540
        %v680 = vunpack.c.l.b16 %v541
        %v681 = vunpack.c.l.b16 %v542
        %v682 = vunpack.c.l.b16 %v543
        %v683 = vunpack.c.l.b16 %v544
        %v684 = vunpack.c.l.b16 %v545
        %v685 = vunpack.c.l.b16 %v546
        %v686 = vunpack.c.l.b16 %v547
        %v687 = vunpack.c.l.b16 %v548
        %v688 = vunpack.c.l.b16 %v549
        %v689 = vunpack.c.l.b16 %v550
        %v690 = vunpack.c.l.b16 %v551
        %v691 = vunpack.c.l.b16 %v552
        %v692 = vunpack.c.l.b16 %v553
        %v693 = vunpack.c.l.b16 %v554
        %v694 = vunpack.c.l.b16 %v555
        %v695 = vunpack.c.l.b16 %v556
        %v696 = vunpack.c.l.b16 %v557
        %v697 = vunpack.c.l.b16 %v558
        %v698 = vunpack.c.l.b16 %v559
        %v699 = vunpack.c.l.b16 %v560
        %v700 = vunpack.c.l.b16 %v561
        %v701 = vunpack.c.l.b16 %v562
        %v702 = vunpack.c.l.b16 %v563
        %v703 = vunpack.c.l.b16 %v564
        %v704 = vunpack.c.l.b16 %v565
        %v705 = vunpack.c.l.b16 %v566
        %v706 = vunpack.c.l.b16 %v567
        %v707 = vunpack.c.l.b16 %v568
        %v708 = vunpack.c.l.b16 %v569
        %v709 = vunpack.c.l.b16 %v570
        %v710 = vunpack.c.l.b16 %v571
        %v711 = vunpack.c.l.b16 %v572
        %v712 = vunpack.c.l.b16 %v573
        %v713 = vunpack.c.l.b16 %v574
        %v714 = vunpack.c.l.b16 %v575
        %v715 = vunpack.c.l.b16 %v576
        %v716 = vunpack.c.l.b16 %v577
        %v717 = vunpack.c.l.b16 %v578
        %v718 = vunpack.c.l.b16 %v579
        %v719 = vunpack.c.l.b16 %v580
        %v720 = vunpack.c.l.b16 %v581
        %v721 = vunpack.c.l.b16 %v582
        %v722 = vunpack.c.l.b16 %v583
        %v723 = vunpack.c.l.b16 %v584
        %v724 = vunpack.c.l.b16 %v585
        %v725 = vunpack.c.l.b16 %v586
        %v726 = vunpack.c.l.b16 %v587
        %v727 = vunpack.c.l.b16 %v588
        %v728 = vunpack.c.l.b16 %v589
        %v729 = vunpack.c.l.b16 %v590
        %v730 = vunpack.c.l.b16 %v591
        %v731 = vunpack.c.l.b16 %v592
        %v732 = vpack.c.b16 %v669, %v668
        %v733 = vpack.c.b16 %v671, %v670
        %v734 = vpack.c.b16 %v673, %v672
        %v735 = vpack.c.b16 %v675, %v674
        %v736 = vpack.c.b16 %v677, %v676
        %v737 = vpack.c.b16 %v679, %v678
        %v738 = vpack.c.b16 %v681, %v680
        %v739 = vpack.c.b16 %v683, %v682
        %v740 = vpack.c.b16 %v685, %v684
        %v741 = vpack.c.b16 %v687, %v686
        %v742 = vpack.c.b16 %v689, %v688
        %v743 = vpack.c.b16 %v691, %v690
        %v744 = vpack.c.b16 %v693, %v692
        %v745 = vpack.c.b16 %v695, %v694
        %v746 = vpack.c.b16 %v697, %v696
        %v747 = vpack.c.b16 %v699, %v698
        %v748 = vpack.c.b16 %v701, %v700
        %v749 = vpack.c.b16 %v703, %v702
        %v750 = vpack.c.b16 %v705, %v704
        %v751 = vpack.c.b16 %v707, %v706
        %v752 = vpack.c.b16 %v709, %v708
        %v753 = vpack.c.b16 %v711, %v710
        %v754 = vpack.c.b16 %v713, %v712
        %v755 = vpack.c.b16 %v715, %v714
        %v756 = vpack.c.b16 %v717, %v716
        %v757 = vpack.c.b16 %v719, %v718
        %v758 = vpack.c.b16 %v721, %v720
        %v759 = vpack.c.b16 %v723, %v722
        %v760 = vpack.c.b16 %v725, %v724
        %v761 = vpack.c.b16 %v727, %v726
        %v762 = vpack.c.b16 %v729, %v728
        %v763 = vpack.c.b16 %v731, %v730
        %v768 = vunpack.c.l.b16 %v593
        %v769 = vunpack.c.l.b16 %v594
        %v770 = vunpack.c.l.b16 %v595
        %v771 = vunpack.c.l.b16 %v596
        %v772 = vpack.c.b16 %v769, %v768
        %v773 = vpack.c.b16 %v771, %v770
        %vm775 = vcmask 220160
        %v777 = vsel %vm775, %v732, 0
        %v780 = vsel %vm775, %v733, 0
        %v783 = vsel %vm775, %v734, 0
        %v786 = vsel %vm775, %v735, 0
        %v789 = vsel %vm775, %v736, 0
        %v792 = vsel %vm775, %v737, 0
        %v795 = vsel %vm775, %v738, 0
        %v798 = vsel %vm775, %v739, 0
        %v801 = vsel %vm775, %v740, 0
        %v804 = vsel %vm775, %v741, 0
        %v807 = vsel %vm775, %v742, 0
        %v810 = vsel %vm775, %v743, 0
        %v813 = vsel %vm775, %v744, 0
        %v816 = vsel %vm775, %v745, 0
        %v819 = vsel %vm775, %v746, 0
        %v822 = vsel %vm775, %v747, 0
        %v825 = vsel %vm775, %v748, 0
        %v828 = vsel %vm775, %v749, 0
        %v831 = vsel %vm775, %v750, 0
        %v834 = vsel %vm775, %v751, 0
        %v837 = vsel %vm775, %v752, 0
        %v840 = vsel %vm775, %v753, 0
        %v843 = vsel %vm775, %v754, 0
        %v846 = vsel %vm775, %v755, 0
        %v849 = vsel %vm775, %v756, 0
        %v852 = vsel %vm775, %v757, 0
        %v855 = vsel %vm775, %v758, 0
        %v858 = vsel %vm775, %v759, 0
        %v861 = vsel %vm775, %v760, 0
        %v864 = vsel %vm775, %v761, 0
        %v867 = vsel %vm775, %v762, 0
        %v870 = vsel %vm775, %v763, 0
        %vm872 = vcmask 1044480
        %vm873 = vcmask 1045504
        %v874 = vsel %vm872, 4294967295, 65535
        %v875 = vsel %vm873, %v874, 0
        %v877 = vand.u32 %v773, %v875
        %879 = vmatprep.subr.bf16.mxu0 0
        %880 = vmatpush1.bf16.msra.mxu0 %v772
        %881 = vmatprep.subr.bf16.mxu0 0
        %882 = vmatpush1.bf16.msra.mxu0 %v877
        %883 = vmatprep.subr.bf16.mxu0 0
        %884 = vmatpush1.bf16.msra.mxu0 0
        %885 = vmatprep.subr.bf16.mxu0 0
        %886 = vmatpush1.bf16.msra.mxu0 0
        %887 = vmatprep.subr.bf16.mxu0 0
        %888 = vmatpush1.bf16.msra.mxu0 0
        %889 = vmatprep.subr.bf16.mxu0 0
        %890 = vmatpush1.bf16.msra.mxu0 0
        %891 = vmatprep.subr.bf16.mxu0 0
        %892 = vmatpush1.bf16.msra.mxu0 0
        %893 = vmatprep.subr.bf16.mxu0 0
        %894 = vmatpush1.bf16.msra.mxu0 0
        %895 = vmatprep.subr.bf16.mxu0 0
        %896 = vmatpush1.bf16.msra.mxu0 0
        %897 = vmatprep.subr.bf16.mxu0 0
        %898 = vmatpush1.bf16.msra.mxu0 0
        %899 = vmatprep.subr.bf16.mxu0 0
        %900 = vmatpush1.bf16.msra.mxu0 0
        %901 = vmatprep.subr.bf16.mxu0 0
        %902 = vmatpush1.bf16.msra.mxu0 0
        %903 = vmatprep.subr.bf16.mxu0 0
        %904 = vmatpush1.bf16.msra.mxu0 0
        %905 = vmatprep.subr.bf16.mxu0 0
        %906 = vmatpush1.bf16.msra.mxu0 0
        %907 = vmatprep.subr.bf16.mxu0 0
        %908 = vmatpush1.bf16.msra.mxu0 0
        %909 = vmatprep.subr.bf16.mxu0 0
        %910 = vmatpush1.bf16.msra.mxu0 0
        %911 = vmatprep.mubr.bf16.mxu0 0
        %912 = vmatmul.mubr.bf16.gmra.mrb[0].mxu0 %v777
        %v913 = vpop.f32.mrb[0].mxu0
        %v914 = vadd.f32 %v602, %v913
        %v915 = vpop.f32.mrb[0].mxu0
        %v916 = vpop.f32.mrb[0].mxu0
        %v917 = vadd.f32 %v602, %v916
        %v918 = vpop.f32.mrb[0].mxu0
        %919 = vmatprep.mubr.bf16.mxu0 0
        %920 = vmatmul.mubr.bf16.gmra.mrb[0].mxu0 %v780
        %v921 = vpop.f32.mrb[0].mxu0
        %v922 = vadd.f32 %v602, %v921
        %v923 = vpop.f32.mrb[0].mxu0
        %v924 = vpop.f32.mrb[0].mxu0
        %v925 = vadd.f32 %v602, %v924
        %v926 = vpop.f32.mrb[0].mxu0
        %927 = vmatprep.mubr.bf16.mxu0 0
        %928 = vmatmul.mubr.bf16.gmra.mrb[0].mxu0 %v783
        %v929 = vpop.f32.mrb[0].mxu0
        %v930 = vadd.f32 %v602, %v929
        %v931 = vpop.f32.mrb[0].mxu0
        %v932 = vpop.f32.mrb[0].mxu0
        %v933 = vadd.f32 %v602, %v932
        %v934 = vpop.f32.mrb[0].mxu0
        %935 = vmatprep.mubr.bf16.mxu0 0
        %936 = vmatmul.mubr.bf16.gmra.mrb[0].mxu0 %v786
        %v937 = vpop.f32.mrb[0].mxu0
        %v938 = vadd.f32 %v602, %v937
        %v939 = vpop.f32.mrb[0].mxu0
        %v940 = vpop.f32.mrb[0].mxu0
        %v941 = vadd.f32 %v602, %v940
        %v942 = vpop.f32.mrb[0].mxu0
        %943 = vmatprep.mubr.bf16.mxu0 0
        %944 = vmatmul.mubr.bf16.gmra.mrb[0].mxu0 %v789
        %v945 = vpop.f32.mrb[0].mxu0
        %v946 = vadd.f32 %v602, %v945
        %v947 = vpop.f32.mrb[0].mxu0
        %v948 = vpop.f32.mrb[0].mxu0
        %v949 = vadd.f32 %v602, %v948
        %v950 = vpop.f32.mrb[0].mxu0
        %951 = vmatprep.mubr.bf16.mxu0 0
        %952 = vmatmul.mubr.bf16.gmra.mrb[0].mxu0 %v792
        %v953 = vpop.f32.mrb[0].mxu0
        %v954 = vadd.f32 %v602, %v953
        %v955 = vpop.f32.mrb[0].mxu0
        %v956 = vpop.f32.mrb[0].mxu0
        %v957 = vadd.f32 %v602, %v956
        %v958 = vpop.f32.mrb[0].mxu0
        %959 = vmatprep.mubr.bf16.mxu0 0
        %960 = vmatmul.mubr.bf16.gmra.mrb[0].mxu0 %v795
        %v961 = vpop.f32.mrb[0].mxu0
        %v962 = vadd.f32 %v602, %v961
        %v963 = vpop.f32.mrb[0].mxu0
        %v964 = vpop.f32.mrb[0].mxu0
        %v965 = vadd.f32 %v602, %v964
        %v966 = vpop.f32.mrb[0].mxu0
        %967 = vmatprep.mubr.bf16.mxu0 0
        %968 = vmatmul.mubr.bf16.gmra.mrb[0].mxu0 %v798
        %v969 = vpop.f32.mrb[0].mxu0
        %v970 = vadd.f32 %v602, %v969
        %v971 = vpop.f32.mrb[0].mxu0
        %v972 = vpop.f32.mrb[0].mxu0
        %v973 = vadd.f32 %v602, %v972
        %v974 = vpop.f32.mrb[0].mxu0
        %975 = vmatprep.mubr.bf16.mxu0 0
        %976 = vmatmul.mubr.bf16.gmra.mrb[0].mxu0 %v801
        %v977 = vpop.f32.mrb[0].mxu0
        %v978 = vadd.f32 %v602, %v977
        %v979 = vpop.f32.mrb[0].mxu0
        %v980 = vpop.f32.mrb[0].mxu0
        %v981 = vadd.f32 %v602, %v980
        %v982 = vpop.f32.mrb[0].mxu0
        %983 = vmatprep.mubr.bf16.mxu0 0
        %984 = vmatmul.mubr.bf16.gmra.mrb[0].mxu0 %v804
        %v985 = vpop.f32.mrb[0].mxu0
        %v986 = vadd.f32 %v602, %v985
        %v987 = vpop.f32.mrb[0].mxu0
        %v988 = vpop.f32.mrb[0].mxu0
        %v989 = vadd.f32 %v602, %v988
        %v990 = vpop.f32.mrb[0].mxu0
        %991 = vmatprep.mubr.bf16.mxu0 0
        %992 = vmatmul.mubr.bf16.gmra.mrb[0].mxu0 %v807
        %v993 = vpop.f32.mrb[0].mxu0
        %v994 = vadd.f32 %v602, %v993
        %v995 = vpop.f32.mrb[0].mxu0
        %v996 = vpop.f32.mrb[0].mxu0
        %v997 = vadd.f32 %v602, %v996
        %v998 = vpop.f32.mrb[0].mxu0
        %999 = vmatprep.mubr.bf16.mxu0 0
        %1000 = vmatmul.mubr.bf16.gmra.mrb[0].mxu0 %v810
        %v1001 = vpop.f32.mrb[0].mxu0
        %v1002 = vadd.f32 %v602, %v1001
        %v1003 = vpop.f32.mrb[0].mxu0
        %v1004 = vpop.f32.mrb[0].mxu0
        %v1005 = vadd.f32 %v602, %v1004
        %v1006 = vpop.f32.mrb[0].mxu0
        %1007 = vmatprep.mubr.bf16.mxu0 0
        %1008 = vmatmul.mubr.bf16.gmra.mrb[0].mxu0 %v813
        %v1009 = vpop.f32.mrb[0].mxu0
        %v1010 = vadd.f32 %v602, %v1009
        %v1011 = vpop.f32.mrb[0].mxu0
        %v1012 = vpop.f32.mrb[0].mxu0
        %v1013 = vadd.f32 %v602, %v1012
        %v1014 = vpop.f32.mrb[0].mxu0
        %1015 = vmatprep.mubr.bf16.mxu0 0
        %1016 = vmatmul.mubr.bf16.gmra.mrb[0].mxu0 %v816
        %v1017 = vpop.f32.mrb[0].mxu0
        %v1018 = vadd.f32 %v602, %v1017
        %v1019 = vpop.f32.mrb[0].mxu0
        %v1020 = vpop.f32.mrb[0].mxu0
        %v1021 = vadd.f32 %v602, %v1020
        %v1022 = vpop.f32.mrb[0].mxu0
        %1023 = vmatprep.mubr.bf16.mxu0 0
        %1024 = vmatmul.mubr.bf16.gmra.mrb[0].mxu0 %v819
        %v1025 = vpop.f32.mrb[0].mxu0
        %v1026 = vadd.f32 %v602, %v1025
        %v1027 = vpop.f32.mrb[0].mxu0
        %v1028 = vpop.f32.mrb[0].mxu0
        %v1029 = vadd.f32 %v602, %v1028
        %v1030 = vpop.f32.mrb[0].mxu0
        %1031 = vmatprep.mubr.bf16.mxu0 0
        %1032 = vmatmul.mubr.bf16.gmra.mrb[0].mxu0 %v822
        %v1033 = vpop.f32.mrb[0].mxu0
        %v1034 = vadd.f32 %v602, %v1033
        %v1035 = vpop.f32.mrb[0].mxu0
        %v1036 = vpop.f32.mrb[0].mxu0
        %v1037 = vadd.f32 %v602, %v1036
        %v1038 = vpop.f32.mrb[0].mxu0
        %1039 = vmatprep.mubr.bf16.mxu0 0
        %1040 = vmatmul.mubr.bf16.gmra.mrb[0].mxu0 %v825
        %v1041 = vpop.f32.mrb[0].mxu0
        %v1042 = vadd.f32 %v602, %v1041
        %v1043 = vpop.f32.mrb[0].mxu0
        %v1044 = vpop.f32.mrb[0].mxu0
        %v1045 = vadd.f32 %v602, %v1044
        %v1046 = vpop.f32.mrb[0].mxu0
        %1047 = vmatprep.mubr.bf16.mxu0 0
        %1048 = vmatmul.mubr.bf16.gmra.mrb[0].mxu0 %v828
        %v1049 = vpop.f32.mrb[0].mxu0
        %v1050 = vadd.f32 %v602, %v1049
        %v1051 = vpop.f32.mrb[0].mxu0
        %v1052 = vpop.f32.mrb[0].mxu0
        %v1053 = vadd.f32 %v602, %v1052
        %v1054 = vpop.f32.mrb[0].mxu0
        %1055 = vmatprep.mubr.bf16.mxu0 0
        %1056 = vmatmul.mubr.bf16.gmra.mrb[0].mxu0 %v831
        %v1057 = vpop.f32.mrb[0].mxu0
        %v1058 = vadd.f32 %v602, %v1057
        %v1059 = vpop.f32.mrb[0].mxu0
        %v1060 = vpop.f32.mrb[0].mxu0
        %v1061 = vadd.f32 %v602, %v1060
        %v1062 = vpop.f32.mrb[0].mxu0
        %1063 = vmatprep.mubr.bf16.mxu0 0
        %1064 = vmatmul.mubr.bf16.gmra.mrb[0].mxu0 %v834
        %v1065 = vpop.f32.mrb[0].mxu0
        %v1066 = vadd.f32 %v602, %v1065
        %v1067 = vpop.f32.mrb[0].mxu0
        %v1068 = vpop.f32.mrb[0].mxu0
        %v1069 = vadd.f32 %v602, %v1068
        %v1070 = vpop.f32.mrb[0].mxu0
        %1071 = vmatprep.mubr.bf16.mxu0 0
        %1072 = vmatmul.mubr.bf16.gmra.mrb[0].mxu0 %v837
        %v1073 = vpop.f32.mrb[0].mxu0
        %v1074 = vadd.f32 %v602, %v1073
        %v1075 = vpop.f32.mrb[0].mxu0
        %v1076 = vpop.f32.mrb[0].mxu0
        %v1077 = vadd.f32 %v602, %v1076
        %v1078 = vpop.f32.mrb[0].mxu0
        %1079 = vmatprep.mubr.bf16.mxu0 0
        %1080 = vmatmul.mubr.bf16.gmra.mrb[0].mxu0 %v840
        %v1081 = vpop.f32.mrb[0].mxu0
        %v1082 = vadd.f32 %v602, %v1081
        %v1083 = vpop.f32.mrb[0].mxu0
        %v1084 = vpop.f32.mrb[0].mxu0
        %v1085 = vadd.f32 %v602, %v1084
        %v1086 = vpop.f32.mrb[0].mxu0
        %1087 = vmatprep.mubr.bf16.mxu0 0
        %1088 = vmatmul.mubr.bf16.gmra.mrb[0].mxu0 %v843
        %v1089 = vpop.f32.mrb[0].mxu0
        %v1090 = vadd.f32 %v602, %v1089
        %v1091 = vpop.f32.mrb[0].mxu0
        %v1092 = vpop.f32.mrb[0].mxu0
        %v1093 = vadd.f32 %v602, %v1092
        %v1094 = vpop.f32.mrb[0].mxu0
        %1095 = vmatprep.mubr.bf16.mxu0 0
        %1096 = vmatmul.mubr.bf16.gmra.mrb[0].mxu0 %v846
        %v1097 = vpop.f32.mrb[0].mxu0
        %v1098 = vadd.f32 %v602, %v1097
        %v1099 = vpop.f32.mrb[0].mxu0
        %v1100 = vpop.f32.mrb[0].mxu0
        %v1101 = vadd.f32 %v602, %v1100
        %v1102 = vpop.f32.mrb[0].mxu0
        %1103 = vmatprep.mubr.bf16.mxu0 0
        %1104 = vmatmul.mubr.bf16.gmra.mrb[0].mxu0 %v849
        %v1105 = vpop.f32.mrb[0].mxu0
        %v1106 = vadd.f32 %v602, %v1105
        %v1107 = vpop.f32.mrb[0].mxu0
        %v1108 = vpop.f32.mrb[0].mxu0
        %v1109 = vadd.f32 %v602, %v1108
        %v1110 = vpop.f32.mrb[0].mxu0
        %1111 = vmatprep.mubr.bf16.mxu0 0
        %1112 = vmatmul.mubr.bf16.gmra.mrb[0].mxu0 %v852
        %v1113 = vpop.f32.mrb[0].mxu0
        %v1114 = vadd.f32 %v602, %v1113
        %v1115 = vpop.f32.mrb[0].mxu0
        %v1116 = vpop.f32.mrb[0].mxu0
        %v1117 = vadd.f32 %v602, %v1116
        %v1118 = vpop.f32.mrb[0].mxu0
        %1119 = vmatprep.mubr.bf16.mxu0 0
        %1120 = vmatmul.mubr.bf16.gmra.mrb[0].mxu0 %v855
        %v1121 = vpop.f32.mrb[0].mxu0
        %v1122 = vadd.f32 %v602, %v1121
        %v1123 = vpop.f32.mrb[0].mxu0
        %v1124 = vpop.f32.mrb[0].mxu0
        %v1125 = vadd.f32 %v602, %v1124
        %v1126 = vpop.f32.mrb[0].mxu0
        %1127 = vmatprep.mubr.bf16.mxu0 0
        %1128 = vmatmul.mubr.bf16.gmra.mrb[0].mxu0 %v858
        %v1129 = vpop.f32.mrb[0].mxu0
        %v1130 = vadd.f32 %v602, %v1129
        %v1131 = vpop.f32.mrb[0].mxu0
        %v1132 = vpop.f32.mrb[0].mxu0
        %v1133 = vadd.f32 %v602, %v1132
        %v1134 = vpop.f32.mrb[0].mxu0
        %1135 = vmatprep.mubr.bf16.mxu0 0
        %1136 = vmatmul.mubr.bf16.gmra.mrb[0].mxu0 %v861
        %v1137 = vpop.f32.mrb[0].mxu0
        %v1138 = vadd.f32 %v602, %v1137
        %v1139 = vpop.f32.mrb[0].mxu0
        %v1140 = vpop.f32.mrb[0].mxu0
        %v1141 = vadd.f32 %v602, %v1140
        %v1142 = vpop.f32.mrb[0].mxu0
        %1143 = vmatprep.mubr.bf16.mxu0 0
        %1144 = vmatmul.mubr.bf16.gmra.mrb[0].mxu0 %v864
        %v1145 = vpop.f32.mrb[0].mxu0
        %v1146 = vadd.f32 %v602, %v1145
        %v1147 = vpop.f32.mrb[0].mxu0
        %v1148 = vpop.f32.mrb[0].mxu0
        %v1149 = vadd.f32 %v602, %v1148
        %v1150 = vpop.f32.mrb[0].mxu0
        %1151 = vmatprep.mubr.bf16.mxu0 0
        %1152 = vmatmul.mubr.bf16.gmra.mrb[0].mxu0 %v867
        %v1153 = vpop.f32.mrb[0].mxu0
        %v1154 = vadd.f32 %v602, %v1153
        %v1155 = vpop.f32.mrb[0].mxu0
        %v1156 = vpop.f32.mrb[0].mxu0
        %v1157 = vadd.f32 %v602, %v1156
        %v1158 = vpop.f32.mrb[0].mxu0
        %1159 = vmatprep.mubr.bf16.mxu0 0
        %1160 = vmatmul.mubr.bf16.gmra.mrb[0].mxu0 %v870
        %v1161 = vpop.f32.mrb[0].mxu0
        %v1162 = vadd.f32 %v602, %v1161
        %v1163 = vpop.f32.mrb[0].mxu0
        %v1164 = vpop.f32.mrb[0].mxu0
        %v1165 = vadd.f32 %v602, %v1164
        %v1166 = vpop.f32.mrb[0].mxu0
        %1167 = vdwg.mxu0
        %v1168 = vmax.f32 %v914, 0.0
        %v1169 = vmax.f32 %v917, 0.0
        %v1170 = vmax.f32 %v922, 0.0
        %v1171 = vmax.f32 %v925, 0.0
        %v1172 = vmax.f32 %v930, 0.0
        %v1173 = vmax.f32 %v933, 0.0
        %v1174 = vmax.f32 %v938, 0.0
        %v1175 = vmax.f32 %v941, 0.0
        %v1176 = vmax.f32 %v946, 0.0
        %v1177 = vmax.f32 %v949, 0.0
        %v1178 = vmax.f32 %v954, 0.0
        %v1179 = vmax.f32 %v957, 0.0
        %v1180 = vmax.f32 %v962, 0.0
        %v1181 = vmax.f32 %v965, 0.0
        %v1182 = vmax.f32 %v970, 0.0
        %v1183 = vmax.f32 %v973, 0.0
        %v1184 = vmax.f32 %v978, 0.0
        %v1185 = vmax.f32 %v981, 0.0
        %v1186 = vmax.f32 %v986, 0.0
        %v1187 = vmax.f32 %v989, 0.0
        %v1188 = vmax.f32 %v994, 0.0
        %v1189 = vmax.f32 %v997, 0.0
        %v1190 = vmax.f32 %v1002, 0.0
        %v1191 = vmax.f32 %v1005, 0.0
        %v1192 = vmax.f32 %v1010, 0.0
        %v1193 = vmax.f32 %v1013, 0.0
        %v1194 = vmax.f32 %v1018, 0.0
        %v1195 = vmax.f32 %v1021, 0.0
        %v1196 = vmax.f32 %v1026, 0.0
        %v1197 = vmax.f32 %v1029, 0.0
        %v1198 = vmax.f32 %v1034, 0.0
        %v1199 = vmax.f32 %v1037, 0.0
        %v1200 = vmax.f32 %v1042, 0.0
        %v1201 = vmax.f32 %v1045, 0.0
        %v1202 = vmax.f32 %v1050, 0.0
        %v1203 = vmax.f32 %v1053, 0.0
        %v1204 = vmax.f32 %v1058, 0.0
        %v1205 = vmax.f32 %v1061, 0.0
        %v1206 = vmax.f32 %v1066, 0.0
        %v1207 = vmax.f32 %v1069, 0.0
        %v1208 = vmax.f32 %v1074, 0.0
        %v1209 = vmax.f32 %v1077, 0.0
        %v1210 = vmax.f32 %v1082, 0.0
        %v1211 = vmax.f32 %v1085, 0.0
        %v1212 = vmax.f32 %v1090, 0.0
        %v1213 = vmax.f32 %v1093, 0.0
        %v1214 = vmax.f32 %v1098, 0.0
        %v1215 = vmax.f32 %v1101, 0.0
        %v1216 = vmax.f32 %v1106, 0.0
        %v1217 = vmax.f32 %v1109, 0.0
        %v1218 = vmax.f32 %v1114, 0.0
        %v1219 = vmax.f32 %v1117, 0.0
        %v1220 = vmax.f32 %v1122, 0.0
        %v1221 = vmax.f32 %v1125, 0.0
        %v1222 = vmax.f32 %v1130, 0.0
        %v1223 = vmax.f32 %v1133, 0.0
        %v1224 = vmax.f32 %v1138, 0.0
        %v1225 = vmax.f32 %v1141, 0.0
        %v1226 = vmax.f32 %v1146, 0.0
        %v1227 = vmax.f32 %v1149, 0.0
        %v1228 = vmax.f32 %v1154, 0.0
        %v1229 = vmax.f32 %v1157, 0.0
        %v1230 = vmax.f32 %v1162, 0.0
        %v1231 = vmax.f32 %v1165, 0.0
        %v1232 = vmax.f32 %v1168, %v1170
        %v1233 = vmax.f32 %v1169, %v1171
        %v1234 = vmax.f32 %v1172, %v1174
        %v1235 = vmax.f32 %v1173, %v1175
        %v1236 = vmax.f32 %v1176, %v1178
        %v1237 = vmax.f32 %v1177, %v1179
        %v1238 = vmax.f32 %v1180, %v1182
        %v1239 = vmax.f32 %v1181, %v1183
        %v1240 = vmax.f32 %v1184, %v1186
        %v1241 = vmax.f32 %v1185, %v1187
        %v1242 = vmax.f32 %v1188, %v1190
        %v1243 = vmax.f32 %v1189, %v1191
        %v1244 = vmax.f32 %v1192, %v1194
        %v1245 = vmax.f32 %v1193, %v1195
        %v1246 = vmax.f32 %v1196, %v1198
        %v1247 = vmax.f32 %v1197, %v1199
        %v1248 = vmax.f32 %v1200, %v1202
        %v1249 = vmax.f32 %v1201, %v1203
        %v1250 = vmax.f32 %v1204, %v1206
        %v1251 = vmax.f32 %v1205, %v1207
        %v1252 = vmax.f32 %v1208, %v1210
        %v1253 = vmax.f32 %v1209, %v1211
        %v1254 = vmax.f32 %v1212, %v1214
        %v1255 = vmax.f32 %v1213, %v1215
        %v1256 = vmax.f32 %v1216, %v1218
        %v1257 = vmax.f32 %v1217, %v1219
        %v1258 = vmax.f32 %v1220, %v1222
        %v1259 = vmax.f32 %v1221, %v1223
        %v1260 = vmax.f32 %v1224, %v1226
        %v1261 = vmax.f32 %v1225, %v1227
        %v1262 = vmax.f32 %v1228, %v1230
        %v1263 = vmax.f32 %v1229, %v1231
        %v1296 = vcombine.high %v1232, %v1232
        %v1298 = vunpack.c.l.s4 1983009808
        %v1299 = vunpack.c.0.s8 %v1298
        %v1300 = vlaneseq
        %v1301 = vshrl.u32 %v1300, 7
        %v1302 = vsub.s32 %v1299, %v1301
        %v1303 = vrot.slane %v1232, %v1302
        %v1305 = vunpack.c.l.s4 1983009808
        %v1306 = vunpack.c.0.s8 %v1305
        %v1307 = vlaneseq
        %v1308 = vshrl.u32 %v1307, 7
        %v1309 = vsub.s32 %v1306, %v1308
        %v1310 = vrot.slane %v1296, %v1309
        %v1311 = vcombine.high %v1303, %v1303
        %v1312 = vcombine.high %v1310, %v1310
        %v1313 = vcombine.high %v1233, %v1233
        %v1315 = vunpack.c.l.s4 1983009808
        %v1316 = vunpack.c.0.s8 %v1315
        %v1317 = vlaneseq
        %v1318 = vshrl.u32 %v1317, 7
        %v1319 = vsub.s32 %v1316, %v1318
        %v1320 = vrot.slane %v1233, %v1319
        %v1322 = vunpack.c.l.s4 1983009808
        %v1323 = vunpack.c.0.s8 %v1322
        %v1324 = vlaneseq
        %v1325 = vshrl.u32 %v1324, 7
        %v1326 = vsub.s32 %v1323, %v1325
        %v1327 = vrot.slane %v1313, %v1326
        %v1328 = vcombine.high %v1320, %v1320
        %v1329 = vcombine.high %v1327, %v1327
        %v1330 = vcombine.high %v1234, %v1234
        %v1332 = vunpack.c.l.s4 1983009808
        %v1333 = vunpack.c.0.s8 %v1332
        %v1334 = vlaneseq
        %v1335 = vshrl.u32 %v1334, 7
        %v1336 = vsub.s32 %v1333, %v1335
        %v1337 = vrot.slane %v1234, %v1336
        %v1339 = vunpack.c.l.s4 1983009808
        %v1340 = vunpack.c.0.s8 %v1339
        %v1341 = vlaneseq
        %v1342 = vshrl.u32 %v1341, 7
        %v1343 = vsub.s32 %v1340, %v1342
        %v1344 = vrot.slane %v1330, %v1343
        %v1345 = vcombine.high %v1337, %v1337
        %v1346 = vcombine.high %v1344, %v1344
        %v1347 = vcombine.high %v1235, %v1235
        %v1349 = vunpack.c.l.s4 1983009808
        %v1350 = vunpack.c.0.s8 %v1349
        %v1351 = vlaneseq
        %v1352 = vshrl.u32 %v1351, 7
        %v1353 = vsub.s32 %v1350, %v1352
        %v1354 = vrot.slane %v1235, %v1353
        %v1356 = vunpack.c.l.s4 1983009808
        %v1357 = vunpack.c.0.s8 %v1356
        %v1358 = vlaneseq
        %v1359 = vshrl.u32 %v1358, 7
        %v1360 = vsub.s32 %v1357, %v1359
        %v1361 = vrot.slane %v1347, %v1360
        %v1362 = vcombine.high %v1354, %v1354
        %v1363 = vcombine.high %v1361, %v1361
        %v1364 = vcombine.high %v1236, %v1236
        %v1366 = vunpack.c.l.s4 1983009808
        %v1367 = vunpack.c.0.s8 %v1366
        %v1368 = vlaneseq
        %v1369 = vshrl.u32 %v1368, 7
        %v1370 = vsub.s32 %v1367, %v1369
        %v1371 = vrot.slane %v1236, %v1370
        %v1373 = vunpack.c.l.s4 1983009808
        %v1374 = vunpack.c.0.s8 %v1373
        %v1375 = vlaneseq
        %v1376 = vshrl.u32 %v1375, 7
        %v1377 = vsub.s32 %v1374, %v1376
        %v1378 = vrot.slane %v1364, %v1377
        %v1379 = vcombine.high %v1371, %v1371
        %v1380 = vcombine.high %v1378, %v1378
        %v1381 = vcombine.high %v1237, %v1237
        %v1383 = vunpack.c.l.s4 1983009808
        %v1384 = vunpack.c.0.s8 %v1383
        %v1385 = vlaneseq
        %v1386 = vshrl.u32 %v1385, 7
        %v1387 = vsub.s32 %v1384, %v1386
        %v1388 = vrot.slane %v1237, %v1387
        %v1390 = vunpack.c.l.s4 1983009808
        %v1391 = vunpack.c.0.s8 %v1390
        %v1392 = vlaneseq
        %v1393 = vshrl.u32 %v1392, 7
        %v1394 = vsub.s32 %v1391, %v1393
        %v1395 = vrot.slane %v1381, %v1394
        %v1396 = vcombine.high %v1388, %v1388
        %v1397 = vcombine.high %v1395, %v1395
        %v1398 = vcombine.high %v1238, %v1238
        %v1400 = vunpack.c.l.s4 1983009808
        %v1401 = vunpack.c.0.s8 %v1400
        %v1402 = vlaneseq
        %v1403 = vshrl.u32 %v1402, 7
        %v1404 = vsub.s32 %v1401, %v1403
        %v1405 = vrot.slane %v1238, %v1404
        %v1407 = vunpack.c.l.s4 1983009808
        %v1408 = vunpack.c.0.s8 %v1407
        %v1409 = vlaneseq
        %v1410 = vshrl.u32 %v1409, 7
        %v1411 = vsub.s32 %v1408, %v1410
        %v1412 = vrot.slane %v1398, %v1411
        %v1413 = vcombine.high %v1405, %v1405
        %v1414 = vcombine.high %v1412, %v1412
        %v1415 = vcombine.high %v1239, %v1239
        %v1417 = vunpack.c.l.s4 1983009808
        %v1418 = vunpack.c.0.s8 %v1417
        %v1419 = vlaneseq
        %v1420 = vshrl.u32 %v1419, 7
        %v1421 = vsub.s32 %v1418, %v1420
        %v1422 = vrot.slane %v1239, %v1421
        %v1424 = vunpack.c.l.s4 1983009808
        %v1425 = vunpack.c.0.s8 %v1424
        %v1426 = vlaneseq
        %v1427 = vshrl.u32 %v1426, 7
        %v1428 = vsub.s32 %v1425, %v1427
        %v1429 = vrot.slane %v1415, %v1428
        %v1430 = vcombine.high %v1422, %v1422
        %v1431 = vcombine.high %v1429, %v1429
        %v1432 = vcombine.high %v1240, %v1240
        %v1434 = vunpack.c.l.s4 1983009808
        %v1435 = vunpack.c.0.s8 %v1434
        %v1436 = vlaneseq
        %v1437 = vshrl.u32 %v1436, 7
        %v1438 = vsub.s32 %v1435, %v1437
        %v1439 = vrot.slane %v1240, %v1438
        %v1441 = vunpack.c.l.s4 1983009808
        %v1442 = vunpack.c.0.s8 %v1441
        %v1443 = vlaneseq
        %v1444 = vshrl.u32 %v1443, 7
        %v1445 = vsub.s32 %v1442, %v1444
        %v1446 = vrot.slane %v1432, %v1445
        %v1447 = vcombine.high %v1439, %v1439
        %v1448 = vcombine.high %v1446, %v1446
        %v1449 = vcombine.high %v1241, %v1241
        %v1451 = vunpack.c.l.s4 1983009808
        %v1452 = vunpack.c.0.s8 %v1451
        %v1453 = vlaneseq
        %v1454 = vshrl.u32 %v1453, 7
        %v1455 = vsub.s32 %v1452, %v1454
        %v1456 = vrot.slane %v1241, %v1455
        %v1458 = vunpack.c.l.s4 1983009808
        %v1459 = vunpack.c.0.s8 %v1458
        %v1460 = vlaneseq
        %v1461 = vshrl.u32 %v1460, 7
        %v1462 = vsub.s32 %v1459, %v1461
        %v1463 = vrot.slane %v1449, %v1462
        %v1464 = vcombine.high %v1456, %v1456
        %v1465 = vcombine.high %v1463, %v1463
        %v1466 = vcombine.high %v1242, %v1242
        %v1468 = vunpack.c.l.s4 1983009808
        %v1469 = vunpack.c.0.s8 %v1468
        %v1470 = vlaneseq
        %v1471 = vshrl.u32 %v1470, 7
        %v1472 = vsub.s32 %v1469, %v1471
        %v1473 = vrot.slane %v1242, %v1472
        %v1475 = vunpack.c.l.s4 1983009808
        %v1476 = vunpack.c.0.s8 %v1475
        %v1477 = vlaneseq
        %v1478 = vshrl.u32 %v1477, 7
        %v1479 = vsub.s32 %v1476, %v1478
        %v1480 = vrot.slane %v1466, %v1479
        %v1481 = vcombine.high %v1473, %v1473
        %v1482 = vcombine.high %v1480, %v1480
        %v1483 = vcombine.high %v1243, %v1243
        %v1485 = vunpack.c.l.s4 1983009808
        %v1486 = vunpack.c.0.s8 %v1485
        %v1487 = vlaneseq
        %v1488 = vshrl.u32 %v1487, 7
        %v1489 = vsub.s32 %v1486, %v1488
        %v1490 = vrot.slane %v1243, %v1489
        %v1492 = vunpack.c.l.s4 1983009808
        %v1493 = vunpack.c.0.s8 %v1492
        %v1494 = vlaneseq
        %v1495 = vshrl.u32 %v1494, 7
        %v1496 = vsub.s32 %v1493, %v1495
        %v1497 = vrot.slane %v1483, %v1496
        %v1498 = vcombine.high %v1490, %v1490
        %v1499 = vcombine.high %v1497, %v1497
        %v1500 = vcombine.high %v1244, %v1244
        %v1502 = vunpack.c.l.s4 1983009808
        %v1503 = vunpack.c.0.s8 %v1502
        %v1504 = vlaneseq
        %v1505 = vshrl.u32 %v1504, 7
        %v1506 = vsub.s32 %v1503, %v1505
        %v1507 = vrot.slane %v1244, %v1506
        %v1509 = vunpack.c.l.s4 1983009808
        %v1510 = vunpack.c.0.s8 %v1509
        %v1511 = vlaneseq
        %v1512 = vshrl.u32 %v1511, 7
        %v1513 = vsub.s32 %v1510, %v1512
        %v1514 = vrot.slane %v1500, %v1513
        %v1515 = vcombine.high %v1507, %v1507
        %v1516 = vcombine.high %v1514, %v1514
        %v1517 = vcombine.high %v1245, %v1245
        %v1519 = vunpack.c.l.s4 1983009808
        %v1520 = vunpack.c.0.s8 %v1519
        %v1521 = vlaneseq
        %v1522 = vshrl.u32 %v1521, 7
        %v1523 = vsub.s32 %v1520, %v1522
        %v1524 = vrot.slane %v1245, %v1523
        %v1526 = vunpack.c.l.s4 1983009808
        %v1527 = vunpack.c.0.s8 %v1526
        %v1528 = vlaneseq
        %v1529 = vshrl.u32 %v1528, 7
        %v1530 = vsub.s32 %v1527, %v1529
        %v1531 = vrot.slane %v1517, %v1530
        %v1532 = vcombine.high %v1524, %v1524
        %v1533 = vcombine.high %v1531, %v1531
        %v1534 = vcombine.high %v1246, %v1246
        %v1536 = vunpack.c.l.s4 1983009808
        %v1537 = vunpack.c.0.s8 %v1536
        %v1538 = vlaneseq
        %v1539 = vshrl.u32 %v1538, 7
        %v1540 = vsub.s32 %v1537, %v1539
        %v1541 = vrot.slane %v1246, %v1540
        %v1543 = vunpack.c.l.s4 1983009808
        %v1544 = vunpack.c.0.s8 %v1543
        %v1545 = vlaneseq
        %v1546 = vshrl.u32 %v1545, 7
        %v1547 = vsub.s32 %v1544, %v1546
        %v1548 = vrot.slane %v1534, %v1547
        %v1549 = vcombine.high %v1541, %v1541
        %v1550 = vcombine.high %v1548, %v1548
        %v1551 = vcombine.high %v1247, %v1247
        %v1553 = vunpack.c.l.s4 1983009808
        %v1554 = vunpack.c.0.s8 %v1553
        %v1555 = vlaneseq
        %v1556 = vshrl.u32 %v1555, 7
        %v1557 = vsub.s32 %v1554, %v1556
        %v1558 = vrot.slane %v1247, %v1557
        %v1560 = vunpack.c.l.s4 1983009808
        %v1561 = vunpack.c.0.s8 %v1560
        %v1562 = vlaneseq
        %v1563 = vshrl.u32 %v1562, 7
        %v1564 = vsub.s32 %v1561, %v1563
        %v1565 = vrot.slane %v1551, %v1564
        %v1566 = vcombine.high %v1558, %v1558
        %v1567 = vcombine.high %v1565, %v1565
        %v1568 = vcombine.high %v1248, %v1248
        %v1570 = vunpack.c.l.s4 1983009808
        %v1571 = vunpack.c.0.s8 %v1570
        %v1572 = vlaneseq
        %v1573 = vshrl.u32 %v1572, 7
        %v1574 = vsub.s32 %v1571, %v1573
        %v1575 = vrot.slane %v1248, %v1574
        %v1577 = vunpack.c.l.s4 1983009808
        %v1578 = vunpack.c.0.s8 %v1577
        %v1579 = vlaneseq
        %v1580 = vshrl.u32 %v1579, 7
        %v1581 = vsub.s32 %v1578, %v1580
        %v1582 = vrot.slane %v1568, %v1581
        %v1583 = vcombine.high %v1575, %v1575
        %v1584 = vcombine.high %v1582, %v1582
        %v1585 = vcombine.high %v1249, %v1249
        %v1587 = vunpack.c.l.s4 1983009808
        %v1588 = vunpack.c.0.s8 %v1587
        %v1589 = vlaneseq
        %v1590 = vshrl.u32 %v1589, 7
        %v1591 = vsub.s32 %v1588, %v1590
        %v1592 = vrot.slane %v1249, %v1591
        %v1594 = vunpack.c.l.s4 1983009808
        %v1595 = vunpack.c.0.s8 %v1594
        %v1596 = vlaneseq
        %v1597 = vshrl.u32 %v1596, 7
        %v1598 = vsub.s32 %v1595, %v1597
        %v1599 = vrot.slane %v1585, %v1598
        %v1600 = vcombine.high %v1592, %v1592
        %v1601 = vcombine.high %v1599, %v1599
        %v1602 = vcombine.high %v1250, %v1250
        %v1604 = vunpack.c.l.s4 1983009808
        %v1605 = vunpack.c.0.s8 %v1604
        %v1606 = vlaneseq
        %v1607 = vshrl.u32 %v1606, 7
        %v1608 = vsub.s32 %v1605, %v1607
        %v1609 = vrot.slane %v1250, %v1608
        %v1611 = vunpack.c.l.s4 1983009808
        %v1612 = vunpack.c.0.s8 %v1611
        %v1613 = vlaneseq
        %v1614 = vshrl.u32 %v1613, 7
        %v1615 = vsub.s32 %v1612, %v1614
        %v1616 = vrot.slane %v1602, %v1615
        %v1617 = vcombine.high %v1609, %v1609
        %v1618 = vcombine.high %v1616, %v1616
        %v1619 = vcombine.high %v1251, %v1251
        %v1621 = vunpack.c.l.s4 1983009808
        %v1622 = vunpack.c.0.s8 %v1621
        %v1623 = vlaneseq
        %v1624 = vshrl.u32 %v1623, 7
        %v1625 = vsub.s32 %v1622, %v1624
        %v1626 = vrot.slane %v1251, %v1625
        %v1628 = vunpack.c.l.s4 1983009808
        %v1629 = vunpack.c.0.s8 %v1628
        %v1630 = vlaneseq
        %v1631 = vshrl.u32 %v1630, 7
        %v1632 = vsub.s32 %v1629, %v1631
        %v1633 = vrot.slane %v1619, %v1632
        %v1634 = vcombine.high %v1626, %v1626
        %v1635 = vcombine.high %v1633, %v1633
        %v1636 = vcombine.high %v1252, %v1252
        %v1638 = vunpack.c.l.s4 1983009808
        %v1639 = vunpack.c.0.s8 %v1638
        %v1640 = vlaneseq
        %v1641 = vshrl.u32 %v1640, 7
        %v1642 = vsub.s32 %v1639, %v1641
        %v1643 = vrot.slane %v1252, %v1642
        %v1645 = vunpack.c.l.s4 1983009808
        %v1646 = vunpack.c.0.s8 %v1645
        %v1647 = vlaneseq
        %v1648 = vshrl.u32 %v1647, 7
        %v1649 = vsub.s32 %v1646, %v1648
        %v1650 = vrot.slane %v1636, %v1649
        %v1651 = vcombine.high %v1643, %v1643
        %v1652 = vcombine.high %v1650, %v1650
        %v1653 = vcombine.high %v1253, %v1253
        %v1655 = vunpack.c.l.s4 1983009808
        %v1656 = vunpack.c.0.s8 %v1655
        %v1657 = vlaneseq
        %v1658 = vshrl.u32 %v1657, 7
        %v1659 = vsub.s32 %v1656, %v1658
        %v1660 = vrot.slane %v1253, %v1659
        %v1662 = vunpack.c.l.s4 1983009808
        %v1663 = vunpack.c.0.s8 %v1662
        %v1664 = vlaneseq
        %v1665 = vshrl.u32 %v1664, 7
        %v1666 = vsub.s32 %v1663, %v1665
        %v1667 = vrot.slane %v1653, %v1666
        %v1668 = vcombine.high %v1660, %v1660
        %v1669 = vcombine.high %v1667, %v1667
        %v1670 = vcombine.high %v1254, %v1254
        %v1672 = vunpack.c.l.s4 1983009808
        %v1673 = vunpack.c.0.s8 %v1672
        %v1674 = vlaneseq
        %v1675 = vshrl.u32 %v1674, 7
        %v1676 = vsub.s32 %v1673, %v1675
        %v1677 = vrot.slane %v1254, %v1676
        %v1679 = vunpack.c.l.s4 1983009808
        %v1680 = vunpack.c.0.s8 %v1679
        %v1681 = vlaneseq
        %v1682 = vshrl.u32 %v1681, 7
        %v1683 = vsub.s32 %v1680, %v1682
        %v1684 = vrot.slane %v1670, %v1683
        %v1685 = vcombine.high %v1677, %v1677
        %v1686 = vcombine.high %v1684, %v1684
        %v1687 = vcombine.high %v1255, %v1255
        %v1689 = vunpack.c.l.s4 1983009808
        %v1690 = vunpack.c.0.s8 %v1689
        %v1691 = vlaneseq
        %v1692 = vshrl.u32 %v1691, 7
        %v1693 = vsub.s32 %v1690, %v1692
        %v1694 = vrot.slane %v1255, %v1693
        %v1696 = vunpack.c.l.s4 1983009808
        %v1697 = vunpack.c.0.s8 %v1696
        %v1698 = vlaneseq
        %v1699 = vshrl.u32 %v1698, 7
        %v1700 = vsub.s32 %v1697, %v1699
        %v1701 = vrot.slane %v1687, %v1700
        %v1702 = vcombine.high %v1694, %v1694
        %v1703 = vcombine.high %v1701, %v1701
        %v1704 = vcombine.high %v1256, %v1256
        %v1706 = vunpack.c.l.s4 1983009808
        %v1707 = vunpack.c.0.s8 %v1706
        %v1708 = vlaneseq
        %v1709 = vshrl.u32 %v1708, 7
        %v1710 = vsub.s32 %v1707, %v1709
        %v1711 = vrot.slane %v1256, %v1710
        %v1713 = vunpack.c.l.s4 1983009808
        %v1714 = vunpack.c.0.s8 %v1713
        %v1715 = vlaneseq
        %v1716 = vshrl.u32 %v1715, 7
        %v1717 = vsub.s32 %v1714, %v1716
        %v1718 = vrot.slane %v1704, %v1717
        %v1719 = vcombine.high %v1711, %v1711
        %v1720 = vcombine.high %v1718, %v1718
        %v1721 = vcombine.high %v1257, %v1257
        %v1723 = vunpack.c.l.s4 1983009808
        %v1724 = vunpack.c.0.s8 %v1723
        %v1725 = vlaneseq
        %v1726 = vshrl.u32 %v1725, 7
        %v1727 = vsub.s32 %v1724, %v1726
        %v1728 = vrot.slane %v1257, %v1727
        %v1730 = vunpack.c.l.s4 1983009808
        %v1731 = vunpack.c.0.s8 %v1730
        %v1732 = vlaneseq
        %v1733 = vshrl.u32 %v1732, 7
        %v1734 = vsub.s32 %v1731, %v1733
        %v1735 = vrot.slane %v1721, %v1734
        %v1736 = vcombine.high %v1728, %v1728
        %v1737 = vcombine.high %v1735, %v1735
        %v1738 = vcombine.high %v1258, %v1258
        %v1740 = vunpack.c.l.s4 1983009808
        %v1741 = vunpack.c.0.s8 %v1740
        %v1742 = vlaneseq
        %v1743 = vshrl.u32 %v1742, 7
        %v1744 = vsub.s32 %v1741, %v1743
        %v1745 = vrot.slane %v1258, %v1744
        %v1747 = vunpack.c.l.s4 1983009808
        %v1748 = vunpack.c.0.s8 %v1747
        %v1749 = vlaneseq
        %v1750 = vshrl.u32 %v1749, 7
        %v1751 = vsub.s32 %v1748, %v1750
        %v1752 = vrot.slane %v1738, %v1751
        %v1753 = vcombine.high %v1745, %v1745
        %v1754 = vcombine.high %v1752, %v1752
        %v1755 = vcombine.high %v1259, %v1259
        %v1757 = vunpack.c.l.s4 1983009808
        %v1758 = vunpack.c.0.s8 %v1757
        %v1759 = vlaneseq
        %v1760 = vshrl.u32 %v1759, 7
        %v1761 = vsub.s32 %v1758, %v1760
        %v1762 = vrot.slane %v1259, %v1761
        %v1764 = vunpack.c.l.s4 1983009808
        %v1765 = vunpack.c.0.s8 %v1764
        %v1766 = vlaneseq
        %v1767 = vshrl.u32 %v1766, 7
        %v1768 = vsub.s32 %v1765, %v1767
        %v1769 = vrot.slane %v1755, %v1768
        %v1770 = vcombine.high %v1762, %v1762
        %v1771 = vcombine.high %v1769, %v1769
        %v1772 = vcombine.high %v1260, %v1260
        %v1774 = vunpack.c.l.s4 1983009808
        %v1775 = vunpack.c.0.s8 %v1774
        %v1776 = vlaneseq
        %v1777 = vshrl.u32 %v1776, 7
        %v1778 = vsub.s32 %v1775, %v1777
        %v1779 = vrot.slane %v1260, %v1778
        %v1781 = vunpack.c.l.s4 1983009808
        %v1782 = vunpack.c.0.s8 %v1781
        %v1783 = vlaneseq
        %v1784 = vshrl.u32 %v1783, 7
        %v1785 = vsub.s32 %v1782, %v1784
        %v1786 = vrot.slane %v1772, %v1785
        %v1787 = vcombine.high %v1779, %v1779
        %v1788 = vcombine.high %v1786, %v1786
        %v1789 = vcombine.high %v1261, %v1261
        %v1791 = vunpack.c.l.s4 1983009808
        %v1792 = vunpack.c.0.s8 %v1791
        %v1793 = vlaneseq
        %v1794 = vshrl.u32 %v1793, 7
        %v1795 = vsub.s32 %v1792, %v1794
        %v1796 = vrot.slane %v1261, %v1795
        %v1798 = vunpack.c.l.s4 1983009808
        %v1799 = vunpack.c.0.s8 %v1798
        %v1800 = vlaneseq
        %v1801 = vshrl.u32 %v1800, 7
        %v1802 = vsub.s32 %v1799, %v1801
        %v1803 = vrot.slane %v1789, %v1802
        %v1804 = vcombine.high %v1796, %v1796
        %v1805 = vcombine.high %v1803, %v1803
        %v1806 = vcombine.high %v1262, %v1262
        %v1808 = vunpack.c.l.s4 1983009808
        %v1809 = vunpack.c.0.s8 %v1808
        %v1810 = vlaneseq
        %v1811 = vshrl.u32 %v1810, 7
        %v1812 = vsub.s32 %v1809, %v1811
        %v1813 = vrot.slane %v1262, %v1812
        %v1815 = vunpack.c.l.s4 1983009808
        %v1816 = vunpack.c.0.s8 %v1815
        %v1817 = vlaneseq
        %v1818 = vshrl.u32 %v1817, 7
        %v1819 = vsub.s32 %v1816, %v1818
        %v1820 = vrot.slane %v1806, %v1819
        %v1821 = vcombine.high %v1813, %v1813
        %v1822 = vcombine.high %v1820, %v1820
        %v1823 = vcombine.high %v1263, %v1263
        %v1825 = vunpack.c.l.s4 1983009808
        %v1826 = vunpack.c.0.s8 %v1825
        %v1827 = vlaneseq
        %v1828 = vshrl.u32 %v1827, 7
        %v1829 = vsub.s32 %v1826, %v1828
        %v1830 = vrot.slane %v1263, %v1829
        %v1832 = vunpack.c.l.s4 1983009808
        %v1833 = vunpack.c.0.s8 %v1832
        %v1834 = vlaneseq
        %v1835 = vshrl.u32 %v1834, 7
        %v1836 = vsub.s32 %v1833, %v1835
        %v1837 = vrot.slane %v1823, %v1836
        %v1838 = vcombine.high %v1830, %v1830
        %v1839 = vcombine.high %v1837, %v1837
        %v1968 = vrot.slane %v1303, 7
        %v1969 = vrot.slane %v1968, 2
        %v1970 = vrot.slane %v1311, 7
        %v1971 = vrot.slane %v1970, 2
        %v1972 = vrot.slane %v1310, 7
        %v1973 = vrot.slane %v1972, 2
        %v1974 = vrot.slane %v1312, 7
        %v1975 = vrot.slane %v1974, 2
        %v1976 = vrot.slane %v1320, 7
        %v1977 = vrot.slane %v1976, 2
        %v1978 = vrot.slane %v1328, 7
        %v1979 = vrot.slane %v1978, 2
        %v1980 = vrot.slane %v1327, 7
        %v1981 = vrot.slane %v1980, 2
        %v1982 = vrot.slane %v1329, 7
        %v1983 = vrot.slane %v1982, 2
        %v1984 = vrot.slane %v1337, 7
        %v1985 = vrot.slane %v1984, 2
        %v1986 = vrot.slane %v1345, 7
        %v1987 = vrot.slane %v1986, 2
        %v1988 = vrot.slane %v1344, 7
        %v1989 = vrot.slane %v1988, 2
        %v1990 = vrot.slane %v1346, 7
        %v1991 = vrot.slane %v1990, 2
        %v1992 = vrot.slane %v1354, 7
        %v1993 = vrot.slane %v1992, 2
        %v1994 = vrot.slane %v1362, 7
        %v1995 = vrot.slane %v1994, 2
        %v1996 = vrot.slane %v1361, 7
        %v1997 = vrot.slane %v1996, 2
        %v1998 = vrot.slane %v1363, 7
        %v1999 = vrot.slane %v1998, 2
        %v2000 = vrot.slane %v1371, 7
        %v2001 = vrot.slane %v2000, 2
        %v2002 = vrot.slane %v1379, 7
        %v2003 = vrot.slane %v2002, 2
        %v2004 = vrot.slane %v1378, 7
        %v2005 = vrot.slane %v2004, 2
        %v2006 = vrot.slane %v1380, 7
        %v2007 = vrot.slane %v2006, 2
        %v2008 = vrot.slane %v1388, 7
        %v2009 = vrot.slane %v2008, 2
        %v2010 = vrot.slane %v1396, 7
        %v2011 = vrot.slane %v2010, 2
        %v2012 = vrot.slane %v1395, 7
        %v2013 = vrot.slane %v2012, 2
        %v2014 = vrot.slane %v1397, 7
        %v2015 = vrot.slane %v2014, 2
        %v2016 = vrot.slane %v1405, 7
        %v2017 = vrot.slane %v2016, 2
        %v2018 = vrot.slane %v1413, 7
        %v2019 = vrot.slane %v2018, 2
        %v2020 = vrot.slane %v1412, 7
        %v2021 = vrot.slane %v2020, 2
        %v2022 = vrot.slane %v1414, 7
        %v2023 = vrot.slane %v2022, 2
        %v2024 = vrot.slane %v1422, 7
        %v2025 = vrot.slane %v2024, 2
        %v2026 = vrot.slane %v1430, 7
        %v2027 = vrot.slane %v2026, 2
        %v2028 = vrot.slane %v1429, 7
        %v2029 = vrot.slane %v2028, 2
        %v2030 = vrot.slane %v1431, 7
        %v2031 = vrot.slane %v2030, 2
        %v2032 = vrot.slane %v1439, 7
        %v2033 = vrot.slane %v2032, 2
        %v2034 = vrot.slane %v1447, 7
        %v2035 = vrot.slane %v2034, 2
        %v2036 = vrot.slane %v1446, 7
        %v2037 = vrot.slane %v2036, 2
        %v2038 = vrot.slane %v1448, 7
        %v2039 = vrot.slane %v2038, 2
        %v2040 = vrot.slane %v1456, 7
        %v2041 = vrot.slane %v2040, 2
        %v2042 = vrot.slane %v1464, 7
        %v2043 = vrot.slane %v2042, 2
        %v2044 = vrot.slane %v1463, 7
        %v2045 = vrot.slane %v2044, 2
        %v2046 = vrot.slane %v1465, 7
        %v2047 = vrot.slane %v2046, 2
        %v2048 = vrot.slane %v1473, 7
        %v2049 = vrot.slane %v2048, 2
        %v2050 = vrot.slane %v1481, 7
        %v2051 = vrot.slane %v2050, 2
        %v2052 = vrot.slane %v1480, 7
        %v2053 = vrot.slane %v2052, 2
        %v2054 = vrot.slane %v1482, 7
        %v2055 = vrot.slane %v2054, 2
        %v2056 = vrot.slane %v1490, 7
        %v2057 = vrot.slane %v2056, 2
        %v2058 = vrot.slane %v1498, 7
        %v2059 = vrot.slane %v2058, 2
        %v2060 = vrot.slane %v1497, 7
        %v2061 = vrot.slane %v2060, 2
        %v2062 = vrot.slane %v1499, 7
        %v2063 = vrot.slane %v2062, 2
        %v2064 = vrot.slane %v1507, 7
        %v2065 = vrot.slane %v2064, 2
        %v2066 = vrot.slane %v1515, 7
        %v2067 = vrot.slane %v2066, 2
        %v2068 = vrot.slane %v1514, 7
        %v2069 = vrot.slane %v2068, 2
        %v2070 = vrot.slane %v1516, 7
        %v2071 = vrot.slane %v2070, 2
        %v2072 = vrot.slane %v1524, 7
        %v2073 = vrot.slane %v2072, 2
        %v2074 = vrot.slane %v1532, 7
        %v2075 = vrot.slane %v2074, 2
        %v2076 = vrot.slane %v1531, 7
        %v2077 = vrot.slane %v2076, 2
        %v2078 = vrot.slane %v1533, 7
        %v2079 = vrot.slane %v2078, 2
        %v2080 = vrot.slane %v1541, 7
        %v2081 = vrot.slane %v2080, 2
        %v2082 = vrot.slane %v1549, 7
        %v2083 = vrot.slane %v2082, 2
        %v2084 = vrot.slane %v1548, 7
        %v2085 = vrot.slane %v2084, 2
        %v2086 = vrot.slane %v1550, 7
        %v2087 = vrot.slane %v2086, 2
        %v2088 = vrot.slane %v1558, 7
        %v2089 = vrot.slane %v2088, 2
        %v2090 = vrot.slane %v1566, 7
        %v2091 = vrot.slane %v2090, 2
        %v2092 = vrot.slane %v1565, 7
        %v2093 = vrot.slane %v2092, 2
        %v2094 = vrot.slane %v1567, 7
        %v2095 = vrot.slane %v2094, 2
        %v2096 = vrot.slane %v1575, 7
        %v2097 = vrot.slane %v2096, 2
        %v2098 = vrot.slane %v1583, 7
        %v2099 = vrot.slane %v2098, 2
        %v2100 = vrot.slane %v1582, 7
        %v2101 = vrot.slane %v2100, 2
        %v2102 = vrot.slane %v1584, 7
        %v2103 = vrot.slane %v2102, 2
        %v2104 = vrot.slane %v1592, 7
        %v2105 = vrot.slane %v2104, 2
        %v2106 = vrot.slane %v1600, 7
        %v2107 = vrot.slane %v2106, 2
        %v2108 = vrot.slane %v1599, 7
        %v2109 = vrot.slane %v2108, 2
        %v2110 = vrot.slane %v1601, 7
        %v2111 = vrot.slane %v2110, 2
        %v2112 = vrot.slane %v1609, 7
        %v2113 = vrot.slane %v2112, 2
        %v2114 = vrot.slane %v1617, 7
        %v2115 = vrot.slane %v2114, 2
        %v2116 = vrot.slane %v1616, 7
        %v2117 = vrot.slane %v2116, 2
        %v2118 = vrot.slane %v1618, 7
        %v2119 = vrot.slane %v2118, 2
        %v2120 = vrot.slane %v1626, 7
        %v2121 = vrot.slane %v2120, 2
        %v2122 = vrot.slane %v1634, 7
        %v2123 = vrot.slane %v2122, 2
        %v2124 = vrot.slane %v1633, 7
        %v2125 = vrot.slane %v2124, 2
        %v2126 = vrot.slane %v1635, 7
        %v2127 = vrot.slane %v2126, 2
        %v2128 = vrot.slane %v1643, 7
        %v2129 = vrot.slane %v2128, 2
        %v2130 = vrot.slane %v1651, 7
        %v2131 = vrot.slane %v2130, 2
        %v2132 = vrot.slane %v1650, 7
        %v2133 = vrot.slane %v2132, 2
        %v2134 = vrot.slane %v1652, 7
        %v2135 = vrot.slane %v2134, 2
        %v2136 = vrot.slane %v1660, 7
        %v2137 = vrot.slane %v2136, 2
        %v2138 = vrot.slane %v1668, 7
        %v2139 = vrot.slane %v2138, 2
        %v2140 = vrot.slane %v1667, 7
        %v2141 = vrot.slane %v2140, 2
        %v2142 = vrot.slane %v1669, 7
        %v2143 = vrot.slane %v2142, 2
        %v2144 = vrot.slane %v1677, 7
        %v2145 = vrot.slane %v2144, 2
        %v2146 = vrot.slane %v1685, 7
        %v2147 = vrot.slane %v2146, 2
        %v2148 = vrot.slane %v1684, 7
        %v2149 = vrot.slane %v2148, 2
        %v2150 = vrot.slane %v1686, 7
        %v2151 = vrot.slane %v2150, 2
        %v2152 = vrot.slane %v1694, 7
        %v2153 = vrot.slane %v2152, 2
        %v2154 = vrot.slane %v1702, 7
        %v2155 = vrot.slane %v2154, 2
        %v2156 = vrot.slane %v1701, 7
        %v2157 = vrot.slane %v2156, 2
        %v2158 = vrot.slane %v1703, 7
        %v2159 = vrot.slane %v2158, 2
        %v2160 = vrot.slane %v1711, 7
        %v2161 = vrot.slane %v2160, 2
        %v2162 = vrot.slane %v1719, 7
        %v2163 = vrot.slane %v2162, 2
        %v2164 = vrot.slane %v1718, 7
        %v2165 = vrot.slane %v2164, 2
        %v2166 = vrot.slane %v1720, 7
        %v2167 = vrot.slane %v2166, 2
        %v2168 = vrot.slane %v1728, 7
        %v2169 = vrot.slane %v2168, 2
        %v2170 = vrot.slane %v1736, 7
        %v2171 = vrot.slane %v2170, 2
        %v2172 = vrot.slane %v1735, 7
        %v2173 = vrot.slane %v2172, 2
        %v2174 = vrot.slane %v1737, 7
        %v2175 = vrot.slane %v2174, 2
        %v2176 = vrot.slane %v1745, 7
        %v2177 = vrot.slane %v2176, 2
        %v2178 = vrot.slane %v1753, 7
        %v2179 = vrot.slane %v2178, 2
        %v2180 = vrot.slane %v1752, 7
        %v2181 = vrot.slane %v2180, 2
        %v2182 = vrot.slane %v1754, 7
        %v2183 = vrot.slane %v2182, 2
        %v2184 = vrot.slane %v1762, 7
        %v2185 = vrot.slane %v2184, 2
        %v2186 = vrot.slane %v1770, 7
        %v2187 = vrot.slane %v2186, 2
        %v2188 = vrot.slane %v1769, 7
        %v2189 = vrot.slane %v2188, 2
        %v2190 = vrot.slane %v1771, 7
        %v2191 = vrot.slane %v2190, 2
        %v2192 = vrot.slane %v1779, 7
        %v2193 = vrot.slane %v2192, 2
        %v2194 = vrot.slane %v1787, 7
        %v2195 = vrot.slane %v2194, 2
        %v2196 = vrot.slane %v1786, 7
        %v2197 = vrot.slane %v2196, 2
        %v2198 = vrot.slane %v1788, 7
        %v2199 = vrot.slane %v2198, 2
        %v2200 = vrot.slane %v1796, 7
        %v2201 = vrot.slane %v2200, 2
        %v2202 = vrot.slane %v1804, 7
        %v2203 = vrot.slane %v2202, 2
        %v2204 = vrot.slane %v1803, 7
        %v2205 = vrot.slane %v2204, 2
        %v2206 = vrot.slane %v1805, 7
        %v2207 = vrot.slane %v2206, 2
        %v2208 = vrot.slane %v1813, 7
        %v2209 = vrot.slane %v2208, 2
        %v2210 = vrot.slane %v1821, 7
        %v2211 = vrot.slane %v2210, 2
        %v2212 = vrot.slane %v1820, 7
        %v2213 = vrot.slane %v2212, 2
        %v2214 = vrot.slane %v1822, 7
        %v2215 = vrot.slane %v2214, 2
        %v2216 = vrot.slane %v1830, 7
        %v2217 = vrot.slane %v2216, 2
        %v2218 = vrot.slane %v1838, 7
        %v2219 = vrot.slane %v2218, 2
        %v2220 = vrot.slane %v1837, 7
        %v2221 = vrot.slane %v2220, 2
        %v2222 = vrot.slane %v1839, 7
        %v2223 = vrot.slane %v2222, 2
        %v2352 = vmax.f32 %v1303, %v1969
        %v2353 = vmax.f32 %v1311, %v1971
        %v2354 = vmax.f32 %v1310, %v1973
        %v2355 = vmax.f32 %v1312, %v1975
        %v2356 = vmax.f32 %v1320, %v1977
        %v2357 = vmax.f32 %v1328, %v1979
        %v2358 = vmax.f32 %v1327, %v1981
        %v2359 = vmax.f32 %v1329, %v1983
        %v2360 = vmax.f32 %v1337, %v1985
        %v2361 = vmax.f32 %v1345, %v1987
        %v2362 = vmax.f32 %v1344, %v1989
        %v2363 = vmax.f32 %v1346, %v1991
        %v2364 = vmax.f32 %v1354, %v1993
        %v2365 = vmax.f32 %v1362, %v1995
        %v2366 = vmax.f32 %v1361, %v1997
        %v2367 = vmax.f32 %v1363, %v1999
        %v2368 = vmax.f32 %v1371, %v2001
        %v2369 = vmax.f32 %v1379, %v2003
        %v2370 = vmax.f32 %v1378, %v2005
        %v2371 = vmax.f32 %v1380, %v2007
        %v2372 = vmax.f32 %v1388, %v2009
        %v2373 = vmax.f32 %v1396, %v2011
        %v2374 = vmax.f32 %v1395, %v2013
        %v2375 = vmax.f32 %v1397, %v2015
        %v2376 = vmax.f32 %v1405, %v2017
        %v2377 = vmax.f32 %v1413, %v2019
        %v2378 = vmax.f32 %v1412, %v2021
        %v2379 = vmax.f32 %v1414, %v2023
        %v2380 = vmax.f32 %v1422, %v2025
        %v2381 = vmax.f32 %v1430, %v2027
        %v2382 = vmax.f32 %v1429, %v2029
        %v2383 = vmax.f32 %v1431, %v2031
        %v2384 = vmax.f32 %v1439, %v2033
        %v2385 = vmax.f32 %v1447, %v2035
        %v2386 = vmax.f32 %v1446, %v2037
        %v2387 = vmax.f32 %v1448, %v2039
        %v2388 = vmax.f32 %v1456, %v2041
        %v2389 = vmax.f32 %v1464, %v2043
        %v2390 = vmax.f32 %v1463, %v2045
        %v2391 = vmax.f32 %v1465, %v2047
        %v2392 = vmax.f32 %v1473, %v2049
        %v2393 = vmax.f32 %v1481, %v2051
        %v2394 = vmax.f32 %v1480, %v2053
        %v2395 = vmax.f32 %v1482, %v2055
        %v2396 = vmax.f32 %v1490, %v2057
        %v2397 = vmax.f32 %v1498, %v2059
        %v2398 = vmax.f32 %v1497, %v2061
        %v2399 = vmax.f32 %v1499, %v2063
        %v2400 = vmax.f32 %v1507, %v2065
        %v2401 = vmax.f32 %v1515, %v2067
        %v2402 = vmax.f32 %v1514, %v2069
        %v2403 = vmax.f32 %v1516, %v2071
        %v2404 = vmax.f32 %v1524, %v2073
        %v2405 = vmax.f32 %v1532, %v2075
        %v2406 = vmax.f32 %v1531, %v2077
        %v2407 = vmax.f32 %v1533, %v2079
        %v2408 = vmax.f32 %v1541, %v2081
        %v2409 = vmax.f32 %v1549, %v2083
        %v2410 = vmax.f32 %v1548, %v2085
        %v2411 = vmax.f32 %v1550, %v2087
        %v2412 = vmax.f32 %v1558, %v2089
        %v2413 = vmax.f32 %v1566, %v2091
        %v2414 = vmax.f32 %v1565, %v2093
        %v2415 = vmax.f32 %v1567, %v2095
        %v2416 = vmax.f32 %v1575, %v2097
        %v2417 = vmax.f32 %v1583, %v2099
        %v2418 = vmax.f32 %v1582, %v2101
        %v2419 = vmax.f32 %v1584, %v2103
        %v2420 = vmax.f32 %v1592, %v2105
        %v2421 = vmax.f32 %v1600, %v2107
        %v2422 = vmax.f32 %v1599, %v2109
        %v2423 = vmax.f32 %v1601, %v2111
        %v2424 = vmax.f32 %v1609, %v2113
        %v2425 = vmax.f32 %v1617, %v2115
        %v2426 = vmax.f32 %v1616, %v2117
        %v2427 = vmax.f32 %v1618, %v2119
        %v2428 = vmax.f32 %v1626, %v2121
        %v2429 = vmax.f32 %v1634, %v2123
        %v2430 = vmax.f32 %v1633, %v2125
        %v2431 = vmax.f32 %v1635, %v2127
        %v2432 = vmax.f32 %v1643, %v2129
        %v2433 = vmax.f32 %v1651, %v2131
        %v2434 = vmax.f32 %v1650, %v2133
        %v2435 = vmax.f32 %v1652, %v2135
        %v2436 = vmax.f32 %v1660, %v2137
        %v2437 = vmax.f32 %v1668, %v2139
        %v2438 = vmax.f32 %v1667, %v2141
        %v2439 = vmax.f32 %v1669, %v2143
        %v2440 = vmax.f32 %v1677, %v2145
        %v2441 = vmax.f32 %v1685, %v2147
        %v2442 = vmax.f32 %v1684, %v2149
        %v2443 = vmax.f32 %v1686, %v2151
        %v2444 = vmax.f32 %v1694, %v2153
        %v2445 = vmax.f32 %v1702, %v2155
        %v2446 = vmax.f32 %v1701, %v2157
        %v2447 = vmax.f32 %v1703, %v2159
        %v2448 = vmax.f32 %v1711, %v2161
        %v2449 = vmax.f32 %v1719, %v2163
        %v2450 = vmax.f32 %v1718, %v2165
        %v2451 = vmax.f32 %v1720, %v2167
        %v2452 = vmax.f32 %v1728, %v2169
        %v2453 = vmax.f32 %v1736, %v2171
        %v2454 = vmax.f32 %v1735, %v2173
        %v2455 = vmax.f32 %v1737, %v2175
        %v2456 = vmax.f32 %v1745, %v2177
        %v2457 = vmax.f32 %v1753, %v2179
        %v2458 = vmax.f32 %v1752, %v2181
        %v2459 = vmax.f32 %v1754, %v2183
        %v2460 = vmax.f32 %v1762, %v2185
        %v2461 = vmax.f32 %v1770, %v2187
        %v2462 = vmax.f32 %v1769, %v2189
        %v2463 = vmax.f32 %v1771, %v2191
        %v2464 = vmax.f32 %v1779, %v2193
        %v2465 = vmax.f32 %v1787, %v2195
        %v2466 = vmax.f32 %v1786, %v2197
        %v2467 = vmax.f32 %v1788, %v2199
        %v2468 = vmax.f32 %v1796, %v2201
        %v2469 = vmax.f32 %v1804, %v2203
        %v2470 = vmax.f32 %v1803, %v2205
        %v2471 = vmax.f32 %v1805, %v2207
        %v2472 = vmax.f32 %v1813, %v2209
        %v2473 = vmax.f32 %v1821, %v2211
        %v2474 = vmax.f32 %v1820, %v2213
        %v2475 = vmax.f32 %v1822, %v2215
        %v2476 = vmax.f32 %v1830, %v2217
        %v2477 = vmax.f32 %v1838, %v2219
        %v2478 = vmax.f32 %v1837, %v2221
        %v2479 = vmax.f32 %v1839, %v2223
        %v2480 = vpack.c.bf16 %v2352, %v2352
        %v2481 = vpack.c.bf16 %v2353, %v2353
        %v2482 = vpack.c.bf16 %v2354, %v2354
        %v2483 = vpack.c.bf16 %v2355, %v2355
        %v2484 = vpack.c.bf16 %v2356, %v2356
        %v2485 = vpack.c.bf16 %v2357, %v2357
        %v2486 = vpack.c.bf16 %v2358, %v2358
        %v2487 = vpack.c.bf16 %v2359, %v2359
        %v2488 = vpack.c.bf16 %v2360, %v2360
        %v2489 = vpack.c.bf16 %v2361, %v2361
        %v2490 = vpack.c.bf16 %v2362, %v2362
        %v2491 = vpack.c.bf16 %v2363, %v2363
        %v2492 = vpack.c.bf16 %v2364, %v2364
        %v2493 = vpack.c.bf16 %v2365, %v2365
        %v2494 = vpack.c.bf16 %v2366, %v2366
        %v2495 = vpack.c.bf16 %v2367, %v2367
        %v2496 = vpack.c.bf16 %v2368, %v2368
        %v2497 = vpack.c.bf16 %v2369, %v2369
        %v2498 = vpack.c.bf16 %v2370, %v2370
        %v2499 = vpack.c.bf16 %v2371, %v2371
        %v2500 = vpack.c.bf16 %v2372, %v2372
        %v2501 = vpack.c.bf16 %v2373, %v2373
        %v2502 = vpack.c.bf16 %v2374, %v2374
        %v2503 = vpack.c.bf16 %v2375, %v2375
        %v2504 = vpack.c.bf16 %v2376, %v2376
        %v2505 = vpack.c.bf16 %v2377, %v2377
        %v2506 = vpack.c.bf16 %v2378, %v2378
        %v2507 = vpack.c.bf16 %v2379, %v2379
        %v2508 = vpack.c.bf16 %v2380, %v2380
        %v2509 = vpack.c.bf16 %v2381, %v2381
        %v2510 = vpack.c.bf16 %v2382, %v2382
        %v2511 = vpack.c.bf16 %v2383, %v2383
        %v2512 = vpack.c.bf16 %v2384, %v2384
        %v2513 = vpack.c.bf16 %v2385, %v2385
        %v2514 = vpack.c.bf16 %v2386, %v2386
        %v2515 = vpack.c.bf16 %v2387, %v2387
        %v2516 = vpack.c.bf16 %v2388, %v2388
        %v2517 = vpack.c.bf16 %v2389, %v2389
        %v2518 = vpack.c.bf16 %v2390, %v2390
        %v2519 = vpack.c.bf16 %v2391, %v2391
        %v2520 = vpack.c.bf16 %v2392, %v2392
        %v2521 = vpack.c.bf16 %v2393, %v2393
        %v2522 = vpack.c.bf16 %v2394, %v2394
        %v2523 = vpack.c.bf16 %v2395, %v2395
        %v2524 = vpack.c.bf16 %v2396, %v2396
        %v2525 = vpack.c.bf16 %v2397, %v2397
        %v2526 = vpack.c.bf16 %v2398, %v2398
        %v2527 = vpack.c.bf16 %v2399, %v2399
        %v2528 = vpack.c.bf16 %v2400, %v2400
        %v2529 = vpack.c.bf16 %v2401, %v2401
        %v2530 = vpack.c.bf16 %v2402, %v2402
        %v2531 = vpack.c.bf16 %v2403, %v2403
        %v2532 = vpack.c.bf16 %v2404, %v2404
        %v2533 = vpack.c.bf16 %v2405, %v2405
        %v2534 = vpack.c.bf16 %v2406, %v2406
        %v2535 = vpack.c.bf16 %v2407, %v2407
        %v2536 = vpack.c.bf16 %v2408, %v2408
        %v2537 = vpack.c.bf16 %v2409, %v2409
        %v2538 = vpack.c.bf16 %v2410, %v2410
        %v2539 = vpack.c.bf16 %v2411, %v2411
        %v2540 = vpack.c.bf16 %v2412, %v2412
        %v2541 = vpack.c.bf16 %v2413, %v2413
        %v2542 = vpack.c.bf16 %v2414, %v2414
        %v2543 = vpack.c.bf16 %v2415, %v2415
        %v2544 = vpack.c.bf16 %v2416, %v2416
        %v2545 = vpack.c.bf16 %v2417, %v2417
        %v2546 = vpack.c.bf16 %v2418, %v2418
        %v2547 = vpack.c.bf16 %v2419, %v2419
        %v2548 = vpack.c.bf16 %v2420, %v2420
        %v2549 = vpack.c.bf16 %v2421, %v2421
        %v2550 = vpack.c.bf16 %v2422, %v2422
        %v2551 = vpack.c.bf16 %v2423, %v2423
        %v2552 = vpack.c.bf16 %v2424, %v2424
        %v2553 = vpack.c.bf16 %v2425, %v2425
        %v2554 = vpack.c.bf16 %v2426, %v2426
        %v2555 = vpack.c.bf16 %v2427, %v2427
        %v2556 = vpack.c.bf16 %v2428, %v2428
        %v2557 = vpack.c.bf16 %v2429, %v2429
        %v2558 = vpack.c.bf16 %v2430, %v2430
        %v2559 = vpack.c.bf16 %v2431, %v2431
        %v2560 = vpack.c.bf16 %v2432, %v2432
        %v2561 = vpack.c.bf16 %v2433, %v2433
        %v2562 = vpack.c.bf16 %v2434, %v2434
        %v2563 = vpack.c.bf16 %v2435, %v2435
        %v2564 = vpack.c.bf16 %v2436, %v2436
        %v2565 = vpack.c.bf16 %v2437, %v2437
        %v2566 = vpack.c.bf16 %v2438, %v2438
        %v2567 = vpack.c.bf16 %v2439, %v2439
        %v2568 = vpack.c.bf16 %v2440, %v2440
        %v2569 = vpack.c.bf16 %v2441, %v2441
        %v2570 = vpack.c.bf16 %v2442, %v2442
        %v2571 = vpack.c.bf16 %v2443, %v2443
        %v2572 = vpack.c.bf16 %v2444, %v2444
        %v2573 = vpack.c.bf16 %v2445, %v2445
        %v2574 = vpack.c.bf16 %v2446, %v2446
        %v2575 = vpack.c.bf16 %v2447, %v2447
        %v2576 = vpack.c.bf16 %v2448, %v2448
        %v2577 = vpack.c.bf16 %v2449, %v2449
        %v2578 = vpack.c.bf16 %v2450, %v2450
        %v2579 = vpack.c.bf16 %v2451, %v2451
        %v2580 = vpack.c.bf16 %v2452, %v2452
        %v2581 = vpack.c.bf16 %v2453, %v2453
        %v2582 = vpack.c.bf16 %v2454, %v2454
        %v2583 = vpack.c.bf16 %v2455, %v2455
        %v2584 = vpack.c.bf16 %v2456, %v2456
        %v2585 = vpack.c.bf16 %v2457, %v2457
        %v2586 = vpack.c.bf16 %v2458, %v2458
        %v2587 = vpack.c.bf16 %v2459, %v2459
        %v2588 = vpack.c.bf16 %v2460, %v2460
        %v2589 = vpack.c.bf16 %v2461, %v2461
        %v2590 = vpack.c.bf16 %v2462, %v2462
        %v2591 = vpack.c.bf16 %v2463, %v2463
        %v2592 = vpack.c.bf16 %v2464, %v2464
        %v2593 = vpack.c.bf16 %v2465, %v2465
        %v2594 = vpack.c.bf16 %v2466, %v2466
        %v2595 = vpack.c.bf16 %v2467, %v2467
        %v2596 = vpack.c.bf16 %v2468, %v2468
        %v2597 = vpack.c.bf16 %v2469, %v2469
        %v2598 = vpack.c.bf16 %v2470, %v2470
        %v2599 = vpack.c.bf16 %v2471, %v2471
        %v2600 = vpack.c.bf16 %v2472, %v2472
        %v2601 = vpack.c.bf16 %v2473, %v2473
        %v2602 = vpack.c.bf16 %v2474, %v2474
        %v2603 = vpack.c.bf16 %v2475, %v2475
        %v2604 = vpack.c.bf16 %v2476, %v2476
        %v2605 = vpack.c.bf16 %v2477, %v2477
        %v2606 = vpack.c.bf16 %v2478, %v2478
        %v2607 = vpack.c.bf16 %v2479, %v2479
        %v2736 = vunpack.c.l.b16 %v2480
        %v2737 = vunpack.c.l.b16 %v2481
        %v2738 = vunpack.c.l.b16 %v2482
        %v2739 = vunpack.c.l.b16 %v2483
        %v2740 = vunpack.c.l.b16 %v2484
        %v2741 = vunpack.c.l.b16 %v2485
        %v2742 = vunpack.c.l.b16 %v2486
        %v2743 = vunpack.c.l.b16 %v2487
        %v2744 = vunpack.c.l.b16 %v2488
        %v2745 = vunpack.c.l.b16 %v2489
        %v2746 = vunpack.c.l.b16 %v2490
        %v2747 = vunpack.c.l.b16 %v2491
        %v2748 = vunpack.c.l.b16 %v2492
        %v2749 = vunpack.c.l.b16 %v2493
        %v2750 = vunpack.c.l.b16 %v2494
        %v2751 = vunpack.c.l.b16 %v2495
        %v2752 = vunpack.c.l.b16 %v2496
        %v2753 = vunpack.c.l.b16 %v2497
        %v2754 = vunpack.c.l.b16 %v2498
        %v2755 = vunpack.c.l.b16 %v2499
        %v2756 = vunpack.c.l.b16 %v2500
        %v2757 = vunpack.c.l.b16 %v2501
        %v2758 = vunpack.c.l.b16 %v2502
        %v2759 = vunpack.c.l.b16 %v2503
        %v2760 = vunpack.c.l.b16 %v2504
        %v2761 = vunpack.c.l.b16 %v2505
        %v2762 = vunpack.c.l.b16 %v2506
        %v2763 = vunpack.c.l.b16 %v2507
        %v2764 = vunpack.c.l.b16 %v2508
        %v2765 = vunpack.c.l.b16 %v2509
        %v2766 = vunpack.c.l.b16 %v2510
        %v2767 = vunpack.c.l.b16 %v2511
        %v2768 = vunpack.c.l.b16 %v2512
        %v2769 = vunpack.c.l.b16 %v2513
        %v2770 = vunpack.c.l.b16 %v2514
        %v2771 = vunpack.c.l.b16 %v2515
        %v2772 = vunpack.c.l.b16 %v2516
        %v2773 = vunpack.c.l.b16 %v2517
        %v2774 = vunpack.c.l.b16 %v2518
        %v2775 = vunpack.c.l.b16 %v2519
        %v2776 = vunpack.c.l.b16 %v2520
        %v2777 = vunpack.c.l.b16 %v2521
        %v2778 = vunpack.c.l.b16 %v2522
        %v2779 = vunpack.c.l.b16 %v2523
        %v2780 = vunpack.c.l.b16 %v2524
        %v2781 = vunpack.c.l.b16 %v2525
        %v2782 = vunpack.c.l.b16 %v2526
        %v2783 = vunpack.c.l.b16 %v2527
        %v2784 = vunpack.c.l.b16 %v2528
        %v2785 = vunpack.c.l.b16 %v2529
        %v2786 = vunpack.c.l.b16 %v2530
        %v2787 = vunpack.c.l.b16 %v2531
        %v2788 = vunpack.c.l.b16 %v2532
        %v2789 = vunpack.c.l.b16 %v2533
        %v2790 = vunpack.c.l.b16 %v2534
        %v2791 = vunpack.c.l.b16 %v2535
        %v2792 = vunpack.c.l.b16 %v2536
        %v2793 = vunpack.c.l.b16 %v2537
        %v2794 = vunpack.c.l.b16 %v2538
        %v2795 = vunpack.c.l.b16 %v2539
        %v2796 = vunpack.c.l.b16 %v2540
        %v2797 = vunpack.c.l.b16 %v2541
        %v2798 = vunpack.c.l.b16 %v2542
        %v2799 = vunpack.c.l.b16 %v2543
        %v2800 = vunpack.c.l.b16 %v2544
        %v2801 = vunpack.c.l.b16 %v2545
        %v2802 = vunpack.c.l.b16 %v2546
        %v2803 = vunpack.c.l.b16 %v2547
        %v2804 = vunpack.c.l.b16 %v2548
        %v2805 = vunpack.c.l.b16 %v2549
        %v2806 = vunpack.c.l.b16 %v2550
        %v2807 = vunpack.c.l.b16 %v2551
        %v2808 = vunpack.c.l.b16 %v2552
        %v2809 = vunpack.c.l.b16 %v2553
        %v2810 = vunpack.c.l.b16 %v2554
        %v2811 = vunpack.c.l.b16 %v2555
        %v2812 = vunpack.c.l.b16 %v2556
        %v2813 = vunpack.c.l.b16 %v2557
        %v2814 = vunpack.c.l.b16 %v2558
        %v2815 = vunpack.c.l.b16 %v2559
        %v2816 = vunpack.c.l.b16 %v2560
        %v2817 = vunpack.c.l.b16 %v2561
        %v2818 = vunpack.c.l.b16 %v2562
        %v2819 = vunpack.c.l.b16 %v2563
        %v2820 = vunpack.c.l.b16 %v2564
        %v2821 = vunpack.c.l.b16 %v2565
        %v2822 = vunpack.c.l.b16 %v2566
        %v2823 = vunpack.c.l.b16 %v2567
        %v2824 = vunpack.c.l.b16 %v2568
        %v2825 = vunpack.c.l.b16 %v2569
        %v2826 = vunpack.c.l.b16 %v2570
        %v2827 = vunpack.c.l.b16 %v2571
        %v2828 = vunpack.c.l.b16 %v2572
        %v2829 = vunpack.c.l.b16 %v2573
        %v2830 = vunpack.c.l.b16 %v2574
        %v2831 = vunpack.c.l.b16 %v2575
        %v2832 = vunpack.c.l.b16 %v2576
        %v2833 = vunpack.c.l.b16 %v2577
        %v2834 = vunpack.c.l.b16 %v2578
        %v2835 = vunpack.c.l.b16 %v2579
        %v2836 = vunpack.c.l.b16 %v2580
        %v2837 = vunpack.c.l.b16 %v2581
        %v2838 = vunpack.c.l.b16 %v2582
        %v2839 = vunpack.c.l.b16 %v2583
        %v2840 = vunpack.c.l.b16 %v2584
        %v2841 = vunpack.c.l.b16 %v2585
        %v2842 = vunpack.c.l.b16 %v2586
        %v2843 = vunpack.c.l.b16 %v2587
        %v2844 = vunpack.c.l.b16 %v2588
        %v2845 = vunpack.c.l.b16 %v2589
        %v2846 = vunpack.c.l.b16 %v2590
        %v2847 = vunpack.c.l.b16 %v2591
        %v2848 = vunpack.c.l.b16 %v2592
        %v2849 = vunpack.c.l.b16 %v2593
        %v2850 = vunpack.c.l.b16 %v2594
        %v2851 = vunpack.c.l.b16 %v2595
        %v2852 = vunpack.c.l.b16 %v2596
        %v2853 = vunpack.c.l.b16 %v2597
        %v2854 = vunpack.c.l.b16 %v2598
        %v2855 = vunpack.c.l.b16 %v2599
        %v2856 = vunpack.c.l.b16 %v2600
        %v2857 = vunpack.c.l.b16 %v2601
        %v2858 = vunpack.c.l.b16 %v2602
        %v2859 = vunpack.c.l.b16 %v2603
        %v2860 = vunpack.c.l.b16 %v2604
        %v2861 = vunpack.c.l.b16 %v2605
        %v2862 = vunpack.c.l.b16 %v2606
        %v2863 = vunpack.c.l.b16 %v2607
        %v2864 = vrot.slane %v2737, 7
        %vm2865 = vcmask 1041409
        %v2866 = vsel %vm2865, %v2864, %v2736
        %v2867 = vrot.slane %v2738, 6
        %vm2868 = vcmask 1042434
        %v2869 = vsel %vm2868, %v2867, %v2866
        %v2870 = vrot.slane %v2739, 5
        %vm2871 = vcmask 1043459
        %v2872 = vsel %vm2871, %v2870, %v2869
        %v2873 = vrot.slane %v2740, 4
        %vm2874 = vcmask 1044484
        %v2875 = vsel %vm2874, %v2873, %v2872
        %v2876 = vrot.slane %v2741, 3
        %vm2877 = vcmask 1045509
        %v2878 = vsel %vm2877, %v2876, %v2875
        %v2879 = vrot.slane %v2742, 2
        %vm2880 = vcmask 1046534
        %v2881 = vsel %vm2880, %v2879, %v2878
        %v2882 = vrot.slane %v2743, 1
        %vm2883 = vcmask 1047559
        %v2884 = vsel %vm2883, %v2882, %v2881
        %v2885 = vrot.slane %v2745, 7
        %v2886 = vsel %vm2865, %v2885, %v2744
        %v2887 = vrot.slane %v2746, 6
        %v2888 = vsel %vm2868, %v2887, %v2886
        %v2889 = vrot.slane %v2747, 5
        %v2890 = vsel %vm2871, %v2889, %v2888
        %v2891 = vrot.slane %v2748, 4
        %v2892 = vsel %vm2874, %v2891, %v2890
        %v2893 = vrot.slane %v2749, 3
        %v2894 = vsel %vm2877, %v2893, %v2892
        %v2895 = vrot.slane %v2750, 2
        %v2896 = vsel %vm2880, %v2895, %v2894
        %v2897 = vrot.slane %v2751, 1
        %v2898 = vsel %vm2883, %v2897, %v2896
        %v2899 = vrot.slane %v2753, 7
        %v2900 = vsel %vm2865, %v2899, %v2752
        %v2901 = vrot.slane %v2754, 6
        %v2902 = vsel %vm2868, %v2901, %v2900
        %v2903 = vrot.slane %v2755, 5
        %v2904 = vsel %vm2871, %v2903, %v2902
        %v2905 = vrot.slane %v2756, 4
        %v2906 = vsel %vm2874, %v2905, %v2904
        %v2907 = vrot.slane %v2757, 3
        %v2908 = vsel %vm2877, %v2907, %v2906
        %v2909 = vrot.slane %v2758, 2
        %v2910 = vsel %vm2880, %v2909, %v2908
        %v2911 = vrot.slane %v2759, 1
        %v2912 = vsel %vm2883, %v2911, %v2910
        %v2913 = vrot.slane %v2761, 7
        %v2914 = vsel %vm2865, %v2913, %v2760
        %v2915 = vrot.slane %v2762, 6
        %v2916 = vsel %vm2868, %v2915, %v2914
        %v2917 = vrot.slane %v2763, 5
        %v2918 = vsel %vm2871, %v2917, %v2916
        %v2919 = vrot.slane %v2764, 4
        %v2920 = vsel %vm2874, %v2919, %v2918
        %v2921 = vrot.slane %v2765, 3
        %v2922 = vsel %vm2877, %v2921, %v2920
        %v2923 = vrot.slane %v2766, 2
        %v2924 = vsel %vm2880, %v2923, %v2922
        %v2925 = vrot.slane %v2767, 1
        %v2926 = vsel %vm2883, %v2925, %v2924
        %v2927 = vrot.slane %v2769, 7
        %v2928 = vsel %vm2865, %v2927, %v2768
        %v2929 = vrot.slane %v2770, 6
        %v2930 = vsel %vm2868, %v2929, %v2928
        %v2931 = vrot.slane %v2771, 5
        %v2932 = vsel %vm2871, %v2931, %v2930
        %v2933 = vrot.slane %v2772, 4
        %v2934 = vsel %vm2874, %v2933, %v2932
        %v2935 = vrot.slane %v2773, 3
        %v2936 = vsel %vm2877, %v2935, %v2934
        %v2937 = vrot.slane %v2774, 2
        %v2938 = vsel %vm2880, %v2937, %v2936
        %v2939 = vrot.slane %v2775, 1
        %v2940 = vsel %vm2883, %v2939, %v2938
        %v2941 = vrot.slane %v2777, 7
        %v2942 = vsel %vm2865, %v2941, %v2776
        %v2943 = vrot.slane %v2778, 6
        %v2944 = vsel %vm2868, %v2943, %v2942
        %v2945 = vrot.slane %v2779, 5
        %v2946 = vsel %vm2871, %v2945, %v2944
        %v2947 = vrot.slane %v2780, 4
        %v2948 = vsel %vm2874, %v2947, %v2946
        %v2949 = vrot.slane %v2781, 3
        %v2950 = vsel %vm2877, %v2949, %v2948
        %v2951 = vrot.slane %v2782, 2
        %v2952 = vsel %vm2880, %v2951, %v2950
        %v2953 = vrot.slane %v2783, 1
        %v2954 = vsel %vm2883, %v2953, %v2952
        %v2955 = vrot.slane %v2785, 7
        %v2956 = vsel %vm2865, %v2955, %v2784
        %v2957 = vrot.slane %v2786, 6
        %v2958 = vsel %vm2868, %v2957, %v2956
        %v2959 = vrot.slane %v2787, 5
        %v2960 = vsel %vm2871, %v2959, %v2958
        %v2961 = vrot.slane %v2788, 4
        %v2962 = vsel %vm2874, %v2961, %v2960
        %v2963 = vrot.slane %v2789, 3
        %v2964 = vsel %vm2877, %v2963, %v2962
        %v2965 = vrot.slane %v2790, 2
        %v2966 = vsel %vm2880, %v2965, %v2964
        %v2967 = vrot.slane %v2791, 1
        %v2968 = vsel %vm2883, %v2967, %v2966
        %v2969 = vrot.slane %v2793, 7
        %v2970 = vsel %vm2865, %v2969, %v2792
        %v2971 = vrot.slane %v2794, 6
        %v2972 = vsel %vm2868, %v2971, %v2970
        %v2973 = vrot.slane %v2795, 5
        %v2974 = vsel %vm2871, %v2973, %v2972
        %v2975 = vrot.slane %v2796, 4
        %v2976 = vsel %vm2874, %v2975, %v2974
        %v2977 = vrot.slane %v2797, 3
        %v2978 = vsel %vm2877, %v2977, %v2976
        %v2979 = vrot.slane %v2798, 2
        %v2980 = vsel %vm2880, %v2979, %v2978
        %v2981 = vrot.slane %v2799, 1
        %v2982 = vsel %vm2883, %v2981, %v2980
        %v2983 = vrot.slane %v2801, 7
        %v2984 = vsel %vm2865, %v2983, %v2800
        %v2985 = vrot.slane %v2802, 6
        %v2986 = vsel %vm2868, %v2985, %v2984
        %v2987 = vrot.slane %v2803, 5
        %v2988 = vsel %vm2871, %v2987, %v2986
        %v2989 = vrot.slane %v2804, 4
        %v2990 = vsel %vm2874, %v2989, %v2988
        %v2991 = vrot.slane %v2805, 3
        %v2992 = vsel %vm2877, %v2991, %v2990
        %v2993 = vrot.slane %v2806, 2
        %v2994 = vsel %vm2880, %v2993, %v2992
        %v2995 = vrot.slane %v2807, 1
        %v2996 = vsel %vm2883, %v2995, %v2994
        %v2997 = vrot.slane %v2809, 7
        %v2998 = vsel %vm2865, %v2997, %v2808
        %v2999 = vrot.slane %v2810, 6
        %v3000 = vsel %vm2868, %v2999, %v2998
        %v3001 = vrot.slane %v2811, 5
        %v3002 = vsel %vm2871, %v3001, %v3000
        %v3003 = vrot.slane %v2812, 4
        %v3004 = vsel %vm2874, %v3003, %v3002
        %v3005 = vrot.slane %v2813, 3
        %v3006 = vsel %vm2877, %v3005, %v3004
        %v3007 = vrot.slane %v2814, 2
        %v3008 = vsel %vm2880, %v3007, %v3006
        %v3009 = vrot.slane %v2815, 1
        %v3010 = vsel %vm2883, %v3009, %v3008
        %v3011 = vrot.slane %v2817, 7
        %v3012 = vsel %vm2865, %v3011, %v2816
        %v3013 = vrot.slane %v2818, 6
        %v3014 = vsel %vm2868, %v3013, %v3012
        %v3015 = vrot.slane %v2819, 5
        %v3016 = vsel %vm2871, %v3015, %v3014
        %v3017 = vrot.slane %v2820, 4
        %v3018 = vsel %vm2874, %v3017, %v3016
        %v3019 = vrot.slane %v2821, 3
        %v3020 = vsel %vm2877, %v3019, %v3018
        %v3021 = vrot.slane %v2822, 2
        %v3022 = vsel %vm2880, %v3021, %v3020
        %v3023 = vrot.slane %v2823, 1
        %v3024 = vsel %vm2883, %v3023, %v3022
        %v3025 = vrot.slane %v2825, 7
        %v3026 = vsel %vm2865, %v3025, %v2824
        %v3027 = vrot.slane %v2826, 6
        %v3028 = vsel %vm2868, %v3027, %v3026
        %v3029 = vrot.slane %v2827, 5
        %v3030 = vsel %vm2871, %v3029, %v3028
        %v3031 = vrot.slane %v2828, 4
        %v3032 = vsel %vm2874, %v3031, %v3030
        %v3033 = vrot.slane %v2829, 3
        %v3034 = vsel %vm2877, %v3033, %v3032
        %v3035 = vrot.slane %v2830, 2
        %v3036 = vsel %vm2880, %v3035, %v3034
        %v3037 = vrot.slane %v2831, 1
        %v3038 = vsel %vm2883, %v3037, %v3036
        %v3039 = vrot.slane %v2833, 7
        %v3040 = vsel %vm2865, %v3039, %v2832
        %v3041 = vrot.slane %v2834, 6
        %v3042 = vsel %vm2868, %v3041, %v3040
        %v3043 = vrot.slane %v2835, 5
        %v3044 = vsel %vm2871, %v3043, %v3042
        %v3045 = vrot.slane %v2836, 4
        %v3046 = vsel %vm2874, %v3045, %v3044
        %v3047 = vrot.slane %v2837, 3
        %v3048 = vsel %vm2877, %v3047, %v3046
        %v3049 = vrot.slane %v2838, 2
        %v3050 = vsel %vm2880, %v3049, %v3048
        %v3051 = vrot.slane %v2839, 1
        %v3052 = vsel %vm2883, %v3051, %v3050
        %v3053 = vrot.slane %v2841, 7
        %v3054 = vsel %vm2865, %v3053, %v2840
        %v3055 = vrot.slane %v2842, 6
        %v3056 = vsel %vm2868, %v3055, %v3054
        %v3057 = vrot.slane %v2843, 5
        %v3058 = vsel %vm2871, %v3057, %v3056
        %v3059 = vrot.slane %v2844, 4
        %v3060 = vsel %vm2874, %v3059, %v3058
        %v3061 = vrot.slane %v2845, 3
        %v3062 = vsel %vm2877, %v3061, %v3060
        %v3063 = vrot.slane %v2846, 2
        %v3064 = vsel %vm2880, %v3063, %v3062
        %v3065 = vrot.slane %v2847, 1
        %v3066 = vsel %vm2883, %v3065, %v3064
        %v3067 = vrot.slane %v2849, 7
        %v3068 = vsel %vm2865, %v3067, %v2848
        %v3069 = vrot.slane %v2850, 6
        %v3070 = vsel %vm2868, %v3069, %v3068
        %v3071 = vrot.slane %v2851, 5
        %v3072 = vsel %vm2871, %v3071, %v3070
        %v3073 = vrot.slane %v2852, 4
        %v3074 = vsel %vm2874, %v3073, %v3072
        %v3075 = vrot.slane %v2853, 3
        %v3076 = vsel %vm2877, %v3075, %v3074
        %v3077 = vrot.slane %v2854, 2
        %v3078 = vsel %vm2880, %v3077, %v3076
        %v3079 = vrot.slane %v2855, 1
        %v3080 = vsel %vm2883, %v3079, %v3078
        %v3081 = vrot.slane %v2857, 7
        %v3082 = vsel %vm2865, %v3081, %v2856
        %v3083 = vrot.slane %v2858, 6
        %v3084 = vsel %vm2868, %v3083, %v3082
        %v3085 = vrot.slane %v2859, 5
        %v3086 = vsel %vm2871, %v3085, %v3084
        %v3087 = vrot.slane %v2860, 4
        %v3088 = vsel %vm2874, %v3087, %v3086
        %v3089 = vrot.slane %v2861, 3
        %v3090 = vsel %vm2877, %v3089, %v3088
        %v3091 = vrot.slane %v2862, 2
        %v3092 = vsel %vm2880, %v3091, %v3090
        %v3093 = vrot.slane %v2863, 1
        %v3094 = vsel %vm2883, %v3093, %v3092
        %v3095 = vpack.c.b16 %v2884, %v2884
        %v3096 = vpack.c.b16 %v2898, %v2898
        %v3097 = vpack.c.b16 %v2912, %v2912
        %v3098 = vpack.c.b16 %v2926, %v2926
        %v3099 = vpack.c.b16 %v2940, %v2940
        %v3100 = vpack.c.b16 %v2954, %v2954
        %v3101 = vpack.c.b16 %v2968, %v2968
        %v3102 = vpack.c.b16 %v2982, %v2982
        %v3103 = vpack.c.b16 %v2996, %v2996
        %v3104 = vpack.c.b16 %v3010, %v3010
        %v3105 = vpack.c.b16 %v3024, %v3024
        %v3106 = vpack.c.b16 %v3038, %v3038
        %v3107 = vpack.c.b16 %v3052, %v3052
        %v3108 = vpack.c.b16 %v3066, %v3066
        %v3109 = vpack.c.b16 %v3080, %v3080
        %v3110 = vpack.c.b16 %v3094, %v3094
        %v3112 = vshrl.u32 0, 16
        %v3114 = vrot.slane %v3112, 7
        %v3115 = vshll.u32 0, 16
        %v3117 = vor.u32 %v3114, %v3115
        %v3119 = vshrl.u32 %v3095, 16
        %v3121 = vrot.slane %v3119, 7
        %v3122 = vshll.u32 %v3095, 16
        %v3124 = vor.u32 %v3121, %v3122
        %v3126 = vshrl.u32 %v3096, 16
        %v3128 = vrot.slane %v3126, 7
        %v3129 = vshll.u32 %v3096, 16
        %v3131 = vor.u32 %v3128, %v3129
        %v3133 = vshrl.u32 %v3097, 16
        %v3135 = vrot.slane %v3133, 7
        %v3136 = vshll.u32 %v3097, 16
        %v3138 = vor.u32 %v3135, %v3136
        %v3140 = vshrl.u32 %v3098, 16
        %v3142 = vrot.slane %v3140, 7
        %v3143 = vshll.u32 %v3098, 16
        %v3145 = vor.u32 %v3142, %v3143
        %v3147 = vshrl.u32 %v3099, 16
        %v3149 = vrot.slane %v3147, 7
        %v3150 = vshll.u32 %v3099, 16
        %v3152 = vor.u32 %v3149, %v3150
        %v3154 = vshrl.u32 %v3100, 16
        %v3156 = vrot.slane %v3154, 7
        %v3157 = vshll.u32 %v3100, 16
        %v3159 = vor.u32 %v3156, %v3157
        %v3161 = vshrl.u32 %v3101, 16
        %v3163 = vrot.slane %v3161, 7
        %v3164 = vshll.u32 %v3101, 16
        %v3166 = vor.u32 %v3163, %v3164
        %v3168 = vshrl.u32 %v3102, 16
        %v3170 = vrot.slane %v3168, 7
        %v3171 = vshll.u32 %v3102, 16
        %v3173 = vor.u32 %v3170, %v3171
        %v3175 = vshrl.u32 %v3103, 16
        %v3177 = vrot.slane %v3175, 7
        %v3178 = vshll.u32 %v3103, 16
        %v3180 = vor.u32 %v3177, %v3178
        %v3182 = vshrl.u32 %v3104, 16
        %v3184 = vrot.slane %v3182, 7
        %v3185 = vshll.u32 %v3104, 16
        %v3187 = vor.u32 %v3184, %v3185
        %v3189 = vshrl.u32 %v3105, 16
        %v3191 = vrot.slane %v3189, 7
        %v3192 = vshll.u32 %v3105, 16
        %v3194 = vor.u32 %v3191, %v3192
        %v3196 = vshrl.u32 %v3106, 16
        %v3198 = vrot.slane %v3196, 7
        %v3199 = vshll.u32 %v3106, 16
        %v3201 = vor.u32 %v3198, %v3199
        %v3203 = vshrl.u32 %v3107, 16
        %v3205 = vrot.slane %v3203, 7
        %v3206 = vshll.u32 %v3107, 16
        %v3208 = vor.u32 %v3205, %v3206
        %v3210 = vshrl.u32 %v3108, 16
        %v3212 = vrot.slane %v3210, 7
        %v3213 = vshll.u32 %v3108, 16
        %v3215 = vor.u32 %v3212, %v3213
        %v3217 = vshrl.u32 %v3109, 16
        %v3219 = vrot.slane %v3217, 7
        %v3220 = vshll.u32 %v3109, 16
        %v3222 = vor.u32 %v3219, %v3220
        %v3224 = vshrl.u32 %v3110, 16
        %v3226 = vrot.slane %v3224, 7
        %v3227 = vshll.u32 %v3110, 16
        %v3229 = vor.u32 %v3226, %v3227
        %vm3247 = vcmask 1040384
        %vm3248 = vsmask.f32 256
        %vm3249 = vmand %vm3247, %vm3248
        %v3250 = vsel %vm3249, 0, %v3117
        %v3251 = vsel %vm3249, 0, %v3124
        %v3252 = vsel %vm3249, 0, %v3131
        %v3253 = vsel %vm3249, 0, %v3138
        %v3254 = vsel %vm3249, 0, %v3145
        %v3255 = vsel %vm3249, 0, %v3152
        %v3256 = vsel %vm3249, 0, %v3159
        %v3257 = vsel %vm3249, 0, %v3166
        %v3258 = vsel %vm3249, 0, %v3173
        %v3259 = vsel %vm3249, 0, %v3180
        %v3260 = vsel %vm3249, 0, %v3187
        %v3261 = vsel %vm3249, 0, %v3194
        %v3262 = vsel %vm3249, 0, %v3201
        %v3263 = vsel %vm3249, 0, %v3208
        %v3264 = vsel %vm3249, 0, %v3215
        %v3265 = vsel %vm3249, 0, %v3222
        %v3266 = vsel %vm3249, 0, %v3229
        %v3267 = vrot.slane %v3115, 1
        %v3268 = vor.u32 %v3112, %v3267
        %v3269 = vrot.slane %v3122, 1
        %v3270 = vor.u32 %v3119, %v3269
        %v3271 = vrot.slane %v3129, 1
        %v3272 = vor.u32 %v3126, %v3271
        %v3273 = vrot.slane %v3136, 1
        %v3274 = vor.u32 %v3133, %v3273
        %v3275 = vrot.slane %v3143, 1
        %v3276 = vor.u32 %v3140, %v3275
        %v3277 = vrot.slane %v3150, 1
        %v3278 = vor.u32 %v3147, %v3277
        %v3279 = vrot.slane %v3157, 1
        %v3280 = vor.u32 %v3154, %v3279
        %v3281 = vrot.slane %v3164, 1
        %v3282 = vor.u32 %v3161, %v3281
        %v3283 = vrot.slane %v3171, 1
        %v3284 = vor.u32 %v3168, %v3283
        %v3285 = vrot.slane %v3178, 1
        %v3286 = vor.u32 %v3175, %v3285
        %v3287 = vrot.slane %v3185, 1
        %v3288 = vor.u32 %v3182, %v3287
        %v3289 = vrot.slane %v3192, 1
        %v3290 = vor.u32 %v3189, %v3289
        %v3291 = vrot.slane %v3199, 1
        %v3292 = vor.u32 %v3196, %v3291
        %v3293 = vrot.slane %v3206, 1
        %v3294 = vor.u32 %v3203, %v3293
        %v3295 = vrot.slane %v3213, 1
        %v3296 = vor.u32 %v3210, %v3295
        %v3297 = vrot.slane %v3220, 1
        %v3298 = vor.u32 %v3217, %v3297
        %v3299 = vrot.slane %v3227, 1
        %v3300 = vor.u32 %v3224, %v3299
        %vm3318 = vcmask 1043456
        %vm3319 = vsmask.f32 3328
        %vm3320 = vmand %vm3318, %vm3319
        %v3321 = vsel %vm3320, %v3268, 0
        %v3322 = vsel %vm3320, %v3270, 0
        %v3323 = vsel %vm3320, %v3272, 0
        %v3324 = vsel %vm3320, %v3274, 0
        %v3325 = vsel %vm3320, %v3276, 0
        %v3326 = vsel %vm3320, %v3278, 0
        %v3327 = vsel %vm3320, %v3280, 0
        %v3328 = vsel %vm3320, %v3282, 0
        %v3329 = vsel %vm3320, %v3284, 0
        %v3330 = vsel %vm3320, %v3286, 0
        %v3331 = vsel %vm3320, %v3288, 0
        %v3332 = vsel %vm3320, %v3290, 0
        %v3333 = vsel %vm3320, %v3292, 0
        %v3334 = vsel %vm3320, %v3294, 0
        %v3335 = vsel %vm3320, %v3296, 0
        %v3336 = vsel %vm3320, %v3298, 0
        %v3337 = vsel %vm3320, %v3300, 0
        %3339 = vrot.lane.b32.xlu0 0, 64
        %v3340 = vpop.permute.xlu0 %3339
        %3341 = vrot.lane.b32.xlu0 %v3095, 64
        %v3342 = vpop.permute.xlu0 %3341
        %3343 = vrot.lane.b32.xlu0 %v3096, 64
        %v3344 = vpop.permute.xlu0 %3343
        %3345 = vrot.lane.b32.xlu0 %v3097, 64
        %v3346 = vpop.permute.xlu0 %3345
        %3347 = vrot.lane.b32.xlu0 %v3098, 64
        %v3348 = vpop.permute.xlu0 %3347
        %3349 = vrot.lane.b32.xlu0 %v3099, 64
        %v3350 = vpop.permute.xlu0 %3349
        %3351 = vrot.lane.b32.xlu0 %v3100, 64
        %v3352 = vpop.permute.xlu0 %3351
        %3353 = vrot.lane.b32.xlu0 %v3101, 64
        %v3354 = vpop.permute.xlu0 %3353
        %3355 = vrot.lane.b32.xlu0 %v3103, 64
        %v3356 = vpop.permute.xlu0 %3355
        %3357 = vrot.lane.b32.xlu0 %v3104, 64
        %v3358 = vpop.permute.xlu0 %3357
        %3359 = vrot.lane.b32.xlu0 %v3105, 64
        %v3360 = vpop.permute.xlu0 %3359
        %3361 = vrot.lane.b32.xlu0 %v3106, 64
        %v3362 = vpop.permute.xlu0 %3361
        %3363 = vrot.lane.b32.xlu0 %v3107, 64
        %v3364 = vpop.permute.xlu0 %3363
        %3365 = vrot.lane.b32.xlu0 %v3108, 64
        %v3366 = vpop.permute.xlu0 %3365
        %3367 = vrot.lane.b32.xlu0 %v3109, 64
        %v3368 = vpop.permute.xlu0 %3367
        %3385 = vrot.lane.b32.xlu0 %v3251, 64
        %v3386 = vpop.permute.xlu0 %3385
        %3387 = vrot.lane.b32.xlu0 %v3252, 64
        %v3388 = vpop.permute.xlu0 %3387
        %3389 = vrot.lane.b32.xlu0 %v3253, 64
        %v3390 = vpop.permute.xlu0 %3389
        %3391 = vrot.lane.b32.xlu0 %v3254, 64
        %v3392 = vpop.permute.xlu0 %3391
        %3393 = vrot.lane.b32.xlu0 %v3255, 64
        %v3394 = vpop.permute.xlu0 %3393
        %3395 = vrot.lane.b32.xlu0 %v3256, 64
        %v3396 = vpop.permute.xlu0 %3395
        %3397 = vrot.lane.b32.xlu0 %v3257, 64
        %v3398 = vpop.permute.xlu0 %3397
        %3399 = vrot.lane.b32.xlu0 %v3258, 64
        %v3400 = vpop.permute.xlu0 %3399
        %3401 = vrot.lane.b32.xlu0 %v3259, 64
        %v3402 = vpop.permute.xlu0 %3401
        %3403 = vrot.lane.b32.xlu0 %v3260, 64
        %v3404 = vpop.permute.xlu0 %3403
        %3405 = vrot.lane.b32.xlu0 %v3261, 64
        %v3406 = vpop.permute.xlu0 %3405
        %3407 = vrot.lane.b32.xlu0 %v3262, 64
        %v3408 = vpop.permute.xlu0 %3407
        %3409 = vrot.lane.b32.xlu0 %v3263, 64
        %v3410 = vpop.permute.xlu0 %3409
        %3411 = vrot.lane.b32.xlu0 %v3264, 64
        %v3412 = vpop.permute.xlu0 %3411
        %3413 = vrot.lane.b32.xlu0 %v3265, 64
        %v3414 = vpop.permute.xlu0 %3413
        %3415 = vrot.lane.b32.xlu0 %v3266, 64
        %v3416 = vpop.permute.xlu0 %3415
        %3433 = vrot.lane.b32.xlu0 %v3322, 64
        %v3434 = vpop.permute.xlu0 %3433
        %3435 = vrot.lane.b32.xlu0 %v3323, 64
        %v3436 = vpop.permute.xlu0 %3435
        %3437 = vrot.lane.b32.xlu0 %v3324, 64
        %v3438 = vpop.permute.xlu0 %3437
        %3439 = vrot.lane.b32.xlu0 %v3325, 64
        %v3440 = vpop.permute.xlu0 %3439
        %3441 = vrot.lane.b32.xlu0 %v3326, 64
        %v3442 = vpop.permute.xlu0 %3441
        %3443 = vrot.lane.b32.xlu0 %v3327, 64
        %v3444 = vpop.permute.xlu0 %3443
        %3445 = vrot.lane.b32.xlu0 %v3328, 64
        %v3446 = vpop.permute.xlu0 %3445
        %3447 = vrot.lane.b32.xlu0 %v3329, 64
        %v3448 = vpop.permute.xlu0 %3447
        %3449 = vrot.lane.b32.xlu0 %v3330, 64
        %v3450 = vpop.permute.xlu0 %3449
        %3451 = vrot.lane.b32.xlu0 %v3331, 64
        %v3452 = vpop.permute.xlu0 %3451
        %3453 = vrot.lane.b32.xlu0 %v3332, 64
        %v3454 = vpop.permute.xlu0 %3453
        %3455 = vrot.lane.b32.xlu0 %v3333, 64
        %v3456 = vpop.permute.xlu0 %3455
        %3457 = vrot.lane.b32.xlu0 %v3334, 64
        %v3458 = vpop.permute.xlu0 %3457
        %3459 = vrot.lane.b32.xlu0 %v3335, 64
        %v3460 = vpop.permute.xlu0 %3459
        %3461 = vrot.lane.b32.xlu0 %v3336, 64
        %v3462 = vpop.permute.xlu0 %3461
        %3463 = vrot.lane.b32.xlu0 %v3337, 64
        %v3464 = vpop.permute.xlu0 %3463
        %3465 = vrot.lane.b32.xlu0 %v3102, 64
        %v3466 = vpop.permute.xlu0 %3465
        %3467 = vrot.lane.b32.xlu0 %v3110, 64
        %v3468 = vpop.permute.xlu0 %3467
        %vm3469 = vcmask 523264
        %v3472 = vsel %vm3469, %v3250, %v3340
        %v3475 = vsel %vm3469, %v3251, %v3342
        %v3478 = vsel %vm3469, %v3252, %v3344
        %v3481 = vsel %vm3469, %v3253, %v3346
        %v3484 = vsel %vm3469, %v3254, %v3348
        %v3487 = vsel %vm3469, %v3255, %v3350
        %v3490 = vsel %vm3469, %v3256, %v3352
        %v3493 = vsel %vm3469, %v3257, %v3354
        %v3496 = vsel %vm3469, %v3259, %v3356
        %v3499 = vsel %vm3469, %v3260, %v3358
        %v3502 = vsel %vm3469, %v3261, %v3360
        %v3505 = vsel %vm3469, %v3262, %v3362
        %v3508 = vsel %vm3469, %v3263, %v3364
        %v3511 = vsel %vm3469, %v3264, %v3366
        %v3514 = vsel %vm3469, %v3265, %v3368
        %v3517 = vsel %vm3469, %v3321, %v3386
        %v3520 = vsel %vm3469, %v3322, %v3388
        %v3523 = vsel %vm3469, %v3323, %v3390
        %v3526 = vsel %vm3469, %v3324, %v3392
        %v3529 = vsel %vm3469, %v3325, %v3394
        %v3532 = vsel %vm3469, %v3326, %v3396
        %v3535 = vsel %vm3469, %v3327, %v3398
        %v3538 = vsel %vm3469, %v3328, %v3400
        %v3540 = vsel %vm3469, %v3321, %v3402
        %v3543 = vsel %vm3469, %v3330, %v3404
        %v3546 = vsel %vm3469, %v3331, %v3406
        %v3549 = vsel %vm3469, %v3332, %v3408
        %v3552 = vsel %vm3469, %v3333, %v3410
        %v3555 = vsel %vm3469, %v3334, %v3412
        %v3558 = vsel %vm3469, %v3335, %v3414
        %v3561 = vsel %vm3469, %v3336, %v3416
        %v3563 = vsel %vm3469, %v3095, %v3434
        %v3565 = vsel %vm3469, %v3096, %v3436
        %v3567 = vsel %vm3469, %v3097, %v3438
        %v3569 = vsel %vm3469, %v3098, %v3440
        %v3571 = vsel %vm3469, %v3099, %v3442
        %v3573 = vsel %vm3469, %v3100, %v3444
        %v3575 = vsel %vm3469, %v3101, %v3446
        %v3577 = vsel %vm3469, %v3102, %v3448
        %v3579 = vsel %vm3469, %v3103, %v3450
        %v3581 = vsel %vm3469, %v3104, %v3452
        %v3583 = vsel %vm3469, %v3105, %v3454
        %v3585 = vsel %vm3469, %v3106, %v3456
        %v3587 = vsel %vm3469, %v3107, %v3458
        %v3589 = vsel %vm3469, %v3108, %v3460
        %v3591 = vsel %vm3469, %v3109, %v3462
        %v3593 = vsel %vm3469, %v3110, %v3464
        %v3596 = vsel %vm3469, %v3258, %v3466
        %v3599 = vsel %vm3469, %v3266, %v3468
        %v3650 = vunpack.c.l.b16 %v3472
        %v3651 = vunpack.c.l.b16 %v3517
        %v3652 = vunpack.c.l.b16 %v3563
        %v3653 = vunpack.c.l.b16 %v3478
        %v3654 = vunpack.c.l.b16 %v3323
        %v3655 = vunpack.c.l.b16 %v3475
        %v3656 = vunpack.c.l.b16 %v3520
        %v3657 = vunpack.c.l.b16 %v3565
        %v3658 = vunpack.c.l.b16 %v3481
        %v3659 = vunpack.c.l.b16 %v3324
        %v3660 = vunpack.c.l.b16 %v3523
        %v3661 = vunpack.c.l.b16 %v3567
        %v3662 = vunpack.c.l.b16 %v3484
        %v3663 = vunpack.c.l.b16 %v3325
        %v3664 = vunpack.c.l.b16 %v3526
        %v3665 = vunpack.c.l.b16 %v3569
        %v3666 = vunpack.c.l.b16 %v3487
        %v3667 = vunpack.c.l.b16 %v3326
        %v3668 = vunpack.c.l.b16 %v3529
        %v3669 = vunpack.c.l.b16 %v3571
        %v3670 = vunpack.c.l.b16 %v3490
        %v3671 = vunpack.c.l.b16 %v3327
        %v3672 = vunpack.c.l.b16 %v3532
        %v3673 = vunpack.c.l.b16 %v3573
        %v3674 = vunpack.c.l.b16 %v3493
        %v3675 = vunpack.c.l.b16 %v3328
        %v3676 = vunpack.c.l.b16 %v3535
        %v3677 = vunpack.c.l.b16 %v3575
        %v3678 = vunpack.c.l.b16 %v3596
        %v3679 = vunpack.c.l.b16 %v3329
        %v3680 = vunpack.c.l.b16 %v3538
        %v3681 = vunpack.c.l.b16 %v3577
        %v3682 = vunpack.c.l.b16 %v3321
        %v3683 = vunpack.c.l.b16 %v3540
        %v3684 = vunpack.c.l.b16 %v3579
        %v3685 = vunpack.c.l.b16 %v3499
        %v3686 = vunpack.c.l.b16 %v3331
        %v3687 = vunpack.c.l.b16 %v3496
        %v3688 = vunpack.c.l.b16 %v3543
        %v3689 = vunpack.c.l.b16 %v3581
        %v3690 = vunpack.c.l.b16 %v3502
        %v3691 = vunpack.c.l.b16 %v3332
        %v3692 = vunpack.c.l.b16 %v3546
        %v3693 = vunpack.c.l.b16 %v3583
        %v3694 = vunpack.c.l.b16 %v3505
        %v3695 = vunpack.c.l.b16 %v3333
        %v3696 = vunpack.c.l.b16 %v3549
        %v3697 = vunpack.c.l.b16 %v3585
        %v3698 = vunpack.c.l.b16 %v3508
        %v3699 = vunpack.c.l.b16 %v3334
        %v3700 = vunpack.c.l.b16 %v3552
        %v3701 = vunpack.c.l.b16 %v3587
        %v3702 = vunpack.c.l.b16 %v3511
        %v3703 = vunpack.c.l.b16 %v3335
        %v3704 = vunpack.c.l.b16 %v3555
        %v3705 = vunpack.c.l.b16 %v3589
        %v3706 = vunpack.c.l.b16 %v3514
        %v3707 = vunpack.c.l.b16 %v3336
        %v3708 = vunpack.c.l.b16 %v3558
        %v3709 = vunpack.c.l.b16 %v3591
        %v3710 = vunpack.c.l.b16 %v3599
        %v3711 = vunpack.c.l.b16 %v3337
        %v3712 = vunpack.c.l.b16 %v3561
        %v3713 = vunpack.c.l.b16 %v3593
        %v3714 = vld [vmem:[#allocation2] sm:$0xf]
        %v3715 = vld [vmem:[#allocation2 + $0x4] sm:$0xf]
        %v3716 = vld [vmem:[#allocation2 + $0x8] sm:$0xf]
        %v3717 = vld [vmem:[#allocation2 + $0xc] sm:$0xf]
        %v3718 = vld [vmem:[#allocation2 + $0x10] sm:$0xf]
        %v3719 = vld [vmem:[#allocation2 + $0x14] sm:$0xf]
        %v3720 = vld [vmem:[#allocation2 + $0x18] sm:$0xf]
        %v3721 = vld [vmem:[#allocation2 + $0x1c] sm:$0xf]
        %v3722 = vld [vmem:[#allocation2 + $0x20] sm:$0xf]
        %v3723 = vld [vmem:[#allocation2 + $0x24] sm:$0xf]
        %v3724 = vld [vmem:[#allocation2 + $0x28] sm:$0xf]
        %v3725 = vld [vmem:[#allocation2 + $0x2c] sm:$0xf]
        %v3726 = vld [vmem:[#allocation2 + $0x30] sm:$0xf]
        %v3727 = vld [vmem:[#allocation2 + $0x34] sm:$0xf]
        %v3728 = vld [vmem:[#allocation2 + $0x38] sm:$0xf]
        %v3729 = vld [vmem:[#allocation2 + $0x3c] sm:$0xf]
        %v3730 = vld [vmem:[#allocation2 + $0x40] sm:$0xf]
        %v3731 = vld [vmem:[#allocation2 + $0x44] sm:$0xf]
        %v3732 = vld [vmem:[#allocation2 + $0x48] sm:$0xf]
        %v3733 = vld [vmem:[#allocation2 + $0x4c] sm:$0xf]
        %v3734 = vld [vmem:[#allocation2 + $0x50] sm:$0xf]
        %v3735 = vld [vmem:[#allocation2 + $0x54] sm:$0xf]
        %v3736 = vld [vmem:[#allocation2 + $0x58] sm:$0xf]
        %v3737 = vld [vmem:[#allocation2 + $0x5c] sm:$0xf]
        %v3738 = vld [vmem:[#allocation2 + $0x60] sm:$0xf]
        %v3739 = vld [vmem:[#allocation2 + $0x64] sm:$0xf]
        %v3740 = vld [vmem:[#allocation2 + $0x68] sm:$0xf]
        %v3741 = vld [vmem:[#allocation2 + $0x6c] sm:$0xf]
        %v3742 = vld [vmem:[#allocation2 + $0x70] sm:$0xf]
        %v3743 = vld [vmem:[#allocation2 + $0x74] sm:$0xf]
        %v3744 = vld [vmem:[#allocation2 + $0x78] sm:$0xf]
        %v3745 = vld [vmem:[#allocation2 + $0x7c] sm:$0xf]
        %v3746 = vld [vmem:[#allocation2 + $0x80] sm:$0xf]
        %v3747 = vld [vmem:[#allocation2 + $0x84] sm:$0xf]
        %v3748 = vld [vmem:[#allocation2 + $0x88] sm:$0xf]
        %v3749 = vld [vmem:[#allocation2 + $0x8c] sm:$0xf]
        %v3750 = vld [vmem:[#allocation2 + $0x90] sm:$0xf]
        %v3751 = vld [vmem:[#allocation2 + $0x94] sm:$0xf]
        %v3752 = vld [vmem:[#allocation2 + $0x98] sm:$0xf]
        %v3753 = vld [vmem:[#allocation2 + $0x9c] sm:$0xf]
        %v3754 = vld [vmem:[#allocation2 + $0xa0] sm:$0xf]
        %v3755 = vld [vmem:[#allocation2 + $0xa4] sm:$0xf]
        %v3756 = vld [vmem:[#allocation2 + $0xa8] sm:$0xf]
        %v3757 = vld [vmem:[#allocation2 + $0xac] sm:$0xf]
        %v3758 = vld [vmem:[#allocation2 + $0xb0] sm:$0xf]
        %v3759 = vld [vmem:[#allocation2 + $0xb4] sm:$0xf]
        %v3760 = vld [vmem:[#allocation2 + $0xb8] sm:$0xf]
        %v3761 = vld [vmem:[#allocation2 + $0xbc] sm:$0xf]
        %v3762 = vld [vmem:[#allocation2 + $0xc0] sm:$0xf]
        %v3763 = vld [vmem:[#allocation2 + $0xc4] sm:$0xf]
        %v3764 = vld [vmem:[#allocation2 + $0xc8] sm:$0xf]
        %v3765 = vld [vmem:[#allocation2 + $0xcc] sm:$0xf]
        %v3766 = vld [vmem:[#allocation2 + $0xd0] sm:$0xf]
        %v3767 = vld [vmem:[#allocation2 + $0xd4] sm:$0xf]
        %v3768 = vld [vmem:[#allocation2 + $0xd8] sm:$0xf]
        %v3769 = vld [vmem:[#allocation2 + $0xdc] sm:$0xf]
        %v3770 = vld [vmem:[#allocation2 + $0xe0] sm:$0xf]
        %v3771 = vld [vmem:[#allocation2 + $0xe4] sm:$0xf]
        %v3772 = vld [vmem:[#allocation2 + $0xe8] sm:$0xf]
        %v3773 = vld [vmem:[#allocation2 + $0xec] sm:$0xf]
        %v3774 = vld [vmem:[#allocation2 + $0xf0] sm:$0xf]
        %v3775 = vld [vmem:[#allocation2 + $0xf4] sm:$0xf]
        %v3776 = vld [vmem:[#allocation2 + $0xf8] sm:$0xf]
        %v3777 = vld [vmem:[#allocation2 + $0xfc] sm:$0xf]
        %v3778 = vld [vmem:[#allocation2 + $0x100] sm:$0xf]
        %v3779 = vld [vmem:[#allocation2 + $0x104] sm:$0xf]
        %v3780 = vld [vmem:[#allocation2 + $0x108] sm:$0xf]
        %v3781 = vld [vmem:[#allocation2 + $0x10c] sm:$0xf]
        %v3782 = vld [vmem:[#allocation2 + $0x110] sm:$0xf]
        %v3783 = vld [vmem:[#allocation2 + $0x114] sm:$0xf]
        %v3784 = vld [vmem:[#allocation2 + $0x118] sm:$0xf]
        %v3785 = vld [vmem:[#allocation2 + $0x11c] sm:$0xf]
        %v3786 = vld [vmem:[%s4] sm:$0x1]
        %v3788 = vlaneseq
        %v3789 = vshrl.u32 %v3788, 7
        %v3790 = vsub.s32 0, %v3789
        %v3791 = vrot.slane %v3786, %v3790
        %v3793 = vpack.c.b16 %v3655, %v3650
        %v3794 = vpack.c.b16 %v3656, %v3651
        %v3795 = vpack.c.b16 %v3657, %v3652
        %v3796 = vpack.c.b16 %v3658, %v3653
        %v3797 = vpack.c.b16 %v3659, %v3654
        %v3798 = vpack.c.b16 %v3664, %v3660
        %v3799 = vpack.c.b16 %v3665, %v3661
        %v3800 = vpack.c.b16 %v3666, %v3662
        %v3801 = vpack.c.b16 %v3667, %v3663
        %v3802 = vpack.c.b16 %v3672, %v3668
        %v3803 = vpack.c.b16 %v3673, %v3669
        %v3804 = vpack.c.b16 %v3674, %v3670
        %v3805 = vpack.c.b16 %v3675, %v3671
        %v3806 = vpack.c.b16 %v3680, %v3676
        %v3807 = vpack.c.b16 %v3681, %v3677
        %v3808 = vpack.c.b16 %v3650, %v3678
        %v3809 = vpack.c.b16 %v3682, %v3679
        %v3810 = vpack.c.b16 %v3687, %v3650
        %v3811 = vpack.c.b16 %v3688, %v3683
        %v3812 = vpack.c.b16 %v3689, %v3684
        %v3813 = vpack.c.b16 %v3690, %v3685
        %v3814 = vpack.c.b16 %v3691, %v3686
        %v3815 = vpack.c.b16 %v3696, %v3692
        %v3816 = vpack.c.b16 %v3697, %v3693
        %v3817 = vpack.c.b16 %v3698, %v3694
        %v3818 = vpack.c.b16 %v3699, %v3695
        %v3819 = vpack.c.b16 %v3704, %v3700
        %v3820 = vpack.c.b16 %v3705, %v3701
        %v3821 = vpack.c.b16 %v3706, %v3702
        %v3822 = vpack.c.b16 %v3707, %v3703
        %v3823 = vpack.c.b16 %v3712, %v3708
        %v3824 = vpack.c.b16 %v3713, %v3709
        %v3825 = vpack.c.b16 %v3650, %v3710
        %v3826 = vpack.c.b16 %v3682, %v3711
        %v3925 = vunpack.c.l.b16 %v3714
        %v3926 = vunpack.c.l.b16 %v3715
        %v3927 = vunpack.c.l.b16 %v3716
        %v3928 = vunpack.c.l.b16 %v3717
        %v3929 = vunpack.c.l.b16 %v3718
        %v3930 = vunpack.c.l.b16 %v3719
        %v3931 = vunpack.c.l.b16 %v3720
        %v3932 = vunpack.c.l.b16 %v3721
        %v3933 = vunpack.c.l.b16 %v3722
        %v3934 = vunpack.c.l.b16 %v3723
        %v3935 = vunpack.c.l.b16 %v3724
        %v3936 = vunpack.c.l.b16 %v3725
        %v3937 = vunpack.c.l.b16 %v3726
        %v3938 = vunpack.c.l.b16 %v3727
        %v3939 = vunpack.c.l.b16 %v3728
        %v3940 = vunpack.c.l.b16 %v3729
        %v3941 = vunpack.c.l.b16 %v3730
        %v3942 = vunpack.c.l.b16 %v3731
        %v3943 = vunpack.c.l.b16 %v3732
        %v3944 = vunpack.c.l.b16 %v3733
        %v3945 = vunpack.c.l.b16 %v3734
        %v3946 = vunpack.c.l.b16 %v3735
        %v3947 = vunpack.c.l.b16 %v3736
        %v3948 = vunpack.c.l.b16 %v3737
        %v3949 = vunpack.c.l.b16 %v3738
        %v3950 = vunpack.c.l.b16 %v3739
        %v3951 = vunpack.c.l.b16 %v3740
        %v3952 = vunpack.c.l.b16 %v3741
        %v3953 = vunpack.c.l.b16 %v3742
        %v3954 = vunpack.c.l.b16 %v3743
        %v3955 = vunpack.c.l.b16 %v3744
        %v3956 = vunpack.c.l.b16 %v3745
        %v3957 = vunpack.c.l.b16 %v3746
        %v3958 = vunpack.c.l.b16 %v3747
        %v3959 = vunpack.c.l.b16 %v3748
        %v3960 = vunpack.c.l.b16 %v3749
        %v3961 = vunpack.c.l.b16 %v3750
        %v3962 = vunpack.c.l.b16 %v3751
        %v3963 = vunpack.c.l.b16 %v3752
        %v3964 = vunpack.c.l.b16 %v3753
        %v3965 = vunpack.c.l.b16 %v3754
        %v3966 = vunpack.c.l.b16 %v3755
        %v3967 = vunpack.c.l.b16 %v3756
        %v3968 = vunpack.c.l.b16 %v3757
        %v3969 = vunpack.c.l.b16 %v3758
        %v3970 = vunpack.c.l.b16 %v3759
        %v3971 = vunpack.c.l.b16 %v3760
        %v3972 = vunpack.c.l.b16 %v3761
        %v3973 = vunpack.c.l.b16 %v3762
        %v3974 = vunpack.c.l.b16 %v3763
        %v3975 = vunpack.c.l.b16 %v3764
        %v3976 = vunpack.c.l.b16 %v3765
        %v3977 = vunpack.c.l.b16 %v3766
        %v3978 = vunpack.c.l.b16 %v3767
        %v3979 = vunpack.c.l.b16 %v3768
        %v3980 = vunpack.c.l.b16 %v3769
        %v3981 = vunpack.c.l.b16 %v3770
        %v3982 = vunpack.c.l.b16 %v3771
        %v3983 = vunpack.c.l.b16 %v3772
        %v3984 = vunpack.c.l.b16 %v3773
        %v3985 = vunpack.c.l.b16 %v3774
        %v3986 = vunpack.c.l.b16 %v3775
        %v3987 = vunpack.c.l.b16 %v3776
        %v3988 = vunpack.c.l.b16 %v3777
        %v3989 = vunpack.c.l.b16 %v3778
        %v3990 = vunpack.c.l.b16 %v3779
        %v3991 = vunpack.c.l.b16 %v3780
        %v3992 = vunpack.c.l.b16 %v3781
        %v3993 = vunpack.c.l.b16 %v3782
        %v3994 = vunpack.c.l.b16 %v3783
        %v3995 = vunpack.c.l.b16 %v3784
        %v3996 = vunpack.c.l.b16 %v3785
        %v3997 = vpack.c.b16 %v3926, %v3925
        %v3998 = vpack.c.b16 %v3928, %v3927
        %v3999 = vpack.c.b16 %v3930, %v3929
        %v4000 = vpack.c.b16 %v3932, %v3931
        %v4001 = vpack.c.b16 %v3934, %v3933
        %v4002 = vpack.c.b16 %v3936, %v3935
        %v4003 = vpack.c.b16 %v3938, %v3937
        %v4004 = vpack.c.b16 %v3940, %v3939
        %v4005 = vpack.c.b16 %v3942, %v3941
        %v4006 = vpack.c.b16 %v3944, %v3943
        %v4007 = vpack.c.b16 %v3946, %v3945
        %v4008 = vpack.c.b16 %v3948, %v3947
        %v4009 = vpack.c.b16 %v3950, %v3949
        %v4010 = vpack.c.b16 %v3952, %v3951
        %v4011 = vpack.c.b16 %v3954, %v3953
        %v4012 = vpack.c.b16 %v3956, %v3955
        %v4013 = vpack.c.b16 %v3958, %v3957
        %v4014 = vpack.c.b16 %v3960, %v3959
        %v4015 = vpack.c.b16 %v3962, %v3961
        %v4016 = vpack.c.b16 %v3964, %v3963
        %v4017 = vpack.c.b16 %v3966, %v3965
        %v4018 = vpack.c.b16 %v3968, %v3967
        %v4019 = vpack.c.b16 %v3970, %v3969
        %v4020 = vpack.c.b16 %v3972, %v3971
        %v4021 = vpack.c.b16 %v3974, %v3973
        %v4022 = vpack.c.b16 %v3976, %v3975
        %v4023 = vpack.c.b16 %v3978, %v3977
        %v4024 = vpack.c.b16 %v3980, %v3979
        %v4025 = vpack.c.b16 %v3982, %v3981
        %v4026 = vpack.c.b16 %v3984, %v3983
        %v4027 = vpack.c.b16 %v3986, %v3985
        %v4028 = vpack.c.b16 %v3988, %v3987
        %v4029 = vpack.c.b16 %v3990, %v3989
        %v4030 = vpack.c.b16 %v3992, %v3991
        %v4031 = vpack.c.b16 %v3994, %v3993
        %v4032 = vpack.c.b16 %v3996, %v3995
        %v4070 = vsel %vm3469, %v3797, 0
        %v4073 = vsel %vm3469, %v3801, 0
        %v4076 = vsel %vm3469, %v3805, 0
        %v4079 = vsel %vm3469, %v3809, 0
        %v4082 = vsel %vm3469, %v3814, 0
        %v4085 = vsel %vm3469, %v3818, 0
        %v4088 = vsel %vm3469, %v3822, 0
        %v4091 = vsel %vm3469, %v3826, 0
        %4093 = vmatprep.subr.bf16.mxu0 0
        %4094 = vmatpush1.bf16.msra.mxu0 %v3997
        %4095 = vmatprep.subr.bf16.mxu0 0
        %4096 = vmatpush1.bf16.msra.mxu0 %v3998
        %4097 = vmatprep.subr.bf16.mxu0 0
        %4098 = vmatpush1.bf16.msra.mxu0 %v3999
        %4099 = vmatprep.subr.bf16.mxu0 0
        %4100 = vmatpush1.bf16.msra.mxu0 %v4000
        %4101 = vmatprep.subr.bf16.mxu0 0
        %4102 = vmatpush1.bf16.msra.mxu0 %v4001
        %4103 = vmatprep.subr.bf16.mxu0 0
        %4104 = vmatpush1.bf16.msra.mxu0 %v4002
        %4105 = vmatprep.subr.bf16.mxu0 0
        %4106 = vmatpush1.bf16.msra.mxu0 %v4003
        %4107 = vmatprep.subr.bf16.mxu0 0
        %4108 = vmatpush1.bf16.msra.mxu0 %v4004
        %4109 = vmatprep.subr.bf16.mxu0 0
        %4110 = vmatpush1.bf16.msra.mxu0 %v4005
        %4111 = vmatprep.subr.bf16.mxu0 0
        %4112 = vmatpush1.bf16.msra.mxu0 %v4006
        %4113 = vmatprep.subr.bf16.mxu0 0
        %4114 = vmatpush1.bf16.msra.mxu0 %v4007
        %4115 = vmatprep.subr.bf16.mxu0 0
        %4116 = vmatpush1.bf16.msra.mxu0 %v4008
        %4117 = vmatprep.subr.bf16.mxu0 0
        %4118 = vmatpush1.bf16.msra.mxu0 %v4009
        %4119 = vmatprep.subr.bf16.mxu0 0
        %4120 = vmatpush1.bf16.msra.mxu0 %v4010
        %4121 = vmatprep.subr.bf16.mxu0 0
        %4122 = vmatpush1.bf16.msra.mxu0 %v4011
        %4123 = vmatprep.subr.bf16.mxu0 0
        %4124 = vmatpush1.bf16.msra.mxu0 %v4012
        %4125 = vmatprep.mubr.bf16.mxu0 %v3794
        %4126 = vmatmul.mubr.bf16.gmra.mrb[0].mxu0 %v3793
        %v4127 = vpop.f32.mrb[0].mxu0
        %v4128 = vadd.f32 %v3791, %v4127
        %v4129 = vpop.f32.mrb[0].mxu0
        %v4130 = vpop.f32.mrb[0].mxu0
        %v4131 = vadd.f32 %v3791, %v4130
        %v4132 = vpop.f32.mrb[0].mxu0
        %4133 = vmatprep.mubr.bf16.mxu0 %v3798
        %4134 = vmatmul.mubr.bf16.gmra.mrb[0].mxu0 %v3796
        %v4135 = vpop.f32.mrb[0].mxu0
        %v4136 = vadd.f32 %v3791, %v4135
        %v4137 = vpop.f32.mrb[0].mxu0
        %v4138 = vpop.f32.mrb[0].mxu0
        %v4139 = vadd.f32 %v3791, %v4138
        %v4140 = vpop.f32.mrb[0].mxu0
        %4141 = vmatprep.mubr.bf16.mxu0 %v3802
        %4142 = vmatmul.mubr.bf16.gmra.mrb[0].mxu0 %v3800
        %v4143 = vpop.f32.mrb[0].mxu0
        %v4144 = vadd.f32 %v3791, %v4143
        %v4145 = vpop.f32.mrb[0].mxu0
        %v4146 = vpop.f32.mrb[0].mxu0
        %v4147 = vadd.f32 %v3791, %v4146
        %v4148 = vpop.f32.mrb[0].mxu0
        %4149 = vmatprep.mubr.bf16.mxu0 %v3806
        %4150 = vmatmul.mubr.bf16.gmra.mrb[0].mxu0 %v3804
        %v4151 = vpop.f32.mrb[0].mxu0
        %v4152 = vadd.f32 %v3791, %v4151
        %v4153 = vpop.f32.mrb[0].mxu0
        %v4154 = vpop.f32.mrb[0].mxu0
        %v4155 = vadd.f32 %v3791, %v4154
        %v4156 = vpop.f32.mrb[0].mxu0
        %4157 = vmatprep.mubr.bf16.mxu0 %v3811
        %4158 = vmatmul.mubr.bf16.gmra.mrb[0].mxu0 %v3810
        %v4159 = vpop.f32.mrb[0].mxu0
        %v4160 = vadd.f32 %v3791, %v4159
        %v4161 = vpop.f32.mrb[0].mxu0
        %v4162 = vpop.f32.mrb[0].mxu0
        %v4163 = vadd.f32 %v3791, %v4162
        %v4164 = vpop.f32.mrb[0].mxu0
        %4165 = vmatprep.mubr.bf16.mxu0 %v3815
        %4166 = vmatmul.mubr.bf16.gmra.mrb[0].mxu0 %v3813
        %v4167 = vpop.f32.mrb[0].mxu0
        %v4168 = vadd.f32 %v3791, %v4167
        %v4169 = vpop.f32.mrb[0].mxu0
        %v4170 = vpop.f32.mrb[0].mxu0
        %v4171 = vadd.f32 %v3791, %v4170
        %v4172 = vpop.f32.mrb[0].mxu0
        %4173 = vmatprep.mubr.bf16.mxu0 %v3819
        %4174 = vmatmul.mubr.bf16.gmra.mrb[0].mxu0 %v3817
        %v4175 = vpop.f32.mrb[0].mxu0
        %v4176 = vadd.f32 %v3791, %v4175
        %v4177 = vpop.f32.mrb[0].mxu0
        %v4178 = vpop.f32.mrb[0].mxu0
        %v4179 = vadd.f32 %v3791, %v4178
        %v4180 = vpop.f32.mrb[0].mxu0
        %4181 = vmatprep.mubr.bf16.mxu0 %v3823
        %4182 = vmatmul.mubr.bf16.gmra.mrb[0].mxu0 %v3821
        %v4183 = vpop.f32.mrb[0].mxu0
        %v4184 = vadd.f32 %v3791, %v4183
        %v4185 = vpop.f32.mrb[0].mxu0
        %v4186 = vpop.f32.mrb[0].mxu0
        %v4187 = vadd.f32 %v3791, %v4186
        %v4188 = vpop.f32.mrb[0].mxu0
        %4189 = vdwg.mxu0
        %4190 = vmatprep.subr.bf16.mxu0 0
        %4191 = vmatpush1.bf16.msra.mxu0 %v4013
        %4192 = vmatprep.subr.bf16.mxu0 0
        %4193 = vmatpush1.bf16.msra.mxu0 %v4014
        %4194 = vmatprep.subr.bf16.mxu0 0
        %4195 = vmatpush1.bf16.msra.mxu0 %v4015
        %4196 = vmatprep.subr.bf16.mxu0 0
        %4197 = vmatpush1.bf16.msra.mxu0 %v4016
        %4198 = vmatprep.subr.bf16.mxu0 0
        %4199 = vmatpush1.bf16.msra.mxu0 %v4017
        %4200 = vmatprep.subr.bf16.mxu0 0
        %4201 = vmatpush1.bf16.msra.mxu0 %v4018
        %4202 = vmatprep.subr.bf16.mxu0 0
        %4203 = vmatpush1.bf16.msra.mxu0 %v4019
        %4204 = vmatprep.subr.bf16.mxu0 0
        %4205 = vmatpush1.bf16.msra.mxu0 %v4020
        %4206 = vmatprep.subr.bf16.mxu0 0
        %4207 = vmatpush1.bf16.msra.mxu0 %v4021
        %4208 = vmatprep.subr.bf16.mxu0 0
        %4209 = vmatpush1.bf16.msra.mxu0 %v4022
        %4210 = vmatprep.subr.bf16.mxu0 0
        %4211 = vmatpush1.bf16.msra.mxu0 %v4023
        %4212 = vmatprep.subr.bf16.mxu0 0
        %4213 = vmatpush1.bf16.msra.mxu0 %v4024
        %4214 = vmatprep.subr.bf16.mxu0 0
        %4215 = vmatpush1.bf16.msra.mxu0 %v4025
        %4216 = vmatprep.subr.bf16.mxu0 0
        %4217 = vmatpush1.bf16.msra.mxu0 %v4026
        %4218 = vmatprep.subr.bf16.mxu0 0
        %4219 = vmatpush1.bf16.msra.mxu0 %v4027
        %4220 = vmatprep.subr.bf16.mxu0 0
        %4221 = vmatpush1.bf16.msra.mxu0 %v4028
        %4222 = vmatprep.mubr.bf16.mxu0 %v3796
        %4223 = vmatmul.mubr.bf16.gmra.mrb[0].mxu0 %v3795
        %v4224 = vpop.f32.mrb[0].mxu0
        %v4225 = vadd.f32 %v4128, %v4224
        %v4226 = vpop.f32.mrb[0].mxu0
        %v4227 = vpop.f32.mrb[0].mxu0
        %v4228 = vadd.f32 %v4131, %v4227
        %v4229 = vpop.f32.mrb[0].mxu0
        %4230 = vmatprep.mubr.bf16.mxu0 %v3800
        %4231 = vmatmul.mubr.bf16.gmra.mrb[0].mxu0 %v3799
        %v4232 = vpop.f32.mrb[0].mxu0
        %v4233 = vadd.f32 %v4136, %v4232
        %v4234 = vpop.f32.mrb[0].mxu0
        %v4235 = vpop.f32.mrb[0].mxu0
        %v4236 = vadd.f32 %v4139, %v4235
        %v4237 = vpop.f32.mrb[0].mxu0
        %4238 = vmatprep.mubr.bf16.mxu0 %v3804
        %4239 = vmatmul.mubr.bf16.gmra.mrb[0].mxu0 %v3803
        %v4240 = vpop.f32.mrb[0].mxu0
        %v4241 = vadd.f32 %v4144, %v4240
        %v4242 = vpop.f32.mrb[0].mxu0
        %v4243 = vpop.f32.mrb[0].mxu0
        %v4244 = vadd.f32 %v4147, %v4243
        %v4245 = vpop.f32.mrb[0].mxu0
        %4246 = vmatprep.mubr.bf16.mxu0 %v3808
        %4247 = vmatmul.mubr.bf16.gmra.mrb[0].mxu0 %v3807
        %v4248 = vpop.f32.mrb[0].mxu0
        %v4249 = vadd.f32 %v4152, %v4248
        %v4250 = vpop.f32.mrb[0].mxu0
        %v4251 = vpop.f32.mrb[0].mxu0
        %v4252 = vadd.f32 %v4155, %v4251
        %v4253 = vpop.f32.mrb[0].mxu0
        %4254 = vmatprep.mubr.bf16.mxu0 %v3813
        %4255 = vmatmul.mubr.bf16.gmra.mrb[0].mxu0 %v3812
        %v4256 = vpop.f32.mrb[0].mxu0
        %v4257 = vadd.f32 %v4160, %v4256
        %v4258 = vpop.f32.mrb[0].mxu0
        %v4259 = vpop.f32.mrb[0].mxu0
        %v4260 = vadd.f32 %v4163, %v4259
        %v4261 = vpop.f32.mrb[0].mxu0
        %4262 = vmatprep.mubr.bf16.mxu0 %v3817
        %4263 = vmatmul.mubr.bf16.gmra.mrb[0].mxu0 %v3816
        %v4264 = vpop.f32.mrb[0].mxu0
        %v4265 = vadd.f32 %v4168, %v4264
        %v4266 = vpop.f32.mrb[0].mxu0
        %v4267 = vpop.f32.mrb[0].mxu0
        %v4268 = vadd.f32 %v4171, %v4267
        %v4269 = vpop.f32.mrb[0].mxu0
        %4270 = vmatprep.mubr.bf16.mxu0 %v3821
        %4271 = vmatmul.mubr.bf16.gmra.mrb[0].mxu0 %v3820
        %v4272 = vpop.f32.mrb[0].mxu0
        %v4273 = vadd.f32 %v4176, %v4272
        %v4274 = vpop.f32.mrb[0].mxu0
        %v4275 = vpop.f32.mrb[0].mxu0
        %v4276 = vadd.f32 %v4179, %v4275
        %v4277 = vpop.f32.mrb[0].mxu0
        %4278 = vmatprep.mubr.bf16.mxu0 %v3825
        %4279 = vmatmul.mubr.bf16.gmra.mrb[0].mxu0 %v3824
        %v4280 = vpop.f32.mrb[0].mxu0
        %v4281 = vadd.f32 %v4184, %v4280
        %v4282 = vpop.f32.mrb[0].mxu0
        %v4283 = vpop.f32.mrb[0].mxu0
        %v4284 = vadd.f32 %v4187, %v4283
        %v4285 = vpop.f32.mrb[0].mxu0
        %4286 = vdwg.mxu0
        %4287 = vmatprep.subr.bf16.mxu0 0
        %4288 = vmatpush1.bf16.msra.mxu0 %v4029
        %4289 = vmatprep.subr.bf16.mxu0 0
        %4290 = vmatpush1.bf16.msra.mxu0 %v4030
        %4291 = vmatprep.subr.bf16.mxu0 0
        %4292 = vmatpush1.bf16.msra.mxu0 %v4031
        %4293 = vmatprep.subr.bf16.mxu0 0
        %4294 = vmatpush1.bf16.msra.mxu0 %v4032
        %4295 = vmatprep.subr.bf16.mxu0 0
        %4296 = vmatpush1.bf16.msra.mxu0 0
        %4297 = vmatprep.subr.bf16.mxu0 0
        %4298 = vmatpush1.bf16.msra.mxu0 0
        %4299 = vmatprep.subr.bf16.mxu0 0
        %4300 = vmatpush1.bf16.msra.mxu0 0
        %4301 = vmatprep.subr.bf16.mxu0 0
        %4302 = vmatpush1.bf16.msra.mxu0 0
        %4303 = vmatprep.subr.bf16.mxu0 0
        %4304 = vmatpush1.bf16.msra.mxu0 0
        %4305 = vmatprep.subr.bf16.mxu0 0
        %4306 = vmatpush1.bf16.msra.mxu0 0
        %4307 = vmatprep.subr.bf16.mxu0 0
        %4308 = vmatpush1.bf16.msra.mxu0 0
        %4309 = vmatprep.subr.bf16.mxu0 0
        %4310 = vmatpush1.bf16.msra.mxu0 0
        %4311 = vmatprep.subr.bf16.mxu0 0
        %4312 = vmatpush1.bf16.msra.mxu0 0
        %4313 = vmatprep.subr.bf16.mxu0 0
        %4314 = vmatpush1.bf16.msra.mxu0 0
        %4315 = vmatprep.subr.bf16.mxu0 0
        %4316 = vmatpush1.bf16.msra.mxu0 0
        %4317 = vmatprep.subr.bf16.mxu0 0
        %4318 = vmatpush1.bf16.msra.mxu0 0
        %4319 = vmatprep.mubr.bf16.mxu0 0
        %4320 = vmatmul.mubr.bf16.gmra.mrb[0].mxu0 %v4070
        %v4321 = vpop.f32.mrb[0].mxu0
        %v4322 = vadd.f32 %v4225, %v4321
        %v4323 = vpop.f32.mrb[0].mxu0
        %v4324 = vpop.f32.mrb[0].mxu0
        %v4325 = vadd.f32 %v4228, %v4324
        %v4326 = vpop.f32.mrb[0].mxu0
        %4327 = vmatprep.mubr.bf16.mxu0 0
        %4328 = vmatmul.mubr.bf16.gmra.mrb[0].mxu0 %v4073
        %v4329 = vpop.f32.mrb[0].mxu0
        %v4330 = vadd.f32 %v4233, %v4329
        %v4331 = vpop.f32.mrb[0].mxu0
        %v4332 = vpop.f32.mrb[0].mxu0
        %v4333 = vadd.f32 %v4236, %v4332
        %v4334 = vpop.f32.mrb[0].mxu0
        %4335 = vmatprep.mubr.bf16.mxu0 0
        %4336 = vmatmul.mubr.bf16.gmra.mrb[0].mxu0 %v4076
        %v4337 = vpop.f32.mrb[0].mxu0
        %v4338 = vadd.f32 %v4241, %v4337
        %v4339 = vpop.f32.mrb[0].mxu0
        %v4340 = vpop.f32.mrb[0].mxu0
        %v4341 = vadd.f32 %v4244, %v4340
        %v4342 = vpop.f32.mrb[0].mxu0
        %4343 = vmatprep.mubr.bf16.mxu0 0
        %4344 = vmatmul.mubr.bf16.gmra.mrb[0].mxu0 %v4079
        %v4345 = vpop.f32.mrb[0].mxu0
        %v4346 = vadd.f32 %v4249, %v4345
        %v4347 = vpop.f32.mrb[0].mxu0
        %v4348 = vpop.f32.mrb[0].mxu0
        %v4349 = vadd.f32 %v4252, %v4348
        %v4350 = vpop.f32.mrb[0].mxu0
        %4351 = vmatprep.mubr.bf16.mxu0 0
        %4352 = vmatmul.mubr.bf16.gmra.mrb[0].mxu0 %v4082
        %v4353 = vpop.f32.mrb[0].mxu0
        %v4354 = vadd.f32 %v4257, %v4353
        %v4355 = vpop.f32.mrb[0].mxu0
        %v4356 = vpop.f32.mrb[0].mxu0
        %v4357 = vadd.f32 %v4260, %v4356
        %v4358 = vpop.f32.mrb[0].mxu0
        %4359 = vmatprep.mubr.bf16.mxu0 0
        %4360 = vmatmul.mubr.bf16.gmra.mrb[0].mxu0 %v4085
        %v4361 = vpop.f32.mrb[0].mxu0
        %v4362 = vadd.f32 %v4265, %v4361
        %v4363 = vpop.f32.mrb[0].mxu0
        %v4364 = vpop.f32.mrb[0].mxu0
        %v4365 = vadd.f32 %v4268, %v4364
        %v4366 = vpop.f32.mrb[0].mxu0
        %4367 = vmatprep.mubr.bf16.mxu0 0
        %4368 = vmatmul.mubr.bf16.gmra.mrb[0].mxu0 %v4088
        %v4369 = vpop.f32.mrb[0].mxu0
        %v4370 = vadd.f32 %v4273, %v4369
        %v4371 = vpop.f32.mrb[0].mxu0
        %v4372 = vpop.f32.mrb[0].mxu0
        %v4373 = vadd.f32 %v4276, %v4372
        %v4374 = vpop.f32.mrb[0].mxu0
        %4375 = vmatprep.mubr.bf16.mxu0 0
        %4376 = vmatmul.mubr.bf16.gmra.mrb[0].mxu0 %v4091
        %v4377 = vpop.f32.mrb[0].mxu0
        %v4378 = vadd.f32 %v4281, %v4377
        %v4379 = vpop.f32.mrb[0].mxu0
        %v4380 = vpop.f32.mrb[0].mxu0
        %v4381 = vadd.f32 %v4284, %v4380
        %v4382 = vpop.f32.mrb[0].mxu0
        %4383 = vdwg.mxu0
        %v4384 = vmax.f32 %v4322, 0.0
        %v4385 = vmax.f32 %v4325, 0.0
        %v4386 = vmax.f32 %v4330, 0.0
        %v4387 = vmax.f32 %v4333, 0.0
        %v4388 = vmax.f32 %v4338, 0.0
        %v4389 = vmax.f32 %v4341, 0.0
        %v4390 = vmax.f32 %v4346, 0.0
        %v4391 = vmax.f32 %v4349, 0.0
        %v4392 = vmax.f32 %v4354, 0.0
        %v4393 = vmax.f32 %v4357, 0.0
        %v4394 = vmax.f32 %v4362, 0.0
        %v4395 = vmax.f32 %v4365, 0.0
        %v4396 = vmax.f32 %v4370, 0.0
        %v4397 = vmax.f32 %v4373, 0.0
        %v4398 = vmax.f32 %v4378, 0.0
        %v4399 = vmax.f32 %v4381, 0.0
        %v4400 = vmax.f32 %v4384, %v4385
        %v4401 = vmax.f32 %v4386, %v4387
        %v4402 = vmax.f32 %v4388, %v4389
        %v4403 = vmax.f32 %v4390, %v4391
        %v4404 = vmax.f32 %v4392, %v4393
        %v4405 = vmax.f32 %v4394, %v4395
        %v4406 = vmax.f32 %v4396, %v4397
        %v4407 = vmax.f32 %v4398, %v4399
        %v4416 = vcombine.high %v4400, %v4400
        %v4418 = vunpack.c.l.s4 1983009808
        %v4419 = vunpack.c.0.s8 %v4418
        %v4420 = vlaneseq
        %v4421 = vshrl.u32 %v4420, 7
        %v4422 = vsub.s32 %v4419, %v4421
        %v4423 = vrot.slane %v4400, %v4422
        %v4425 = vunpack.c.l.s4 1983009808
        %v4426 = vunpack.c.0.s8 %v4425
        %v4427 = vlaneseq
        %v4428 = vshrl.u32 %v4427, 7
        %v4429 = vsub.s32 %v4426, %v4428
        %v4430 = vrot.slane %v4416, %v4429
        %v4431 = vcombine.high %v4423, %v4423
        %v4432 = vcombine.high %v4430, %v4430
        %v4433 = vcombine.high %v4401, %v4401
        %v4435 = vunpack.c.l.s4 1983009808
        %v4436 = vunpack.c.0.s8 %v4435
        %v4437 = vlaneseq
        %v4438 = vshrl.u32 %v4437, 7
        %v4439 = vsub.s32 %v4436, %v4438
        %v4440 = vrot.slane %v4401, %v4439
        %v4442 = vunpack.c.l.s4 1983009808
        %v4443 = vunpack.c.0.s8 %v4442
        %v4444 = vlaneseq
        %v4445 = vshrl.u32 %v4444, 7
        %v4446 = vsub.s32 %v4443, %v4445
        %v4447 = vrot.slane %v4433, %v4446
        %v4448 = vcombine.high %v4440, %v4440
        %v4449 = vcombine.high %v4447, %v4447
        %v4450 = vcombine.high %v4402, %v4402
        %v4452 = vunpack.c.l.s4 1983009808
        %v4453 = vunpack.c.0.s8 %v4452
        %v4454 = vlaneseq
        %v4455 = vshrl.u32 %v4454, 7
        %v4456 = vsub.s32 %v4453, %v4455
        %v4457 = vrot.slane %v4402, %v4456
        %v4459 = vunpack.c.l.s4 1983009808
        %v4460 = vunpack.c.0.s8 %v4459
        %v4461 = vlaneseq
        %v4462 = vshrl.u32 %v4461, 7
        %v4463 = vsub.s32 %v4460, %v4462
        %v4464 = vrot.slane %v4450, %v4463
        %v4465 = vcombine.high %v4457, %v4457
        %v4466 = vcombine.high %v4464, %v4464
        %v4467 = vcombine.high %v4403, %v4403
        %v4469 = vunpack.c.l.s4 1983009808
        %v4470 = vunpack.c.0.s8 %v4469
        %v4471 = vlaneseq
        %v4472 = vshrl.u32 %v4471, 7
        %v4473 = vsub.s32 %v4470, %v4472
        %v4474 = vrot.slane %v4403, %v4473
        %v4476 = vunpack.c.l.s4 1983009808
        %v4477 = vunpack.c.0.s8 %v4476
        %v4478 = vlaneseq
        %v4479 = vshrl.u32 %v4478, 7
        %v4480 = vsub.s32 %v4477, %v4479
        %v4481 = vrot.slane %v4467, %v4480
        %v4482 = vcombine.high %v4474, %v4474
        %v4483 = vcombine.high %v4481, %v4481
        %v4484 = vcombine.high %v4404, %v4404
        %v4486 = vunpack.c.l.s4 1983009808
        %v4487 = vunpack.c.0.s8 %v4486
        %v4488 = vlaneseq
        %v4489 = vshrl.u32 %v4488, 7
        %v4490 = vsub.s32 %v4487, %v4489
        %v4491 = vrot.slane %v4404, %v4490
        %v4493 = vunpack.c.l.s4 1983009808
        %v4494 = vunpack.c.0.s8 %v4493
        %v4495 = vlaneseq
        %v4496 = vshrl.u32 %v4495, 7
        %v4497 = vsub.s32 %v4494, %v4496
        %v4498 = vrot.slane %v4484, %v4497
        %v4499 = vcombine.high %v4491, %v4491
        %v4500 = vcombine.high %v4498, %v4498
        %v4501 = vcombine.high %v4405, %v4405
        %v4503 = vunpack.c.l.s4 1983009808
        %v4504 = vunpack.c.0.s8 %v4503
        %v4505 = vlaneseq
        %v4506 = vshrl.u32 %v4505, 7
        %v4507 = vsub.s32 %v4504, %v4506
        %v4508 = vrot.slane %v4405, %v4507
        %v4510 = vunpack.c.l.s4 1983009808
        %v4511 = vunpack.c.0.s8 %v4510
        %v4512 = vlaneseq
        %v4513 = vshrl.u32 %v4512, 7
        %v4514 = vsub.s32 %v4511, %v4513
        %v4515 = vrot.slane %v4501, %v4514
        %v4516 = vcombine.high %v4508, %v4508
        %v4517 = vcombine.high %v4515, %v4515
        %v4518 = vcombine.high %v4406, %v4406
        %v4520 = vunpack.c.l.s4 1983009808
        %v4521 = vunpack.c.0.s8 %v4520
        %v4522 = vlaneseq
        %v4523 = vshrl.u32 %v4522, 7
        %v4524 = vsub.s32 %v4521, %v4523
        %v4525 = vrot.slane %v4406, %v4524
        %v4527 = vunpack.c.l.s4 1983009808
        %v4528 = vunpack.c.0.s8 %v4527
        %v4529 = vlaneseq
        %v4530 = vshrl.u32 %v4529, 7
        %v4531 = vsub.s32 %v4528, %v4530
        %v4532 = vrot.slane %v4518, %v4531
        %v4533 = vcombine.high %v4525, %v4525
        %v4534 = vcombine.high %v4532, %v4532
        %v4535 = vcombine.high %v4407, %v4407
        %v4537 = vunpack.c.l.s4 1983009808
        %v4538 = vunpack.c.0.s8 %v4537
        %v4539 = vlaneseq
        %v4540 = vshrl.u32 %v4539, 7
        %v4541 = vsub.s32 %v4538, %v4540
        %v4542 = vrot.slane %v4407, %v4541
        %v4544 = vunpack.c.l.s4 1983009808
        %v4545 = vunpack.c.0.s8 %v4544
        %v4546 = vlaneseq
        %v4547 = vshrl.u32 %v4546, 7
        %v4548 = vsub.s32 %v4545, %v4547
        %v4549 = vrot.slane %v4535, %v4548
        %v4550 = vcombine.high %v4542, %v4542
        %v4551 = vcombine.high %v4549, %v4549
        %v4584 = vrot.slane %v4423, 7
        %v4585 = vrot.slane %v4584, 2
        %v4586 = vrot.slane %v4431, 7
        %v4587 = vrot.slane %v4586, 2
        %v4588 = vrot.slane %v4430, 7
        %v4589 = vrot.slane %v4588, 2
        %v4590 = vrot.slane %v4432, 7
        %v4591 = vrot.slane %v4590, 2
        %v4592 = vrot.slane %v4440, 7
        %v4593 = vrot.slane %v4592, 2
        %v4594 = vrot.slane %v4448, 7
        %v4595 = vrot.slane %v4594, 2
        %v4596 = vrot.slane %v4447, 7
        %v4597 = vrot.slane %v4596, 2
        %v4598 = vrot.slane %v4449, 7
        %v4599 = vrot.slane %v4598, 2
        %v4600 = vrot.slane %v4457, 7
        %v4601 = vrot.slane %v4600, 2
        %v4602 = vrot.slane %v4465, 7
        %v4603 = vrot.slane %v4602, 2
        %v4604 = vrot.slane %v4464, 7
        %v4605 = vrot.slane %v4604, 2
        %v4606 = vrot.slane %v4466, 7
        %v4607 = vrot.slane %v4606, 2
        %v4608 = vrot.slane %v4474, 7
        %v4609 = vrot.slane %v4608, 2
        %v4610 = vrot.slane %v4482, 7
        %v4611 = vrot.slane %v4610, 2
        %v4612 = vrot.slane %v4481, 7
        %v4613 = vrot.slane %v4612, 2
        %v4614 = vrot.slane %v4483, 7
        %v4615 = vrot.slane %v4614, 2
        %v4616 = vrot.slane %v4491, 7
        %v4617 = vrot.slane %v4616, 2
        %v4618 = vrot.slane %v4499, 7
        %v4619 = vrot.slane %v4618, 2
        %v4620 = vrot.slane %v4498, 7
        %v4621 = vrot.slane %v4620, 2
        %v4622 = vrot.slane %v4500, 7
        %v4623 = vrot.slane %v4622, 2
        %v4624 = vrot.slane %v4508, 7
        %v4625 = vrot.slane %v4624, 2
        %v4626 = vrot.slane %v4516, 7
        %v4627 = vrot.slane %v4626, 2
        %v4628 = vrot.slane %v4515, 7
        %v4629 = vrot.slane %v4628, 2
        %v4630 = vrot.slane %v4517, 7
        %v4631 = vrot.slane %v4630, 2
        %v4632 = vrot.slane %v4525, 7
        %v4633 = vrot.slane %v4632, 2
        %v4634 = vrot.slane %v4533, 7
        %v4635 = vrot.slane %v4634, 2
        %v4636 = vrot.slane %v4532, 7
        %v4637 = vrot.slane %v4636, 2
        %v4638 = vrot.slane %v4534, 7
        %v4639 = vrot.slane %v4638, 2
        %v4640 = vrot.slane %v4542, 7
        %v4641 = vrot.slane %v4640, 2
        %v4642 = vrot.slane %v4550, 7
        %v4643 = vrot.slane %v4642, 2
        %v4644 = vrot.slane %v4549, 7
        %v4645 = vrot.slane %v4644, 2
        %v4646 = vrot.slane %v4551, 7
        %v4647 = vrot.slane %v4646, 2
        %v4680 = vmax.f32 %v4423, %v4585
        %v4681 = vmax.f32 %v4431, %v4587
        %v4682 = vmax.f32 %v4430, %v4589
        %v4683 = vmax.f32 %v4432, %v4591
        %v4684 = vmax.f32 %v4440, %v4593
        %v4685 = vmax.f32 %v4448, %v4595
        %v4686 = vmax.f32 %v4447, %v4597
        %v4687 = vmax.f32 %v4449, %v4599
        %v4688 = vmax.f32 %v4457, %v4601
        %v4689 = vmax.f32 %v4465, %v4603
        %v4690 = vmax.f32 %v4464, %v4605
        %v4691 = vmax.f32 %v4466, %v4607
        %v4692 = vmax.f32 %v4474, %v4609
        %v4693 = vmax.f32 %v4482, %v4611
        %v4694 = vmax.f32 %v4481, %v4613
        %v4695 = vmax.f32 %v4483, %v4615
        %v4696 = vmax.f32 %v4491, %v4617
        %v4697 = vmax.f32 %v4499, %v4619
        %v4698 = vmax.f32 %v4498, %v4621
        %v4699 = vmax.f32 %v4500, %v4623
        %v4700 = vmax.f32 %v4508, %v4625
        %v4701 = vmax.f32 %v4516, %v4627
        %v4702 = vmax.f32 %v4515, %v4629
        %v4703 = vmax.f32 %v4517, %v4631
        %v4704 = vmax.f32 %v4525, %v4633
        %v4705 = vmax.f32 %v4533, %v4635
        %v4706 = vmax.f32 %v4532, %v4637
        %v4707 = vmax.f32 %v4534, %v4639
        %v4708 = vmax.f32 %v4542, %v4641
        %v4709 = vmax.f32 %v4550, %v4643
        %v4710 = vmax.f32 %v4549, %v4645
        %v4711 = vmax.f32 %v4551, %v4647
        %v4712 = vpack.c.bf16 %v4680, %v4680
        %v4713 = vpack.c.bf16 %v4681, %v4681
        %v4714 = vpack.c.bf16 %v4682, %v4682
        %v4715 = vpack.c.bf16 %v4683, %v4683
        %v4716 = vpack.c.bf16 %v4684, %v4684
        %v4717 = vpack.c.bf16 %v4685, %v4685
        %v4718 = vpack.c.bf16 %v4686, %v4686
        %v4719 = vpack.c.bf16 %v4687, %v4687
        %v4720 = vpack.c.bf16 %v4688, %v4688
        %v4721 = vpack.c.bf16 %v4689, %v4689
        %v4722 = vpack.c.bf16 %v4690, %v4690
        %v4723 = vpack.c.bf16 %v4691, %v4691
        %v4724 = vpack.c.bf16 %v4692, %v4692
        %v4725 = vpack.c.bf16 %v4693, %v4693
        %v4726 = vpack.c.bf16 %v4694, %v4694
        %v4727 = vpack.c.bf16 %v4695, %v4695
        %v4728 = vpack.c.bf16 %v4696, %v4696
        %v4729 = vpack.c.bf16 %v4697, %v4697
        %v4730 = vpack.c.bf16 %v4698, %v4698
        %v4731 = vpack.c.bf16 %v4699, %v4699
        %v4732 = vpack.c.bf16 %v4700, %v4700
        %v4733 = vpack.c.bf16 %v4701, %v4701
        %v4734 = vpack.c.bf16 %v4702, %v4702
        %v4735 = vpack.c.bf16 %v4703, %v4703
        %v4736 = vpack.c.bf16 %v4704, %v4704
        %v4737 = vpack.c.bf16 %v4705, %v4705
        %v4738 = vpack.c.bf16 %v4706, %v4706
        %v4739 = vpack.c.bf16 %v4707, %v4707
        %v4740 = vpack.c.bf16 %v4708, %v4708
        %v4741 = vpack.c.bf16 %v4709, %v4709
        %v4742 = vpack.c.bf16 %v4710, %v4710
        %v4743 = vpack.c.bf16 %v4711, %v4711
        %v4776 = vunpack.c.l.b16 %v4712
        %v4777 = vunpack.c.l.b16 %v4713
        %v4778 = vunpack.c.l.b16 %v4714
        %v4779 = vunpack.c.l.b16 %v4715
        %v4780 = vunpack.c.l.b16 %v4716
        %v4781 = vunpack.c.l.b16 %v4717
        %v4782 = vunpack.c.l.b16 %v4718
        %v4783 = vunpack.c.l.b16 %v4719
        %v4784 = vunpack.c.l.b16 %v4720
        %v4785 = vunpack.c.l.b16 %v4721
        %v4786 = vunpack.c.l.b16 %v4722
        %v4787 = vunpack.c.l.b16 %v4723
        %v4788 = vunpack.c.l.b16 %v4724
        %v4789 = vunpack.c.l.b16 %v4725
        %v4790 = vunpack.c.l.b16 %v4726
        %v4791 = vunpack.c.l.b16 %v4727
        %v4792 = vunpack.c.l.b16 %v4728
        %v4793 = vunpack.c.l.b16 %v4729
        %v4794 = vunpack.c.l.b16 %v4730
        %v4795 = vunpack.c.l.b16 %v4731
        %v4796 = vunpack.c.l.b16 %v4732
        %v4797 = vunpack.c.l.b16 %v4733
        %v4798 = vunpack.c.l.b16 %v4734
        %v4799 = vunpack.c.l.b16 %v4735
        %v4800 = vunpack.c.l.b16 %v4736
        %v4801 = vunpack.c.l.b16 %v4737
        %v4802 = vunpack.c.l.b16 %v4738
        %v4803 = vunpack.c.l.b16 %v4739
        %v4804 = vunpack.c.l.b16 %v4740
        %v4805 = vunpack.c.l.b16 %v4741
        %v4806 = vunpack.c.l.b16 %v4742
        %v4807 = vunpack.c.l.b16 %v4743
        %v4808 = vrot.slane %v4777, 7
        %v4809 = vsel %vm2865, %v4808, %v4776
        %v4810 = vrot.slane %v4778, 6
        %v4811 = vsel %vm2868, %v4810, %v4809
        %v4812 = vrot.slane %v4779, 5
        %v4813 = vsel %vm2871, %v4812, %v4811
        %v4814 = vrot.slane %v4781, 7
        %v4815 = vsel %vm2865, %v4814, %v4780
        %v4816 = vrot.slane %v4782, 6
        %v4817 = vsel %vm2868, %v4816, %v4815
        %v4818 = vrot.slane %v4783, 5
        %v4819 = vsel %vm2871, %v4818, %v4817
        %v4820 = vrot.slane %v4785, 7
        %v4821 = vsel %vm2865, %v4820, %v4784
        %v4822 = vrot.slane %v4786, 6
        %v4823 = vsel %vm2868, %v4822, %v4821
        %v4824 = vrot.slane %v4787, 5
        %v4825 = vsel %vm2871, %v4824, %v4823
        %v4826 = vrot.slane %v4789, 7
        %v4827 = vsel %vm2865, %v4826, %v4788
        %v4828 = vrot.slane %v4790, 6
        %v4829 = vsel %vm2868, %v4828, %v4827
        %v4830 = vrot.slane %v4791, 5
        %v4831 = vsel %vm2871, %v4830, %v4829
        %v4832 = vrot.slane %v4793, 7
        %v4833 = vsel %vm2865, %v4832, %v4792
        %v4834 = vrot.slane %v4794, 6
        %v4835 = vsel %vm2868, %v4834, %v4833
        %v4836 = vrot.slane %v4795, 5
        %v4837 = vsel %vm2871, %v4836, %v4835
        %v4838 = vrot.slane %v4797, 7
        %v4839 = vsel %vm2865, %v4838, %v4796
        %v4840 = vrot.slane %v4798, 6
        %v4841 = vsel %vm2868, %v4840, %v4839
        %v4842 = vrot.slane %v4799, 5
        %v4843 = vsel %vm2871, %v4842, %v4841
        %v4844 = vrot.slane %v4801, 7
        %v4845 = vsel %vm2865, %v4844, %v4800
        %v4846 = vrot.slane %v4802, 6
        %v4847 = vsel %vm2868, %v4846, %v4845
        %v4848 = vrot.slane %v4803, 5
        %v4849 = vsel %vm2871, %v4848, %v4847
        %v4850 = vrot.slane %v4805, 7
        %v4851 = vsel %vm2865, %v4850, %v4804
        %v4852 = vrot.slane %v4806, 6
        %v4853 = vsel %vm2868, %v4852, %v4851
        %v4854 = vrot.slane %v4807, 5
        %v4855 = vsel %vm2871, %v4854, %v4853
        %v4856 = vpack.c.b16 %v4813, %v4813
        %v4857 = vpack.c.b16 %v4819, %v4819
        %v4858 = vpack.c.b16 %v4825, %v4825
        %v4859 = vpack.c.b16 %v4831, %v4831
        %v4860 = vpack.c.b16 %v4837, %v4837
        %v4861 = vpack.c.b16 %v4843, %v4843
        %v4862 = vpack.c.b16 %v4849, %v4849
        %v4863 = vpack.c.b16 %v4855, %v4855
        %v4865 = vshrl.u32 %v4856, 16
        %v4867 = vrot.slane %v4865, 7
        %v4868 = vshll.u32 %v4856, 16
        %v4870 = vor.u32 %v4867, %v4868
        %v4872 = vshrl.u32 %v4857, 16
        %v4874 = vrot.slane %v4872, 7
        %v4875 = vshll.u32 %v4857, 16
        %v4877 = vor.u32 %v4874, %v4875
        %v4879 = vshrl.u32 %v4858, 16
        %v4881 = vrot.slane %v4879, 7
        %v4882 = vshll.u32 %v4858, 16
        %v4884 = vor.u32 %v4881, %v4882
        %v4886 = vshrl.u32 %v4859, 16
        %v4888 = vrot.slane %v4886, 7
        %v4889 = vshll.u32 %v4859, 16
        %v4891 = vor.u32 %v4888, %v4889
        %v4893 = vshrl.u32 %v4860, 16
        %v4895 = vrot.slane %v4893, 7
        %v4896 = vshll.u32 %v4860, 16
        %v4898 = vor.u32 %v4895, %v4896
        %v4900 = vshrl.u32 %v4861, 16
        %v4902 = vrot.slane %v4900, 7
        %v4903 = vshll.u32 %v4861, 16
        %v4905 = vor.u32 %v4902, %v4903
        %v4907 = vshrl.u32 %v4862, 16
        %v4909 = vrot.slane %v4907, 7
        %v4910 = vshll.u32 %v4862, 16
        %v4912 = vor.u32 %v4909, %v4910
        %v4914 = vshrl.u32 %v4863, 16
        %v4916 = vrot.slane %v4914, 7
        %v4917 = vshll.u32 %v4863, 16
        %v4919 = vor.u32 %v4916, %v4917
        %v4928 = vsel %vm3249, 0, %v4870
        %v4929 = vsel %vm3249, 0, %v4877
        %v4930 = vsel %vm3249, 0, %v4884
        %v4931 = vsel %vm3249, 0, %v4891
        %v4932 = vsel %vm3249, 0, %v4898
        %v4933 = vsel %vm3249, 0, %v4905
        %v4934 = vsel %vm3249, 0, %v4912
        %v4935 = vsel %vm3249, 0, %v4919
        %v4936 = vrot.slane %v4868, 1
        %v4937 = vor.u32 %v4865, %v4936
        %v4938 = vrot.slane %v4875, 1
        %v4939 = vor.u32 %v4872, %v4938
        %v4940 = vrot.slane %v4882, 1
        %v4941 = vor.u32 %v4879, %v4940
        %v4942 = vrot.slane %v4889, 1
        %v4943 = vor.u32 %v4886, %v4942
        %v4944 = vrot.slane %v4896, 1
        %v4945 = vor.u32 %v4893, %v4944
        %v4946 = vrot.slane %v4903, 1
        %v4947 = vor.u32 %v4900, %v4946
        %v4948 = vrot.slane %v4910, 1
        %v4949 = vor.u32 %v4907, %v4948
        %v4950 = vrot.slane %v4917, 1
        %v4951 = vor.u32 %v4914, %v4950
        %vm4960 = vcmask 1041408
        %vm4961 = vsmask.f32 1280
        %vm4962 = vmand %vm4960, %vm4961
        %v4963 = vsel %vm4962, %v3268, 0
        %v4964 = vsel %vm4962, %v4937, 0
        %v4965 = vsel %vm4962, %v4939, 0
        %v4966 = vsel %vm4962, %v4941, 0
        %v4967 = vsel %vm4962, %v4943, 0
        %v4968 = vsel %vm4962, %v4945, 0
        %v4969 = vsel %vm4962, %v4947, 0
        %v4970 = vsel %vm4962, %v4949, 0
        %v4971 = vsel %vm4962, %v4951, 0
        %v4990 = vcombine.low %v3250, 0
        %v4991 = vcombine.low %v4963, %v4928
        %v4993 = vunpack.c.l.s4 1983009808
        %v4994 = vunpack.c.0.s8 %v4993
        %v4995 = vlaneseq
        %v4996 = vshrl.u32 %v4995, 7
        %v4997 = vsub.s32 %v4994, %v4996
        %v4998 = vrot.slane %v4990, %v4997
        %v5000 = vunpack.c.l.s4 1983009808
        %v5001 = vunpack.c.0.s8 %v5000
        %v5002 = vlaneseq
        %v5003 = vshrl.u32 %v5002, 7
        %v5004 = vsub.s32 %v5001, %v5003
        %v5005 = vrot.slane %v4991, %v5004
        %v5006 = vcombine.low %v4998, %v5005
        %v5007 = vcombine.low %v4856, %v4964
        %v5008 = vcombine.low %v4929, %v4857
        %v5010 = vunpack.c.l.s4 1983009808
        %v5011 = vunpack.c.0.s8 %v5010
        %v5012 = vlaneseq
        %v5013 = vshrl.u32 %v5012, 7
        %v5014 = vsub.s32 %v5011, %v5013
        %v5015 = vrot.slane %v5007, %v5014
        %v5017 = vunpack.c.l.s4 1983009808
        %v5018 = vunpack.c.0.s8 %v5017
        %v5019 = vlaneseq
        %v5020 = vshrl.u32 %v5019, 7
        %v5021 = vsub.s32 %v5018, %v5020
        %v5022 = vrot.slane %v5008, %v5021
        %v5023 = vcombine.low %v5015, %v5022
        %v5025 = vunpack.c.l.s4 1983009808
        %v5026 = vunpack.c.0.s8 %v5025
        %v5027 = vlaneseq
        %v5028 = vshrl.u32 %v5027, 7
        %v5029 = vsub.s32 %v5026, %v5028
        %v5030 = vrot.slane %v4965, %v5029
        %v5031 = vcombine.low %v4928, %v4856
        %v5032 = vcombine.low %v4964, %v4929
        %v5034 = vunpack.c.l.s4 1983009808
        %v5035 = vunpack.c.0.s8 %v5034
        %v5036 = vlaneseq
        %v5037 = vshrl.u32 %v5036, 7
        %v5038 = vsub.s32 %v5035, %v5037
        %v5039 = vrot.slane %v5031, %v5038
        %v5041 = vunpack.c.l.s4 1983009808
        %v5042 = vunpack.c.0.s8 %v5041
        %v5043 = vlaneseq
        %v5044 = vshrl.u32 %v5043, 7
        %v5045 = vsub.s32 %v5042, %v5044
        %v5046 = vrot.slane %v5032, %v5045
        %v5047 = vcombine.low %v5039, %v5046
        %v5048 = vcombine.low %v4857, %v4965
        %v5049 = vcombine.low %v4930, %v4858
        %v5051 = vunpack.c.l.s4 1983009808
        %v5052 = vunpack.c.0.s8 %v5051
        %v5053 = vlaneseq
        %v5054 = vshrl.u32 %v5053, 7
        %v5055 = vsub.s32 %v5052, %v5054
        %v5056 = vrot.slane %v5048, %v5055
        %v5058 = vunpack.c.l.s4 1983009808
        %v5059 = vunpack.c.0.s8 %v5058
        %v5060 = vlaneseq
        %v5061 = vshrl.u32 %v5060, 7
        %v5062 = vsub.s32 %v5059, %v5061
        %v5063 = vrot.slane %v5049, %v5062
        %v5064 = vcombine.low %v5056, %v5063
        %v5066 = vunpack.c.l.s4 1983009808
        %v5067 = vunpack.c.0.s8 %v5066
        %v5068 = vlaneseq
        %v5069 = vshrl.u32 %v5068, 7
        %v5070 = vsub.s32 %v5067, %v5069
        %v5071 = vrot.slane %v4966, %v5070
        %v5072 = vcombine.low %v4965, %v4930
        %v5074 = vunpack.c.l.s4 1983009808
        %v5075 = vunpack.c.0.s8 %v5074
        %v5076 = vlaneseq
        %v5077 = vshrl.u32 %v5076, 7
        %v5078 = vsub.s32 %v5075, %v5077
        %v5079 = vrot.slane %v5072, %v5078
        %v5080 = vcombine.low %v5022, %v5079
        %v5081 = vcombine.low %v4858, %v4966
        %v5082 = vcombine.low %v4931, %v4859
        %v5084 = vunpack.c.l.s4 1983009808
        %v5085 = vunpack.c.0.s8 %v5084
        %v5086 = vlaneseq
        %v5087 = vshrl.u32 %v5086, 7
        %v5088 = vsub.s32 %v5085, %v5087
        %v5089 = vrot.slane %v5081, %v5088
        %v5091 = vunpack.c.l.s4 1983009808
        %v5092 = vunpack.c.0.s8 %v5091
        %v5093 = vlaneseq
        %v5094 = vshrl.u32 %v5093, 7
        %v5095 = vsub.s32 %v5092, %v5094
        %v5096 = vrot.slane %v5082, %v5095
        %v5097 = vcombine.low %v5089, %v5096
        %v5099 = vunpack.c.l.s4 1983009808
        %v5100 = vunpack.c.0.s8 %v5099
        %v5101 = vlaneseq
        %v5102 = vshrl.u32 %v5101, 7
        %v5103 = vsub.s32 %v5100, %v5102
        %v5104 = vrot.slane %v4967, %v5103
        %v5105 = vcombine.low %v4966, %v4931
        %v5107 = vunpack.c.l.s4 1983009808
        %v5108 = vunpack.c.0.s8 %v5107
        %v5109 = vlaneseq
        %v5110 = vshrl.u32 %v5109, 7
        %v5111 = vsub.s32 %v5108, %v5110
        %v5112 = vrot.slane %v5105, %v5111
        %v5113 = vcombine.low %v5063, %v5112
        %v5114 = vcombine.low %v4859, %v4967
        %v5116 = vunpack.c.l.s4 1983009808
        %v5117 = vunpack.c.0.s8 %v5116
        %v5118 = vlaneseq
        %v5119 = vshrl.u32 %v5118, 7
        %v5120 = vsub.s32 %v5117, %v5119
        %v5121 = vrot.slane %v5114, %v5120
        %v5122 = vcombine.low %v5121, %v4998
        %v5124 = vunpack.c.l.s4 1983009808
        %v5125 = vunpack.c.0.s8 %v5124
        %v5126 = vlaneseq
        %v5127 = vshrl.u32 %v5126, 7
        %v5128 = vsub.s32 %v5125, %v5127
        %v5129 = vrot.slane %v4963, %v5128
        %v5130 = vcombine.low %v4963, %v4932
        %v5132 = vunpack.c.l.s4 1983009808
        %v5133 = vunpack.c.0.s8 %v5132
        %v5134 = vlaneseq
        %v5135 = vshrl.u32 %v5134, 7
        %v5136 = vsub.s32 %v5133, %v5135
        %v5137 = vrot.slane %v5130, %v5136
        %v5138 = vcombine.low %v4998, %v5137
        %v5139 = vcombine.low %v4860, %v4968
        %v5140 = vcombine.low %v4933, %v4861
        %v5142 = vunpack.c.l.s4 1983009808
        %v5143 = vunpack.c.0.s8 %v5142
        %v5144 = vlaneseq
        %v5145 = vshrl.u32 %v5144, 7
        %v5146 = vsub.s32 %v5143, %v5145
        %v5147 = vrot.slane %v5139, %v5146
        %v5149 = vunpack.c.l.s4 1983009808
        %v5150 = vunpack.c.0.s8 %v5149
        %v5151 = vlaneseq
        %v5152 = vshrl.u32 %v5151, 7
        %v5153 = vsub.s32 %v5150, %v5152
        %v5154 = vrot.slane %v5140, %v5153
        %v5155 = vcombine.low %v5147, %v5154
        %v5157 = vunpack.c.l.s4 1983009808
        %v5158 = vunpack.c.0.s8 %v5157
        %v5159 = vlaneseq
        %v5160 = vshrl.u32 %v5159, 7
        %v5161 = vsub.s32 %v5158, %v5160
        %v5162 = vrot.slane %v4969, %v5161
        %v5163 = vcombine.low %v4932, %v4860
        %v5164 = vcombine.low %v4968, %v4933
        %v5166 = vunpack.c.l.s4 1983009808
        %v5167 = vunpack.c.0.s8 %v5166
        %v5168 = vlaneseq
        %v5169 = vshrl.u32 %v5168, 7
        %v5170 = vsub.s32 %v5167, %v5169
        %v5171 = vrot.slane %v5163, %v5170
        %v5173 = vunpack.c.l.s4 1983009808
        %v5174 = vunpack.c.0.s8 %v5173
        %v5175 = vlaneseq
        %v5176 = vshrl.u32 %v5175, 7
        %v5177 = vsub.s32 %v5174, %v5176
        %v5178 = vrot.slane %v5164, %v5177
        %v5179 = vcombine.low %v5171, %v5178
        %v5180 = vcombine.low %v4861, %v4969
        %v5181 = vcombine.low %v4934, %v4862
        %v5183 = vunpack.c.l.s4 1983009808
        %v5184 = vunpack.c.0.s8 %v5183
        %v5185 = vlaneseq
        %v5186 = vshrl.u32 %v5185, 7
        %v5187 = vsub.s32 %v5184, %v5186
        %v5188 = vrot.slane %v5180, %v5187
        %v5190 = vunpack.c.l.s4 1983009808
        %v5191 = vunpack.c.0.s8 %v5190
        %v5192 = vlaneseq
        %v5193 = vshrl.u32 %v5192, 7
        %v5194 = vsub.s32 %v5191, %v5193
        %v5195 = vrot.slane %v5181, %v5194
        %v5196 = vcombine.low %v5188, %v5195
        %v5198 = vunpack.c.l.s4 1983009808
        %v5199 = vunpack.c.0.s8 %v5198
        %v5200 = vlaneseq
        %v5201 = vshrl.u32 %v5200, 7
        %v5202 = vsub.s32 %v5199, %v5201
        %v5203 = vrot.slane %v4970, %v5202
        %v5204 = vcombine.low %v4969, %v4934
        %v5206 = vunpack.c.l.s4 1983009808
        %v5207 = vunpack.c.0.s8 %v5206
        %v5208 = vlaneseq
        %v5209 = vshrl.u32 %v5208, 7
        %v5210 = vsub.s32 %v5207, %v5209
        %v5211 = vrot.slane %v5204, %v5210
        %v5212 = vcombine.low %v5154, %v5211
        %v5213 = vcombine.low %v4862, %v4970
        %v5214 = vcombine.low %v4935, %v4863
        %v5216 = vunpack.c.l.s4 1983009808
        %v5217 = vunpack.c.0.s8 %v5216
        %v5218 = vlaneseq
        %v5219 = vshrl.u32 %v5218, 7
        %v5220 = vsub.s32 %v5217, %v5219
        %v5221 = vrot.slane %v5213, %v5220
        %v5223 = vunpack.c.l.s4 1983009808
        %v5224 = vunpack.c.0.s8 %v5223
        %v5225 = vlaneseq
        %v5226 = vshrl.u32 %v5225, 7
        %v5227 = vsub.s32 %v5224, %v5226
        %v5228 = vrot.slane %v5214, %v5227
        %v5229 = vcombine.low %v5221, %v5228
        %v5231 = vunpack.c.l.s4 1983009808
        %v5232 = vunpack.c.0.s8 %v5231
        %v5233 = vlaneseq
        %v5234 = vshrl.u32 %v5233, 7
        %v5235 = vsub.s32 %v5232, %v5234
        %v5236 = vrot.slane %v4971, %v5235
        %v5237 = vcombine.low %v4970, %v4935
        %v5239 = vunpack.c.l.s4 1983009808
        %v5240 = vunpack.c.0.s8 %v5239
        %v5241 = vlaneseq
        %v5242 = vshrl.u32 %v5241, 7
        %v5243 = vsub.s32 %v5240, %v5242
        %v5244 = vrot.slane %v5237, %v5243
        %v5245 = vcombine.low %v5195, %v5244
        %v5246 = vcombine.low %v4863, %v4971
        %v5248 = vunpack.c.l.s4 1983009808
        %v5249 = vunpack.c.0.s8 %v5248
        %v5250 = vlaneseq
        %v5251 = vshrl.u32 %v5250, 7
        %v5252 = vsub.s32 %v5249, %v5251
        %v5253 = vrot.slane %v5246, %v5252
        %v5254 = vcombine.low %v5253, %v4998
        %v5255 = vld [vmem:[%s5] sm:$0xff]
        %v5256 = vld [vmem:[%s5 + $0x8] sm:$0xff]
        %v5257 = vld [vmem:[%s5 + $0x10] sm:$0xff]
        %v5258 = vld [vmem:[%s5 + $0x18] sm:$0xff]
        %v5259 = vld [vmem:[%s5 + $0x20] sm:$0xff]
        %v5260 = vld [vmem:[%s5 + $0x28] sm:$0xff]
        %v5261 = vld [vmem:[%s5 + $0x30] sm:$0xff]
        %v5262 = vld [vmem:[%s5 + $0x38] sm:$0xff]
        %v5263 = vld [vmem:[%s5 + $0x40] sm:$0xff]
        %v5264 = vld [vmem:[%s5 + $0x48] sm:$0xff]
        %v5265 = vld [vmem:[%s5 + $0x50] sm:$0xff]
        %v5266 = vld [vmem:[%s5 + $0x58] sm:$0xff]
        %v5267 = vld [vmem:[%s5 + $0x60] sm:$0xff]
        %v5268 = vld [vmem:[%s5 + $0x68] sm:$0xff]
        %v5269 = vld [vmem:[%s5 + $0x70] sm:$0xff]
        %v5270 = vld [vmem:[%s5 + $0x78] sm:$0xff]
        %v5271 = vld [vmem:[%s5 + $0x80] sm:$0xff]
        %v5272 = vld [vmem:[%s5 + $0x88] sm:$0xff]
        %v5273 = vld [vmem:[%s5 + $0x90] sm:$0xff]
        %v5274 = vld [vmem:[%s5 + $0x98] sm:$0xff]
        %v5275 = vld [vmem:[%s5 + $0xa0] sm:$0xff]
        %v5276 = vld [vmem:[%s5 + $0xa8] sm:$0xff]
        %v5277 = vld [vmem:[%s5 + $0xb0] sm:$0xff]
        %v5278 = vld [vmem:[%s5 + $0xb8] sm:$0xff]
        %v5279 = vld [vmem:[%s5 + $0xc0] sm:$0xff]
        %v5280 = vld [vmem:[%s5 + $0xc8] sm:$0xff]
        %v5281 = vld [vmem:[%s5 + $0xd0] sm:$0xff]
        %v5282 = vld [vmem:[%s5 + $0xd8] sm:$0xff]
        %v5283 = vld [vmem:[%s5 + $0xe0] sm:$0xff]
        %v5284 = vld [vmem:[%s5 + $0xe8] sm:$0xff]
        %v5285 = vld [vmem:[%s5 + $0xf0] sm:$0xff]
        %v5286 = vld [vmem:[%s5 + $0xf8] sm:$0xff]
        %v5287 = vld [vmem:[%s5 + $0x100] sm:$0xff]
        %v5288 = vld [vmem:[%s5 + $0x108] sm:$0xff]
        %v5289 = vld [vmem:[%s5 + $0x110] sm:$0xff]
        %v5290 = vld [vmem:[%s5 + $0x118] sm:$0xff]
        %v5291 = vld [vmem:[%s5 + $0x120] sm:$0xff]
        %v5292 = vld [vmem:[%s5 + $0x128] sm:$0xff]
        %v5293 = vld [vmem:[%s5 + $0x130] sm:$0xff]
        %v5294 = vld [vmem:[%s5 + $0x138] sm:$0xff]
        %v5295 = vld [vmem:[%s5 + $0x140] sm:$0xff]
        %v5296 = vld [vmem:[%s5 + $0x148] sm:$0xff]
        %v5297 = vld [vmem:[%s5 + $0x150] sm:$0xff]
        %v5298 = vld [vmem:[%s5 + $0x158] sm:$0xff]
        %v5299 = vld [vmem:[%s5 + $0x160] sm:$0xff]
        %v5300 = vld [vmem:[%s5 + $0x168] sm:$0xff]
        %v5301 = vld [vmem:[%s5 + $0x170] sm:$0xff]
        %v5302 = vld [vmem:[%s5 + $0x178] sm:$0xff]
        %v5303 = vld [vmem:[%s5 + $0x180] sm:$0xff]
        %v5304 = vld [vmem:[%s5 + $0x188] sm:$0xff]
        %v5305 = vld [vmem:[%s5 + $0x190] sm:$0xff]
        %v5306 = vld [vmem:[%s5 + $0x198] sm:$0xff]
        %v5307 = vld [vmem:[%s5 + $0x1a0] sm:$0xff]
        %v5308 = vld [vmem:[%s5 + $0x1a8] sm:$0xff]
        %v5309 = vld [vmem:[%s5 + $0x1b0] sm:$0xff]
        %v5310 = vld [vmem:[%s5 + $0x1b8] sm:$0xff]
        %v5311 = vld [vmem:[%s5 + $0x1c0] sm:$0xff]
        %v5312 = vld [vmem:[%s5 + $0x1c8] sm:$0xff]
        %v5313 = vld [vmem:[%s5 + $0x1d0] sm:$0xff]
        %v5314 = vld [vmem:[%s5 + $0x1d8] sm:$0xff]
        %v5315 = vld [vmem:[%s5 + $0x1e0] sm:$0xff]
        %v5316 = vld [vmem:[%s5 + $0x1e8] sm:$0xff]
        %v5317 = vld [vmem:[%s5 + $0x1f0] sm:$0xff]
        %v5318 = vld [vmem:[%s5 + $0x1f8] sm:$0xff]
        %v5319 = vld [vmem:[%s5 + $0x200] sm:$0xff]
        %v5320 = vld [vmem:[%s5 + $0x208] sm:$0xff]
        %v5321 = vld [vmem:[%s5 + $0x210] sm:$0xff]
        %v5322 = vld [vmem:[%s5 + $0x218] sm:$0xff]
        %v5323 = vld [vmem:[%s5 + $0x220] sm:$0xff]
        %v5324 = vld [vmem:[%s5 + $0x228] sm:$0xff]
        %v5325 = vld [vmem:[%s5 + $0x230] sm:$0xff]
        %v5326 = vld [vmem:[%s5 + $0x238] sm:$0xff]
        %v5327 = vld [vmem:[%s5 + $0x240] sm:$0xff]
        %v5328 = vld [vmem:[%s5 + $0x248] sm:$0xff]
        %v5329 = vld [vmem:[%s5 + $0x250] sm:$0xff]
        %v5330 = vld [vmem:[%s5 + $0x258] sm:$0xff]
        %v5331 = vld [vmem:[%s5 + $0x260] sm:$0xff]
        %v5332 = vld [vmem:[%s5 + $0x268] sm:$0xff]
        %v5333 = vld [vmem:[%s5 + $0x270] sm:$0xff]
        %v5334 = vld [vmem:[%s5 + $0x278] sm:$0xff]
        %v5335 = vld [vmem:[%s5 + $0x280] sm:$0xff]
        %v5336 = vld [vmem:[%s5 + $0x288] sm:$0xff]
        %v5337 = vld [vmem:[%s5 + $0x290] sm:$0xff]
        %v5338 = vld [vmem:[%s5 + $0x298] sm:$0xff]
        %v5339 = vld [vmem:[%s5 + $0x2a0] sm:$0xff]
        %v5340 = vld [vmem:[%s5 + $0x2a8] sm:$0xff]
        %v5341 = vld [vmem:[%s5 + $0x2b0] sm:$0xff]
        %v5342 = vld [vmem:[%s5 + $0x2b8] sm:$0xff]
        %v5343 = vld [vmem:[%s5 + $0x2c0] sm:$0xff]
        %v5344 = vld [vmem:[%s5 + $0x2c8] sm:$0xff]
        %v5345 = vld [vmem:[%s5 + $0x2d0] sm:$0xff]
        %v5346 = vld [vmem:[%s5 + $0x2d8] sm:$0xff]
        %v5347 = vld [vmem:[%s5 + $0x2e0] sm:$0xff]
        %v5348 = vld [vmem:[%s5 + $0x2e8] sm:$0xff]
        %v5349 = vld [vmem:[%s5 + $0x2f0] sm:$0xff]
        %v5350 = vld [vmem:[%s5 + $0x2f8] sm:$0xff]
        %v5351 = vld [vmem:[%s5 + $0x300] sm:$0xff]
        %v5352 = vld [vmem:[%s5 + $0x308] sm:$0xff]
        %v5353 = vld [vmem:[%s5 + $0x310] sm:$0xff]
        %v5354 = vld [vmem:[%s5 + $0x318] sm:$0xff]
        %v5355 = vld [vmem:[%s5 + $0x320] sm:$0xff]
        %v5356 = vld [vmem:[%s5 + $0x328] sm:$0xff]
        %v5357 = vld [vmem:[%s5 + $0x330] sm:$0xff]
        %v5358 = vld [vmem:[%s5 + $0x338] sm:$0xff]
        %v5359 = vld [vmem:[%s5 + $0x340] sm:$0xff]
        %v5360 = vld [vmem:[%s5 + $0x348] sm:$0xff]
        %v5361 = vld [vmem:[%s5 + $0x350] sm:$0xff]
        %v5362 = vld [vmem:[%s5 + $0x358] sm:$0xff]
        %v5363 = vld [vmem:[%s5 + $0x360] sm:$0xff]
        %v5364 = vld [vmem:[%s5 + $0x368] sm:$0xff]
        %v5365 = vld [vmem:[%s5 + $0x370] sm:$0xff]
        %v5366 = vld [vmem:[%s5 + $0x378] sm:$0xff]
        %v5367 = vld [vmem:[%s5 + $0x380] sm:$0xff]
        %v5368 = vld [vmem:[%s5 + $0x388] sm:$0xff]
        %v5369 = vld [vmem:[%s5 + $0x390] sm:$0xff]
        %v5370 = vld [vmem:[%s5 + $0x398] sm:$0xff]
        %v5371 = vld [vmem:[%s5 + $0x3a0] sm:$0xff]
        %v5372 = vld [vmem:[%s5 + $0x3a8] sm:$0xff]
        %v5373 = vld [vmem:[%s5 + $0x3b0] sm:$0xff]
        %v5374 = vld [vmem:[%s5 + $0x3b8] sm:$0xff]
        %v5375 = vld [vmem:[%s5 + $0x3c0] sm:$0xff]
        %v5376 = vld [vmem:[%s5 + $0x3c8] sm:$0xff]
        %v5377 = vld [vmem:[%s5 + $0x3d0] sm:$0xff]
        %v5378 = vld [vmem:[%s5 + $0x3d8] sm:$0xff]
        %v5379 = vld [vmem:[%s5 + $0x3e0] sm:$0xff]
        %v5380 = vld [vmem:[%s5 + $0x3e8] sm:$0xff]
        %v5381 = vld [vmem:[%s5 + $0x3f0] sm:$0xff]
        %v5382 = vld [vmem:[%s5 + $0x3f8] sm:$0xff]
        %v5383 = vld [vmem:[%s5 + $0x400] sm:$0xff]
        %v5384 = vld [vmem:[%s5 + $0x408] sm:$0xff]
        %v5385 = vld [vmem:[%s5 + $0x410] sm:$0xff]
        %v5386 = vld [vmem:[%s5 + $0x418] sm:$0xff]
        %v5387 = vld [vmem:[%s5 + $0x420] sm:$0xff]
        %v5388 = vld [vmem:[%s5 + $0x428] sm:$0xff]
        %v5389 = vld [vmem:[%s5 + $0x430] sm:$0xff]
        %v5390 = vld [vmem:[%s5 + $0x438] sm:$0xff]
        %v5391 = vld [vmem:[%s5 + $0x440] sm:$0xff]
        %v5392 = vld [vmem:[%s5 + $0x448] sm:$0xff]
        %v5393 = vld [vmem:[%s5 + $0x450] sm:$0xff]
        %v5394 = vld [vmem:[%s5 + $0x458] sm:$0xff]
        %v5395 = vld [vmem:[%s5 + $0x460] sm:$0xff]
        %v5396 = vld [vmem:[%s5 + $0x468] sm:$0xff]
        %v5397 = vld [vmem:[%s5 + $0x470] sm:$0xff]
        %v5398 = vld [vmem:[%s5 + $0x478] sm:$0xff]
        %v5399 = vld [vmem:[%s5 + $0x480] sm:$0xff]
        %v5400 = vld [vmem:[%s5 + $0x488] sm:$0xff]
        %v5401 = vld [vmem:[%s5 + $0x490] sm:$0xff]
        %v5402 = vld [vmem:[%s5 + $0x498] sm:$0xff]
        %v5403 = vld [vmem:[%s5 + $0x4a0] sm:$0xff]
        %v5404 = vld [vmem:[%s5 + $0x4a8] sm:$0xff]
        %v5405 = vld [vmem:[%s5 + $0x4b0] sm:$0xff]
        %v5406 = vld [vmem:[%s5 + $0x4b8] sm:$0xff]
        %v5407 = vld [vmem:[%s5 + $0x4c0] sm:$0xff]
        %v5408 = vld [vmem:[%s5 + $0x4c8] sm:$0xff]
        %v5409 = vld [vmem:[%s5 + $0x4d0] sm:$0xff]
        %v5410 = vld [vmem:[%s5 + $0x4d8] sm:$0xff]
        %v5411 = vld [vmem:[%s5 + $0x4e0] sm:$0xff]
        %v5412 = vld [vmem:[%s5 + $0x4e8] sm:$0xff]
        %v5413 = vld [vmem:[%s5 + $0x4f0] sm:$0xff]
        %v5414 = vld [vmem:[%s5 + $0x4f8] sm:$0xff]
        %v5415 = vld [vmem:[%s5 + $0x500] sm:$0xff]
        %v5416 = vld [vmem:[%s5 + $0x508] sm:$0xff]
        %v5417 = vld [vmem:[%s5 + $0x510] sm:$0xff]
        %v5418 = vld [vmem:[%s5 + $0x518] sm:$0xff]
        %v5419 = vld [vmem:[%s5 + $0x520] sm:$0xff]
        %v5420 = vld [vmem:[%s5 + $0x528] sm:$0xff]
        %v5421 = vld [vmem:[%s5 + $0x530] sm:$0xff]
        %v5422 = vld [vmem:[%s5 + $0x538] sm:$0xff]
        %v5423 = vld [vmem:[%s5 + $0x540] sm:$0xff]
        %v5424 = vld [vmem:[%s5 + $0x548] sm:$0xff]
        %v5425 = vld [vmem:[%s5 + $0x550] sm:$0xff]
        %v5426 = vld [vmem:[%s5 + $0x558] sm:$0xff]
        %v5427 = vld [vmem:[%s5 + $0x560] sm:$0xff]
        %v5428 = vld [vmem:[%s5 + $0x568] sm:$0xff]
        %v5429 = vld [vmem:[%s5 + $0x570] sm:$0xff]
        %v5430 = vld [vmem:[%s5 + $0x578] sm:$0xff]
        %v5431 = vld [vmem:[%s5 + $0x580] sm:$0xff]
        %v5432 = vld [vmem:[%s5 + $0x588] sm:$0xff]
        %v5433 = vld [vmem:[%s5 + $0x590] sm:$0xff]
        %v5434 = vld [vmem:[%s5 + $0x598] sm:$0xff]
        %v5435 = vld [vmem:[%s5 + $0x5a0] sm:$0xff]
        %v5436 = vld [vmem:[%s5 + $0x5a8] sm:$0xff]
        %v5437 = vld [vmem:[%s5 + $0x5b0] sm:$0xff]
        %v5438 = vld [vmem:[%s5 + $0x5b8] sm:$0xff]
        %v5439 = vld [vmem:[%s5 + $0x5c0] sm:$0xff]
        %v5440 = vld [vmem:[%s5 + $0x5c8] sm:$0xff]
        %v5441 = vld [vmem:[%s5 + $0x5d0] sm:$0xff]
        %v5442 = vld [vmem:[%s5 + $0x5d8] sm:$0xff]
        %v5443 = vld [vmem:[%s5 + $0x5e0] sm:$0xff]
        %v5444 = vld [vmem:[%s5 + $0x5e8] sm:$0xff]
        %v5445 = vld [vmem:[%s5 + $0x5f0] sm:$0xff]
        %v5446 = vld [vmem:[%s5 + $0x5f8] sm:$0xff]
        %v5447 = vld [vmem:[%s5 + $0x600] sm:$0xff]
        %v5448 = vld [vmem:[%s5 + $0x608] sm:$0xff]
        %v5449 = vld [vmem:[%s5 + $0x610] sm:$0xff]
        %v5450 = vld [vmem:[%s5 + $0x618] sm:$0xff]
        %v5451 = vld [vmem:[%s5 + $0x620] sm:$0xff]
        %v5452 = vld [vmem:[%s5 + $0x628] sm:$0xff]
        %v5453 = vld [vmem:[%s5 + $0x630] sm:$0xff]
        %v5454 = vld [vmem:[%s5 + $0x638] sm:$0xff]
        %v5455 = vld [vmem:[%s5 + $0x640] sm:$0xff]
        %v5456 = vld [vmem:[%s5 + $0x648] sm:$0xff]
        %v5457 = vld [vmem:[%s5 + $0x650] sm:$0xff]
        %v5458 = vld [vmem:[%s5 + $0x658] sm:$0xff]
        %v5459 = vld [vmem:[%s5 + $0x660] sm:$0xff]
        %v5460 = vld [vmem:[%s5 + $0x668] sm:$0xff]
        %v5461 = vld [vmem:[%s5 + $0x670] sm:$0xff]
        %v5462 = vld [vmem:[%s5 + $0x678] sm:$0xff]
        %v5463 = vld [vmem:[%s5 + $0x680] sm:$0xff]
        %v5464 = vld [vmem:[%s5 + $0x688] sm:$0xff]
        %v5465 = vld [vmem:[%s5 + $0x690] sm:$0xff]
        %v5466 = vld [vmem:[%s5 + $0x698] sm:$0xff]
        %v5467 = vld [vmem:[%s5 + $0x6a0] sm:$0xff]
        %v5468 = vld [vmem:[%s5 + $0x6a8] sm:$0xff]
        %v5469 = vld [vmem:[%s5 + $0x6b0] sm:$0xff]
        %v5470 = vld [vmem:[%s5 + $0x6b8] sm:$0xff]
        %v5471 = vld [vmem:[%s5 + $0x6c0] sm:$0xff]
        %v5472 = vld [vmem:[%s5 + $0x6c8] sm:$0xff]
        %v5473 = vld [vmem:[%s5 + $0x6d0] sm:$0xff]
        %v5474 = vld [vmem:[%s5 + $0x6d8] sm:$0xff]
        %v5475 = vld [vmem:[%s5 + $0x6e0] sm:$0xff]
        %v5476 = vld [vmem:[%s5 + $0x6e8] sm:$0xff]
        %v5477 = vld [vmem:[%s5 + $0x6f0] sm:$0xff]
        %v5478 = vld [vmem:[%s5 + $0x6f8] sm:$0xff]
        %v5479 = vld [vmem:[%s5 + $0x700] sm:$0xff]
        %v5480 = vld [vmem:[%s5 + $0x708] sm:$0xff]
        %v5481 = vld [vmem:[%s5 + $0x710] sm:$0xff]
        %v5482 = vld [vmem:[%s5 + $0x718] sm:$0xff]
        %v5483 = vld [vmem:[%s5 + $0x720] sm:$0xff]
        %v5484 = vld [vmem:[%s5 + $0x728] sm:$0xff]
        %v5485 = vld [vmem:[%s5 + $0x730] sm:$0xff]
        %v5486 = vld [vmem:[%s5 + $0x738] sm:$0xff]
        %v5487 = vld [vmem:[%s5 + $0x740] sm:$0xff]
        %v5488 = vld [vmem:[%s5 + $0x748] sm:$0xff]
        %v5489 = vld [vmem:[%s5 + $0x750] sm:$0xff]
        %v5490 = vld [vmem:[%s5 + $0x758] sm:$0xff]
        %v5491 = vld [vmem:[%s5 + $0x760] sm:$0xff]
        %v5492 = vld [vmem:[%s5 + $0x768] sm:$0xff]
        %v5493 = vld [vmem:[%s5 + $0x770] sm:$0xff]
        %v5494 = vld [vmem:[%s5 + $0x778] sm:$0xff]
        %v5495 = vld [vmem:[%s5 + $0x780] sm:$0xff]
        %v5496 = vld [vmem:[%s5 + $0x788] sm:$0xff]
        %v5497 = vld [vmem:[%s5 + $0x790] sm:$0xff]
        %v5498 = vld [vmem:[%s5 + $0x798] sm:$0xff]
        %v5499 = vld [vmem:[%s5 + $0x7a0] sm:$0xff]
        %v5500 = vld [vmem:[%s5 + $0x7a8] sm:$0xff]
        %v5501 = vld [vmem:[%s5 + $0x7b0] sm:$0xff]
        %v5502 = vld [vmem:[%s5 + $0x7b8] sm:$0xff]
        %v5503 = vld [vmem:[%s5 + $0x7c0] sm:$0xff]
        %v5504 = vld [vmem:[%s5 + $0x7c8] sm:$0xff]
        %v5505 = vld [vmem:[%s5 + $0x7d0] sm:$0xff]
        %v5506 = vld [vmem:[%s5 + $0x7d8] sm:$0xff]
        %v5507 = vld [vmem:[%s5 + $0x7e0] sm:$0xff]
        %v5508 = vld [vmem:[%s5 + $0x7e8] sm:$0xff]
        %v5509 = vld [vmem:[%s5 + $0x7f0] sm:$0xff]
        %v5510 = vld [vmem:[%s5 + $0x7f8] sm:$0xff]
        %v5511 = vld [vmem:[%s5 + $0x800] sm:$0xff]
        %v5512 = vld [vmem:[%s5 + $0x808] sm:$0xff]
        %v5513 = vld [vmem:[%s5 + $0x810] sm:$0xff]
        %v5514 = vld [vmem:[%s5 + $0x818] sm:$0xff]
        %v5515 = vld [vmem:[%s5 + $0x820] sm:$0xff]
        %v5516 = vld [vmem:[%s5 + $0x828] sm:$0xff]
        %v5517 = vld [vmem:[%s5 + $0x830] sm:$0xff]
        %v5518 = vld [vmem:[%s5 + $0x838] sm:$0xff]
        %v5519 = vld [vmem:[%s5 + $0x840] sm:$0xff]
        %v5520 = vld [vmem:[%s5 + $0x848] sm:$0xff]
        %v5521 = vld [vmem:[%s5 + $0x850] sm:$0xff]
        %v5522 = vld [vmem:[%s5 + $0x858] sm:$0xff]
        %v5523 = vld [vmem:[%s5 + $0x860] sm:$0xff]
        %v5524 = vld [vmem:[%s5 + $0x868] sm:$0xff]
        %v5525 = vld [vmem:[%s5 + $0x870] sm:$0xff]
        %v5526 = vld [vmem:[%s5 + $0x878] sm:$0xff]
        %v5527 = vld [vmem:[%s5 + $0x880] sm:$0xff]
        %v5528 = vld [vmem:[%s5 + $0x888] sm:$0xff]
        %v5529 = vld [vmem:[%s5 + $0x890] sm:$0xff]
        %v5530 = vld [vmem:[%s5 + $0x898] sm:$0xff]
        %v5531 = vld [vmem:[%s5 + $0x8a0] sm:$0xff]
        %v5532 = vld [vmem:[%s5 + $0x8a8] sm:$0xff]
        %v5533 = vld [vmem:[%s5 + $0x8b0] sm:$0xff]
        %v5534 = vld [vmem:[%s5 + $0x8b8] sm:$0xff]
        %v5535 = vld [vmem:[%s5 + $0x8c0] sm:$0xff]
        %v5536 = vld [vmem:[%s5 + $0x8c8] sm:$0xff]
        %v5537 = vld [vmem:[%s5 + $0x8d0] sm:$0xff]
        %v5538 = vld [vmem:[%s5 + $0x8d8] sm:$0xff]
        %v5539 = vld [vmem:[%s5 + $0x8e0] sm:$0xff]
        %v5540 = vld [vmem:[%s5 + $0x8e8] sm:$0xff]
        %v5541 = vld [vmem:[%s5 + $0x8f0] sm:$0xff]
        %v5542 = vld [vmem:[%s5 + $0x8f8] sm:$0xff]
        %v5543 = vld [vmem:[%s6] sm:$0xf]
        %v5545 = vlaneseq
        %v5546 = vshrl.u32 %v5545, 7
        %v5547 = vsub.s32 0, %v5546
        %v5548 = vrot.slane %v5543, %v5547
        %v5549 = vlaneseq
        %v5550 = vshrl.u32 %v5549, 7
        %v5551 = vsub.s32 1, %v5550
        %v5552 = vrot.slane %v5543, %v5551
        %v5553 = vlaneseq
        %v5554 = vshrl.u32 %v5553, 7
        %v5555 = vsub.s32 2, %v5554
        %v5556 = vrot.slane %v5543, %v5555
        %v5557 = vlaneseq
        %v5558 = vshrl.u32 %v5557, 7
        %v5559 = vsub.s32 3, %v5558
        %v5560 = vrot.slane %v5543, %v5559
        %v5565 = vcombine.low %v5006, %v5047
        %v5566 = vcombine.high %v5006, %v5047
        %v5567 = vcombine.low %v5080, %v5113
        %v5568 = vcombine.high %v5080, %v5113
        %v5570 = vunpack.c.l.s4 1983009808
        %v5571 = vunpack.c.0.s8 %v5570
        %v5572 = vlaneseq
        %v5573 = vshrl.u32 %v5572, 7
        %v5574 = vsub.s32 %v5571, %v5573
        %v5575 = vrot.slane %v5565, %v5574
        %v5577 = vunpack.c.l.s4 1983009808
        %v5578 = vunpack.c.0.s8 %v5577
        %v5579 = vlaneseq
        %v5580 = vshrl.u32 %v5579, 7
        %v5581 = vsub.s32 %v5578, %v5580
        %v5582 = vrot.slane %v5566, %v5581
        %v5584 = vunpack.c.l.s4 1983009808
        %v5585 = vunpack.c.0.s8 %v5584
        %v5586 = vlaneseq
        %v5587 = vshrl.u32 %v5586, 7
        %v5588 = vsub.s32 %v5585, %v5587
        %v5589 = vrot.slane %v5567, %v5588
        %v5591 = vunpack.c.l.s4 1983009808
        %v5592 = vunpack.c.0.s8 %v5591
        %v5593 = vlaneseq
        %v5594 = vshrl.u32 %v5593, 7
        %v5595 = vsub.s32 %v5592, %v5594
        %v5596 = vrot.slane %v5568, %v5595
        %v5597 = vcombine.low %v5575, %v5589
        %v5598 = vcombine.high %v5575, %v5589
        %v5599 = vcombine.low %v5582, %v5596
        %v5600 = vcombine.high %v5582, %v5596
        %v5601 = vcombine.low %v5023, %v5064
        %v5602 = vcombine.high %v5023, %v5064
        %v5603 = vcombine.low %v5097, %v5122
        %v5604 = vcombine.high %v5097, %v5122
        %v5606 = vunpack.c.l.s4 1983009808
        %v5607 = vunpack.c.0.s8 %v5606
        %v5608 = vlaneseq
        %v5609 = vshrl.u32 %v5608, 7
        %v5610 = vsub.s32 %v5607, %v5609
        %v5611 = vrot.slane %v5601, %v5610
        %v5613 = vunpack.c.l.s4 1983009808
        %v5614 = vunpack.c.0.s8 %v5613
        %v5615 = vlaneseq
        %v5616 = vshrl.u32 %v5615, 7
        %v5617 = vsub.s32 %v5614, %v5616
        %v5618 = vrot.slane %v5602, %v5617
        %v5620 = vunpack.c.l.s4 1983009808
        %v5621 = vunpack.c.0.s8 %v5620
        %v5622 = vlaneseq
        %v5623 = vshrl.u32 %v5622, 7
        %v5624 = vsub.s32 %v5621, %v5623
        %v5625 = vrot.slane %v5603, %v5624
        %v5627 = vunpack.c.l.s4 1983009808
        %v5628 = vunpack.c.0.s8 %v5627
        %v5629 = vlaneseq
        %v5630 = vshrl.u32 %v5629, 7
        %v5631 = vsub.s32 %v5628, %v5630
        %v5632 = vrot.slane %v5604, %v5631
        %v5633 = vcombine.low %v5611, %v5625
        %v5634 = vcombine.high %v5611, %v5625
        %v5635 = vcombine.low %v5618, %v5632
        %v5636 = vcombine.high %v5618, %v5632
        %v5637 = vcombine.low %v5030, %v5071
        %v5638 = vcombine.low %v5104, %v5129
        %v5640 = vunpack.c.l.s4 1983009808
        %v5641 = vunpack.c.0.s8 %v5640
        %v5642 = vlaneseq
        %v5643 = vshrl.u32 %v5642, 7
        %v5644 = vsub.s32 %v5641, %v5643
        %v5645 = vrot.slane %v5637, %v5644
        %v5647 = vunpack.c.l.s4 1983009808
        %v5648 = vunpack.c.0.s8 %v5647
        %v5649 = vlaneseq
        %v5650 = vshrl.u32 %v5649, 7
        %v5651 = vsub.s32 %v5648, %v5650
        %v5652 = vrot.slane %v5638, %v5651
        %v5653 = vcombine.low %v5645, %v5652
        %v5654 = vcombine.low %v5138, %v5179
        %v5655 = vcombine.high %v5138, %v5179
        %v5656 = vcombine.low %v5212, %v5245
        %v5657 = vcombine.high %v5212, %v5245
        %v5659 = vunpack.c.l.s4 1983009808
        %v5660 = vunpack.c.0.s8 %v5659
        %v5661 = vlaneseq
        %v5662 = vshrl.u32 %v5661, 7
        %v5663 = vsub.s32 %v5660, %v5662
        %v5664 = vrot.slane %v5654, %v5663
        %v5666 = vunpack.c.l.s4 1983009808
        %v5667 = vunpack.c.0.s8 %v5666
        %v5668 = vlaneseq
        %v5669 = vshrl.u32 %v5668, 7
        %v5670 = vsub.s32 %v5667, %v5669
        %v5671 = vrot.slane %v5655, %v5670
        %v5673 = vunpack.c.l.s4 1983009808
        %v5674 = vunpack.c.0.s8 %v5673
        %v5675 = vlaneseq
        %v5676 = vshrl.u32 %v5675, 7
        %v5677 = vsub.s32 %v5674, %v5676
        %v5678 = vrot.slane %v5656, %v5677
        %v5680 = vunpack.c.l.s4 1983009808
        %v5681 = vunpack.c.0.s8 %v5680
        %v5682 = vlaneseq
        %v5683 = vshrl.u32 %v5682, 7
        %v5684 = vsub.s32 %v5681, %v5683
        %v5685 = vrot.slane %v5657, %v5684
        %v5686 = vcombine.low %v5664, %v5678
        %v5687 = vcombine.high %v5664, %v5678
        %v5688 = vcombine.low %v5671, %v5685
        %v5689 = vcombine.high %v5671, %v5685
        %v5690 = vcombine.low %v5155, %v5196
        %v5691 = vcombine.high %v5155, %v5196
        %v5692 = vcombine.low %v5229, %v5254
        %v5693 = vcombine.high %v5229, %v5254
        %v5695 = vunpack.c.l.s4 1983009808
        %v5696 = vunpack.c.0.s8 %v5695
        %v5697 = vlaneseq
        %v5698 = vshrl.u32 %v5697, 7
        %v5699 = vsub.s32 %v5696, %v5698
        %v5700 = vrot.slane %v5690, %v5699
        %v5702 = vunpack.c.l.s4 1983009808
        %v5703 = vunpack.c.0.s8 %v5702
        %v5704 = vlaneseq
        %v5705 = vshrl.u32 %v5704, 7
        %v5706 = vsub.s32 %v5703, %v5705
        %v5707 = vrot.slane %v5691, %v5706
        %v5709 = vunpack.c.l.s4 1983009808
        %v5710 = vunpack.c.0.s8 %v5709
        %v5711 = vlaneseq
        %v5712 = vshrl.u32 %v5711, 7
        %v5713 = vsub.s32 %v5710, %v5712
        %v5714 = vrot.slane %v5692, %v5713
        %v5716 = vunpack.c.l.s4 1983009808
        %v5717 = vunpack.c.0.s8 %v5716
        %v5718 = vlaneseq
        %v5719 = vshrl.u32 %v5718, 7
        %v5720 = vsub.s32 %v5717, %v5719
        %v5721 = vrot.slane %v5693, %v5720
        %v5722 = vcombine.low %v5700, %v5714
        %v5723 = vcombine.high %v5700, %v5714
        %v5724 = vcombine.low %v5707, %v5721
        %v5725 = vcombine.high %v5707, %v5721
        %v5726 = vcombine.low %v5162, %v5203
        %v5727 = vcombine.low %v5236, %v5129
        %v5729 = vunpack.c.l.s4 1983009808
        %v5730 = vunpack.c.0.s8 %v5729
        %v5731 = vlaneseq
        %v5732 = vshrl.u32 %v5731, 7
        %v5733 = vsub.s32 %v5730, %v5732
        %v5734 = vrot.slane %v5726, %v5733
        %v5736 = vunpack.c.l.s4 1983009808
        %v5737 = vunpack.c.0.s8 %v5736
        %v5738 = vlaneseq
        %v5739 = vshrl.u32 %v5738, 7
        %v5740 = vsub.s32 %v5737, %v5739
        %v5741 = vrot.slane %v5727, %v5740
        %v5742 = vcombine.low %v5734, %v5741
        %v6049 = vunpack.c.l.b16 %v5255
        %v6050 = vunpack.c.h.b16 %v5255
        %v6051 = vunpack.c.l.b16 %v5256
        %v6052 = vunpack.c.h.b16 %v5256
        %v6053 = vunpack.c.l.b16 %v5257
        %v6054 = vunpack.c.h.b16 %v5257
        %v6055 = vunpack.c.l.b16 %v5258
        %v6056 = vunpack.c.h.b16 %v5258
        %v6057 = vunpack.c.l.b16 %v5259
        %v6058 = vunpack.c.h.b16 %v5259
        %v6059 = vunpack.c.l.b16 %v5260
        %v6060 = vunpack.c.h.b16 %v5260
        %v6061 = vunpack.c.l.b16 %v5261
        %v6062 = vunpack.c.h.b16 %v5261
        %v6063 = vunpack.c.l.b16 %v5262
        %v6064 = vunpack.c.h.b16 %v5262
        %v6065 = vunpack.c.l.b16 %v5263
        %v6066 = vunpack.c.h.b16 %v5263
        %v6067 = vunpack.c.l.b16 %v5264
        %v6068 = vunpack.c.h.b16 %v5264
        %v6069 = vunpack.c.l.b16 %v5265
        %v6070 = vunpack.c.h.b16 %v5265
        %v6071 = vunpack.c.l.b16 %v5266
        %v6072 = vunpack.c.h.b16 %v5266
        %v6073 = vunpack.c.l.b16 %v5267
        %v6074 = vunpack.c.h.b16 %v5267
        %v6075 = vunpack.c.l.b16 %v5268
        %v6076 = vunpack.c.h.b16 %v5268
        %v6077 = vunpack.c.l.b16 %v5269
        %v6078 = vunpack.c.h.b16 %v5269
        %v6079 = vunpack.c.l.b16 %v5270
        %v6080 = vunpack.c.h.b16 %v5270
        %v6081 = vunpack.c.l.b16 %v5271
        %v6082 = vunpack.c.h.b16 %v5271
        %v6083 = vunpack.c.l.b16 %v5272
        %v6084 = vunpack.c.h.b16 %v5272
        %v6085 = vunpack.c.l.b16 %v5273
        %v6086 = vunpack.c.h.b16 %v5273
        %v6087 = vunpack.c.l.b16 %v5274
        %v6088 = vunpack.c.h.b16 %v5274
        %v6089 = vunpack.c.l.b16 %v5275
        %v6090 = vunpack.c.h.b16 %v5275
        %v6091 = vunpack.c.l.b16 %v5276
        %v6092 = vunpack.c.h.b16 %v5276
        %v6093 = vunpack.c.l.b16 %v5277
        %v6094 = vunpack.c.h.b16 %v5277
        %v6095 = vunpack.c.l.b16 %v5278
        %v6096 = vunpack.c.h.b16 %v5278
        %v6097 = vunpack.c.l.b16 %v5279
        %v6098 = vunpack.c.h.b16 %v5279
        %v6099 = vunpack.c.l.b16 %v5280
        %v6100 = vunpack.c.h.b16 %v5280
        %v6101 = vunpack.c.l.b16 %v5281
        %v6102 = vunpack.c.h.b16 %v5281
        %v6103 = vunpack.c.l.b16 %v5282
        %v6104 = vunpack.c.h.b16 %v5282
        %v6105 = vunpack.c.l.b16 %v5283
        %v6106 = vunpack.c.h.b16 %v5283
        %v6107 = vunpack.c.l.b16 %v5284
        %v6108 = vunpack.c.h.b16 %v5284
        %v6109 = vunpack.c.l.b16 %v5285
        %v6110 = vunpack.c.h.b16 %v5285
        %v6111 = vunpack.c.l.b16 %v5286
        %v6112 = vunpack.c.h.b16 %v5286
        %v6113 = vunpack.c.l.b16 %v5287
        %v6114 = vunpack.c.h.b16 %v5287
        %v6115 = vunpack.c.l.b16 %v5288
        %v6116 = vunpack.c.h.b16 %v5288
        %v6117 = vunpack.c.l.b16 %v5289
        %v6118 = vunpack.c.h.b16 %v5289
        %v6119 = vunpack.c.l.b16 %v5290
        %v6120 = vunpack.c.h.b16 %v5290
        %v6121 = vunpack.c.l.b16 %v5291
        %v6122 = vunpack.c.h.b16 %v5291
        %v6123 = vunpack.c.l.b16 %v5292
        %v6124 = vunpack.c.h.b16 %v5292
        %v6125 = vunpack.c.l.b16 %v5293
        %v6126 = vunpack.c.h.b16 %v5293
        %v6127 = vunpack.c.l.b16 %v5294
        %v6128 = vunpack.c.h.b16 %v5294
        %v6129 = vunpack.c.l.b16 %v5295
        %v6130 = vunpack.c.h.b16 %v5295
        %v6131 = vunpack.c.l.b16 %v5296
        %v6132 = vunpack.c.h.b16 %v5296
        %v6133 = vunpack.c.l.b16 %v5297
        %v6134 = vunpack.c.h.b16 %v5297
        %v6135 = vunpack.c.l.b16 %v5298
        %v6136 = vunpack.c.h.b16 %v5298
        %v6137 = vunpack.c.l.b16 %v5299
        %v6138 = vunpack.c.h.b16 %v5299
        %v6139 = vunpack.c.l.b16 %v5300
        %v6140 = vunpack.c.h.b16 %v5300
        %v6141 = vunpack.c.l.b16 %v5301
        %v6142 = vunpack.c.h.b16 %v5301
        %v6143 = vunpack.c.l.b16 %v5302
        %v6144 = vunpack.c.h.b16 %v5302
        %v6145 = vunpack.c.l.b16 %v5303
        %v6146 = vunpack.c.h.b16 %v5303
        %v6147 = vunpack.c.l.b16 %v5304
        %v6148 = vunpack.c.h.b16 %v5304
        %v6149 = vunpack.c.l.b16 %v5305
        %v6150 = vunpack.c.h.b16 %v5305
        %v6151 = vunpack.c.l.b16 %v5306
        %v6152 = vunpack.c.h.b16 %v5306
        %v6153 = vunpack.c.l.b16 %v5307
        %v6154 = vunpack.c.h.b16 %v5307
        %v6155 = vunpack.c.l.b16 %v5308
        %v6156 = vunpack.c.h.b16 %v5308
        %v6157 = vunpack.c.l.b16 %v5309
        %v6158 = vunpack.c.h.b16 %v5309
        %v6159 = vunpack.c.l.b16 %v5310
        %v6160 = vunpack.c.h.b16 %v5310
        %v6161 = vunpack.c.l.b16 %v5311
        %v6162 = vunpack.c.h.b16 %v5311
        %v6163 = vunpack.c.l.b16 %v5312
        %v6164 = vunpack.c.h.b16 %v5312
        %v6165 = vunpack.c.l.b16 %v5313
        %v6166 = vunpack.c.h.b16 %v5313
        %v6167 = vunpack.c.l.b16 %v5314
        %v6168 = vunpack.c.h.b16 %v5314
        %v6169 = vunpack.c.l.b16 %v5315
        %v6170 = vunpack.c.h.b16 %v5315
        %v6171 = vunpack.c.l.b16 %v5316
        %v6172 = vunpack.c.h.b16 %v5316
        %v6173 = vunpack.c.l.b16 %v5317
        %v6174 = vunpack.c.h.b16 %v5317
        %v6175 = vunpack.c.l.b16 %v5318
        %v6176 = vunpack.c.h.b16 %v5318
        %v6177 = vunpack.c.l.b16 %v5319
        %v6178 = vunpack.c.h.b16 %v5319
        %v6179 = vunpack.c.l.b16 %v5320
        %v6180 = vunpack.c.h.b16 %v5320
        %v6181 = vunpack.c.l.b16 %v5321
        %v6182 = vunpack.c.h.b16 %v5321
        %v6183 = vunpack.c.l.b16 %v5322
        %v6184 = vunpack.c.h.b16 %v5322
        %v6185 = vunpack.c.l.b16 %v5323
        %v6186 = vunpack.c.h.b16 %v5323
        %v6187 = vunpack.c.l.b16 %v5324
        %v6188 = vunpack.c.h.b16 %v5324
        %v6189 = vunpack.c.l.b16 %v5325
        %v6190 = vunpack.c.h.b16 %v5325
        %v6191 = vunpack.c.l.b16 %v5326
        %v6192 = vunpack.c.h.b16 %v5326
        %v6193 = vunpack.c.l.b16 %v5327
        %v6194 = vunpack.c.h.b16 %v5327
        %v6195 = vunpack.c.l.b16 %v5328
        %v6196 = vunpack.c.h.b16 %v5328
        %v6197 = vunpack.c.l.b16 %v5329
        %v6198 = vunpack.c.h.b16 %v5329
        %v6199 = vunpack.c.l.b16 %v5330
        %v6200 = vunpack.c.h.b16 %v5330
        %v6201 = vunpack.c.l.b16 %v5331
        %v6202 = vunpack.c.h.b16 %v5331
        %v6203 = vunpack.c.l.b16 %v5332
        %v6204 = vunpack.c.h.b16 %v5332
        %v6205 = vunpack.c.l.b16 %v5333
        %v6206 = vunpack.c.h.b16 %v5333
        %v6207 = vunpack.c.l.b16 %v5334
        %v6208 = vunpack.c.h.b16 %v5334
        %v6209 = vunpack.c.l.b16 %v5335
        %v6210 = vunpack.c.h.b16 %v5335
        %v6211 = vunpack.c.l.b16 %v5336
        %v6212 = vunpack.c.h.b16 %v5336
        %v6213 = vunpack.c.l.b16 %v5337
        %v6214 = vunpack.c.h.b16 %v5337
        %v6215 = vunpack.c.l.b16 %v5338
        %v6216 = vunpack.c.h.b16 %v5338
        %v6217 = vunpack.c.l.b16 %v5339
        %v6218 = vunpack.c.h.b16 %v5339
        %v6219 = vunpack.c.l.b16 %v5340
        %v6220 = vunpack.c.h.b16 %v5340
        %v6221 = vunpack.c.l.b16 %v5341
        %v6222 = vunpack.c.h.b16 %v5341
        %v6223 = vunpack.c.l.b16 %v5342
        %v6224 = vunpack.c.h.b16 %v5342
        %v6225 = vunpack.c.l.b16 %v5343
        %v6226 = vunpack.c.h.b16 %v5343
        %v6227 = vunpack.c.l.b16 %v5344
        %v6228 = vunpack.c.h.b16 %v5344
        %v6229 = vunpack.c.l.b16 %v5345
        %v6230 = vunpack.c.h.b16 %v5345
        %v6231 = vunpack.c.l.b16 %v5346
        %v6232 = vunpack.c.h.b16 %v5346
        %v6233 = vunpack.c.l.b16 %v5347
        %v6234 = vunpack.c.h.b16 %v5347
        %v6235 = vunpack.c.l.b16 %v5348
        %v6236 = vunpack.c.h.b16 %v5348
        %v6237 = vunpack.c.l.b16 %v5349
        %v6238 = vunpack.c.h.b16 %v5349
        %v6239 = vunpack.c.l.b16 %v5350
        %v6240 = vunpack.c.h.b16 %v5350
        %v6241 = vunpack.c.l.b16 %v5351
        %v6242 = vunpack.c.h.b16 %v5351
        %v6243 = vunpack.c.l.b16 %v5352
        %v6244 = vunpack.c.h.b16 %v5352
        %v6245 = vunpack.c.l.b16 %v5353
        %v6246 = vunpack.c.h.b16 %v5353
        %v6247 = vunpack.c.l.b16 %v5354
        %v6248 = vunpack.c.h.b16 %v5354
        %v6249 = vunpack.c.l.b16 %v5355
        %v6250 = vunpack.c.h.b16 %v5355
        %v6251 = vunpack.c.l.b16 %v5356
        %v6252 = vunpack.c.h.b16 %v5356
        %v6253 = vunpack.c.l.b16 %v5357
        %v6254 = vunpack.c.h.b16 %v5357
        %v6255 = vunpack.c.l.b16 %v5358
        %v6256 = vunpack.c.h.b16 %v5358
        %v6257 = vunpack.c.l.b16 %v5359
        %v6258 = vunpack.c.h.b16 %v5359
        %v6259 = vunpack.c.l.b16 %v5360
        %v6260 = vunpack.c.h.b16 %v5360
        %v6261 = vunpack.c.l.b16 %v5361
        %v6262 = vunpack.c.h.b16 %v5361
        %v6263 = vunpack.c.l.b16 %v5362
        %v6264 = vunpack.c.h.b16 %v5362
        %v6265 = vunpack.c.l.b16 %v5363
        %v6266 = vunpack.c.h.b16 %v5363
        %v6267 = vunpack.c.l.b16 %v5364
        %v6268 = vunpack.c.h.b16 %v5364
        %v6269 = vunpack.c.l.b16 %v5365
        %v6270 = vunpack.c.h.b16 %v5365
        %v6271 = vunpack.c.l.b16 %v5366
        %v6272 = vunpack.c.h.b16 %v5366
        %v6273 = vunpack.c.l.b16 %v5367
        %v6274 = vunpack.c.h.b16 %v5367
        %v6275 = vunpack.c.l.b16 %v5368
        %v6276 = vunpack.c.h.b16 %v5368
        %v6277 = vunpack.c.l.b16 %v5369
        %v6278 = vunpack.c.h.b16 %v5369
        %v6279 = vunpack.c.l.b16 %v5370
        %v6280 = vunpack.c.h.b16 %v5370
        %v6281 = vunpack.c.l.b16 %v5371
        %v6282 = vunpack.c.h.b16 %v5371
        %v6283 = vunpack.c.l.b16 %v5372
        %v6284 = vunpack.c.h.b16 %v5372
        %v6285 = vunpack.c.l.b16 %v5373
        %v6286 = vunpack.c.h.b16 %v5373
        %v6287 = vunpack.c.l.b16 %v5374
        %v6288 = vunpack.c.h.b16 %v5374
        %v6289 = vunpack.c.l.b16 %v5375
        %v6290 = vunpack.c.h.b16 %v5375
        %v6291 = vunpack.c.l.b16 %v5376
        %v6292 = vunpack.c.h.b16 %v5376
        %v6293 = vunpack.c.l.b16 %v5377
        %v6294 = vunpack.c.h.b16 %v5377
        %v6295 = vunpack.c.l.b16 %v5378
        %v6296 = vunpack.c.h.b16 %v5378
        %v6297 = vunpack.c.l.b16 %v5379
        %v6298 = vunpack.c.h.b16 %v5379
        %v6299 = vunpack.c.l.b16 %v5380
        %v6300 = vunpack.c.h.b16 %v5380
        %v6301 = vunpack.c.l.b16 %v5381
        %v6302 = vunpack.c.h.b16 %v5381
        %v6303 = vunpack.c.l.b16 %v5382
        %v6304 = vunpack.c.h.b16 %v5382
        %v6305 = vunpack.c.l.b16 %v5383
        %v6306 = vunpack.c.h.b16 %v5383
        %v6307 = vunpack.c.l.b16 %v5384
        %v6308 = vunpack.c.h.b16 %v5384
        %v6309 = vunpack.c.l.b16 %v5385
        %v6310 = vunpack.c.h.b16 %v5385
        %v6311 = vunpack.c.l.b16 %v5386
        %v6312 = vunpack.c.h.b16 %v5386
        %v6313 = vunpack.c.l.b16 %v5387
        %v6314 = vunpack.c.h.b16 %v5387
        %v6315 = vunpack.c.l.b16 %v5388
        %v6316 = vunpack.c.h.b16 %v5388
        %v6317 = vunpack.c.l.b16 %v5389
        %v6318 = vunpack.c.h.b16 %v5389
        %v6319 = vunpack.c.l.b16 %v5390
        %v6320 = vunpack.c.h.b16 %v5390
        %v6321 = vunpack.c.l.b16 %v5391
        %v6322 = vunpack.c.h.b16 %v5391
        %v6323 = vunpack.c.l.b16 %v5392
        %v6324 = vunpack.c.h.b16 %v5392
        %v6325 = vunpack.c.l.b16 %v5393
        %v6326 = vunpack.c.h.b16 %v5393
        %v6327 = vunpack.c.l.b16 %v5394
        %v6328 = vunpack.c.h.b16 %v5394
        %v6329 = vunpack.c.l.b16 %v5395
        %v6330 = vunpack.c.h.b16 %v5395
        %v6331 = vunpack.c.l.b16 %v5396
        %v6332 = vunpack.c.h.b16 %v5396
        %v6333 = vunpack.c.l.b16 %v5397
        %v6334 = vunpack.c.h.b16 %v5397
        %v6335 = vunpack.c.l.b16 %v5398
        %v6336 = vunpack.c.h.b16 %v5398
        %v6337 = vunpack.c.l.b16 %v5399
        %v6338 = vunpack.c.h.b16 %v5399
        %v6339 = vunpack.c.l.b16 %v5400
        %v6340 = vunpack.c.h.b16 %v5400
        %v6341 = vunpack.c.l.b16 %v5401
        %v6342 = vunpack.c.h.b16 %v5401
        %v6343 = vunpack.c.l.b16 %v5402
        %v6344 = vunpack.c.h.b16 %v5402
        %v6345 = vunpack.c.l.b16 %v5403
        %v6346 = vunpack.c.h.b16 %v5403
        %v6347 = vunpack.c.l.b16 %v5404
        %v6348 = vunpack.c.h.b16 %v5404
        %v6349 = vunpack.c.l.b16 %v5405
        %v6350 = vunpack.c.h.b16 %v5405
        %v6351 = vunpack.c.l.b16 %v5406
        %v6352 = vunpack.c.h.b16 %v5406
        %v6353 = vunpack.c.l.b16 %v5407
        %v6354 = vunpack.c.h.b16 %v5407
        %v6355 = vunpack.c.l.b16 %v5408
        %v6356 = vunpack.c.h.b16 %v5408
        %v6357 = vunpack.c.l.b16 %v5409
        %v6358 = vunpack.c.h.b16 %v5409
        %v6359 = vunpack.c.l.b16 %v5410
        %v6360 = vunpack.c.h.b16 %v5410
        %v6361 = vunpack.c.l.b16 %v5411
        %v6362 = vunpack.c.h.b16 %v5411
        %v6363 = vunpack.c.l.b16 %v5412
        %v6364 = vunpack.c.h.b16 %v5412
        %v6365 = vunpack.c.l.b16 %v5413
        %v6366 = vunpack.c.h.b16 %v5413
        %v6367 = vunpack.c.l.b16 %v5414
        %v6368 = vunpack.c.h.b16 %v5414
        %v6369 = vunpack.c.l.b16 %v5415
        %v6370 = vunpack.c.h.b16 %v5415
        %v6371 = vunpack.c.l.b16 %v5416
        %v6372 = vunpack.c.h.b16 %v5416
        %v6373 = vunpack.c.l.b16 %v5417
        %v6374 = vunpack.c.h.b16 %v5417
        %v6375 = vunpack.c.l.b16 %v5418
        %v6376 = vunpack.c.h.b16 %v5418
        %v6377 = vunpack.c.l.b16 %v5419
        %v6378 = vunpack.c.h.b16 %v5419
        %v6379 = vunpack.c.l.b16 %v5420
        %v6380 = vunpack.c.h.b16 %v5420
        %v6381 = vunpack.c.l.b16 %v5421
        %v6382 = vunpack.c.h.b16 %v5421
        %v6383 = vunpack.c.l.b16 %v5422
        %v6384 = vunpack.c.h.b16 %v5422
        %v6385 = vunpack.c.l.b16 %v5423
        %v6386 = vunpack.c.h.b16 %v5423
        %v6387 = vunpack.c.l.b16 %v5424
        %v6388 = vunpack.c.h.b16 %v5424
        %v6389 = vunpack.c.l.b16 %v5425
        %v6390 = vunpack.c.h.b16 %v5425
        %v6391 = vunpack.c.l.b16 %v5426
        %v6392 = vunpack.c.h.b16 %v5426
        %v6393 = vunpack.c.l.b16 %v5427
        %v6394 = vunpack.c.h.b16 %v5427
        %v6395 = vunpack.c.l.b16 %v5428
        %v6396 = vunpack.c.h.b16 %v5428
        %v6397 = vunpack.c.l.b16 %v5429
        %v6398 = vunpack.c.h.b16 %v5429
        %v6399 = vunpack.c.l.b16 %v5430
        %v6400 = vunpack.c.h.b16 %v5430
        %v6401 = vunpack.c.l.b16 %v5431
        %v6402 = vunpack.c.h.b16 %v5431
        %v6403 = vunpack.c.l.b16 %v5432
        %v6404 = vunpack.c.h.b16 %v5432
        %v6405 = vunpack.c.l.b16 %v5433
        %v6406 = vunpack.c.h.b16 %v5433
        %v6407 = vunpack.c.l.b16 %v5434
        %v6408 = vunpack.c.h.b16 %v5434
        %v6409 = vunpack.c.l.b16 %v5435
        %v6410 = vunpack.c.h.b16 %v5435
        %v6411 = vunpack.c.l.b16 %v5436
        %v6412 = vunpack.c.h.b16 %v5436
        %v6413 = vunpack.c.l.b16 %v5437
        %v6414 = vunpack.c.h.b16 %v5437
        %v6415 = vunpack.c.l.b16 %v5438
        %v6416 = vunpack.c.h.b16 %v5438
        %v6417 = vunpack.c.l.b16 %v5439
        %v6418 = vunpack.c.h.b16 %v5439
        %v6419 = vunpack.c.l.b16 %v5440
        %v6420 = vunpack.c.h.b16 %v5440
        %v6421 = vunpack.c.l.b16 %v5441
        %v6422 = vunpack.c.h.b16 %v5441
        %v6423 = vunpack.c.l.b16 %v5442
        %v6424 = vunpack.c.h.b16 %v5442
        %v6425 = vunpack.c.l.b16 %v5443
        %v6426 = vunpack.c.h.b16 %v5443
        %v6427 = vunpack.c.l.b16 %v5444
        %v6428 = vunpack.c.h.b16 %v5444
        %v6429 = vunpack.c.l.b16 %v5445
        %v6430 = vunpack.c.h.b16 %v5445
        %v6431 = vunpack.c.l.b16 %v5446
        %v6432 = vunpack.c.h.b16 %v5446
        %v6433 = vunpack.c.l.b16 %v5447
        %v6434 = vunpack.c.h.b16 %v5447
        %v6435 = vunpack.c.l.b16 %v5448
        %v6436 = vunpack.c.h.b16 %v5448
        %v6437 = vunpack.c.l.b16 %v5449
        %v6438 = vunpack.c.h.b16 %v5449
        %v6439 = vunpack.c.l.b16 %v5450
        %v6440 = vunpack.c.h.b16 %v5450
        %v6441 = vunpack.c.l.b16 %v5451
        %v6442 = vunpack.c.h.b16 %v5451
        %v6443 = vunpack.c.l.b16 %v5452
        %v6444 = vunpack.c.h.b16 %v5452
        %v6445 = vunpack.c.l.b16 %v5453
        %v6446 = vunpack.c.h.b16 %v5453
        %v6447 = vunpack.c.l.b16 %v5454
        %v6448 = vunpack.c.h.b16 %v5454
        %v6449 = vunpack.c.l.b16 %v5455
        %v6450 = vunpack.c.h.b16 %v5455
        %v6451 = vunpack.c.l.b16 %v5456
        %v6452 = vunpack.c.h.b16 %v5456
        %v6453 = vunpack.c.l.b16 %v5457
        %v6454 = vunpack.c.h.b16 %v5457
        %v6455 = vunpack.c.l.b16 %v5458
        %v6456 = vunpack.c.h.b16 %v5458
        %v6457 = vunpack.c.l.b16 %v5459
        %v6458 = vunpack.c.h.b16 %v5459
        %v6459 = vunpack.c.l.b16 %v5460
        %v6460 = vunpack.c.h.b16 %v5460
        %v6461 = vunpack.c.l.b16 %v5461
        %v6462 = vunpack.c.h.b16 %v5461
        %v6463 = vunpack.c.l.b16 %v5462
        %v6464 = vunpack.c.h.b16 %v5462
        %v6465 = vunpack.c.l.b16 %v5463
        %v6466 = vunpack.c.h.b16 %v5463
        %v6467 = vunpack.c.l.b16 %v5464
        %v6468 = vunpack.c.h.b16 %v5464
        %v6469 = vunpack.c.l.b16 %v5465
        %v6470 = vunpack.c.h.b16 %v5465
        %v6471 = vunpack.c.l.b16 %v5466
        %v6472 = vunpack.c.h.b16 %v5466
        %v6473 = vunpack.c.l.b16 %v5467
        %v6474 = vunpack.c.h.b16 %v5467
        %v6475 = vunpack.c.l.b16 %v5468
        %v6476 = vunpack.c.h.b16 %v5468
        %v6477 = vunpack.c.l.b16 %v5469
        %v6478 = vunpack.c.h.b16 %v5469
        %v6479 = vunpack.c.l.b16 %v5470
        %v6480 = vunpack.c.h.b16 %v5470
        %v6481 = vunpack.c.l.b16 %v5471
        %v6482 = vunpack.c.h.b16 %v5471
        %v6483 = vunpack.c.l.b16 %v5472
        %v6484 = vunpack.c.h.b16 %v5472
        %v6485 = vunpack.c.l.b16 %v5473
        %v6486 = vunpack.c.h.b16 %v5473
        %v6487 = vunpack.c.l.b16 %v5474
        %v6488 = vunpack.c.h.b16 %v5474
        %v6489 = vunpack.c.l.b16 %v5475
        %v6490 = vunpack.c.h.b16 %v5475
        %v6491 = vunpack.c.l.b16 %v5476
        %v6492 = vunpack.c.h.b16 %v5476
        %v6493 = vunpack.c.l.b16 %v5477
        %v6494 = vunpack.c.h.b16 %v5477
        %v6495 = vunpack.c.l.b16 %v5478
        %v6496 = vunpack.c.h.b16 %v5478
        %v6497 = vunpack.c.l.b16 %v5479
        %v6498 = vunpack.c.h.b16 %v5479
        %v6499 = vunpack.c.l.b16 %v5480
        %v6500 = vunpack.c.h.b16 %v5480
        %v6501 = vunpack.c.l.b16 %v5481
        %v6502 = vunpack.c.h.b16 %v5481
        %v6503 = vunpack.c.l.b16 %v5482
        %v6504 = vunpack.c.h.b16 %v5482
        %v6505 = vunpack.c.l.b16 %v5483
        %v6506 = vunpack.c.h.b16 %v5483
        %v6507 = vunpack.c.l.b16 %v5484
        %v6508 = vunpack.c.h.b16 %v5484
        %v6509 = vunpack.c.l.b16 %v5485
        %v6510 = vunpack.c.h.b16 %v5485
        %v6511 = vunpack.c.l.b16 %v5486
        %v6512 = vunpack.c.h.b16 %v5486
        %v6513 = vunpack.c.l.b16 %v5487
        %v6514 = vunpack.c.h.b16 %v5487
        %v6515 = vunpack.c.l.b16 %v5488
        %v6516 = vunpack.c.h.b16 %v5488
        %v6517 = vunpack.c.l.b16 %v5489
        %v6518 = vunpack.c.h.b16 %v5489
        %v6519 = vunpack.c.l.b16 %v5490
        %v6520 = vunpack.c.h.b16 %v5490
        %v6521 = vunpack.c.l.b16 %v5491
        %v6522 = vunpack.c.h.b16 %v5491
        %v6523 = vunpack.c.l.b16 %v5492
        %v6524 = vunpack.c.h.b16 %v5492
        %v6525 = vunpack.c.l.b16 %v5493
        %v6526 = vunpack.c.h.b16 %v5493
        %v6527 = vunpack.c.l.b16 %v5494
        %v6528 = vunpack.c.h.b16 %v5494
        %v6529 = vunpack.c.l.b16 %v5495
        %v6530 = vunpack.c.h.b16 %v5495
        %v6531 = vunpack.c.l.b16 %v5496
        %v6532 = vunpack.c.h.b16 %v5496
        %v6533 = vunpack.c.l.b16 %v5497
        %v6534 = vunpack.c.h.b16 %v5497
        %v6535 = vunpack.c.l.b16 %v5498
        %v6536 = vunpack.c.h.b16 %v5498
        %v6537 = vunpack.c.l.b16 %v5499
        %v6538 = vunpack.c.h.b16 %v5499
        %v6539 = vunpack.c.l.b16 %v5500
        %v6540 = vunpack.c.h.b16 %v5500
        %v6541 = vunpack.c.l.b16 %v5501
        %v6542 = vunpack.c.h.b16 %v5501
        %v6543 = vunpack.c.l.b16 %v5502
        %v6544 = vunpack.c.h.b16 %v5502
        %v6545 = vunpack.c.l.b16 %v5503
        %v6546 = vunpack.c.h.b16 %v5503
        %v6547 = vunpack.c.l.b16 %v5504
        %v6548 = vunpack.c.h.b16 %v5504
        %v6549 = vunpack.c.l.b16 %v5505
        %v6550 = vunpack.c.h.b16 %v5505
        %v6551 = vunpack.c.l.b16 %v5506
        %v6552 = vunpack.c.h.b16 %v5506
        %v6553 = vunpack.c.l.b16 %v5507
        %v6554 = vunpack.c.h.b16 %v5507
        %v6555 = vunpack.c.l.b16 %v5508
        %v6556 = vunpack.c.h.b16 %v5508
        %v6557 = vunpack.c.l.b16 %v5509
        %v6558 = vunpack.c.h.b16 %v5509
        %v6559 = vunpack.c.l.b16 %v5510
        %v6560 = vunpack.c.h.b16 %v5510
        %v6561 = vunpack.c.l.b16 %v5511
        %v6562 = vunpack.c.h.b16 %v5511
        %v6563 = vunpack.c.l.b16 %v5512
        %v6564 = vunpack.c.h.b16 %v5512
        %v6565 = vunpack.c.l.b16 %v5513
        %v6566 = vunpack.c.h.b16 %v5513
        %v6567 = vunpack.c.l.b16 %v5514
        %v6568 = vunpack.c.h.b16 %v5514
        %v6569 = vunpack.c.l.b16 %v5515
        %v6570 = vunpack.c.h.b16 %v5515
        %v6571 = vunpack.c.l.b16 %v5516
        %v6572 = vunpack.c.h.b16 %v5516
        %v6573 = vunpack.c.l.b16 %v5517
        %v6574 = vunpack.c.h.b16 %v5517
        %v6575 = vunpack.c.l.b16 %v5518
        %v6576 = vunpack.c.h.b16 %v5518
        %v6577 = vunpack.c.l.b16 %v5519
        %v6578 = vunpack.c.h.b16 %v5519
        %v6579 = vunpack.c.l.b16 %v5520
        %v6580 = vunpack.c.h.b16 %v5520
        %v6581 = vunpack.c.l.b16 %v5521
        %v6582 = vunpack.c.h.b16 %v5521
        %v6583 = vunpack.c.l.b16 %v5522
        %v6584 = vunpack.c.h.b16 %v5522
        %v6585 = vunpack.c.l.b16 %v5523
        %v6586 = vunpack.c.h.b16 %v5523
        %v6587 = vunpack.c.l.b16 %v5524
        %v6588 = vunpack.c.h.b16 %v5524
        %v6589 = vunpack.c.l.b16 %v5525
        %v6590 = vunpack.c.h.b16 %v5525
        %v6591 = vunpack.c.l.b16 %v5526
        %v6592 = vunpack.c.h.b16 %v5526
        %v6593 = vunpack.c.l.b16 %v5527
        %v6594 = vunpack.c.h.b16 %v5527
        %v6595 = vunpack.c.l.b16 %v5528
        %v6596 = vunpack.c.h.b16 %v5528
        %v6597 = vunpack.c.l.b16 %v5529
        %v6598 = vunpack.c.h.b16 %v5529
        %v6599 = vunpack.c.l.b16 %v5530
        %v6600 = vunpack.c.h.b16 %v5530
        %v6601 = vunpack.c.l.b16 %v5531
        %v6602 = vunpack.c.h.b16 %v5531
        %v6603 = vunpack.c.l.b16 %v5532
        %v6604 = vunpack.c.h.b16 %v5532
        %v6605 = vunpack.c.l.b16 %v5533
        %v6606 = vunpack.c.h.b16 %v5533
        %v6607 = vunpack.c.l.b16 %v5534
        %v6608 = vunpack.c.h.b16 %v5534
        %v6609 = vunpack.c.l.b16 %v5535
        %v6610 = vunpack.c.h.b16 %v5535
        %v6611 = vunpack.c.l.b16 %v5536
        %v6612 = vunpack.c.h.b16 %v5536
        %v6613 = vunpack.c.l.b16 %v5537
        %v6614 = vunpack.c.h.b16 %v5537
        %v6615 = vunpack.c.l.b16 %v5538
        %v6616 = vunpack.c.h.b16 %v5538
        %v6617 = vunpack.c.l.b16 %v5539
        %v6618 = vunpack.c.h.b16 %v5539
        %v6619 = vunpack.c.l.b16 %v5540
        %v6620 = vunpack.c.h.b16 %v5540
        %v6621 = vunpack.c.l.b16 %v5541
        %v6622 = vunpack.c.h.b16 %v5541
        %v6623 = vunpack.c.l.b16 %v5542
        %v6624 = vunpack.c.h.b16 %v5542
        %v6625 = vpack.c.b16 %v6053, %v6049
        %v6626 = vpack.c.b16 %v6054, %v6050
        %v6627 = vpack.c.b16 %v6055, %v6051
        %v6628 = vpack.c.b16 %v6056, %v6052
        %v6629 = vpack.c.b16 %v6061, %v6057
        %v6630 = vpack.c.b16 %v6062, %v6058
        %v6631 = vpack.c.b16 %v6063, %v6059
        %v6632 = vpack.c.b16 %v6064, %v6060
        %v6633 = vpack.c.b16 %v6069, %v6065
        %v6634 = vpack.c.b16 %v6070, %v6066
        %v6635 = vpack.c.b16 %v6071, %v6067
        %v6636 = vpack.c.b16 %v6072, %v6068
        %v6637 = vpack.c.b16 %v6077, %v6073
        %v6638 = vpack.c.b16 %v6078, %v6074
        %v6639 = vpack.c.b16 %v6079, %v6075
        %v6640 = vpack.c.b16 %v6080, %v6076
        %v6641 = vpack.c.b16 %v6085, %v6081
        %v6642 = vpack.c.b16 %v6086, %v6082
        %v6643 = vpack.c.b16 %v6087, %v6083
        %v6644 = vpack.c.b16 %v6088, %v6084
        %v6645 = vpack.c.b16 %v6093, %v6089
        %v6646 = vpack.c.b16 %v6094, %v6090
        %v6647 = vpack.c.b16 %v6095, %v6091
        %v6648 = vpack.c.b16 %v6096, %v6092
        %v6649 = vpack.c.b16 %v6101, %v6097
        %v6650 = vpack.c.b16 %v6102, %v6098
        %v6651 = vpack.c.b16 %v6103, %v6099
        %v6652 = vpack.c.b16 %v6104, %v6100
        %v6653 = vpack.c.b16 %v6109, %v6105
        %v6654 = vpack.c.b16 %v6110, %v6106
        %v6655 = vpack.c.b16 %v6111, %v6107
        %v6656 = vpack.c.b16 %v6112, %v6108
        %v6657 = vpack.c.b16 %v6117, %v6113
        %v6658 = vpack.c.b16 %v6118, %v6114
        %v6659 = vpack.c.b16 %v6119, %v6115
        %v6660 = vpack.c.b16 %v6120, %v6116
        %v6661 = vpack.c.b16 %v6125, %v6121
        %v6662 = vpack.c.b16 %v6126, %v6122
        %v6663 = vpack.c.b16 %v6127, %v6123
        %v6664 = vpack.c.b16 %v6128, %v6124
        %v6665 = vpack.c.b16 %v6133, %v6129
        %v6666 = vpack.c.b16 %v6134, %v6130
        %v6667 = vpack.c.b16 %v6135, %v6131
        %v6668 = vpack.c.b16 %v6136, %v6132
        %v6669 = vpack.c.b16 %v6141, %v6137
        %v6670 = vpack.c.b16 %v6142, %v6138
        %v6671 = vpack.c.b16 %v6143, %v6139
        %v6672 = vpack.c.b16 %v6144, %v6140
        %v6673 = vpack.c.b16 %v6149, %v6145
        %v6674 = vpack.c.b16 %v6150, %v6146
        %v6675 = vpack.c.b16 %v6151, %v6147
        %v6676 = vpack.c.b16 %v6152, %v6148
        %v6677 = vpack.c.b16 %v6157, %v6153
        %v6678 = vpack.c.b16 %v6158, %v6154
        %v6679 = vpack.c.b16 %v6159, %v6155
        %v6680 = vpack.c.b16 %v6160, %v6156
        %v6681 = vpack.c.b16 %v6165, %v6161
        %v6682 = vpack.c.b16 %v6166, %v6162
        %v6683 = vpack.c.b16 %v6167, %v6163
        %v6684 = vpack.c.b16 %v6168, %v6164
        %v6685 = vpack.c.b16 %v6173, %v6169
        %v6686 = vpack.c.b16 %v6174, %v6170
        %v6687 = vpack.c.b16 %v6175, %v6171
        %v6688 = vpack.c.b16 %v6176, %v6172
        %v6689 = vpack.c.b16 %v6181, %v6177
        %v6690 = vpack.c.b16 %v6182, %v6178
        %v6691 = vpack.c.b16 %v6183, %v6179
        %v6692 = vpack.c.b16 %v6184, %v6180
        %v6693 = vpack.c.b16 %v6189, %v6185
        %v6694 = vpack.c.b16 %v6190, %v6186
        %v6695 = vpack.c.b16 %v6191, %v6187
        %v6696 = vpack.c.b16 %v6192, %v6188
        %v6697 = vpack.c.b16 %v6197, %v6193
        %v6698 = vpack.c.b16 %v6198, %v6194
        %v6699 = vpack.c.b16 %v6199, %v6195
        %v6700 = vpack.c.b16 %v6200, %v6196
        %v6701 = vpack.c.b16 %v6205, %v6201
        %v6702 = vpack.c.b16 %v6206, %v6202
        %v6703 = vpack.c.b16 %v6207, %v6203
        %v6704 = vpack.c.b16 %v6208, %v6204
        %v6705 = vpack.c.b16 %v6213, %v6209
        %v6706 = vpack.c.b16 %v6214, %v6210
        %v6707 = vpack.c.b16 %v6215, %v6211
        %v6708 = vpack.c.b16 %v6216, %v6212
        %v6709 = vpack.c.b16 %v6221, %v6217
        %v6710 = vpack.c.b16 %v6222, %v6218
        %v6711 = vpack.c.b16 %v6223, %v6219
        %v6712 = vpack.c.b16 %v6224, %v6220
        %v6713 = vpack.c.b16 %v6229, %v6225
        %v6714 = vpack.c.b16 %v6230, %v6226
        %v6715 = vpack.c.b16 %v6231, %v6227
        %v6716 = vpack.c.b16 %v6232, %v6228
        %v6717 = vpack.c.b16 %v6237, %v6233
        %v6718 = vpack.c.b16 %v6238, %v6234
        %v6719 = vpack.c.b16 %v6239, %v6235
        %v6720 = vpack.c.b16 %v6240, %v6236
        %v6721 = vpack.c.b16 %v6245, %v6241
        %v6722 = vpack.c.b16 %v6246, %v6242
        %v6723 = vpack.c.b16 %v6247, %v6243
        %v6724 = vpack.c.b16 %v6248, %v6244
        %v6725 = vpack.c.b16 %v6253, %v6249
        %v6726 = vpack.c.b16 %v6254, %v6250
        %v6727 = vpack.c.b16 %v6255, %v6251
        %v6728 = vpack.c.b16 %v6256, %v6252
        %v6729 = vpack.c.b16 %v6261, %v6257
        %v6730 = vpack.c.b16 %v6262, %v6258
        %v6731 = vpack.c.b16 %v6263, %v6259
        %v6732 = vpack.c.b16 %v6264, %v6260
        %v6733 = vpack.c.b16 %v6269, %v6265
        %v6734 = vpack.c.b16 %v6270, %v6266
        %v6735 = vpack.c.b16 %v6271, %v6267
        %v6736 = vpack.c.b16 %v6272, %v6268
        %v6737 = vpack.c.b16 %v6277, %v6273
        %v6738 = vpack.c.b16 %v6278, %v6274
        %v6739 = vpack.c.b16 %v6279, %v6275
        %v6740 = vpack.c.b16 %v6280, %v6276
        %v6741 = vpack.c.b16 %v6285, %v6281
        %v6742 = vpack.c.b16 %v6286, %v6282
        %v6743 = vpack.c.b16 %v6287, %v6283
        %v6744 = vpack.c.b16 %v6288, %v6284
        %v6745 = vpack.c.b16 %v6293, %v6289
        %v6746 = vpack.c.b16 %v6294, %v6290
        %v6747 = vpack.c.b16 %v6295, %v6291
        %v6748 = vpack.c.b16 %v6296, %v6292
        %v6749 = vpack.c.b16 %v6301, %v6297
        %v6750 = vpack.c.b16 %v6302, %v6298
        %v6751 = vpack.c.b16 %v6303, %v6299
        %v6752 = vpack.c.b16 %v6304, %v6300
        %v6753 = vpack.c.b16 %v6309, %v6305
        %v6754 = vpack.c.b16 %v6310, %v6306
        %v6755 = vpack.c.b16 %v6311, %v6307
        %v6756 = vpack.c.b16 %v6312, %v6308
        %v6757 = vpack.c.b16 %v6317, %v6313
        %v6758 = vpack.c.b16 %v6318, %v6314
        %v6759 = vpack.c.b16 %v6319, %v6315
        %v6760 = vpack.c.b16 %v6320, %v6316
        %v6761 = vpack.c.b16 %v6325, %v6321
        %v6762 = vpack.c.b16 %v6326, %v6322
        %v6763 = vpack.c.b16 %v6327, %v6323
        %v6764 = vpack.c.b16 %v6328, %v6324
        %v6765 = vpack.c.b16 %v6333, %v6329
        %v6766 = vpack.c.b16 %v6334, %v6330
        %v6767 = vpack.c.b16 %v6335, %v6331
        %v6768 = vpack.c.b16 %v6336, %v6332
        %v6769 = vpack.c.b16 %v6341, %v6337
        %v6770 = vpack.c.b16 %v6342, %v6338
        %v6771 = vpack.c.b16 %v6343, %v6339
        %v6772 = vpack.c.b16 %v6344, %v6340
        %v6773 = vpack.c.b16 %v6349, %v6345
        %v6774 = vpack.c.b16 %v6350, %v6346
        %v6775 = vpack.c.b16 %v6351, %v6347
        %v6776 = vpack.c.b16 %v6352, %v6348
        %v6777 = vpack.c.b16 %v6357, %v6353
        %v6778 = vpack.c.b16 %v6358, %v6354
        %v6779 = vpack.c.b16 %v6359, %v6355
        %v6780 = vpack.c.b16 %v6360, %v6356
        %v6781 = vpack.c.b16 %v6365, %v6361
        %v6782 = vpack.c.b16 %v6366, %v6362
        %v6783 = vpack.c.b16 %v6367, %v6363
        %v6784 = vpack.c.b16 %v6368, %v6364
        %v6785 = vpack.c.b16 %v6373, %v6369
        %v6786 = vpack.c.b16 %v6374, %v6370
        %v6787 = vpack.c.b16 %v6375, %v6371
        %v6788 = vpack.c.b16 %v6376, %v6372
        %v6789 = vpack.c.b16 %v6381, %v6377
        %v6790 = vpack.c.b16 %v6382, %v6378
        %v6791 = vpack.c.b16 %v6383, %v6379
        %v6792 = vpack.c.b16 %v6384, %v6380
        %v6793 = vpack.c.b16 %v6389, %v6385
        %v6794 = vpack.c.b16 %v6390, %v6386
        %v6795 = vpack.c.b16 %v6391, %v6387
        %v6796 = vpack.c.b16 %v6392, %v6388
        %v6797 = vpack.c.b16 %v6397, %v6393
        %v6798 = vpack.c.b16 %v6398, %v6394
        %v6799 = vpack.c.b16 %v6399, %v6395
        %v6800 = vpack.c.b16 %v6400, %v6396
        %v6801 = vpack.c.b16 %v6405, %v6401
        %v6802 = vpack.c.b16 %v6406, %v6402
        %v6803 = vpack.c.b16 %v6407, %v6403
        %v6804 = vpack.c.b16 %v6408, %v6404
        %v6805 = vpack.c.b16 %v6413, %v6409
        %v6806 = vpack.c.b16 %v6414, %v6410
        %v6807 = vpack.c.b16 %v6415, %v6411
        %v6808 = vpack.c.b16 %v6416, %v6412
        %v6809 = vpack.c.b16 %v6421, %v6417
        %v6810 = vpack.c.b16 %v6422, %v6418
        %v6811 = vpack.c.b16 %v6423, %v6419
        %v6812 = vpack.c.b16 %v6424, %v6420
        %v6813 = vpack.c.b16 %v6429, %v6425
        %v6814 = vpack.c.b16 %v6430, %v6426
        %v6815 = vpack.c.b16 %v6431, %v6427
        %v6816 = vpack.c.b16 %v6432, %v6428
        %v6817 = vpack.c.b16 %v6437, %v6433
        %v6818 = vpack.c.b16 %v6438, %v6434
        %v6819 = vpack.c.b16 %v6439, %v6435
        %v6820 = vpack.c.b16 %v6440, %v6436
        %v6821 = vpack.c.b16 %v6445, %v6441
        %v6822 = vpack.c.b16 %v6446, %v6442
        %v6823 = vpack.c.b16 %v6447, %v6443
        %v6824 = vpack.c.b16 %v6448, %v6444
        %v6825 = vpack.c.b16 %v6453, %v6449
        %v6826 = vpack.c.b16 %v6454, %v6450
        %v6827 = vpack.c.b16 %v6455, %v6451
        %v6828 = vpack.c.b16 %v6456, %v6452
        %v6829 = vpack.c.b16 %v6461, %v6457
        %v6830 = vpack.c.b16 %v6462, %v6458
        %v6831 = vpack.c.b16 %v6463, %v6459
        %v6832 = vpack.c.b16 %v6464, %v6460
        %v6833 = vpack.c.b16 %v6469, %v6465
        %v6834 = vpack.c.b16 %v6470, %v6466
        %v6835 = vpack.c.b16 %v6471, %v6467
        %v6836 = vpack.c.b16 %v6472, %v6468
        %v6837 = vpack.c.b16 %v6477, %v6473
        %v6838 = vpack.c.b16 %v6478, %v6474
        %v6839 = vpack.c.b16 %v6479, %v6475
        %v6840 = vpack.c.b16 %v6480, %v6476
        %v6841 = vpack.c.b16 %v6485, %v6481
        %v6842 = vpack.c.b16 %v6486, %v6482
        %v6843 = vpack.c.b16 %v6487, %v6483
        %v6844 = vpack.c.b16 %v6488, %v6484
        %v6845 = vpack.c.b16 %v6493, %v6489
        %v6846 = vpack.c.b16 %v6494, %v6490
        %v6847 = vpack.c.b16 %v6495, %v6491
        %v6848 = vpack.c.b16 %v6496, %v6492
        %v6849 = vpack.c.b16 %v6501, %v6497
        %v6850 = vpack.c.b16 %v6502, %v6498
        %v6851 = vpack.c.b16 %v6503, %v6499
        %v6852 = vpack.c.b16 %v6504, %v6500
        %v6853 = vpack.c.b16 %v6509, %v6505
        %v6854 = vpack.c.b16 %v6510, %v6506
        %v6855 = vpack.c.b16 %v6511, %v6507
        %v6856 = vpack.c.b16 %v6512, %v6508
        %v6857 = vpack.c.b16 %v6517, %v6513
        %v6858 = vpack.c.b16 %v6518, %v6514
        %v6859 = vpack.c.b16 %v6519, %v6515
        %v6860 = vpack.c.b16 %v6520, %v6516
        %v6861 = vpack.c.b16 %v6525, %v6521
        %v6862 = vpack.c.b16 %v6526, %v6522
        %v6863 = vpack.c.b16 %v6527, %v6523
        %v6864 = vpack.c.b16 %v6528, %v6524
        %v6865 = vpack.c.b16 %v6533, %v6529
        %v6866 = vpack.c.b16 %v6534, %v6530
        %v6867 = vpack.c.b16 %v6535, %v6531
        %v6868 = vpack.c.b16 %v6536, %v6532
        %v6869 = vpack.c.b16 %v6541, %v6537
        %v6870 = vpack.c.b16 %v6542, %v6538
        %v6871 = vpack.c.b16 %v6543, %v6539
        %v6872 = vpack.c.b16 %v6544, %v6540
        %v6873 = vpack.c.b16 %v6549, %v6545
        %v6874 = vpack.c.b16 %v6550, %v6546
        %v6875 = vpack.c.b16 %v6551, %v6547
        %v6876 = vpack.c.b16 %v6552, %v6548
        %v6877 = vpack.c.b16 %v6557, %v6553
        %v6878 = vpack.c.b16 %v6558, %v6554
        %v6879 = vpack.c.b16 %v6559, %v6555
        %v6880 = vpack.c.b16 %v6560, %v6556
        %v6881 = vpack.c.b16 %v6565, %v6561
        %v6882 = vpack.c.b16 %v6566, %v6562
        %v6883 = vpack.c.b16 %v6567, %v6563
        %v6884 = vpack.c.b16 %v6568, %v6564
        %v6885 = vpack.c.b16 %v6573, %v6569
        %v6886 = vpack.c.b16 %v6574, %v6570
        %v6887 = vpack.c.b16 %v6575, %v6571
        %v6888 = vpack.c.b16 %v6576, %v6572
        %v6889 = vpack.c.b16 %v6581, %v6577
        %v6890 = vpack.c.b16 %v6582, %v6578
        %v6891 = vpack.c.b16 %v6583, %v6579
        %v6892 = vpack.c.b16 %v6584, %v6580
        %v6893 = vpack.c.b16 %v6589, %v6585
        %v6894 = vpack.c.b16 %v6590, %v6586
        %v6895 = vpack.c.b16 %v6591, %v6587
        %v6896 = vpack.c.b16 %v6592, %v6588
        %v6897 = vpack.c.b16 %v6597, %v6593
        %v6898 = vpack.c.b16 %v6598, %v6594
        %v6899 = vpack.c.b16 %v6599, %v6595
        %v6900 = vpack.c.b16 %v6600, %v6596
        %v6901 = vpack.c.b16 %v6605, %v6601
        %v6902 = vpack.c.b16 %v6606, %v6602
        %v6903 = vpack.c.b16 %v6607, %v6603
        %v6904 = vpack.c.b16 %v6608, %v6604
        %v6905 = vpack.c.b16 %v6613, %v6609
        %v6906 = vpack.c.b16 %v6614, %v6610
        %v6907 = vpack.c.b16 %v6615, %v6611
        %v6908 = vpack.c.b16 %v6616, %v6612
        %v6909 = vpack.c.b16 %v6621, %v6617
        %v6910 = vpack.c.b16 %v6622, %v6618
        %v6911 = vpack.c.b16 %v6623, %v6619
        %v6912 = vpack.c.b16 %v6624, %v6620
        %7201 = vmatprep.subr.bf16.mxu0 %v6626
        %7202 = vmatpush1.bf16.msra.mxu0 %v6625
        %7203 = vmatprep.subr.bf16.mxu0 %v6630
        %7204 = vmatpush1.bf16.msra.mxu0 %v6629
        %7205 = vmatprep.subr.bf16.mxu0 %v6634
        %7206 = vmatpush1.bf16.msra.mxu0 %v6633
        %7207 = vmatprep.subr.bf16.mxu0 %v6638
        %7208 = vmatpush1.bf16.msra.mxu0 %v6637
        %7209 = vmatprep.subr.bf16.mxu0 %v6642
        %7210 = vmatpush1.bf16.msra.mxu0 %v6641
        %7211 = vmatprep.subr.bf16.mxu0 %v6646
        %7212 = vmatpush1.bf16.msra.mxu0 %v6645
        %7213 = vmatprep.subr.bf16.mxu0 %v6650
        %7214 = vmatpush1.bf16.msra.mxu0 %v6649
        %7215 = vmatprep.subr.bf16.mxu0 %v6654
        %7216 = vmatpush1.bf16.msra.mxu0 %v6653
        %7217 = vmatprep.subr.bf16.mxu0 %v6658
        %7218 = vmatpush1.bf16.msra.mxu0 %v6657
        %7219 = vmatprep.subr.bf16.mxu0 %v6662
        %7220 = vmatpush1.bf16.msra.mxu0 %v6661
        %7221 = vmatprep.subr.bf16.mxu0 %v6666
        %7222 = vmatpush1.bf16.msra.mxu0 %v6665
        %7223 = vmatprep.subr.bf16.mxu0 %v6670
        %7224 = vmatpush1.bf16.msra.mxu0 %v6669
        %7225 = vmatprep.subr.bf16.mxu0 %v6674
        %7226 = vmatpush1.bf16.msra.mxu0 %v6673
        %7227 = vmatprep.subr.bf16.mxu0 %v6678
        %7228 = vmatpush1.bf16.msra.mxu0 %v6677
        %7229 = vmatprep.subr.bf16.mxu0 %v6682
        %7230 = vmatpush1.bf16.msra.mxu0 %v6681
        %7231 = vmatprep.subr.bf16.mxu0 %v6686
        %7232 = vmatpush1.bf16.msra.mxu0 %v6685
        %7233 = vmatprep.mubr.bf16.mxu0 %v5598
        %7234 = vmatmul.mubr.bf16.gmra.mrb[0].mxu0 %v5597
        %v7235 = vpop.f32.mrb[0].mxu0
        %v7236 = vadd.f32 %v5548, %v7235
        %v7237 = vpop.f32.mrb[0].mxu0
        %v7238 = vadd.f32 %v5552, %v7237
        %v7239 = vpop.f32.mrb[0].mxu0
        %v7240 = vadd.f32 %v5548, %v7239
        %v7241 = vpop.f32.mrb[0].mxu0
        %v7242 = vadd.f32 %v5552, %v7241
        %7243 = vmatprep.mubr.bf16.mxu0 %v5687
        %7244 = vmatmul.mubr.bf16.gmra.mrb[0].mxu0 %v5686
        %v7245 = vpop.f32.mrb[0].mxu0
        %v7246 = vadd.f32 %v5548, %v7245
        %v7247 = vpop.f32.mrb[0].mxu0
        %v7248 = vadd.f32 %v5552, %v7247
        %v7249 = vpop.f32.mrb[0].mxu0
        %v7250 = vadd.f32 %v5548, %v7249
        %v7251 = vpop.f32.mrb[0].mxu0
        %v7252 = vadd.f32 %v5552, %v7251
        %7253 = vdwg.mxu0
        %7254 = vmatprep.subr.bf16.mxu0 %v6690
        %7255 = vmatpush1.bf16.msra.mxu0 %v6689
        %7256 = vmatprep.subr.bf16.mxu0 %v6694
        %7257 = vmatpush1.bf16.msra.mxu0 %v6693
        %7258 = vmatprep.subr.bf16.mxu0 %v6698
        %7259 = vmatpush1.bf16.msra.mxu0 %v6697
        %7260 = vmatprep.subr.bf16.mxu0 %v6702
        %7261 = vmatpush1.bf16.msra.mxu0 %v6701
        %7262 = vmatprep.subr.bf16.mxu0 %v6706
        %7263 = vmatpush1.bf16.msra.mxu0 %v6705
        %7264 = vmatprep.subr.bf16.mxu0 %v6710
        %7265 = vmatpush1.bf16.msra.mxu0 %v6709
        %7266 = vmatprep.subr.bf16.mxu0 %v6714
        %7267 = vmatpush1.bf16.msra.mxu0 %v6713
        %7268 = vmatprep.subr.bf16.mxu0 %v6718
        %7269 = vmatpush1.bf16.msra.mxu0 %v6717
        %7270 = vmatprep.subr.bf16.mxu0 %v6722
        %7271 = vmatpush1.bf16.msra.mxu0 %v6721
        %7272 = vmatprep.subr.bf16.mxu0 %v6726
        %7273 = vmatpush1.bf16.msra.mxu0 %v6725
        %7274 = vmatprep.subr.bf16.mxu0 %v6730
        %7275 = vmatpush1.bf16.msra.mxu0 %v6729
        %7276 = vmatprep.subr.bf16.mxu0 %v6734
        %7277 = vmatpush1.bf16.msra.mxu0 %v6733
        %7278 = vmatprep.subr.bf16.mxu0 %v6738
        %7279 = vmatpush1.bf16.msra.mxu0 %v6737
        %7280 = vmatprep.subr.bf16.mxu0 %v6742
        %7281 = vmatpush1.bf16.msra.mxu0 %v6741
        %7282 = vmatprep.subr.bf16.mxu0 %v6746
        %7283 = vmatpush1.bf16.msra.mxu0 %v6745
        %7284 = vmatprep.subr.bf16.mxu0 %v6750
        %7285 = vmatpush1.bf16.msra.mxu0 %v6749
        %7286 = vmatprep.mubr.bf16.mxu0 %v5600
        %7287 = vmatmul.mubr.bf16.gmra.mrb[0].mxu0 %v5599
        %v7288 = vpop.f32.mrb[0].mxu0
        %v7289 = vadd.f32 %v7236, %v7288
        %v7290 = vpop.f32.mrb[0].mxu0
        %v7291 = vadd.f32 %v7238, %v7290
        %v7292 = vpop.f32.mrb[0].mxu0
        %v7293 = vadd.f32 %v7240, %v7292
        %v7294 = vpop.f32.mrb[0].mxu0
        %v7295 = vadd.f32 %v7242, %v7294
        %7296 = vmatprep.mubr.bf16.mxu0 %v5689
        %7297 = vmatmul.mubr.bf16.gmra.mrb[0].mxu0 %v5688
        %v7298 = vpop.f32.mrb[0].mxu0
        %v7299 = vadd.f32 %v7246, %v7298
        %v7300 = vpop.f32.mrb[0].mxu0
        %v7301 = vadd.f32 %v7248, %v7300
        %v7302 = vpop.f32.mrb[0].mxu0
        %v7303 = vadd.f32 %v7250, %v7302
        %v7304 = vpop.f32.mrb[0].mxu0
        %v7305 = vadd.f32 %v7252, %v7304
        %7306 = vdwg.mxu0
        %7307 = vmatprep.subr.bf16.mxu0 %v6754
        %7308 = vmatpush1.bf16.msra.mxu0 %v6753
        %7309 = vmatprep.subr.bf16.mxu0 %v6758
        %7310 = vmatpush1.bf16.msra.mxu0 %v6757
        %7311 = vmatprep.subr.bf16.mxu0 %v6762
        %7312 = vmatpush1.bf16.msra.mxu0 %v6761
        %7313 = vmatprep.subr.bf16.mxu0 %v6766
        %7314 = vmatpush1.bf16.msra.mxu0 %v6765
        %7315 = vmatprep.subr.bf16.mxu0 %v6770
        %7316 = vmatpush1.bf16.msra.mxu0 %v6769
        %7317 = vmatprep.subr.bf16.mxu0 %v6774
        %7318 = vmatpush1.bf16.msra.mxu0 %v6773
        %7319 = vmatprep.subr.bf16.mxu0 %v6778
        %7320 = vmatpush1.bf16.msra.mxu0 %v6777
        %7321 = vmatprep.subr.bf16.mxu0 %v6782
        %7322 = vmatpush1.bf16.msra.mxu0 %v6781
        %7323 = vmatprep.subr.bf16.mxu0 %v6786
        %7324 = vmatpush1.bf16.msra.mxu0 %v6785
        %7325 = vmatprep.subr.bf16.mxu0 %v6790
        %7326 = vmatpush1.bf16.msra.mxu0 %v6789
        %7327 = vmatprep.subr.bf16.mxu0 %v6794
        %7328 = vmatpush1.bf16.msra.mxu0 %v6793
        %7329 = vmatprep.subr.bf16.mxu0 %v6798
        %7330 = vmatpush1.bf16.msra.mxu0 %v6797
        %7331 = vmatprep.subr.bf16.mxu0 %v6802
        %7332 = vmatpush1.bf16.msra.mxu0 %v6801
        %7333 = vmatprep.subr.bf16.mxu0 %v6806
        %7334 = vmatpush1.bf16.msra.mxu0 %v6805
        %7335 = vmatprep.subr.bf16.mxu0 %v6810
        %7336 = vmatpush1.bf16.msra.mxu0 %v6809
        %7337 = vmatprep.subr.bf16.mxu0 %v6814
        %7338 = vmatpush1.bf16.msra.mxu0 %v6813
        %7339 = vmatprep.mubr.bf16.mxu0 %v5634
        %7340 = vmatmul.mubr.bf16.gmra.mrb[0].mxu0 %v5633
        %v7341 = vpop.f32.mrb[0].mxu0
        %v7342 = vadd.f32 %v7289, %v7341
        %v7343 = vpop.f32.mrb[0].mxu0
        %v7344 = vadd.f32 %v7291, %v7343
        %v7345 = vpop.f32.mrb[0].mxu0
        %v7346 = vadd.f32 %v7293, %v7345
        %v7347 = vpop.f32.mrb[0].mxu0
        %v7348 = vadd.f32 %v7295, %v7347
        %7349 = vmatprep.mubr.bf16.mxu0 %v5723
        %7350 = vmatmul.mubr.bf16.gmra.mrb[0].mxu0 %v5722
        %v7351 = vpop.f32.mrb[0].mxu0
        %v7352 = vadd.f32 %v7299, %v7351
        %v7353 = vpop.f32.mrb[0].mxu0
        %v7354 = vadd.f32 %v7301, %v7353
        %v7355 = vpop.f32.mrb[0].mxu0
        %v7356 = vadd.f32 %v7303, %v7355
        %v7357 = vpop.f32.mrb[0].mxu0
        %v7358 = vadd.f32 %v7305, %v7357
        %7359 = vdwg.mxu0
        %7360 = vmatprep.subr.bf16.mxu0 %v6818
        %7361 = vmatpush1.bf16.msra.mxu0 %v6817
        %7362 = vmatprep.subr.bf16.mxu0 %v6822
        %7363 = vmatpush1.bf16.msra.mxu0 %v6821
        %7364 = vmatprep.subr.bf16.mxu0 %v6826
        %7365 = vmatpush1.bf16.msra.mxu0 %v6825
        %7366 = vmatprep.subr.bf16.mxu0 %v6830
        %7367 = vmatpush1.bf16.msra.mxu0 %v6829
        %7368 = vmatprep.subr.bf16.mxu0 %v6834
        %7369 = vmatpush1.bf16.msra.mxu0 %v6833
        %7370 = vmatprep.subr.bf16.mxu0 %v6838
        %7371 = vmatpush1.bf16.msra.mxu0 %v6837
        %7372 = vmatprep.subr.bf16.mxu0 %v6842
        %7373 = vmatpush1.bf16.msra.mxu0 %v6841
        %7374 = vmatprep.subr.bf16.mxu0 %v6846
        %7375 = vmatpush1.bf16.msra.mxu0 %v6845
        %7376 = vmatprep.subr.bf16.mxu0 %v6850
        %7377 = vmatpush1.bf16.msra.mxu0 %v6849
        %7378 = vmatprep.subr.bf16.mxu0 %v6854
        %7379 = vmatpush1.bf16.msra.mxu0 %v6853
        %7380 = vmatprep.subr.bf16.mxu0 %v6858
        %7381 = vmatpush1.bf16.msra.mxu0 %v6857
        %7382 = vmatprep.subr.bf16.mxu0 %v6862
        %7383 = vmatpush1.bf16.msra.mxu0 %v6861
        %7384 = vmatprep.subr.bf16.mxu0 %v6866
        %7385 = vmatpush1.bf16.msra.mxu0 %v6865
        %7386 = vmatprep.subr.bf16.mxu0 %v6870
        %7387 = vmatpush1.bf16.msra.mxu0 %v6869
        %7388 = vmatprep.subr.bf16.mxu0 %v6874
        %7389 = vmatpush1.bf16.msra.mxu0 %v6873
        %7390 = vmatprep.subr.bf16.mxu0 %v6878
        %7391 = vmatpush1.bf16.msra.mxu0 %v6877
        %7392 = vmatprep.mubr.bf16.mxu0 %v5636
        %7393 = vmatmul.mubr.bf16.gmra.mrb[0].mxu0 %v5635
        %v7394 = vpop.f32.mrb[0].mxu0
        %v7395 = vadd.f32 %v7342, %v7394
        %v7396 = vpop.f32.mrb[0].mxu0
        %v7397 = vadd.f32 %v7344, %v7396
        %v7398 = vpop.f32.mrb[0].mxu0
        %v7399 = vadd.f32 %v7346, %v7398
        %v7400 = vpop.f32.mrb[0].mxu0
        %v7401 = vadd.f32 %v7348, %v7400
        %7402 = vmatprep.mubr.bf16.mxu0 %v5725
        %7403 = vmatmul.mubr.bf16.gmra.mrb[0].mxu0 %v5724
        %v7404 = vpop.f32.mrb[0].mxu0
        %v7405 = vadd.f32 %v7352, %v7404
        %v7406 = vpop.f32.mrb[0].mxu0
        %v7407 = vadd.f32 %v7354, %v7406
        %v7408 = vpop.f32.mrb[0].mxu0
        %v7409 = vadd.f32 %v7356, %v7408
        %v7410 = vpop.f32.mrb[0].mxu0
        %v7411 = vadd.f32 %v7358, %v7410
        %7412 = vdwg.mxu0
        %7413 = vmatprep.subr.bf16.mxu0 %v6882
        %7414 = vmatpush1.bf16.msra.mxu0 %v6881
        %7415 = vmatprep.subr.bf16.mxu0 %v6886
        %7416 = vmatpush1.bf16.msra.mxu0 %v6885
        %7417 = vmatprep.subr.bf16.mxu0 %v6890
        %7418 = vmatpush1.bf16.msra.mxu0 %v6889
        %7419 = vmatprep.subr.bf16.mxu0 %v6894
        %7420 = vmatpush1.bf16.msra.mxu0 %v6893
        %7421 = vmatprep.subr.bf16.mxu0 %v6898
        %7422 = vmatpush1.bf16.msra.mxu0 %v6897
        %7423 = vmatprep.subr.bf16.mxu0 %v6902
        %7424 = vmatpush1.bf16.msra.mxu0 %v6901
        %7425 = vmatprep.subr.bf16.mxu0 %v6906
        %7426 = vmatpush1.bf16.msra.mxu0 %v6905
        %7427 = vmatprep.subr.bf16.mxu0 %v6910
        %7428 = vmatpush1.bf16.msra.mxu0 %v6909
        %7429 = vmatprep.subr.bf16.mxu0 0
        %7430 = vmatpush1.bf16.msra.mxu0 0
        %7431 = vmatprep.subr.bf16.mxu0 0
        %7432 = vmatpush1.bf16.msra.mxu0 0
        %7433 = vmatprep.subr.bf16.mxu0 0
        %7434 = vmatpush1.bf16.msra.mxu0 0
        %7435 = vmatprep.subr.bf16.mxu0 0
        %7436 = vmatpush1.bf16.msra.mxu0 0
        %7437 = vmatprep.subr.bf16.mxu0 0
        %7438 = vmatpush1.bf16.msra.mxu0 0
        %7439 = vmatprep.subr.bf16.mxu0 0
        %7440 = vmatpush1.bf16.msra.mxu0 0
        %7441 = vmatprep.subr.bf16.mxu0 0
        %7442 = vmatpush1.bf16.msra.mxu0 0
        %7443 = vmatprep.subr.bf16.mxu0 0
        %7444 = vmatpush1.bf16.msra.mxu0 0
        %7445 = vmatprep.mubr.bf16.mxu0 0
        %7446 = vmatmul.mubr.bf16.gmra.mrb[0].mxu0 %v5653
        %v7447 = vpop.f32.mrb[0].mxu0
        %v7448 = vadd.f32 %v7395, %v7447
        %v7449 = vpop.f32.mrb[0].mxu0
        %v7450 = vadd.f32 %v7397, %v7449
        %v7451 = vpop.f32.mrb[0].mxu0
        %v7452 = vadd.f32 %v7399, %v7451
        %v7453 = vpop.f32.mrb[0].mxu0
        %v7454 = vadd.f32 %v7401, %v7453
        %7455 = vmatprep.mubr.bf16.mxu0 0
        %7456 = vmatmul.mubr.bf16.gmra.mrb[0].mxu0 %v5742
        %v7457 = vpop.f32.mrb[0].mxu0
        %v7458 = vadd.f32 %v7405, %v7457
        %v7459 = vpop.f32.mrb[0].mxu0
        %v7460 = vadd.f32 %v7407, %v7459
        %v7461 = vpop.f32.mrb[0].mxu0
        %v7462 = vadd.f32 %v7409, %v7461
        %v7463 = vpop.f32.mrb[0].mxu0
        %v7464 = vadd.f32 %v7411, %v7463
        %7465 = vdwg.mxu0
        %7466 = vmatprep.subr.bf16.mxu0 %v6628
        %7467 = vmatpush1.bf16.msra.mxu0 %v6627
        %7468 = vmatprep.subr.bf16.mxu0 %v6632
        %7469 = vmatpush1.bf16.msra.mxu0 %v6631
        %7470 = vmatprep.subr.bf16.mxu0 %v6636
        %7471 = vmatpush1.bf16.msra.mxu0 %v6635
        %7472 = vmatprep.subr.bf16.mxu0 %v6640
        %7473 = vmatpush1.bf16.msra.mxu0 %v6639
        %7474 = vmatprep.subr.bf16.mxu0 %v6644
        %7475 = vmatpush1.bf16.msra.mxu0 %v6643
        %7476 = vmatprep.subr.bf16.mxu0 %v6648
        %7477 = vmatpush1.bf16.msra.mxu0 %v6647
        %7478 = vmatprep.subr.bf16.mxu0 %v6652
        %7479 = vmatpush1.bf16.msra.mxu0 %v6651
        %7480 = vmatprep.subr.bf16.mxu0 %v6656
        %7481 = vmatpush1.bf16.msra.mxu0 %v6655
        %7482 = vmatprep.subr.bf16.mxu0 %v6660
        %7483 = vmatpush1.bf16.msra.mxu0 %v6659
        %7484 = vmatprep.subr.bf16.mxu0 %v6664
        %7485 = vmatpush1.bf16.msra.mxu0 %v6663
        %7486 = vmatprep.subr.bf16.mxu0 %v6668
        %7487 = vmatpush1.bf16.msra.mxu0 %v6667
        %7488 = vmatprep.subr.bf16.mxu0 %v6672
        %7489 = vmatpush1.bf16.msra.mxu0 %v6671
        %7490 = vmatprep.subr.bf16.mxu0 %v6676
        %7491 = vmatpush1.bf16.msra.mxu0 %v6675
        %7492 = vmatprep.subr.bf16.mxu0 %v6680
        %7493 = vmatpush1.bf16.msra.mxu0 %v6679
        %7494 = vmatprep.subr.bf16.mxu0 %v6684
        %7495 = vmatpush1.bf16.msra.mxu0 %v6683
        %7496 = vmatprep.subr.bf16.mxu0 %v6688
        %7497 = vmatpush1.bf16.msra.mxu0 %v6687
        %7498 = vmatprep.mubr.bf16.mxu0 %v5598
        %7499 = vmatmul.mubr.bf16.gmra.mrb[0].mxu0 %v5597
        %v7500 = vpop.f32.mrb[0].mxu0
        %v7501 = vadd.f32 %v5556, %v7500
        %v7502 = vpop.f32.mrb[0].mxu0
        %v7503 = vadd.f32 %v5560, %v7502
        %v7504 = vpop.f32.mrb[0].mxu0
        %v7505 = vadd.f32 %v5556, %v7504
        %v7506 = vpop.f32.mrb[0].mxu0
        %v7507 = vadd.f32 %v5560, %v7506
        %7508 = vmatprep.mubr.bf16.mxu0 %v5687
        %7509 = vmatmul.mubr.bf16.gmra.mrb[0].mxu0 %v5686
        %v7510 = vpop.f32.mrb[0].mxu0
        %v7511 = vadd.f32 %v5556, %v7510
        %v7512 = vpop.f32.mrb[0].mxu0
        %v7513 = vadd.f32 %v5560, %v7512
        %v7514 = vpop.f32.mrb[0].mxu0
        %v7515 = vadd.f32 %v5556, %v7514
        %v7516 = vpop.f32.mrb[0].mxu0
        %v7517 = vadd.f32 %v5560, %v7516
        %7518 = vdwg.mxu0
        %7519 = vmatprep.subr.bf16.mxu0 %v6692
        %7520 = vmatpush1.bf16.msra.mxu0 %v6691
        %7521 = vmatprep.subr.bf16.mxu0 %v6696
        %7522 = vmatpush1.bf16.msra.mxu0 %v6695
        %7523 = vmatprep.subr.bf16.mxu0 %v6700
        %7524 = vmatpush1.bf16.msra.mxu0 %v6699
        %7525 = vmatprep.subr.bf16.mxu0 %v6704
        %7526 = vmatpush1.bf16.msra.mxu0 %v6703
        %7527 = vmatprep.subr.bf16.mxu0 %v6708
        %7528 = vmatpush1.bf16.msra.mxu0 %v6707
        %7529 = vmatprep.subr.bf16.mxu0 %v6712
        %7530 = vmatpush1.bf16.msra.mxu0 %v6711
        %7531 = vmatprep.subr.bf16.mxu0 %v6716
        %7532 = vmatpush1.bf16.msra.mxu0 %v6715
        %7533 = vmatprep.subr.bf16.mxu0 %v6720
        %7534 = vmatpush1.bf16.msra.mxu0 %v6719
        %7535 = vmatprep.subr.bf16.mxu0 %v6724
        %7536 = vmatpush1.bf16.msra.mxu0 %v6723
        %7537 = vmatprep.subr.bf16.mxu0 %v6728
        %7538 = vmatpush1.bf16.msra.mxu0 %v6727
        %7539 = vmatprep.subr.bf16.mxu0 %v6732
        %7540 = vmatpush1.bf16.msra.mxu0 %v6731
        %7541 = vmatprep.subr.bf16.mxu0 %v6736
        %7542 = vmatpush1.bf16.msra.mxu0 %v6735
        %7543 = vmatprep.subr.bf16.mxu0 %v6740
        %7544 = vmatpush1.bf16.msra.mxu0 %v6739
        %7545 = vmatprep.subr.bf16.mxu0 %v6744
        %7546 = vmatpush1.bf16.msra.mxu0 %v6743
        %7547 = vmatprep.subr.bf16.mxu0 %v6748
        %7548 = vmatpush1.bf16.msra.mxu0 %v6747
        %7549 = vmatprep.subr.bf16.mxu0 %v6752
        %7550 = vmatpush1.bf16.msra.mxu0 %v6751
        %7551 = vmatprep.mubr.bf16.mxu0 %v5600
        %7552 = vmatmul.mubr.bf16.gmra.mrb[0].mxu0 %v5599
        %v7553 = vpop.f32.mrb[0].mxu0
        %v7554 = vadd.f32 %v7501, %v7553
        %v7555 = vpop.f32.mrb[0].mxu0
        %v7556 = vadd.f32 %v7503, %v7555
        %v7557 = vpop.f32.mrb[0].mxu0
        %v7558 = vadd.f32 %v7505, %v7557
        %v7559 = vpop.f32.mrb[0].mxu0
        %v7560 = vadd.f32 %v7507, %v7559
        %7561 = vmatprep.mubr.bf16.mxu0 %v5689
        %7562 = vmatmul.mubr.bf16.gmra.mrb[0].mxu0 %v5688
        %v7563 = vpop.f32.mrb[0].mxu0
        %v7564 = vadd.f32 %v7511, %v7563
        %v7565 = vpop.f32.mrb[0].mxu0
        %v7566 = vadd.f32 %v7513, %v7565
        %v7567 = vpop.f32.mrb[0].mxu0
        %v7568 = vadd.f32 %v7515, %v7567
        %v7569 = vpop.f32.mrb[0].mxu0
        %v7570 = vadd.f32 %v7517, %v7569
        %7571 = vdwg.mxu0
        %7572 = vmatprep.subr.bf16.mxu0 %v6756
        %7573 = vmatpush1.bf16.msra.mxu0 %v6755
        %7574 = vmatprep.subr.bf16.mxu0 %v6760
        %7575 = vmatpush1.bf16.msra.mxu0 %v6759
        %7576 = vmatprep.subr.bf16.mxu0 %v6764
        %7577 = vmatpush1.bf16.msra.mxu0 %v6763
        %7578 = vmatprep.subr.bf16.mxu0 %v6768
        %7579 = vmatpush1.bf16.msra.mxu0 %v6767
        %7580 = vmatprep.subr.bf16.mxu0 %v6772
        %7581 = vmatpush1.bf16.msra.mxu0 %v6771
        %7582 = vmatprep.subr.bf16.mxu0 %v6776
        %7583 = vmatpush1.bf16.msra.mxu0 %v6775
        %7584 = vmatprep.subr.bf16.mxu0 %v6780
        %7585 = vmatpush1.bf16.msra.mxu0 %v6779
        %7586 = vmatprep.subr.bf16.mxu0 %v6784
        %7587 = vmatpush1.bf16.msra.mxu0 %v6783
        %7588 = vmatprep.subr.bf16.mxu0 %v6788
        %7589 = vmatpush1.bf16.msra.mxu0 %v6787
        %7590 = vmatprep.subr.bf16.mxu0 %v6792
        %7591 = vmatpush1.bf16.msra.mxu0 %v6791
        %7592 = vmatprep.subr.bf16.mxu0 %v6796
        %7593 = vmatpush1.bf16.msra.mxu0 %v6795
        %7594 = vmatprep.subr.bf16.mxu0 %v6800
        %7595 = vmatpush1.bf16.msra.mxu0 %v6799
        %7596 = vmatprep.subr.bf16.mxu0 %v6804
        %7597 = vmatpush1.bf16.msra.mxu0 %v6803
        %7598 = vmatprep.subr.bf16.mxu0 %v6808
        %7599 = vmatpush1.bf16.msra.mxu0 %v6807
        %7600 = vmatprep.subr.bf16.mxu0 %v6812
        %7601 = vmatpush1.bf16.msra.mxu0 %v6811
        %7602 = vmatprep.subr.bf16.mxu0 %v6816
        %7603 = vmatpush1.bf16.msra.mxu0 %v6815
        %7604 = vmatprep.mubr.bf16.mxu0 %v5634
        %7605 = vmatmul.mubr.bf16.gmra.mrb[0].mxu0 %v5633
        %v7606 = vpop.f32.mrb[0].mxu0
        %v7607 = vadd.f32 %v7554, %v7606
        %v7608 = vpop.f32.mrb[0].mxu0
        %v7609 = vadd.f32 %v7556, %v7608
        %v7610 = vpop.f32.mrb[0].mxu0
        %v7611 = vadd.f32 %v7558, %v7610
        %v7612 = vpop.f32.mrb[0].mxu0
        %v7613 = vadd.f32 %v7560, %v7612
        %7614 = vmatprep.mubr.bf16.mxu0 %v5723
        %7615 = vmatmul.mubr.bf16.gmra.mrb[0].mxu0 %v5722
        %v7616 = vpop.f32.mrb[0].mxu0
        %v7617 = vadd.f32 %v7564, %v7616
        %v7618 = vpop.f32.mrb[0].mxu0
        %v7619 = vadd.f32 %v7566, %v7618
        %v7620 = vpop.f32.mrb[0].mxu0
        %v7621 = vadd.f32 %v7568, %v7620
        %v7622 = vpop.f32.mrb[0].mxu0
        %v7623 = vadd.f32 %v7570, %v7622
        %7624 = vdwg.mxu0
        %7625 = vmatprep.subr.bf16.mxu0 %v6820
        %7626 = vmatpush1.bf16.msra.mxu0 %v6819
        %7627 = vmatprep.subr.bf16.mxu0 %v6824
        %7628 = vmatpush1.bf16.msra.mxu0 %v6823
        %7629 = vmatprep.subr.bf16.mxu0 %v6828
        %7630 = vmatpush1.bf16.msra.mxu0 %v6827
        %7631 = vmatprep.subr.bf16.mxu0 %v6832
        %7632 = vmatpush1.bf16.msra.mxu0 %v6831
        %7633 = vmatprep.subr.bf16.mxu0 %v6836
        %7634 = vmatpush1.bf16.msra.mxu0 %v6835
        %7635 = vmatprep.subr.bf16.mxu0 %v6840
        %7636 = vmatpush1.bf16.msra.mxu0 %v6839
        %7637 = vmatprep.subr.bf16.mxu0 %v6844
        %7638 = vmatpush1.bf16.msra.mxu0 %v6843
        %7639 = vmatprep.subr.bf16.mxu0 %v6848
        %7640 = vmatpush1.bf16.msra.mxu0 %v6847
        %7641 = vmatprep.subr.bf16.mxu0 %v6852
        %7642 = vmatpush1.bf16.msra.mxu0 %v6851
        %7643 = vmatprep.subr.bf16.mxu0 %v6856
        %7644 = vmatpush1.bf16.msra.mxu0 %v6855
        %7645 = vmatprep.subr.bf16.mxu0 %v6860
        %7646 = vmatpush1.bf16.msra.mxu0 %v6859
        %7647 = vmatprep.subr.bf16.mxu0 %v6864
        %7648 = vmatpush1.bf16.msra.mxu0 %v6863
        %7649 = vmatprep.subr.bf16.mxu0 %v6868
        %7650 = vmatpush1.bf16.msra.mxu0 %v6867
        %7651 = vmatprep.subr.bf16.mxu0 %v6872
        %7652 = vmatpush1.bf16.msra.mxu0 %v6871
        %7653 = vmatprep.subr.bf16.mxu0 %v6876
        %7654 = vmatpush1.bf16.msra.mxu0 %v6875
        %7655 = vmatprep.subr.bf16.mxu0 %v6880
        %7656 = vmatpush1.bf16.msra.mxu0 %v6879
        %7657 = vmatprep.mubr.bf16.mxu0 %v5636
        %7658 = vmatmul.mubr.bf16.gmra.mrb[0].mxu0 %v5635
        %v7659 = vpop.f32.mrb[0].mxu0
        %v7660 = vadd.f32 %v7607, %v7659
        %v7661 = vpop.f32.mrb[0].mxu0
        %v7662 = vadd.f32 %v7609, %v7661
        %v7663 = vpop.f32.mrb[0].mxu0
        %v7664 = vadd.f32 %v7611, %v7663
        %v7665 = vpop.f32.mrb[0].mxu0
        %v7666 = vadd.f32 %v7613, %v7665
        %7667 = vmatprep.mubr.bf16.mxu0 %v5725
        %7668 = vmatmul.mubr.bf16.gmra.mrb[0].mxu0 %v5724
        %v7669 = vpop.f32.mrb[0].mxu0
        %v7670 = vadd.f32 %v7617, %v7669
        %v7671 = vpop.f32.mrb[0].mxu0
        %v7672 = vadd.f32 %v7619, %v7671
        %v7673 = vpop.f32.mrb[0].mxu0
        %v7674 = vadd.f32 %v7621, %v7673
        %v7675 = vpop.f32.mrb[0].mxu0
        %v7676 = vadd.f32 %v7623, %v7675
        %7677 = vdwg.mxu0
        %7678 = vmatprep.subr.bf16.mxu0 %v6884
        %7679 = vmatpush1.bf16.msra.mxu0 %v6883
        %7680 = vmatprep.subr.bf16.mxu0 %v6888
        %7681 = vmatpush1.bf16.msra.mxu0 %v6887
        %7682 = vmatprep.subr.bf16.mxu0 %v6892
        %7683 = vmatpush1.bf16.msra.mxu0 %v6891
        %7684 = vmatprep.subr.bf16.mxu0 %v6896
        %7685 = vmatpush1.bf16.msra.mxu0 %v6895
        %7686 = vmatprep.subr.bf16.mxu0 %v6900
        %7687 = vmatpush1.bf16.msra.mxu0 %v6899
        %7688 = vmatprep.subr.bf16.mxu0 %v6904
        %7689 = vmatpush1.bf16.msra.mxu0 %v6903
        %7690 = vmatprep.subr.bf16.mxu0 %v6908
        %7691 = vmatpush1.bf16.msra.mxu0 %v6907
        %7692 = vmatprep.subr.bf16.mxu0 %v6912
        %7693 = vmatpush1.bf16.msra.mxu0 %v6911
        %7694 = vmatprep.subr.bf16.mxu0 0
        %7695 = vmatpush1.bf16.msra.mxu0 0
        %7696 = vmatprep.subr.bf16.mxu0 0
        %7697 = vmatpush1.bf16.msra.mxu0 0
        %7698 = vmatprep.subr.bf16.mxu0 0
        %7699 = vmatpush1.bf16.msra.mxu0 0
        %7700 = vmatprep.subr.bf16.mxu0 0
        %7701 = vmatpush1.bf16.msra.mxu0 0
        %7702 = vmatprep.subr.bf16.mxu0 0
        %7703 = vmatpush1.bf16.msra.mxu0 0
        %7704 = vmatprep.subr.bf16.mxu0 0
        %7705 = vmatpush1.bf16.msra.mxu0 0
        %7706 = vmatprep.subr.bf16.mxu0 0
        %7707 = vmatpush1.bf16.msra.mxu0 0
        %7708 = vmatprep.subr.bf16.mxu0 0
        %7709 = vmatpush1.bf16.msra.mxu0 0
        %7710 = vmatprep.mubr.bf16.mxu0 0
        %7711 = vmatmul.mubr.bf16.gmra.mrb[0].mxu0 %v5653
        %v7712 = vpop.f32.mrb[0].mxu0
        %v7713 = vadd.f32 %v7660, %v7712
        %v7714 = vpop.f32.mrb[0].mxu0
        %v7715 = vadd.f32 %v7662, %v7714
        %v7716 = vpop.f32.mrb[0].mxu0
        %v7717 = vadd.f32 %v7664, %v7716
        %v7718 = vpop.f32.mrb[0].mxu0
        %v7719 = vadd.f32 %v7666, %v7718
        %7720 = vmatprep.mubr.bf16.mxu0 0
        %7721 = vmatmul.mubr.bf16.gmra.mrb[0].mxu0 %v5742
        %v7722 = vpop.f32.mrb[0].mxu0
        %v7723 = vadd.f32 %v7670, %v7722
        %v7724 = vpop.f32.mrb[0].mxu0
        %v7725 = vadd.f32 %v7672, %v7724
        %v7726 = vpop.f32.mrb[0].mxu0
        %v7727 = vadd.f32 %v7674, %v7726
        %v7728 = vpop.f32.mrb[0].mxu0
        %v7729 = vadd.f32 %v7676, %v7728
        %7730 = vdwg.mxu0
        %v7731 = vmax.f32 %v7448, 0.0
        %v7732 = vmax.f32 %v7450, 0.0
        %v7733 = vmax.f32 %v7713, 0.0
        %v7734 = vmax.f32 %v7715, 0.0
        %v7735 = vmax.f32 %v7452, 0.0
        %v7736 = vmax.f32 %v7454, 0.0
        %v7737 = vmax.f32 %v7717, 0.0
        %v7738 = vmax.f32 %v7719, 0.0
        %v7739 = vmax.f32 %v7458, 0.0
        %v7740 = vmax.f32 %v7460, 0.0
        %v7741 = vmax.f32 %v7723, 0.0
        %v7742 = vmax.f32 %v7725, 0.0
        %v7743 = vmax.f32 %v7462, 0.0
        %v7744 = vmax.f32 %v7464, 0.0
        %v7745 = vmax.f32 %v7727, 0.0
        %v7746 = vmax.f32 %v7729, 0.0
        %v7747 = vadd.f32 %v7731, %v7735
        %v7748 = vrot.slane %v7747, 4
        %v7749 = vadd.f32 %v7747, %v7748
        %v7750 = vrot.slane %v7749, 2
        %v7751 = vadd.f32 %v7749, %v7750
        %v7752 = vrot.slane %v7751, 1
        %v7753 = vadd.f32 %v7751, %v7752
        %v7754 = vadd.f32 %v7732, %v7736
        %v7755 = vrot.slane %v7754, 4
        %v7756 = vadd.f32 %v7754, %v7755
        %v7757 = vrot.slane %v7756, 2
        %v7758 = vadd.f32 %v7756, %v7757
        %v7759 = vrot.slane %v7758, 1
        %v7760 = vadd.f32 %v7758, %v7759
        %v7761 = vadd.f32 %v7733, %v7737
        %v7762 = vrot.slane %v7761, 4
        %v7763 = vadd.f32 %v7761, %v7762
        %v7764 = vrot.slane %v7763, 2
        %v7765 = vadd.f32 %v7763, %v7764
        %v7766 = vrot.slane %v7765, 1
        %v7767 = vadd.f32 %v7765, %v7766
        %v7768 = vadd.f32 %v7734, %v7738
        %v7769 = vrot.slane %v7768, 4
        %v7770 = vadd.f32 %v7768, %v7769
        %v7771 = vrot.slane %v7770, 2
        %v7772 = vadd.f32 %v7770, %v7771
        %v7773 = vrot.slane %v7772, 1
        %v7774 = vadd.f32 %v7772, %v7773
        %v7775 = vadd.f32 %v7739, %v7743
        %v7776 = vrot.slane %v7775, 4
        %v7777 = vadd.f32 %v7775, %v7776
        %v7778 = vrot.slane %v7777, 2
        %v7779 = vadd.f32 %v7777, %v7778
        %v7780 = vrot.slane %v7779, 1
        %v7781 = vadd.f32 %v7779, %v7780
        %v7782 = vadd.f32 %v7740, %v7744
        %v7783 = vrot.slane %v7782, 4
        %v7784 = vadd.f32 %v7782, %v7783
        %v7785 = vrot.slane %v7784, 2
        %v7786 = vadd.f32 %v7784, %v7785
        %v7787 = vrot.slane %v7786, 1
        %v7788 = vadd.f32 %v7786, %v7787
        %v7789 = vadd.f32 %v7741, %v7745
        %v7790 = vrot.slane %v7789, 4
        %v7791 = vadd.f32 %v7789, %v7790
        %v7792 = vrot.slane %v7791, 2
        %v7793 = vadd.f32 %v7791, %v7792
        %v7794 = vrot.slane %v7793, 1
        %v7795 = vadd.f32 %v7793, %v7794
        %v7796 = vadd.f32 %v7742, %v7746
        %v7797 = vrot.slane %v7796, 4
        %v7798 = vadd.f32 %v7796, %v7797
        %v7799 = vrot.slane %v7798, 2
        %v7800 = vadd.f32 %v7798, %v7799
        %v7801 = vrot.slane %v7800, 1
        %v7802 = vadd.f32 %v7800, %v7801
        %v7803 = vrcp.pop 16.0
        %v7804 = vmul.f32 %v7753, %v7803
        %v7805 = vmul.f32 %v7760, %v7803
        %v7806 = vmul.f32 %v7767, %v7803
        %v7807 = vmul.f32 %v7774, %v7803
        %v7808 = vmul.f32 %v7781, %v7803
        %v7809 = vmul.f32 %v7788, %v7803
        %v7810 = vmul.f32 %v7795, %v7803
        %v7811 = vmul.f32 %v7802, %v7803
        %v7820 = vcombine.low %v7804, %v7805
        %v7821 = vcombine.low %v7806, %v7807
        %v7823 = vunpack.c.l.s4 1983009808
        %v7824 = vunpack.c.0.s8 %v7823
        %v7825 = vlaneseq
        %v7826 = vshrl.u32 %v7825, 7
        %v7827 = vsub.s32 %v7824, %v7826
        %v7828 = vrot.slane %v7820, %v7827
        %v7830 = vunpack.c.l.s4 1983009808
        %v7831 = vunpack.c.0.s8 %v7830
        %v7832 = vlaneseq
        %v7833 = vshrl.u32 %v7832, 7
        %v7834 = vsub.s32 %v7831, %v7833
        %v7835 = vrot.slane %v7821, %v7834
        %v7836 = vcombine.low %v7828, %v7835
        %v7837 = vcombine.low %v7808, %v7809
        %v7838 = vcombine.low %v7810, %v7811
        %v7840 = vunpack.c.l.s4 1983009808
        %v7841 = vunpack.c.0.s8 %v7840
        %v7842 = vlaneseq
        %v7843 = vshrl.u32 %v7842, 7
        %v7844 = vsub.s32 %v7841, %v7843
        %v7845 = vrot.slane %v7837, %v7844
        %v7847 = vunpack.c.l.s4 1983009808
        %v7848 = vunpack.c.0.s8 %v7847
        %v7849 = vlaneseq
        %v7850 = vshrl.u32 %v7849, 7
        %v7851 = vsub.s32 %v7848, %v7850
        %v7852 = vrot.slane %v7838, %v7851
        %v7853 = vcombine.low %v7845, %v7852
        %v7854 = vsel %vm2874, %v7836, %v7836
        %v7855 = vsel %vm2880, %v7836, %v7854
        %v7856 = vrot.slane %v7853, 7
        %v7857 = vsel %vm2865, %v7856, %v7855
        %v7858 = vsel %vm2871, %v7856, %v7857
        %v7859 = vsel %vm2877, %v7856, %v7858
        %v7860 = vsel %vm2883, %v7856, %v7859
        %7862 = vst [vmem:[%s527] sm:$0xff] %v7860
        %v7863 = vpack.c.bf16 %v7804, %v7804
        %v7864 = vpack.c.bf16 %v7805, %v7805
        %v7865 = vpack.c.bf16 %v7806, %v7806
        %v7866 = vpack.c.bf16 %v7807, %v7807
        %v7867 = vpack.c.bf16 %v7808, %v7808
        %v7868 = vpack.c.bf16 %v7809, %v7809
        %v7869 = vpack.c.bf16 %v7810, %v7810
        %v7870 = vpack.c.bf16 %v7811, %v7811
        %v7871 = vld [vmem:[%s7] sm:$0xff]
        %v7872 = vld [vmem:[%s7 + $0x8] sm:$0xff]
        %v7873 = vld [vmem:[%s7 + $0x10] sm:$0xff]
        %v7874 = vld [vmem:[%s7 + $0x18] sm:$0xff]
        %v7875 = vld [vmem:[%s7 + $0x20] sm:$0xff]
        %v7876 = vld [vmem:[%s7 + $0x28] sm:$0xff]
        %v7877 = vld [vmem:[%s7 + $0x30] sm:$0xff]
        %v7878 = vld [vmem:[%s7 + $0x38] sm:$0xff]
        %v7879 = vld [vmem:[%s7 + $0x40] sm:$0xff]
        %v7880 = vld [vmem:[%s7 + $0x48] sm:$0xff]
        %v7881 = vld [vmem:[%s7 + $0x50] sm:$0xff]
        %v7882 = vld [vmem:[%s7 + $0x58] sm:$0xff]
        %v7883 = vld [vmem:[%s7 + $0x60] sm:$0xff]
        %v7884 = vld [vmem:[%s7 + $0x68] sm:$0xff]
        %v7885 = vld [vmem:[%s7 + $0x70] sm:$0xff]
        %v7886 = vld [vmem:[%s7 + $0x78] sm:$0xff]
        %v7887 = vld [vmem:[%s7 + $0x80] sm:$0xff]
        %v7888 = vld [vmem:[%s7 + $0x88] sm:$0xff]
        %v7889 = vld [vmem:[%s7 + $0x90] sm:$0xff]
        %v7890 = vld [vmem:[%s7 + $0x98] sm:$0xff]
        %v7891 = vld [vmem:[%s7 + $0xa0] sm:$0xff]
        %v7892 = vld [vmem:[%s7 + $0xa8] sm:$0xff]
        %v7893 = vld [vmem:[%s7 + $0xb0] sm:$0xff]
        %v7894 = vld [vmem:[%s7 + $0xb8] sm:$0xff]
        %v7895 = vld [vmem:[%s7 + $0xc0] sm:$0xff]
        %v7896 = vld [vmem:[%s7 + $0xc8] sm:$0xff]
        %v7897 = vld [vmem:[%s7 + $0xd0] sm:$0xff]
        %v7898 = vld [vmem:[%s7 + $0xd8] sm:$0xff]
        %v7899 = vld [vmem:[%s7 + $0xe0] sm:$0xff]
        %v7900 = vld [vmem:[%s7 + $0xe8] sm:$0xff]
        %v7901 = vld [vmem:[%s7 + $0xf0] sm:$0xff]
        %v7902 = vld [vmem:[%s7 + $0xf8] sm:$0xff]
        %v7903 = vld [vmem:[%s7 + $0x100] sm:$0xff]
        %v7904 = vld [vmem:[%s7 + $0x108] sm:$0xff]
        %v7905 = vld [vmem:[%s7 + $0x110] sm:$0xff]
        %v7906 = vld [vmem:[%s7 + $0x118] sm:$0xff]
        %v7907 = vld [vmem:[%s7 + $0x120] sm:$0xff]
        %v7908 = vld [vmem:[%s7 + $0x128] sm:$0xff]
        %v7909 = vld [vmem:[%s7 + $0x130] sm:$0xff]
        %v7910 = vld [vmem:[%s7 + $0x138] sm:$0xff]
        %v7911 = vld [vmem:[%s7 + $0x140] sm:$0xff]
        %v7912 = vld [vmem:[%s7 + $0x148] sm:$0xff]
        %v7913 = vld [vmem:[%s7 + $0x150] sm:$0xff]
        %v7914 = vld [vmem:[%s7 + $0x158] sm:$0xff]
        %v7915 = vld [vmem:[%s7 + $0x160] sm:$0xff]
        %v7916 = vld [vmem:[%s7 + $0x168] sm:$0xff]
        %v7917 = vld [vmem:[%s7 + $0x170] sm:$0xff]
        %v7918 = vld [vmem:[%s7 + $0x178] sm:$0xff]
        %v7919 = vld [vmem:[%s7 + $0x180] sm:$0xff]
        %v7920 = vld [vmem:[%s7 + $0x188] sm:$0xff]
        %v7921 = vld [vmem:[%s7 + $0x190] sm:$0xff]
        %v7922 = vld [vmem:[%s7 + $0x198] sm:$0xff]
        %v7923 = vld [vmem:[%s7 + $0x1a0] sm:$0xff]
        %v7924 = vld [vmem:[%s7 + $0x1a8] sm:$0xff]
        %v7925 = vld [vmem:[%s7 + $0x1b0] sm:$0xff]
        %v7926 = vld [vmem:[%s7 + $0x1b8] sm:$0xff]
        %v7927 = vld [vmem:[%s7 + $0x1c0] sm:$0xff]
        %v7928 = vld [vmem:[%s7 + $0x1c8] sm:$0xff]
        %v7929 = vld [vmem:[%s7 + $0x1d0] sm:$0xff]
        %v7930 = vld [vmem:[%s7 + $0x1d8] sm:$0xff]
        %v7931 = vld [vmem:[%s7 + $0x1e0] sm:$0xff]
        %v7932 = vld [vmem:[%s7 + $0x1e8] sm:$0xff]
        %v7933 = vld [vmem:[%s7 + $0x1f0] sm:$0xff]
        %v7934 = vld [vmem:[%s7 + $0x1f8] sm:$0xff]
        %v7935 = vld [vmem:[%s7 + $0x200] sm:$0xff]
        %v7936 = vld [vmem:[%s7 + $0x208] sm:$0xff]
        %v7937 = vld [vmem:[%s7 + $0x210] sm:$0xff]
        %v7938 = vld [vmem:[%s7 + $0x218] sm:$0xff]
        %v7939 = vld [vmem:[%s7 + $0x220] sm:$0xff]
        %v7940 = vld [vmem:[%s7 + $0x228] sm:$0xff]
        %v7941 = vld [vmem:[%s7 + $0x230] sm:$0xff]
        %v7942 = vld [vmem:[%s7 + $0x238] sm:$0xff]
        %v7943 = vld [vmem:[%s7 + $0x240] sm:$0xff]
        %v7944 = vld [vmem:[%s7 + $0x248] sm:$0xff]
        %v7945 = vld [vmem:[%s7 + $0x250] sm:$0xff]
        %v7946 = vld [vmem:[%s7 + $0x258] sm:$0xff]
        %v7947 = vld [vmem:[%s7 + $0x260] sm:$0xff]
        %v7948 = vld [vmem:[%s7 + $0x268] sm:$0xff]
        %v7949 = vld [vmem:[%s7 + $0x270] sm:$0xff]
        %v7950 = vld [vmem:[%s7 + $0x278] sm:$0xff]
        %v7951 = vld [vmem:[%s7 + $0x280] sm:$0xff]
        %v7952 = vld [vmem:[%s7 + $0x288] sm:$0xff]
        %v7953 = vld [vmem:[%s7 + $0x290] sm:$0xff]
        %v7954 = vld [vmem:[%s7 + $0x298] sm:$0xff]
        %v7955 = vld [vmem:[%s7 + $0x2a0] sm:$0xff]
        %v7956 = vld [vmem:[%s7 + $0x2a8] sm:$0xff]
        %v7957 = vld [vmem:[%s7 + $0x2b0] sm:$0xff]
        %v7958 = vld [vmem:[%s7 + $0x2b8] sm:$0xff]
        %v7959 = vld [vmem:[%s7 + $0x2c0] sm:$0xff]
        %v7960 = vld [vmem:[%s7 + $0x2c8] sm:$0xff]
        %v7961 = vld [vmem:[%s7 + $0x2d0] sm:$0xff]
        %v7962 = vld [vmem:[%s7 + $0x2d8] sm:$0xff]
        %v7963 = vld [vmem:[%s7 + $0x2e0] sm:$0xff]
        %v7964 = vld [vmem:[%s7 + $0x2e8] sm:$0xff]
        %v7965 = vld [vmem:[%s7 + $0x2f0] sm:$0xff]
        %v7966 = vld [vmem:[%s7 + $0x2f8] sm:$0xff]
        %v7967 = vld [vmem:[%s7 + $0x300] sm:$0xff]
        %v7968 = vld [vmem:[%s7 + $0x308] sm:$0xff]
        %v7969 = vld [vmem:[%s7 + $0x310] sm:$0xff]
        %v7970 = vld [vmem:[%s7 + $0x318] sm:$0xff]
        %v7971 = vld [vmem:[%s7 + $0x320] sm:$0xff]
        %v7972 = vld [vmem:[%s7 + $0x328] sm:$0xff]
        %v7973 = vld [vmem:[%s7 + $0x330] sm:$0xff]
        %v7974 = vld [vmem:[%s7 + $0x338] sm:$0xff]
        %v7975 = vld [vmem:[%s7 + $0x340] sm:$0xff]
        %v7976 = vld [vmem:[%s7 + $0x348] sm:$0xff]
        %v7977 = vld [vmem:[%s7 + $0x350] sm:$0xff]
        %v7978 = vld [vmem:[%s7 + $0x358] sm:$0xff]
        %v7979 = vld [vmem:[%s7 + $0x360] sm:$0xff]
        %v7980 = vld [vmem:[%s7 + $0x368] sm:$0xff]
        %v7981 = vld [vmem:[%s7 + $0x370] sm:$0xff]
        %v7982 = vld [vmem:[%s7 + $0x378] sm:$0xff]
        %v7983 = vld [vmem:[%s7 + $0x380] sm:$0xff]
        %v7984 = vld [vmem:[%s7 + $0x388] sm:$0xff]
        %v7985 = vld [vmem:[%s7 + $0x390] sm:$0xff]
        %v7986 = vld [vmem:[%s7 + $0x398] sm:$0xff]
        %v7987 = vld [vmem:[%s7 + $0x3a0] sm:$0xff]
        %v7988 = vld [vmem:[%s7 + $0x3a8] sm:$0xff]
        %v7989 = vld [vmem:[%s7 + $0x3b0] sm:$0xff]
        %v7990 = vld [vmem:[%s7 + $0x3b8] sm:$0xff]
        %v7991 = vld [vmem:[%s7 + $0x3c0] sm:$0xff]
        %v7992 = vld [vmem:[%s7 + $0x3c8] sm:$0xff]
        %v7993 = vld [vmem:[%s7 + $0x3d0] sm:$0xff]
        %v7994 = vld [vmem:[%s7 + $0x3d8] sm:$0xff]
        %v7995 = vld [vmem:[%s7 + $0x3e0] sm:$0xff]
        %v7996 = vld [vmem:[%s7 + $0x3e8] sm:$0xff]
        %v7997 = vld [vmem:[%s7 + $0x3f0] sm:$0xff]
        %v7998 = vld [vmem:[%s7 + $0x3f8] sm:$0xff]
        %v7999 = vld [vmem:[%s8] sm:$0xf]
        %v8001 = vlaneseq
        %v8002 = vshrl.u32 %v8001, 7
        %v8003 = vsub.s32 0, %v8002
        %v8004 = vrot.slane %v7999, %v8003
        %v8005 = vlaneseq
        %v8006 = vshrl.u32 %v8005, 7
        %v8007 = vsub.s32 1, %v8006
        %v8008 = vrot.slane %v7999, %v8007
        %v8009 = vlaneseq
        %v8010 = vshrl.u32 %v8009, 7
        %v8011 = vsub.s32 2, %v8010
        %v8012 = vrot.slane %v7999, %v8011
        %v8013 = vlaneseq
        %v8014 = vshrl.u32 %v8013, 7
        %v8015 = vsub.s32 3, %v8014
        %v8016 = vrot.slane %v7999, %v8015
        %v8029 = vunpack.c.l.b16 %v7863
        %v8030 = vunpack.c.l.b16 %v7864
        %v8031 = vunpack.c.l.b16 %v7865
        %v8032 = vunpack.c.l.b16 %v7866
        %v8033 = vunpack.c.l.b16 %v7867
        %v8034 = vunpack.c.l.b16 %v7868
        %v8035 = vunpack.c.l.b16 %v7869
        %v8036 = vunpack.c.l.b16 %v7870
        %v8037 = vsel %vm2865, %v8033, %v8029
        %v8038 = vsel %vm2865, %v8034, %v8030
        %v8039 = vsel %vm2865, %v8035, %v8031
        %v8040 = vsel %vm2865, %v8036, %v8032
        %v8041 = vpack.c.b16 %v8037, %v8037
        %v8042 = vpack.c.b16 %v8038, %v8038
        %v8043 = vpack.c.b16 %v8039, %v8039
        %v8044 = vpack.c.b16 %v8040, %v8040
        %v8177 = vunpack.c.l.b16 %v7871
        %v8178 = vunpack.c.h.b16 %v7871
        %v8179 = vunpack.c.l.b16 %v7872
        %v8180 = vunpack.c.h.b16 %v7872
        %v8181 = vunpack.c.l.b16 %v7873
        %v8182 = vunpack.c.h.b16 %v7873
        %v8183 = vunpack.c.l.b16 %v7874
        %v8184 = vunpack.c.h.b16 %v7874
        %v8185 = vunpack.c.l.b16 %v7875
        %v8186 = vunpack.c.h.b16 %v7875
        %v8187 = vunpack.c.l.b16 %v7876
        %v8188 = vunpack.c.h.b16 %v7876
        %v8189 = vunpack.c.l.b16 %v7877
        %v8190 = vunpack.c.h.b16 %v7877
        %v8191 = vunpack.c.l.b16 %v7878
        %v8192 = vunpack.c.h.b16 %v7878
        %v8193 = vunpack.c.l.b16 %v7879
        %v8194 = vunpack.c.h.b16 %v7879
        %v8195 = vunpack.c.l.b16 %v7880
        %v8196 = vunpack.c.h.b16 %v7880
        %v8197 = vunpack.c.l.b16 %v7881
        %v8198 = vunpack.c.h.b16 %v7881
        %v8199 = vunpack.c.l.b16 %v7882
        %v8200 = vunpack.c.h.b16 %v7882
        %v8201 = vunpack.c.l.b16 %v7883
        %v8202 = vunpack.c.h.b16 %v7883
        %v8203 = vunpack.c.l.b16 %v7884
        %v8204 = vunpack.c.h.b16 %v7884
        %v8205 = vunpack.c.l.b16 %v7885
        %v8206 = vunpack.c.h.b16 %v7885
        %v8207 = vunpack.c.l.b16 %v7886
        %v8208 = vunpack.c.h.b16 %v7886
        %v8209 = vunpack.c.l.b16 %v7887
        %v8210 = vunpack.c.h.b16 %v7887
        %v8211 = vunpack.c.l.b16 %v7888
        %v8212 = vunpack.c.h.b16 %v7888
        %v8213 = vunpack.c.l.b16 %v7889
        %v8214 = vunpack.c.h.b16 %v7889
        %v8215 = vunpack.c.l.b16 %v7890
        %v8216 = vunpack.c.h.b16 %v7890
        %v8217 = vunpack.c.l.b16 %v7891
        %v8218 = vunpack.c.h.b16 %v7891
        %v8219 = vunpack.c.l.b16 %v7892
        %v8220 = vunpack.c.h.b16 %v7892
        %v8221 = vunpack.c.l.b16 %v7893
        %v8222 = vunpack.c.h.b16 %v7893
        %v8223 = vunpack.c.l.b16 %v7894
        %v8224 = vunpack.c.h.b16 %v7894
        %v8225 = vunpack.c.l.b16 %v7895
        %v8226 = vunpack.c.h.b16 %v7895
        %v8227 = vunpack.c.l.b16 %v7896
        %v8228 = vunpack.c.h.b16 %v7896
        %v8229 = vunpack.c.l.b16 %v7897
        %v8230 = vunpack.c.h.b16 %v7897
        %v8231 = vunpack.c.l.b16 %v7898
        %v8232 = vunpack.c.h.b16 %v7898
        %v8233 = vunpack.c.l.b16 %v7899
        %v8234 = vunpack.c.h.b16 %v7899
        %v8235 = vunpack.c.l.b16 %v7900
        %v8236 = vunpack.c.h.b16 %v7900
        %v8237 = vunpack.c.l.b16 %v7901
        %v8238 = vunpack.c.h.b16 %v7901
        %v8239 = vunpack.c.l.b16 %v7902
        %v8240 = vunpack.c.h.b16 %v7902
        %v8241 = vunpack.c.l.b16 %v7903
        %v8242 = vunpack.c.h.b16 %v7903
        %v8243 = vunpack.c.l.b16 %v7904
        %v8244 = vunpack.c.h.b16 %v7904
        %v8245 = vunpack.c.l.b16 %v7905
        %v8246 = vunpack.c.h.b16 %v7905
        %v8247 = vunpack.c.l.b16 %v7906
        %v8248 = vunpack.c.h.b16 %v7906
        %v8249 = vunpack.c.l.b16 %v7907
        %v8250 = vunpack.c.h.b16 %v7907
        %v8251 = vunpack.c.l.b16 %v7908
        %v8252 = vunpack.c.h.b16 %v7908
        %v8253 = vunpack.c.l.b16 %v7909
        %v8254 = vunpack.c.h.b16 %v7909
        %v8255 = vunpack.c.l.b16 %v7910
        %v8256 = vunpack.c.h.b16 %v7910
        %v8257 = vunpack.c.l.b16 %v7911
        %v8258 = vunpack.c.h.b16 %v7911
        %v8259 = vunpack.c.l.b16 %v7912
        %v8260 = vunpack.c.h.b16 %v7912
        %v8261 = vunpack.c.l.b16 %v7913
        %v8262 = vunpack.c.h.b16 %v7913
        %v8263 = vunpack.c.l.b16 %v7914
        %v8264 = vunpack.c.h.b16 %v7914
        %v8265 = vunpack.c.l.b16 %v7915
        %v8266 = vunpack.c.h.b16 %v7915
        %v8267 = vunpack.c.l.b16 %v7916
        %v8268 = vunpack.c.h.b16 %v7916
        %v8269 = vunpack.c.l.b16 %v7917
        %v8270 = vunpack.c.h.b16 %v7917
        %v8271 = vunpack.c.l.b16 %v7918
        %v8272 = vunpack.c.h.b16 %v7918
        %v8273 = vunpack.c.l.b16 %v7919
        %v8274 = vunpack.c.h.b16 %v7919
        %v8275 = vunpack.c.l.b16 %v7920
        %v8276 = vunpack.c.h.b16 %v7920
        %v8277 = vunpack.c.l.b16 %v7921
        %v8278 = vunpack.c.h.b16 %v7921
        %v8279 = vunpack.c.l.b16 %v7922
        %v8280 = vunpack.c.h.b16 %v7922
        %v8281 = vunpack.c.l.b16 %v7923
        %v8282 = vunpack.c.h.b16 %v7923
        %v8283 = vunpack.c.l.b16 %v7924
        %v8284 = vunpack.c.h.b16 %v7924
        %v8285 = vunpack.c.l.b16 %v7925
        %v8286 = vunpack.c.h.b16 %v7925
        %v8287 = vunpack.c.l.b16 %v7926
        %v8288 = vunpack.c.h.b16 %v7926
        %v8289 = vunpack.c.l.b16 %v7927
        %v8290 = vunpack.c.h.b16 %v7927
        %v8291 = vunpack.c.l.b16 %v7928
        %v8292 = vunpack.c.h.b16 %v7928
        %v8293 = vunpack.c.l.b16 %v7929
        %v8294 = vunpack.c.h.b16 %v7929
        %v8295 = vunpack.c.l.b16 %v7930
        %v8296 = vunpack.c.h.b16 %v7930
        %v8297 = vunpack.c.l.b16 %v7931
        %v8298 = vunpack.c.h.b16 %v7931
        %v8299 = vunpack.c.l.b16 %v7932
        %v8300 = vunpack.c.h.b16 %v7932
        %v8301 = vunpack.c.l.b16 %v7933
        %v8302 = vunpack.c.h.b16 %v7933
        %v8303 = vunpack.c.l.b16 %v7934
        %v8304 = vunpack.c.h.b16 %v7934
        %v8305 = vunpack.c.l.b16 %v7935
        %v8306 = vunpack.c.h.b16 %v7935
        %v8307 = vunpack.c.l.b16 %v7936
        %v8308 = vunpack.c.h.b16 %v7936
        %v8309 = vunpack.c.l.b16 %v7937
        %v8310 = vunpack.c.h.b16 %v7937
        %v8311 = vunpack.c.l.b16 %v7938
        %v8312 = vunpack.c.h.b16 %v7938
        %v8313 = vunpack.c.l.b16 %v7939
        %v8314 = vunpack.c.h.b16 %v7939
        %v8315 = vunpack.c.l.b16 %v7940
        %v8316 = vunpack.c.h.b16 %v7940
        %v8317 = vunpack.c.l.b16 %v7941
        %v8318 = vunpack.c.h.b16 %v7941
        %v8319 = vunpack.c.l.b16 %v7942
        %v8320 = vunpack.c.h.b16 %v7942
        %v8321 = vunpack.c.l.b16 %v7943
        %v8322 = vunpack.c.h.b16 %v7943
        %v8323 = vunpack.c.l.b16 %v7944
        %v8324 = vunpack.c.h.b16 %v7944
        %v8325 = vunpack.c.l.b16 %v7945
        %v8326 = vunpack.c.h.b16 %v7945
        %v8327 = vunpack.c.l.b16 %v7946
        %v8328 = vunpack.c.h.b16 %v7946
        %v8329 = vunpack.c.l.b16 %v7947
        %v8330 = vunpack.c.h.b16 %v7947
        %v8331 = vunpack.c.l.b16 %v7948
        %v8332 = vunpack.c.h.b16 %v7948
        %v8333 = vunpack.c.l.b16 %v7949
        %v8334 = vunpack.c.h.b16 %v7949
        %v8335 = vunpack.c.l.b16 %v7950
        %v8336 = vunpack.c.h.b16 %v7950
        %v8337 = vunpack.c.l.b16 %v7951
        %v8338 = vunpack.c.h.b16 %v7951
        %v8339 = vunpack.c.l.b16 %v7952
        %v8340 = vunpack.c.h.b16 %v7952
        %v8341 = vunpack.c.l.b16 %v7953
        %v8342 = vunpack.c.h.b16 %v7953
        %v8343 = vunpack.c.l.b16 %v7954
        %v8344 = vunpack.c.h.b16 %v7954
        %v8345 = vunpack.c.l.b16 %v7955
        %v8346 = vunpack.c.h.b16 %v7955
        %v8347 = vunpack.c.l.b16 %v7956
        %v8348 = vunpack.c.h.b16 %v7956
        %v8349 = vunpack.c.l.b16 %v7957
        %v8350 = vunpack.c.h.b16 %v7957
        %v8351 = vunpack.c.l.b16 %v7958
        %v8352 = vunpack.c.h.b16 %v7958
        %v8353 = vunpack.c.l.b16 %v7959
        %v8354 = vunpack.c.h.b16 %v7959
        %v8355 = vunpack.c.l.b16 %v7960
        %v8356 = vunpack.c.h.b16 %v7960
        %v8357 = vunpack.c.l.b16 %v7961
        %v8358 = vunpack.c.h.b16 %v7961
        %v8359 = vunpack.c.l.b16 %v7962
        %v8360 = vunpack.c.h.b16 %v7962
        %v8361 = vunpack.c.l.b16 %v7963
        %v8362 = vunpack.c.h.b16 %v7963
        %v8363 = vunpack.c.l.b16 %v7964
        %v8364 = vunpack.c.h.b16 %v7964
        %v8365 = vunpack.c.l.b16 %v7965
        %v8366 = vunpack.c.h.b16 %v7965
        %v8367 = vunpack.c.l.b16 %v7966
        %v8368 = vunpack.c.h.b16 %v7966
        %v8369 = vunpack.c.l.b16 %v7967
        %v8370 = vunpack.c.h.b16 %v7967
        %v8371 = vunpack.c.l.b16 %v7968
        %v8372 = vunpack.c.h.b16 %v7968
        %v8373 = vunpack.c.l.b16 %v7969
        %v8374 = vunpack.c.h.b16 %v7969
        %v8375 = vunpack.c.l.b16 %v7970
        %v8376 = vunpack.c.h.b16 %v7970
        %v8377 = vunpack.c.l.b16 %v7971
        %v8378 = vunpack.c.h.b16 %v7971
        %v8379 = vunpack.c.l.b16 %v7972
        %v8380 = vunpack.c.h.b16 %v7972
        %v8381 = vunpack.c.l.b16 %v7973
        %v8382 = vunpack.c.h.b16 %v7973
        %v8383 = vunpack.c.l.b16 %v7974
        %v8384 = vunpack.c.h.b16 %v7974
        %v8385 = vunpack.c.l.b16 %v7975
        %v8386 = vunpack.c.h.b16 %v7975
        %v8387 = vunpack.c.l.b16 %v7976
        %v8388 = vunpack.c.h.b16 %v7976
        %v8389 = vunpack.c.l.b16 %v7977
        %v8390 = vunpack.c.h.b16 %v7977
        %v8391 = vunpack.c.l.b16 %v7978
        %v8392 = vunpack.c.h.b16 %v7978
        %v8393 = vunpack.c.l.b16 %v7979
        %v8394 = vunpack.c.h.b16 %v7979
        %v8395 = vunpack.c.l.b16 %v7980
        %v8396 = vunpack.c.h.b16 %v7980
        %v8397 = vunpack.c.l.b16 %v7981
        %v8398 = vunpack.c.h.b16 %v7981
        %v8399 = vunpack.c.l.b16 %v7982
        %v8400 = vunpack.c.h.b16 %v7982
        %v8401 = vunpack.c.l.b16 %v7983
        %v8402 = vunpack.c.h.b16 %v7983
        %v8403 = vunpack.c.l.b16 %v7984
        %v8404 = vunpack.c.h.b16 %v7984
        %v8405 = vunpack.c.l.b16 %v7985
        %v8406 = vunpack.c.h.b16 %v7985
        %v8407 = vunpack.c.l.b16 %v7986
        %v8408 = vunpack.c.h.b16 %v7986
        %v8409 = vunpack.c.l.b16 %v7987
        %v8410 = vunpack.c.h.b16 %v7987
        %v8411 = vunpack.c.l.b16 %v7988
        %v8412 = vunpack.c.h.b16 %v7988
        %v8413 = vunpack.c.l.b16 %v7989
        %v8414 = vunpack.c.h.b16 %v7989
        %v8415 = vunpack.c.l.b16 %v7990
        %v8416 = vunpack.c.h.b16 %v7990
        %v8417 = vunpack.c.l.b16 %v7991
        %v8418 = vunpack.c.h.b16 %v7991
        %v8419 = vunpack.c.l.b16 %v7992
        %v8420 = vunpack.c.h.b16 %v7992
        %v8421 = vunpack.c.l.b16 %v7993
        %v8422 = vunpack.c.h.b16 %v7993
        %v8423 = vunpack.c.l.b16 %v7994
        %v8424 = vunpack.c.h.b16 %v7994
        %v8425 = vunpack.c.l.b16 %v7995
        %v8426 = vunpack.c.h.b16 %v7995
        %v8427 = vunpack.c.l.b16 %v7996
        %v8428 = vunpack.c.h.b16 %v7996
        %v8429 = vunpack.c.l.b16 %v7997
        %v8430 = vunpack.c.h.b16 %v7997
        %v8431 = vunpack.c.l.b16 %v7998
        %v8432 = vunpack.c.h.b16 %v7998
        %v8433 = vpack.c.b16 %v8181, %v8177
        %v8434 = vpack.c.b16 %v8182, %v8178
        %v8435 = vpack.c.b16 %v8183, %v8179
        %v8436 = vpack.c.b16 %v8184, %v8180
        %v8437 = vpack.c.b16 %v8189, %v8185
        %v8438 = vpack.c.b16 %v8190, %v8186
        %v8439 = vpack.c.b16 %v8191, %v8187
        %v8440 = vpack.c.b16 %v8192, %v8188
        %v8441 = vpack.c.b16 %v8197, %v8193
        %v8442 = vpack.c.b16 %v8198, %v8194
        %v8443 = vpack.c.b16 %v8199, %v8195
        %v8444 = vpack.c.b16 %v8200, %v8196
        %v8445 = vpack.c.b16 %v8205, %v8201
        %v8446 = vpack.c.b16 %v8206, %v8202
        %v8447 = vpack.c.b16 %v8207, %v8203
        %v8448 = vpack.c.b16 %v8208, %v8204
        %v8449 = vpack.c.b16 %v8213, %v8209
        %v8450 = vpack.c.b16 %v8214, %v8210
        %v8451 = vpack.c.b16 %v8215, %v8211
        %v8452 = vpack.c.b16 %v8216, %v8212
        %v8453 = vpack.c.b16 %v8221, %v8217
        %v8454 = vpack.c.b16 %v8222, %v8218
        %v8455 = vpack.c.b16 %v8223, %v8219
        %v8456 = vpack.c.b16 %v8224, %v8220
        %v8457 = vpack.c.b16 %v8229, %v8225
        %v8458 = vpack.c.b16 %v8230, %v8226
        %v8459 = vpack.c.b16 %v8231, %v8227
        %v8460 = vpack.c.b16 %v8232, %v8228
        %v8461 = vpack.c.b16 %v8237, %v8233
        %v8462 = vpack.c.b16 %v8238, %v8234
        %v8463 = vpack.c.b16 %v8239, %v8235
        %v8464 = vpack.c.b16 %v8240, %v8236
        %v8465 = vpack.c.b16 %v8245, %v8241
        %v8466 = vpack.c.b16 %v8246, %v8242
        %v8467 = vpack.c.b16 %v8247, %v8243
        %v8468 = vpack.c.b16 %v8248, %v8244
        %v8469 = vpack.c.b16 %v8253, %v8249
        %v8470 = vpack.c.b16 %v8254, %v8250
        %v8471 = vpack.c.b16 %v8255, %v8251
        %v8472 = vpack.c.b16 %v8256, %v8252
        %v8473 = vpack.c.b16 %v8261, %v8257
        %v8474 = vpack.c.b16 %v8262, %v8258
        %v8475 = vpack.c.b16 %v8263, %v8259
        %v8476 = vpack.c.b16 %v8264, %v8260
        %v8477 = vpack.c.b16 %v8269, %v8265
        %v8478 = vpack.c.b16 %v8270, %v8266
        %v8479 = vpack.c.b16 %v8271, %v8267
        %v8480 = vpack.c.b16 %v8272, %v8268
        %v8481 = vpack.c.b16 %v8277, %v8273
        %v8482 = vpack.c.b16 %v8278, %v8274
        %v8483 = vpack.c.b16 %v8279, %v8275
        %v8484 = vpack.c.b16 %v8280, %v8276
        %v8485 = vpack.c.b16 %v8285, %v8281
        %v8486 = vpack.c.b16 %v8286, %v8282
        %v8487 = vpack.c.b16 %v8287, %v8283
        %v8488 = vpack.c.b16 %v8288, %v8284
        %v8489 = vpack.c.b16 %v8293, %v8289
        %v8490 = vpack.c.b16 %v8294, %v8290
        %v8491 = vpack.c.b16 %v8295, %v8291
        %v8492 = vpack.c.b16 %v8296, %v8292
        %v8493 = vpack.c.b16 %v8301, %v8297
        %v8494 = vpack.c.b16 %v8302, %v8298
        %v8495 = vpack.c.b16 %v8303, %v8299
        %v8496 = vpack.c.b16 %v8304, %v8300
        %v8497 = vpack.c.b16 %v8309, %v8305
        %v8498 = vpack.c.b16 %v8310, %v8306
        %v8499 = vpack.c.b16 %v8311, %v8307
        %v8500 = vpack.c.b16 %v8312, %v8308
        %v8501 = vpack.c.b16 %v8317, %v8313
        %v8502 = vpack.c.b16 %v8318, %v8314
        %v8503 = vpack.c.b16 %v8319, %v8315
        %v8504 = vpack.c.b16 %v8320, %v8316
        %v8505 = vpack.c.b16 %v8325, %v8321
        %v8506 = vpack.c.b16 %v8326, %v8322
        %v8507 = vpack.c.b16 %v8327, %v8323
        %v8508 = vpack.c.b16 %v8328, %v8324
        %v8509 = vpack.c.b16 %v8333, %v8329
        %v8510 = vpack.c.b16 %v8334, %v8330
        %v8511 = vpack.c.b16 %v8335, %v8331
        %v8512 = vpack.c.b16 %v8336, %v8332
        %v8513 = vpack.c.b16 %v8341, %v8337
        %v8514 = vpack.c.b16 %v8342, %v8338
        %v8515 = vpack.c.b16 %v8343, %v8339
        %v8516 = vpack.c.b16 %v8344, %v8340
        %v8517 = vpack.c.b16 %v8349, %v8345
        %v8518 = vpack.c.b16 %v8350, %v8346
        %v8519 = vpack.c.b16 %v8351, %v8347
        %v8520 = vpack.c.b16 %v8352, %v8348
        %v8521 = vpack.c.b16 %v8357, %v8353
        %v8522 = vpack.c.b16 %v8358, %v8354
        %v8523 = vpack.c.b16 %v8359, %v8355
        %v8524 = vpack.c.b16 %v8360, %v8356
        %v8525 = vpack.c.b16 %v8365, %v8361
        %v8526 = vpack.c.b16 %v8366, %v8362
        %v8527 = vpack.c.b16 %v8367, %v8363
        %v8528 = vpack.c.b16 %v8368, %v8364
        %v8529 = vpack.c.b16 %v8373, %v8369
        %v8530 = vpack.c.b16 %v8374, %v8370
        %v8531 = vpack.c.b16 %v8375, %v8371
        %v8532 = vpack.c.b16 %v8376, %v8372
        %v8533 = vpack.c.b16 %v8381, %v8377
        %v8534 = vpack.c.b16 %v8382, %v8378
        %v8535 = vpack.c.b16 %v8383, %v8379
        %v8536 = vpack.c.b16 %v8384, %v8380
        %v8537 = vpack.c.b16 %v8389, %v8385
        %v8538 = vpack.c.b16 %v8390, %v8386
        %v8539 = vpack.c.b16 %v8391, %v8387
        %v8540 = vpack.c.b16 %v8392, %v8388
        %v8541 = vpack.c.b16 %v8397, %v8393
        %v8542 = vpack.c.b16 %v8398, %v8394
        %v8543 = vpack.c.b16 %v8399, %v8395
        %v8544 = vpack.c.b16 %v8400, %v8396
        %v8545 = vpack.c.b16 %v8405, %v8401
        %v8546 = vpack.c.b16 %v8406, %v8402
        %v8547 = vpack.c.b16 %v8407, %v8403
        %v8548 = vpack.c.b16 %v8408, %v8404
        %v8549 = vpack.c.b16 %v8413, %v8409
        %v8550 = vpack.c.b16 %v8414, %v8410
        %v8551 = vpack.c.b16 %v8415, %v8411
        %v8552 = vpack.c.b16 %v8416, %v8412
        %v8553 = vpack.c.b16 %v8421, %v8417
        %v8554 = vpack.c.b16 %v8422, %v8418
        %v8555 = vpack.c.b16 %v8423, %v8419
        %v8556 = vpack.c.b16 %v8424, %v8420
        %v8557 = vpack.c.b16 %v8429, %v8425
        %v8558 = vpack.c.b16 %v8430, %v8426
        %v8559 = vpack.c.b16 %v8431, %v8427
        %v8560 = vpack.c.b16 %v8432, %v8428
        %8689 = vmatprep.subr.bf16.mxu0 %v8434
        %8690 = vmatpush1.bf16.msra.mxu0 %v8433
        %8691 = vmatprep.subr.bf16.mxu0 %v8438
        %8692 = vmatpush1.bf16.msra.mxu0 %v8437
        %8693 = vmatprep.subr.bf16.mxu0 %v8442
        %8694 = vmatpush1.bf16.msra.mxu0 %v8441
        %8695 = vmatprep.subr.bf16.mxu0 %v8446
        %8696 = vmatpush1.bf16.msra.mxu0 %v8445
        %8697 = vmatprep.subr.bf16.mxu0 %v8450
        %8698 = vmatpush1.bf16.msra.mxu0 %v8449
        %8699 = vmatprep.subr.bf16.mxu0 %v8454
        %8700 = vmatpush1.bf16.msra.mxu0 %v8453
        %8701 = vmatprep.subr.bf16.mxu0 %v8458
        %8702 = vmatpush1.bf16.msra.mxu0 %v8457
        %8703 = vmatprep.subr.bf16.mxu0 %v8462
        %8704 = vmatpush1.bf16.msra.mxu0 %v8461
        %8705 = vmatprep.subr.bf16.mxu0 %v8466
        %8706 = vmatpush1.bf16.msra.mxu0 %v8465
        %8707 = vmatprep.subr.bf16.mxu0 %v8470
        %8708 = vmatpush1.bf16.msra.mxu0 %v8469
        %8709 = vmatprep.subr.bf16.mxu0 %v8474
        %8710 = vmatpush1.bf16.msra.mxu0 %v8473
        %8711 = vmatprep.subr.bf16.mxu0 %v8478
        %8712 = vmatpush1.bf16.msra.mxu0 %v8477
        %8713 = vmatprep.subr.bf16.mxu0 %v8482
        %8714 = vmatpush1.bf16.msra.mxu0 %v8481
        %8715 = vmatprep.subr.bf16.mxu0 %v8486
        %8716 = vmatpush1.bf16.msra.mxu0 %v8485
        %8717 = vmatprep.subr.bf16.mxu0 %v8490
        %8718 = vmatpush1.bf16.msra.mxu0 %v8489
        %8719 = vmatprep.subr.bf16.mxu0 %v8494
        %8720 = vmatpush1.bf16.msra.mxu0 %v8493
        %8721 = vmatprep.mubr.bf16.mxu0 %v8042
        %8722 = vmatmul.mubr.bf16.gmra.mrb[0].mxu0 %v8041
        %v8723 = vpop.f32.mrb[0].mxu0
        %v8724 = vadd.f32 %v8004, %v8723
        %v8725 = vpop.f32.mrb[0].mxu0
        %v8726 = vadd.f32 %v8008, %v8725
        %v8727 = vpop.f32.mrb[0].mxu0
        %v8728 = vpop.f32.mrb[0].mxu0
        %8729 = vdwg.mxu0
        %8730 = vmatprep.subr.bf16.mxu0 %v8498
        %8731 = vmatpush1.bf16.msra.mxu0 %v8497
        %8732 = vmatprep.subr.bf16.mxu0 %v8502
        %8733 = vmatpush1.bf16.msra.mxu0 %v8501
        %8734 = vmatprep.subr.bf16.mxu0 %v8506
        %8735 = vmatpush1.bf16.msra.mxu0 %v8505
        %8736 = vmatprep.subr.bf16.mxu0 %v8510
        %8737 = vmatpush1.bf16.msra.mxu0 %v8509
        %8738 = vmatprep.subr.bf16.mxu0 %v8514
        %8739 = vmatpush1.bf16.msra.mxu0 %v8513
        %8740 = vmatprep.subr.bf16.mxu0 %v8518
        %8741 = vmatpush1.bf16.msra.mxu0 %v8517
        %8742 = vmatprep.subr.bf16.mxu0 %v8522
        %8743 = vmatpush1.bf16.msra.mxu0 %v8521
        %8744 = vmatprep.subr.bf16.mxu0 %v8526
        %8745 = vmatpush1.bf16.msra.mxu0 %v8525
        %8746 = vmatprep.subr.bf16.mxu0 %v8530
        %8747 = vmatpush1.bf16.msra.mxu0 %v8529
        %8748 = vmatprep.subr.bf16.mxu0 %v8534
        %8749 = vmatpush1.bf16.msra.mxu0 %v8533
        %8750 = vmatprep.subr.bf16.mxu0 %v8538
        %8751 = vmatpush1.bf16.msra.mxu0 %v8537
        %8752 = vmatprep.subr.bf16.mxu0 %v8542
        %8753 = vmatpush1.bf16.msra.mxu0 %v8541
        %8754 = vmatprep.subr.bf16.mxu0 %v8546
        %8755 = vmatpush1.bf16.msra.mxu0 %v8545
        %8756 = vmatprep.subr.bf16.mxu0 %v8550
        %8757 = vmatpush1.bf16.msra.mxu0 %v8549
        %8758 = vmatprep.subr.bf16.mxu0 %v8554
        %8759 = vmatpush1.bf16.msra.mxu0 %v8553
        %8760 = vmatprep.subr.bf16.mxu0 %v8558
        %8761 = vmatpush1.bf16.msra.mxu0 %v8557
        %8762 = vmatprep.mubr.bf16.mxu0 %v8044
        %8763 = vmatmul.mubr.bf16.gmra.mrb[0].mxu0 %v8043
        %v8764 = vpop.f32.mrb[0].mxu0
        %v8765 = vadd.f32 %v8724, %v8764
        %v8766 = vpop.f32.mrb[0].mxu0
        %v8767 = vadd.f32 %v8726, %v8766
        %v8768 = vpop.f32.mrb[0].mxu0
        %v8769 = vpop.f32.mrb[0].mxu0
        %8770 = vdwg.mxu0
        %8771 = vmatprep.subr.bf16.mxu0 %v8436
        %8772 = vmatpush1.bf16.msra.mxu0 %v8435
        %8773 = vmatprep.subr.bf16.mxu0 %v8440
        %8774 = vmatpush1.bf16.msra.mxu0 %v8439
        %8775 = vmatprep.subr.bf16.mxu0 %v8444
        %8776 = vmatpush1.bf16.msra.mxu0 %v8443
        %8777 = vmatprep.subr.bf16.mxu0 %v8448
        %8778 = vmatpush1.bf16.msra.mxu0 %v8447
        %8779 = vmatprep.subr.bf16.mxu0 %v8452
        %8780 = vmatpush1.bf16.msra.mxu0 %v8451
        %8781 = vmatprep.subr.bf16.mxu0 %v8456
        %8782 = vmatpush1.bf16.msra.mxu0 %v8455
        %8783 = vmatprep.subr.bf16.mxu0 %v8460
        %8784 = vmatpush1.bf16.msra.mxu0 %v8459
        %8785 = vmatprep.subr.bf16.mxu0 %v8464
        %8786 = vmatpush1.bf16.msra.mxu0 %v8463
        %8787 = vmatprep.subr.bf16.mxu0 %v8468
        %8788 = vmatpush1.bf16.msra.mxu0 %v8467
        %8789 = vmatprep.subr.bf16.mxu0 %v8472
        %8790 = vmatpush1.bf16.msra.mxu0 %v8471
        %8791 = vmatprep.subr.bf16.mxu0 %v8476
        %8792 = vmatpush1.bf16.msra.mxu0 %v8475
        %8793 = vmatprep.subr.bf16.mxu0 %v8480
        %8794 = vmatpush1.bf16.msra.mxu0 %v8479
        %8795 = vmatprep.subr.bf16.mxu0 %v8484
        %8796 = vmatpush1.bf16.msra.mxu0 %v8483
        %8797 = vmatprep.subr.bf16.mxu0 %v8488
        %8798 = vmatpush1.bf16.msra.mxu0 %v8487
        %8799 = vmatprep.subr.bf16.mxu0 %v8492
        %8800 = vmatpush1.bf16.msra.mxu0 %v8491
        %8801 = vmatprep.subr.bf16.mxu0 %v8496
        %8802 = vmatpush1.bf16.msra.mxu0 %v8495
        %8803 = vmatprep.mubr.bf16.mxu0 %v8042
        %8804 = vmatmul.mubr.bf16.gmra.mrb[0].mxu0 %v8041
        %v8805 = vpop.f32.mrb[0].mxu0
        %v8806 = vadd.f32 %v8012, %v8805
        %v8807 = vpop.f32.mrb[0].mxu0
        %v8808 = vadd.f32 %v8016, %v8807
        %v8809 = vpop.f32.mrb[0].mxu0
        %v8810 = vpop.f32.mrb[0].mxu0
        %8811 = vdwg.mxu0
        %8812 = vmatprep.subr.bf16.mxu0 %v8500
        %8813 = vmatpush1.bf16.msra.mxu0 %v8499
        %8814 = vmatprep.subr.bf16.mxu0 %v8504
        %8815 = vmatpush1.bf16.msra.mxu0 %v8503
        %8816 = vmatprep.subr.bf16.mxu0 %v8508
        %8817 = vmatpush1.bf16.msra.mxu0 %v8507
        %8818 = vmatprep.subr.bf16.mxu0 %v8512
        %8819 = vmatpush1.bf16.msra.mxu0 %v8511
        %8820 = vmatprep.subr.bf16.mxu0 %v8516
        %8821 = vmatpush1.bf16.msra.mxu0 %v8515
        %8822 = vmatprep.subr.bf16.mxu0 %v8520
        %8823 = vmatpush1.bf16.msra.mxu0 %v8519
        %8824 = vmatprep.subr.bf16.mxu0 %v8524
        %8825 = vmatpush1.bf16.msra.mxu0 %v8523
        %8826 = vmatprep.subr.bf16.mxu0 %v8528
        %8827 = vmatpush1.bf16.msra.mxu0 %v8527
        %8828 = vmatprep.subr.bf16.mxu0 %v8532
        %8829 = vmatpush1.bf16.msra.mxu0 %v8531
        %8830 = vmatprep.subr.bf16.mxu0 %v8536
        %8831 = vmatpush1.bf16.msra.mxu0 %v8535
        %8832 = vmatprep.subr.bf16.mxu0 %v8540
        %8833 = vmatpush1.bf16.msra.mxu0 %v8539
        %8834 = vmatprep.subr.bf16.mxu0 %v8544
        %8835 = vmatpush1.bf16.msra.mxu0 %v8543
        %8836 = vmatprep.subr.bf16.mxu0 %v8548
        %8837 = vmatpush1.bf16.msra.mxu0 %v8547
        %8838 = vmatprep.subr.bf16.mxu0 %v8552
        %8839 = vmatpush1.bf16.msra.mxu0 %v8551
        %8840 = vmatprep.subr.bf16.mxu0 %v8556
        %8841 = vmatpush1.bf16.msra.mxu0 %v8555
        %8842 = vmatprep.subr.bf16.mxu0 %v8560
        %8843 = vmatpush1.bf16.msra.mxu0 %v8559
        %8844 = vmatprep.mubr.bf16.mxu0 %v8044
        %8845 = vmatmul.mubr.bf16.gmra.mrb[0].mxu0 %v8043
        %v8846 = vpop.f32.mrb[0].mxu0
        %v8847 = vadd.f32 %v8806, %v8846
        %v8848 = vpop.f32.mrb[0].mxu0
        %v8849 = vadd.f32 %v8808, %v8848
        %v8850 = vpop.f32.mrb[0].mxu0
        %v8851 = vpop.f32.mrb[0].mxu0
        %8852 = vdwg.mxu0
        %v8853 = vmax.f32 %v8765, 0.0
        %v8854 = vmax.f32 %v8767, 0.0
        %v8855 = vmax.f32 %v8847, 0.0
        %v8856 = vmax.f32 %v8849, 0.0
        %v8857 = vpack.c.bf16 %v8853, %v8853
        %v8858 = vpack.c.bf16 %v8854, %v8854
        %v8859 = vpack.c.bf16 %v8855, %v8855
        %v8860 = vpack.c.bf16 %v8856, %v8856
        %v8861 = vld [vmem:[#allocation5] sm:$0xff]
        %v8862 = vld [vmem:[#allocation5 + $0x8] sm:$0xff]
        %v8863 = vld [vmem:[#allocation5 + $0x10] sm:$0xff]
        %v8864 = vld [vmem:[#allocation5 + $0x18] sm:$0xff]
        %v8865 = vld [vmem:[#allocation5 + $0x20] sm:$0xff]
        %v8866 = vld [vmem:[#allocation5 + $0x28] sm:$0xff]
        %v8867 = vld [vmem:[#allocation5 + $0x30] sm:$0xff]
        %v8868 = vld [vmem:[#allocation5 + $0x38] sm:$0xff]
        %v8869 = vld [vmem:[#allocation5 + $0x40] sm:$0xff]
        %v8870 = vld [vmem:[#allocation5 + $0x48] sm:$0xff]
        %v8871 = vld [vmem:[#allocation5 + $0x50] sm:$0xff]
        %v8872 = vld [vmem:[#allocation5 + $0x58] sm:$0xff]
        %v8873 = vld [vmem:[#allocation5 + $0x60] sm:$0xff]
        %v8874 = vld [vmem:[#allocation5 + $0x68] sm:$0xff]
        %v8875 = vld [vmem:[#allocation5 + $0x70] sm:$0xff]
        %v8876 = vld [vmem:[#allocation5 + $0x78] sm:$0xff]
        %v8877 = vld [vmem:[#allocation5 + $0x80] sm:$0xff]
        %v8878 = vld [vmem:[#allocation5 + $0x88] sm:$0xff]
        %v8879 = vld [vmem:[#allocation5 + $0x90] sm:$0xff]
        %v8880 = vld [vmem:[#allocation5 + $0x98] sm:$0xff]
        %v8881 = vld [vmem:[#allocation5 + $0xa0] sm:$0xff]
        %v8882 = vld [vmem:[#allocation5 + $0xa8] sm:$0xff]
        %v8883 = vld [vmem:[#allocation5 + $0xb0] sm:$0xff]
        %v8884 = vld [vmem:[#allocation5 + $0xb8] sm:$0xff]
        %v8885 = vld [vmem:[#allocation5 + $0xc0] sm:$0xff]
        %v8886 = vld [vmem:[#allocation5 + $0xc8] sm:$0xff]
        %v8887 = vld [vmem:[#allocation5 + $0xd0] sm:$0xff]
        %v8888 = vld [vmem:[#allocation5 + $0xd8] sm:$0xff]
        %v8889 = vld [vmem:[#allocation5 + $0xe0] sm:$0xff]
        %v8890 = vld [vmem:[#allocation5 + $0xe8] sm:$0xff]
        %v8891 = vld [vmem:[#allocation5 + $0xf0] sm:$0xff]
        %v8892 = vld [vmem:[#allocation5 + $0xf8] sm:$0xff]
        %v8893 = vld [vmem:[#allocation5 + $0x100] sm:$0xff]
        %v8894 = vld [vmem:[#allocation5 + $0x108] sm:$0xff]
        %v8895 = vld [vmem:[#allocation5 + $0x110] sm:$0xff]
        %v8896 = vld [vmem:[#allocation5 + $0x118] sm:$0xff]
        %v8897 = vld [vmem:[#allocation5 + $0x120] sm:$0xff]
        %v8898 = vld [vmem:[#allocation5 + $0x128] sm:$0xff]
        %v8899 = vld [vmem:[#allocation5 + $0x130] sm:$0xff]
        %v8900 = vld [vmem:[#allocation5 + $0x138] sm:$0xff]
        %v8901 = vld [vmem:[#allocation5 + $0x140] sm:$0xff]
        %v8902 = vld [vmem:[#allocation5 + $0x148] sm:$0xff]
        %v8903 = vld [vmem:[#allocation5 + $0x150] sm:$0xff]
        %v8904 = vld [vmem:[#allocation5 + $0x158] sm:$0xff]
        %v8905 = vld [vmem:[#allocation5 + $0x160] sm:$0xff]
        %v8906 = vld [vmem:[#allocation5 + $0x168] sm:$0xff]
        %v8907 = vld [vmem:[#allocation5 + $0x170] sm:$0xff]
        %v8908 = vld [vmem:[#allocation5 + $0x178] sm:$0xff]
        %v8909 = vld [vmem:[#allocation5 + $0x180] sm:$0xff]
        %v8910 = vld [vmem:[#allocation5 + $0x188] sm:$0xff]
        %v8911 = vld [vmem:[#allocation5 + $0x190] sm:$0xff]
        %v8912 = vld [vmem:[#allocation5 + $0x198] sm:$0xff]
        %v8913 = vld [vmem:[#allocation5 + $0x1a0] sm:$0xff]
        %v8914 = vld [vmem:[#allocation5 + $0x1a8] sm:$0xff]
        %v8915 = vld [vmem:[#allocation5 + $0x1b0] sm:$0xff]
        %v8916 = vld [vmem:[#allocation5 + $0x1b8] sm:$0xff]
        %v8917 = vld [vmem:[#allocation5 + $0x1c0] sm:$0xff]
        %v8918 = vld [vmem:[#allocation5 + $0x1c8] sm:$0xff]
        %v8919 = vld [vmem:[#allocation5 + $0x1d0] sm:$0xff]
        %v8920 = vld [vmem:[#allocation5 + $0x1d8] sm:$0xff]
        %v8921 = vld [vmem:[#allocation5 + $0x1e0] sm:$0xff]
        %v8922 = vld [vmem:[#allocation5 + $0x1e8] sm:$0xff]
        %v8923 = vld [vmem:[#allocation5 + $0x1f0] sm:$0xff]
        %v8924 = vld [vmem:[#allocation5 + $0x1f8] sm:$0xff]
        %v8925 = vld [vmem:[#allocation5 + $0x200] sm:$0xff]
        %v8926 = vld [vmem:[#allocation5 + $0x208] sm:$0xff]
        %v8927 = vld [vmem:[#allocation5 + $0x210] sm:$0xff]
        %v8928 = vld [vmem:[#allocation5 + $0x218] sm:$0xff]
        %v8929 = vld [vmem:[#allocation5 + $0x220] sm:$0xff]
        %v8930 = vld [vmem:[#allocation5 + $0x228] sm:$0xff]
        %v8931 = vld [vmem:[#allocation5 + $0x230] sm:$0xff]
        %v8932 = vld [vmem:[#allocation5 + $0x238] sm:$0xff]
        %v8933 = vld [vmem:[#allocation5 + $0x240] sm:$0xff]
        %v8934 = vld [vmem:[#allocation5 + $0x248] sm:$0xff]
        %v8935 = vld [vmem:[#allocation5 + $0x250] sm:$0xff]
        %v8936 = vld [vmem:[#allocation5 + $0x258] sm:$0xff]
        %v8937 = vld [vmem:[#allocation5 + $0x260] sm:$0xff]
        %v8938 = vld [vmem:[#allocation5 + $0x268] sm:$0xff]
        %v8939 = vld [vmem:[#allocation5 + $0x270] sm:$0xff]
        %v8940 = vld [vmem:[#allocation5 + $0x278] sm:$0xff]
        %v8941 = vld [vmem:[#allocation5 + $0x280] sm:$0xff]
        %v8942 = vld [vmem:[#allocation5 + $0x288] sm:$0xff]
        %v8943 = vld [vmem:[#allocation5 + $0x290] sm:$0xff]
        %v8944 = vld [vmem:[#allocation5 + $0x298] sm:$0xff]
        %v8945 = vld [vmem:[#allocation5 + $0x2a0] sm:$0xff]
        %v8946 = vld [vmem:[#allocation5 + $0x2a8] sm:$0xff]
        %v8947 = vld [vmem:[#allocation5 + $0x2b0] sm:$0xff]
        %v8948 = vld [vmem:[#allocation5 + $0x2b8] sm:$0xff]
        %v8949 = vld [vmem:[#allocation5 + $0x2c0] sm:$0xff]
        %v8950 = vld [vmem:[#allocation5 + $0x2c8] sm:$0xff]
        %v8951 = vld [vmem:[#allocation5 + $0x2d0] sm:$0xff]
        %v8952 = vld [vmem:[#allocation5 + $0x2d8] sm:$0xff]
        %v8953 = vld [vmem:[#allocation5 + $0x2e0] sm:$0xff]
        %v8954 = vld [vmem:[#allocation5 + $0x2e8] sm:$0xff]
        %v8955 = vld [vmem:[#allocation5 + $0x2f0] sm:$0xff]
        %v8956 = vld [vmem:[#allocation5 + $0x2f8] sm:$0xff]
        %v8957 = vld [vmem:[#allocation5 + $0x300] sm:$0xff]
        %v8958 = vld [vmem:[#allocation5 + $0x308] sm:$0xff]
        %v8959 = vld [vmem:[#allocation5 + $0x310] sm:$0xff]
        %v8960 = vld [vmem:[#allocation5 + $0x318] sm:$0xff]
        %v8961 = vld [vmem:[#allocation5 + $0x320] sm:$0xff]
        %v8962 = vld [vmem:[#allocation5 + $0x328] sm:$0xff]
        %v8963 = vld [vmem:[#allocation5 + $0x330] sm:$0xff]
        %v8964 = vld [vmem:[#allocation5 + $0x338] sm:$0xff]
        %v8965 = vld [vmem:[#allocation5 + $0x340] sm:$0xff]
        %v8966 = vld [vmem:[#allocation5 + $0x348] sm:$0xff]
        %v8967 = vld [vmem:[#allocation5 + $0x350] sm:$0xff]
        %v8968 = vld [vmem:[#allocation5 + $0x358] sm:$0xff]
        %v8969 = vld [vmem:[#allocation5 + $0x360] sm:$0xff]
        %v8970 = vld [vmem:[#allocation5 + $0x368] sm:$0xff]
        %v8971 = vld [vmem:[#allocation5 + $0x370] sm:$0xff]
        %v8972 = vld [vmem:[#allocation5 + $0x378] sm:$0xff]
        %v8973 = vld [vmem:[#allocation5 + $0x380] sm:$0xff]
        %v8974 = vld [vmem:[#allocation5 + $0x388] sm:$0xff]
        %v8975 = vld [vmem:[#allocation5 + $0x390] sm:$0xff]
        %v8976 = vld [vmem:[#allocation5 + $0x398] sm:$0xff]
        %v8977 = vld [vmem:[#allocation5 + $0x3a0] sm:$0xff]
        %v8978 = vld [vmem:[#allocation5 + $0x3a8] sm:$0xff]
        %v8979 = vld [vmem:[#allocation5 + $0x3b0] sm:$0xff]
        %v8980 = vld [vmem:[#allocation5 + $0x3b8] sm:$0xff]
        %v8981 = vld [vmem:[#allocation5 + $0x3c0] sm:$0xff]
        %v8982 = vld [vmem:[#allocation5 + $0x3c8] sm:$0xff]
        %v8983 = vld [vmem:[#allocation5 + $0x3d0] sm:$0xff]
        %v8984 = vld [vmem:[#allocation5 + $0x3d8] sm:$0xff]
        %v8985 = vld [vmem:[#allocation5 + $0x3e0] sm:$0xff]
        %v8986 = vld [vmem:[#allocation5 + $0x3e8] sm:$0xff]
        %v8987 = vld [vmem:[#allocation5 + $0x3f0] sm:$0xff]
        %v8988 = vld [vmem:[#allocation5 + $0x3f8] sm:$0xff]
        %v8989 = vld [vmem:[%s10] sm:$0xf]
        %v8991 = vlaneseq
        %v8992 = vshrl.u32 %v8991, 7
        %v8993 = vsub.s32 0, %v8992
        %v8994 = vrot.slane %v8989, %v8993
        %v8995 = vlaneseq
        %v8996 = vshrl.u32 %v8995, 7
        %v8997 = vsub.s32 1, %v8996
        %v8998 = vrot.slane %v8989, %v8997
        %v8999 = vlaneseq
        %v9000 = vshrl.u32 %v8999, 7
        %v9001 = vsub.s32 2, %v9000
        %v9002 = vrot.slane %v8989, %v9001
        %v9003 = vlaneseq
        %v9004 = vshrl.u32 %v9003, 7
        %v9005 = vsub.s32 3, %v9004
        %v9006 = vrot.slane %v8989, %v9005
        %v9139 = vunpack.c.l.b16 %v8861
        %v9140 = vunpack.c.h.b16 %v8861
        %v9141 = vunpack.c.l.b16 %v8862
        %v9142 = vunpack.c.h.b16 %v8862
        %v9143 = vunpack.c.l.b16 %v8863
        %v9144 = vunpack.c.h.b16 %v8863
        %v9145 = vunpack.c.l.b16 %v8864
        %v9146 = vunpack.c.h.b16 %v8864
        %v9147 = vunpack.c.l.b16 %v8865
        %v9148 = vunpack.c.h.b16 %v8865
        %v9149 = vunpack.c.l.b16 %v8866
        %v9150 = vunpack.c.h.b16 %v8866
        %v9151 = vunpack.c.l.b16 %v8867
        %v9152 = vunpack.c.h.b16 %v8867
        %v9153 = vunpack.c.l.b16 %v8868
        %v9154 = vunpack.c.h.b16 %v8868
        %v9155 = vunpack.c.l.b16 %v8869
        %v9156 = vunpack.c.h.b16 %v8869
        %v9157 = vunpack.c.l.b16 %v8870
        %v9158 = vunpack.c.h.b16 %v8870
        %v9159 = vunpack.c.l.b16 %v8871
        %v9160 = vunpack.c.h.b16 %v8871
        %v9161 = vunpack.c.l.b16 %v8872
        %v9162 = vunpack.c.h.b16 %v8872
        %v9163 = vunpack.c.l.b16 %v8873
        %v9164 = vunpack.c.h.b16 %v8873
        %v9165 = vunpack.c.l.b16 %v8874
        %v9166 = vunpack.c.h.b16 %v8874
        %v9167 = vunpack.c.l.b16 %v8875
        %v9168 = vunpack.c.h.b16 %v8875
        %v9169 = vunpack.c.l.b16 %v8876
        %v9170 = vunpack.c.h.b16 %v8876
        %v9171 = vunpack.c.l.b16 %v8877
        %v9172 = vunpack.c.h.b16 %v8877
        %v9173 = vunpack.c.l.b16 %v8878
        %v9174 = vunpack.c.h.b16 %v8878
        %v9175 = vunpack.c.l.b16 %v8879
        %v9176 = vunpack.c.h.b16 %v8879
        %v9177 = vunpack.c.l.b16 %v8880
        %v9178 = vunpack.c.h.b16 %v8880
        %v9179 = vunpack.c.l.b16 %v8881
        %v9180 = vunpack.c.h.b16 %v8881
        %v9181 = vunpack.c.l.b16 %v8882
        %v9182 = vunpack.c.h.b16 %v8882
        %v9183 = vunpack.c.l.b16 %v8883
        %v9184 = vunpack.c.h.b16 %v8883
        %v9185 = vunpack.c.l.b16 %v8884
        %v9186 = vunpack.c.h.b16 %v8884
        %v9187 = vunpack.c.l.b16 %v8885
        %v9188 = vunpack.c.h.b16 %v8885
        %v9189 = vunpack.c.l.b16 %v8886
        %v9190 = vunpack.c.h.b16 %v8886
        %v9191 = vunpack.c.l.b16 %v8887
        %v9192 = vunpack.c.h.b16 %v8887
        %v9193 = vunpack.c.l.b16 %v8888
        %v9194 = vunpack.c.h.b16 %v8888
        %v9195 = vunpack.c.l.b16 %v8889
        %v9196 = vunpack.c.h.b16 %v8889
        %v9197 = vunpack.c.l.b16 %v8890
        %v9198 = vunpack.c.h.b16 %v8890
        %v9199 = vunpack.c.l.b16 %v8891
        %v9200 = vunpack.c.h.b16 %v8891
        %v9201 = vunpack.c.l.b16 %v8892
        %v9202 = vunpack.c.h.b16 %v8892
        %v9203 = vunpack.c.l.b16 %v8893
        %v9204 = vunpack.c.h.b16 %v8893
        %v9205 = vunpack.c.l.b16 %v8894
        %v9206 = vunpack.c.h.b16 %v8894
        %v9207 = vunpack.c.l.b16 %v8895
        %v9208 = vunpack.c.h.b16 %v8895
        %v9209 = vunpack.c.l.b16 %v8896
        %v9210 = vunpack.c.h.b16 %v8896
        %v9211 = vunpack.c.l.b16 %v8897
        %v9212 = vunpack.c.h.b16 %v8897
        %v9213 = vunpack.c.l.b16 %v8898
        %v9214 = vunpack.c.h.b16 %v8898
        %v9215 = vunpack.c.l.b16 %v8899
        %v9216 = vunpack.c.h.b16 %v8899
        %v9217 = vunpack.c.l.b16 %v8900
        %v9218 = vunpack.c.h.b16 %v8900
        %v9219 = vunpack.c.l.b16 %v8901
        %v9220 = vunpack.c.h.b16 %v8901
        %v9221 = vunpack.c.l.b16 %v8902
        %v9222 = vunpack.c.h.b16 %v8902
        %v9223 = vunpack.c.l.b16 %v8903
        %v9224 = vunpack.c.h.b16 %v8903
        %v9225 = vunpack.c.l.b16 %v8904
        %v9226 = vunpack.c.h.b16 %v8904
        %v9227 = vunpack.c.l.b16 %v8905
        %v9228 = vunpack.c.h.b16 %v8905
        %v9229 = vunpack.c.l.b16 %v8906
        %v9230 = vunpack.c.h.b16 %v8906
        %v9231 = vunpack.c.l.b16 %v8907
        %v9232 = vunpack.c.h.b16 %v8907
        %v9233 = vunpack.c.l.b16 %v8908
        %v9234 = vunpack.c.h.b16 %v8908
        %v9235 = vunpack.c.l.b16 %v8909
        %v9236 = vunpack.c.h.b16 %v8909
        %v9237 = vunpack.c.l.b16 %v8910
        %v9238 = vunpack.c.h.b16 %v8910
        %v9239 = vunpack.c.l.b16 %v8911
        %v9240 = vunpack.c.h.b16 %v8911
        %v9241 = vunpack.c.l.b16 %v8912
        %v9242 = vunpack.c.h.b16 %v8912
        %v9243 = vunpack.c.l.b16 %v8913
        %v9244 = vunpack.c.h.b16 %v8913
        %v9245 = vunpack.c.l.b16 %v8914
        %v9246 = vunpack.c.h.b16 %v8914
        %v9247 = vunpack.c.l.b16 %v8915
        %v9248 = vunpack.c.h.b16 %v8915
        %v9249 = vunpack.c.l.b16 %v8916
        %v9250 = vunpack.c.h.b16 %v8916
        %v9251 = vunpack.c.l.b16 %v8917
        %v9252 = vunpack.c.h.b16 %v8917
        %v9253 = vunpack.c.l.b16 %v8918
        %v9254 = vunpack.c.h.b16 %v8918
        %v9255 = vunpack.c.l.b16 %v8919
        %v9256 = vunpack.c.h.b16 %v8919
        %v9257 = vunpack.c.l.b16 %v8920
        %v9258 = vunpack.c.h.b16 %v8920
        %v9259 = vunpack.c.l.b16 %v8921
        %v9260 = vunpack.c.h.b16 %v8921
        %v9261 = vunpack.c.l.b16 %v8922
        %v9262 = vunpack.c.h.b16 %v8922
        %v9263 = vunpack.c.l.b16 %v8923
        %v9264 = vunpack.c.h.b16 %v8923
        %v9265 = vunpack.c.l.b16 %v8924
        %v9266 = vunpack.c.h.b16 %v8924
        %v9267 = vunpack.c.l.b16 %v8925
        %v9268 = vunpack.c.h.b16 %v8925
        %v9269 = vunpack.c.l.b16 %v8926
        %v9270 = vunpack.c.h.b16 %v8926
        %v9271 = vunpack.c.l.b16 %v8927
        %v9272 = vunpack.c.h.b16 %v8927
        %v9273 = vunpack.c.l.b16 %v8928
        %v9274 = vunpack.c.h.b16 %v8928
        %v9275 = vunpack.c.l.b16 %v8929
        %v9276 = vunpack.c.h.b16 %v8929
        %v9277 = vunpack.c.l.b16 %v8930
        %v9278 = vunpack.c.h.b16 %v8930
        %v9279 = vunpack.c.l.b16 %v8931
        %v9280 = vunpack.c.h.b16 %v8931
        %v9281 = vunpack.c.l.b16 %v8932
        %v9282 = vunpack.c.h.b16 %v8932
        %v9283 = vunpack.c.l.b16 %v8933
        %v9284 = vunpack.c.h.b16 %v8933
        %v9285 = vunpack.c.l.b16 %v8934
        %v9286 = vunpack.c.h.b16 %v8934
        %v9287 = vunpack.c.l.b16 %v8935
        %v9288 = vunpack.c.h.b16 %v8935
        %v9289 = vunpack.c.l.b16 %v8936
        %v9290 = vunpack.c.h.b16 %v8936
        %v9291 = vunpack.c.l.b16 %v8937
        %v9292 = vunpack.c.h.b16 %v8937
        %v9293 = vunpack.c.l.b16 %v8938
        %v9294 = vunpack.c.h.b16 %v8938
        %v9295 = vunpack.c.l.b16 %v8939
        %v9296 = vunpack.c.h.b16 %v8939
        %v9297 = vunpack.c.l.b16 %v8940
        %v9298 = vunpack.c.h.b16 %v8940
        %v9299 = vunpack.c.l.b16 %v8941
        %v9300 = vunpack.c.h.b16 %v8941
        %v9301 = vunpack.c.l.b16 %v8942
        %v9302 = vunpack.c.h.b16 %v8942
        %v9303 = vunpack.c.l.b16 %v8943
        %v9304 = vunpack.c.h.b16 %v8943
        %v9305 = vunpack.c.l.b16 %v8944
        %v9306 = vunpack.c.h.b16 %v8944
        %v9307 = vunpack.c.l.b16 %v8945
        %v9308 = vunpack.c.h.b16 %v8945
        %v9309 = vunpack.c.l.b16 %v8946
        %v9310 = vunpack.c.h.b16 %v8946
        %v9311 = vunpack.c.l.b16 %v8947
        %v9312 = vunpack.c.h.b16 %v8947
        %v9313 = vunpack.c.l.b16 %v8948
        %v9314 = vunpack.c.h.b16 %v8948
        %v9315 = vunpack.c.l.b16 %v8949
        %v9316 = vunpack.c.h.b16 %v8949
        %v9317 = vunpack.c.l.b16 %v8950
        %v9318 = vunpack.c.h.b16 %v8950
        %v9319 = vunpack.c.l.b16 %v8951
        %v9320 = vunpack.c.h.b16 %v8951
        %v9321 = vunpack.c.l.b16 %v8952
        %v9322 = vunpack.c.h.b16 %v8952
        %v9323 = vunpack.c.l.b16 %v8953
        %v9324 = vunpack.c.h.b16 %v8953
        %v9325 = vunpack.c.l.b16 %v8954
        %v9326 = vunpack.c.h.b16 %v8954
        %v9327 = vunpack.c.l.b16 %v8955
        %v9328 = vunpack.c.h.b16 %v8955
        %v9329 = vunpack.c.l.b16 %v8956
        %v9330 = vunpack.c.h.b16 %v8956
        %v9331 = vunpack.c.l.b16 %v8957
        %v9332 = vunpack.c.h.b16 %v8957
        %v9333 = vunpack.c.l.b16 %v8958
        %v9334 = vunpack.c.h.b16 %v8958
        %v9335 = vunpack.c.l.b16 %v8959
        %v9336 = vunpack.c.h.b16 %v8959
        %v9337 = vunpack.c.l.b16 %v8960
        %v9338 = vunpack.c.h.b16 %v8960
        %v9339 = vunpack.c.l.b16 %v8961
        %v9340 = vunpack.c.h.b16 %v8961
        %v9341 = vunpack.c.l.b16 %v8962
        %v9342 = vunpack.c.h.b16 %v8962
        %v9343 = vunpack.c.l.b16 %v8963
        %v9344 = vunpack.c.h.b16 %v8963
        %v9345 = vunpack.c.l.b16 %v8964
        %v9346 = vunpack.c.h.b16 %v8964
        %v9347 = vunpack.c.l.b16 %v8965
        %v9348 = vunpack.c.h.b16 %v8965
        %v9349 = vunpack.c.l.b16 %v8966
        %v9350 = vunpack.c.h.b16 %v8966
        %v9351 = vunpack.c.l.b16 %v8967
        %v9352 = vunpack.c.h.b16 %v8967
        %v9353 = vunpack.c.l.b16 %v8968
        %v9354 = vunpack.c.h.b16 %v8968
        %v9355 = vunpack.c.l.b16 %v8969
        %v9356 = vunpack.c.h.b16 %v8969
        %v9357 = vunpack.c.l.b16 %v8970
        %v9358 = vunpack.c.h.b16 %v8970
        %v9359 = vunpack.c.l.b16 %v8971
        %v9360 = vunpack.c.h.b16 %v8971
        %v9361 = vunpack.c.l.b16 %v8972
        %v9362 = vunpack.c.h.b16 %v8972
        %v9363 = vunpack.c.l.b16 %v8973
        %v9364 = vunpack.c.h.b16 %v8973
        %v9365 = vunpack.c.l.b16 %v8974
        %v9366 = vunpack.c.h.b16 %v8974
        %v9367 = vunpack.c.l.b16 %v8975
        %v9368 = vunpack.c.h.b16 %v8975
        %v9369 = vunpack.c.l.b16 %v8976
        %v9370 = vunpack.c.h.b16 %v8976
        %v9371 = vunpack.c.l.b16 %v8977
        %v9372 = vunpack.c.h.b16 %v8977
        %v9373 = vunpack.c.l.b16 %v8978
        %v9374 = vunpack.c.h.b16 %v8978
        %v9375 = vunpack.c.l.b16 %v8979
        %v9376 = vunpack.c.h.b16 %v8979
        %v9377 = vunpack.c.l.b16 %v8980
        %v9378 = vunpack.c.h.b16 %v8980
        %v9379 = vunpack.c.l.b16 %v8981
        %v9380 = vunpack.c.h.b16 %v8981
        %v9381 = vunpack.c.l.b16 %v8982
        %v9382 = vunpack.c.h.b16 %v8982
        %v9383 = vunpack.c.l.b16 %v8983
        %v9384 = vunpack.c.h.b16 %v8983
        %v9385 = vunpack.c.l.b16 %v8984
        %v9386 = vunpack.c.h.b16 %v8984
        %v9387 = vunpack.c.l.b16 %v8985
        %v9388 = vunpack.c.h.b16 %v8985
        %v9389 = vunpack.c.l.b16 %v8986
        %v9390 = vunpack.c.h.b16 %v8986
        %v9391 = vunpack.c.l.b16 %v8987
        %v9392 = vunpack.c.h.b16 %v8987
        %v9393 = vunpack.c.l.b16 %v8988
        %v9394 = vunpack.c.h.b16 %v8988
        %v9395 = vpack.c.b16 %v9143, %v9139
        %v9396 = vpack.c.b16 %v9144, %v9140
        %v9397 = vpack.c.b16 %v9145, %v9141
        %v9398 = vpack.c.b16 %v9146, %v9142
        %v9399 = vpack.c.b16 %v9151, %v9147
        %v9400 = vpack.c.b16 %v9152, %v9148
        %v9401 = vpack.c.b16 %v9153, %v9149
        %v9402 = vpack.c.b16 %v9154, %v9150
        %v9403 = vpack.c.b16 %v9159, %v9155
        %v9404 = vpack.c.b16 %v9160, %v9156
        %v9405 = vpack.c.b16 %v9161, %v9157
        %v9406 = vpack.c.b16 %v9162, %v9158
        %v9407 = vpack.c.b16 %v9167, %v9163
        %v9408 = vpack.c.b16 %v9168, %v9164
        %v9409 = vpack.c.b16 %v9169, %v9165
        %v9410 = vpack.c.b16 %v9170, %v9166
        %v9411 = vpack.c.b16 %v9175, %v9171
        %v9412 = vpack.c.b16 %v9176, %v9172
        %v9413 = vpack.c.b16 %v9177, %v9173
        %v9414 = vpack.c.b16 %v9178, %v9174
        %v9415 = vpack.c.b16 %v9183, %v9179
        %v9416 = vpack.c.b16 %v9184, %v9180
        %v9417 = vpack.c.b16 %v9185, %v9181
        %v9418 = vpack.c.b16 %v9186, %v9182
        %v9419 = vpack.c.b16 %v9191, %v9187
        %v9420 = vpack.c.b16 %v9192, %v9188
        %v9421 = vpack.c.b16 %v9193, %v9189
        %v9422 = vpack.c.b16 %v9194, %v9190
        %v9423 = vpack.c.b16 %v9199, %v9195
        %v9424 = vpack.c.b16 %v9200, %v9196
        %v9425 = vpack.c.b16 %v9201, %v9197
        %v9426 = vpack.c.b16 %v9202, %v9198
        %v9427 = vpack.c.b16 %v9207, %v9203
        %v9428 = vpack.c.b16 %v9208, %v9204
        %v9429 = vpack.c.b16 %v9209, %v9205
        %v9430 = vpack.c.b16 %v9210, %v9206
        %v9431 = vpack.c.b16 %v9215, %v9211
        %v9432 = vpack.c.b16 %v9216, %v9212
        %v9433 = vpack.c.b16 %v9217, %v9213
        %v9434 = vpack.c.b16 %v9218, %v9214
        %v9435 = vpack.c.b16 %v9223, %v9219
        %v9436 = vpack.c.b16 %v9224, %v9220
        %v9437 = vpack.c.b16 %v9225, %v9221
        %v9438 = vpack.c.b16 %v9226, %v9222
        %v9439 = vpack.c.b16 %v9231, %v9227
        %v9440 = vpack.c.b16 %v9232, %v9228
        %v9441 = vpack.c.b16 %v9233, %v9229
        %v9442 = vpack.c.b16 %v9234, %v9230
        %v9443 = vpack.c.b16 %v9239, %v9235
        %v9444 = vpack.c.b16 %v9240, %v9236
        %v9445 = vpack.c.b16 %v9241, %v9237
        %v9446 = vpack.c.b16 %v9242, %v9238
        %v9447 = vpack.c.b16 %v9247, %v9243
        %v9448 = vpack.c.b16 %v9248, %v9244
        %v9449 = vpack.c.b16 %v9249, %v9245
        %v9450 = vpack.c.b16 %v9250, %v9246
        %v9451 = vpack.c.b16 %v9255, %v9251
        %v9452 = vpack.c.b16 %v9256, %v9252
        %v9453 = vpack.c.b16 %v9257, %v9253
        %v9454 = vpack.c.b16 %v9258, %v9254
        %v9455 = vpack.c.b16 %v9263, %v9259
        %v9456 = vpack.c.b16 %v9264, %v9260
        %v9457 = vpack.c.b16 %v9265, %v9261
        %v9458 = vpack.c.b16 %v9266, %v9262
        %v9459 = vpack.c.b16 %v9271, %v9267
        %v9460 = vpack.c.b16 %v9272, %v9268
        %v9461 = vpack.c.b16 %v9273, %v9269
        %v9462 = vpack.c.b16 %v9274, %v9270
        %v9463 = vpack.c.b16 %v9279, %v9275
        %v9464 = vpack.c.b16 %v9280, %v9276
        %v9465 = vpack.c.b16 %v9281, %v9277
        %v9466 = vpack.c.b16 %v9282, %v9278
        %v9467 = vpack.c.b16 %v9287, %v9283
        %v9468 = vpack.c.b16 %v9288, %v9284
        %v9469 = vpack.c.b16 %v9289, %v9285
        %v9470 = vpack.c.b16 %v9290, %v9286
        %v9471 = vpack.c.b16 %v9295, %v9291
        %v9472 = vpack.c.b16 %v9296, %v9292
        %v9473 = vpack.c.b16 %v9297, %v9293
        %v9474 = vpack.c.b16 %v9298, %v9294
        %v9475 = vpack.c.b16 %v9303, %v9299
        %v9476 = vpack.c.b16 %v9304, %v9300
        %v9477 = vpack.c.b16 %v9305, %v9301
        %v9478 = vpack.c.b16 %v9306, %v9302
        %v9479 = vpack.c.b16 %v9311, %v9307
        %v9480 = vpack.c.b16 %v9312, %v9308
        %v9481 = vpack.c.b16 %v9313, %v9309
        %v9482 = vpack.c.b16 %v9314, %v9310
        %v9483 = vpack.c.b16 %v9319, %v9315
        %v9484 = vpack.c.b16 %v9320, %v9316
        %v9485 = vpack.c.b16 %v9321, %v9317
        %v9486 = vpack.c.b16 %v9322, %v9318
        %v9487 = vpack.c.b16 %v9327, %v9323
        %v9488 = vpack.c.b16 %v9328, %v9324
        %v9489 = vpack.c.b16 %v9329, %v9325
        %v9490 = vpack.c.b16 %v9330, %v9326
        %v9491 = vpack.c.b16 %v9335, %v9331
        %v9492 = vpack.c.b16 %v9336, %v9332
        %v9493 = vpack.c.b16 %v9337, %v9333
        %v9494 = vpack.c.b16 %v9338, %v9334
        %v9495 = vpack.c.b16 %v9343, %v9339
        %v9496 = vpack.c.b16 %v9344, %v9340
        %v9497 = vpack.c.b16 %v9345, %v9341
        %v9498 = vpack.c.b16 %v9346, %v9342
        %v9499 = vpack.c.b16 %v9351, %v9347
        %v9500 = vpack.c.b16 %v9352, %v9348
        %v9501 = vpack.c.b16 %v9353, %v9349
        %v9502 = vpack.c.b16 %v9354, %v9350
        %v9503 = vpack.c.b16 %v9359, %v9355
        %v9504 = vpack.c.b16 %v9360, %v9356
        %v9505 = vpack.c.b16 %v9361, %v9357
        %v9506 = vpack.c.b16 %v9362, %v9358
        %v9507 = vpack.c.b16 %v9367, %v9363
        %v9508 = vpack.c.b16 %v9368, %v9364
        %v9509 = vpack.c.b16 %v9369, %v9365
        %v9510 = vpack.c.b16 %v9370, %v9366
        %v9511 = vpack.c.b16 %v9375, %v9371
        %v9512 = vpack.c.b16 %v9376, %v9372
        %v9513 = vpack.c.b16 %v9377, %v9373
        %v9514 = vpack.c.b16 %v9378, %v9374
        %v9515 = vpack.c.b16 %v9383, %v9379
        %v9516 = vpack.c.b16 %v9384, %v9380
        %v9517 = vpack.c.b16 %v9385, %v9381
        %v9518 = vpack.c.b16 %v9386, %v9382
        %v9519 = vpack.c.b16 %v9391, %v9387
        %v9520 = vpack.c.b16 %v9392, %v9388
        %v9521 = vpack.c.b16 %v9393, %v9389
        %v9522 = vpack.c.b16 %v9394, %v9390
        %9651 = vmatprep.subr.bf16.mxu0 %v9396
        %9652 = vmatpush1.bf16.msra.mxu0 %v9395
        %9653 = vmatprep.subr.bf16.mxu0 %v9400
        %9654 = vmatpush1.bf16.msra.mxu0 %v9399
        %9655 = vmatprep.subr.bf16.mxu0 %v9404
        %9656 = vmatpush1.bf16.msra.mxu0 %v9403
        %9657 = vmatprep.subr.bf16.mxu0 %v9408
        %9658 = vmatpush1.bf16.msra.mxu0 %v9407
        %9659 = vmatprep.subr.bf16.mxu0 %v9412
        %9660 = vmatpush1.bf16.msra.mxu0 %v9411
        %9661 = vmatprep.subr.bf16.mxu0 %v9416
        %9662 = vmatpush1.bf16.msra.mxu0 %v9415
        %9663 = vmatprep.subr.bf16.mxu0 %v9420
        %9664 = vmatpush1.bf16.msra.mxu0 %v9419
        %9665 = vmatprep.subr.bf16.mxu0 %v9424
        %9666 = vmatpush1.bf16.msra.mxu0 %v9423
        %9667 = vmatprep.subr.bf16.mxu0 %v9428
        %9668 = vmatpush1.bf16.msra.mxu0 %v9427
        %9669 = vmatprep.subr.bf16.mxu0 %v9432
        %9670 = vmatpush1.bf16.msra.mxu0 %v9431
        %9671 = vmatprep.subr.bf16.mxu0 %v9436
        %9672 = vmatpush1.bf16.msra.mxu0 %v9435
        %9673 = vmatprep.subr.bf16.mxu0 %v9440
        %9674 = vmatpush1.bf16.msra.mxu0 %v9439
        %9675 = vmatprep.subr.bf16.mxu0 %v9444
        %9676 = vmatpush1.bf16.msra.mxu0 %v9443
        %9677 = vmatprep.subr.bf16.mxu0 %v9448
        %9678 = vmatpush1.bf16.msra.mxu0 %v9447
        %9679 = vmatprep.subr.bf16.mxu0 %v9452
        %9680 = vmatpush1.bf16.msra.mxu0 %v9451
        %9681 = vmatprep.subr.bf16.mxu0 %v9456
        %9682 = vmatpush1.bf16.msra.mxu0 %v9455
        %9683 = vmatprep.mubr.bf16.mxu0 %v8858
        %9684 = vmatmul.mubr.bf16.gmra.mrb[0].mxu0 %v8857
        %v9685 = vpop.f32.mrb[0].mxu0
        %v9686 = vadd.f32 %v8994, %v9685
        %v9687 = vpop.f32.mrb[0].mxu0
        %v9688 = vadd.f32 %v8998, %v9687
        %v9689 = vpop.f32.mrb[0].mxu0
        %v9690 = vpop.f32.mrb[0].mxu0
        %9691 = vdwg.mxu0
        %9692 = vmatprep.subr.bf16.mxu0 %v9460
        %9693 = vmatpush1.bf16.msra.mxu0 %v9459
        %9694 = vmatprep.subr.bf16.mxu0 %v9464
        %9695 = vmatpush1.bf16.msra.mxu0 %v9463
        %9696 = vmatprep.subr.bf16.mxu0 %v9468
        %9697 = vmatpush1.bf16.msra.mxu0 %v9467
        %9698 = vmatprep.subr.bf16.mxu0 %v9472
        %9699 = vmatpush1.bf16.msra.mxu0 %v9471
        %9700 = vmatprep.subr.bf16.mxu0 %v9476
        %9701 = vmatpush1.bf16.msra.mxu0 %v9475
        %9702 = vmatprep.subr.bf16.mxu0 %v9480
        %9703 = vmatpush1.bf16.msra.mxu0 %v9479
        %9704 = vmatprep.subr.bf16.mxu0 %v9484
        %9705 = vmatpush1.bf16.msra.mxu0 %v9483
        %9706 = vmatprep.subr.bf16.mxu0 %v9488
        %9707 = vmatpush1.bf16.msra.mxu0 %v9487
        %9708 = vmatprep.subr.bf16.mxu0 %v9492
        %9709 = vmatpush1.bf16.msra.mxu0 %v9491
        %9710 = vmatprep.subr.bf16.mxu0 %v9496
        %9711 = vmatpush1.bf16.msra.mxu0 %v9495
        %9712 = vmatprep.subr.bf16.mxu0 %v9500
        %9713 = vmatpush1.bf16.msra.mxu0 %v9499
        %9714 = vmatprep.subr.bf16.mxu0 %v9504
        %9715 = vmatpush1.bf16.msra.mxu0 %v9503
        %9716 = vmatprep.subr.bf16.mxu0 %v9508
        %9717 = vmatpush1.bf16.msra.mxu0 %v9507
        %9718 = vmatprep.subr.bf16.mxu0 %v9512
        %9719 = vmatpush1.bf16.msra.mxu0 %v9511
        %9720 = vmatprep.subr.bf16.mxu0 %v9516
        %9721 = vmatpush1.bf16.msra.mxu0 %v9515
        %9722 = vmatprep.subr.bf16.mxu0 %v9520
        %9723 = vmatpush1.bf16.msra.mxu0 %v9519
        %9724 = vmatprep.mubr.bf16.mxu0 %v8860
        %9725 = vmatmul.mubr.bf16.gmra.mrb[0].mxu0 %v8859
        %v9726 = vpop.f32.mrb[0].mxu0
        %v9727 = vadd.f32 %v9686, %v9726
        %v9728 = vpop.f32.mrb[0].mxu0
        %v9729 = vadd.f32 %v9688, %v9728
        %v9730 = vpop.f32.mrb[0].mxu0
        %v9731 = vpop.f32.mrb[0].mxu0
        %9732 = vdwg.mxu0
        %9733 = vmatprep.subr.bf16.mxu0 %v9398
        %9734 = vmatpush1.bf16.msra.mxu0 %v9397
        %9735 = vmatprep.subr.bf16.mxu0 %v9402
        %9736 = vmatpush1.bf16.msra.mxu0 %v9401
        %9737 = vmatprep.subr.bf16.mxu0 %v9406
        %9738 = vmatpush1.bf16.msra.mxu0 %v9405
        %9739 = vmatprep.subr.bf16.mxu0 %v9410
        %9740 = vmatpush1.bf16.msra.mxu0 %v9409
        %9741 = vmatprep.subr.bf16.mxu0 %v9414
        %9742 = vmatpush1.bf16.msra.mxu0 %v9413
        %9743 = vmatprep.subr.bf16.mxu0 %v9418
        %9744 = vmatpush1.bf16.msra.mxu0 %v9417
        %9745 = vmatprep.subr.bf16.mxu0 %v9422
        %9746 = vmatpush1.bf16.msra.mxu0 %v9421
        %9747 = vmatprep.subr.bf16.mxu0 %v9426
        %9748 = vmatpush1.bf16.msra.mxu0 %v9425
        %9749 = vmatprep.subr.bf16.mxu0 %v9430
        %9750 = vmatpush1.bf16.msra.mxu0 %v9429
        %9751 = vmatprep.subr.bf16.mxu0 %v9434
        %9752 = vmatpush1.bf16.msra.mxu0 %v9433
        %9753 = vmatprep.subr.bf16.mxu0 %v9438
        %9754 = vmatpush1.bf16.msra.mxu0 %v9437
        %9755 = vmatprep.subr.bf16.mxu0 %v9442
        %9756 = vmatpush1.bf16.msra.mxu0 %v9441
        %9757 = vmatprep.subr.bf16.mxu0 %v9446
        %9758 = vmatpush1.bf16.msra.mxu0 %v9445
        %9759 = vmatprep.subr.bf16.mxu0 %v9450
        %9760 = vmatpush1.bf16.msra.mxu0 %v9449
        %9761 = vmatprep.subr.bf16.mxu0 %v9454
        %9762 = vmatpush1.bf16.msra.mxu0 %v9453
        %9763 = vmatprep.subr.bf16.mxu0 %v9458
        %9764 = vmatpush1.bf16.msra.mxu0 %v9457
        %9765 = vmatprep.mubr.bf16.mxu0 %v8858
        %9766 = vmatmul.mubr.bf16.gmra.mrb[0].mxu0 %v8857
        %v9767 = vpop.f32.mrb[0].mxu0
        %v9768 = vadd.f32 %v9002, %v9767
        %v9769 = vpop.f32.mrb[0].mxu0
        %v9770 = vadd.f32 %v9006, %v9769
        %v9771 = vpop.f32.mrb[0].mxu0
        %v9772 = vpop.f32.mrb[0].mxu0
        %9773 = vdwg.mxu0
        %9774 = vmatprep.subr.bf16.mxu0 %v9462
        %9775 = vmatpush1.bf16.msra.mxu0 %v9461
        %9776 = vmatprep.subr.bf16.mxu0 %v9466
        %9777 = vmatpush1.bf16.msra.mxu0 %v9465
        %9778 = vmatprep.subr.bf16.mxu0 %v9470
        %9779 = vmatpush1.bf16.msra.mxu0 %v9469
        %9780 = vmatprep.subr.bf16.mxu0 %v9474
        %9781 = vmatpush1.bf16.msra.mxu0 %v9473
        %9782 = vmatprep.subr.bf16.mxu0 %v9478
        %9783 = vmatpush1.bf16.msra.mxu0 %v9477
        %9784 = vmatprep.subr.bf16.mxu0 %v9482
        %9785 = vmatpush1.bf16.msra.mxu0 %v9481
        %9786 = vmatprep.subr.bf16.mxu0 %v9486
        %9787 = vmatpush1.bf16.msra.mxu0 %v9485
        %9788 = vmatprep.subr.bf16.mxu0 %v9490
        %9789 = vmatpush1.bf16.msra.mxu0 %v9489
        %9790 = vmatprep.subr.bf16.mxu0 %v9494
        %9791 = vmatpush1.bf16.msra.mxu0 %v9493
        %9792 = vmatprep.subr.bf16.mxu0 %v9498
        %9793 = vmatpush1.bf16.msra.mxu0 %v9497
        %9794 = vmatprep.subr.bf16.mxu0 %v9502
        %9795 = vmatpush1.bf16.msra.mxu0 %v9501
        %9796 = vmatprep.subr.bf16.mxu0 %v9506
        %9797 = vmatpush1.bf16.msra.mxu0 %v9505
        %9798 = vmatprep.subr.bf16.mxu0 %v9510
        %9799 = vmatpush1.bf16.msra.mxu0 %v9509
        %9800 = vmatprep.subr.bf16.mxu0 %v9514
        %9801 = vmatpush1.bf16.msra.mxu0 %v9513
        %9802 = vmatprep.subr.bf16.mxu0 %v9518
        %9803 = vmatpush1.bf16.msra.mxu0 %v9517
        %9804 = vmatprep.subr.bf16.mxu0 %v9522
        %9805 = vmatpush1.bf16.msra.mxu0 %v9521
        %9806 = vmatprep.mubr.bf16.mxu0 %v8860
        %9807 = vmatmul.mubr.bf16.gmra.mrb[0].mxu0 %v8859
        %v9808 = vpop.f32.mrb[0].mxu0
        %v9809 = vadd.f32 %v9768, %v9808
        %v9810 = vpop.f32.mrb[0].mxu0
        %v9811 = vadd.f32 %v9770, %v9810
        %v9812 = vpop.f32.mrb[0].mxu0
        %v9813 = vpop.f32.mrb[0].mxu0
        %9814 = vdwg.mxu0
        %v9815 = vmax.f32 %v9727, 0.0
        %v9816 = vmax.f32 %v9729, 0.0
        %v9817 = vmax.f32 %v9809, 0.0
        %v9818 = vmax.f32 %v9811, 0.0
        %v9819 = vpack.c.bf16 %v9815, %v9815
        %v9820 = vpack.c.bf16 %v9816, %v9816
        %v9821 = vpack.c.bf16 %v9817, %v9817
        %v9822 = vpack.c.bf16 %v9818, %v9818
        %v9823 = vld [vmem:[#allocation7] sm:$0xf]
        %v9824 = vld [vmem:[#allocation7 + $0x4] sm:$0xf]
        %v9825 = vld [vmem:[#allocation7 + $0x8] sm:$0xf]
        %v9826 = vld [vmem:[#allocation7 + $0xc] sm:$0xf]
        %v9827 = vld [vmem:[#allocation7 + $0x10] sm:$0xf]
        %v9828 = vld [vmem:[#allocation7 + $0x14] sm:$0xf]
        %v9829 = vld [vmem:[#allocation7 + $0x18] sm:$0xf]
        %v9830 = vld [vmem:[#allocation7 + $0x1c] sm:$0xf]
        %v9831 = vld [vmem:[#allocation7 + $0x20] sm:$0xf]
        %v9832 = vld [vmem:[#allocation7 + $0x24] sm:$0xf]
        %v9833 = vld [vmem:[#allocation7 + $0x28] sm:$0xf]
        %v9834 = vld [vmem:[#allocation7 + $0x2c] sm:$0xf]
        %v9835 = vld [vmem:[#allocation7 + $0x30] sm:$0xf]
        %v9836 = vld [vmem:[#allocation7 + $0x34] sm:$0xf]
        %v9837 = vld [vmem:[#allocation7 + $0x38] sm:$0xf]
        %v9838 = vld [vmem:[#allocation7 + $0x3c] sm:$0xf]
        %v9839 = vld [vmem:[#allocation7 + $0x40] sm:$0xf]
        %v9840 = vld [vmem:[#allocation7 + $0x44] sm:$0xf]
        %v9841 = vld [vmem:[#allocation7 + $0x48] sm:$0xf]
        %v9842 = vld [vmem:[#allocation7 + $0x4c] sm:$0xf]
        %v9843 = vld [vmem:[#allocation7 + $0x50] sm:$0xf]
        %v9844 = vld [vmem:[#allocation7 + $0x54] sm:$0xf]
        %v9845 = vld [vmem:[#allocation7 + $0x58] sm:$0xf]
        %v9846 = vld [vmem:[#allocation7 + $0x5c] sm:$0xf]
        %v9847 = vld [vmem:[#allocation7 + $0x60] sm:$0xf]
        %v9848 = vld [vmem:[#allocation7 + $0x64] sm:$0xf]
        %v9849 = vld [vmem:[#allocation7 + $0x68] sm:$0xf]
        %v9850 = vld [vmem:[#allocation7 + $0x6c] sm:$0xf]
        %v9851 = vld [vmem:[#allocation7 + $0x70] sm:$0xf]
        %v9852 = vld [vmem:[#allocation7 + $0x74] sm:$0xf]
        %v9853 = vld [vmem:[#allocation7 + $0x78] sm:$0xf]
        %v9854 = vld [vmem:[#allocation7 + $0x7c] sm:$0xf]
        %v9855 = vld [vmem:[#allocation7 + $0x80] sm:$0xf]
        %v9856 = vld [vmem:[#allocation7 + $0x84] sm:$0xf]
        %v9857 = vld [vmem:[#allocation7 + $0x88] sm:$0xf]
        %v9858 = vld [vmem:[#allocation7 + $0x8c] sm:$0xf]
        %v9859 = vld [vmem:[#allocation7 + $0x90] sm:$0xf]
        %v9860 = vld [vmem:[#allocation7 + $0x94] sm:$0xf]
        %v9861 = vld [vmem:[#allocation7 + $0x98] sm:$0xf]
        %v9862 = vld [vmem:[#allocation7 + $0x9c] sm:$0xf]
        %v9863 = vld [vmem:[#allocation7 + $0xa0] sm:$0xf]
        %v9864 = vld [vmem:[#allocation7 + $0xa4] sm:$0xf]
        %v9865 = vld [vmem:[#allocation7 + $0xa8] sm:$0xf]
        %v9866 = vld [vmem:[#allocation7 + $0xac] sm:$0xf]
        %v9867 = vld [vmem:[#allocation7 + $0xb0] sm:$0xf]
        %v9868 = vld [vmem:[#allocation7 + $0xb4] sm:$0xf]
        %v9869 = vld [vmem:[#allocation7 + $0xb8] sm:$0xf]
        %v9870 = vld [vmem:[#allocation7 + $0xbc] sm:$0xf]
        %v9871 = vld [vmem:[#allocation7 + $0xc0] sm:$0xf]
        %v9872 = vld [vmem:[#allocation7 + $0xc4] sm:$0xf]
        %v9873 = vld [vmem:[#allocation7 + $0xc8] sm:$0xf]
        %v9874 = vld [vmem:[#allocation7 + $0xcc] sm:$0xf]
        %v9875 = vld [vmem:[#allocation7 + $0xd0] sm:$0xf]
        %v9876 = vld [vmem:[#allocation7 + $0xd4] sm:$0xf]
        %v9877 = vld [vmem:[#allocation7 + $0xd8] sm:$0xf]
        %v9878 = vld [vmem:[#allocation7 + $0xdc] sm:$0xf]
        %v9879 = vld [vmem:[#allocation7 + $0xe0] sm:$0xf]
        %v9880 = vld [vmem:[#allocation7 + $0xe4] sm:$0xf]
        %v9881 = vld [vmem:[#allocation7 + $0xe8] sm:$0xf]
        %v9882 = vld [vmem:[#allocation7 + $0xec] sm:$0xf]
        %v9883 = vld [vmem:[#allocation7 + $0xf0] sm:$0xf]
        %v9884 = vld [vmem:[#allocation7 + $0xf4] sm:$0xf]
        %v9885 = vld [vmem:[#allocation7 + $0xf8] sm:$0xf]
        %v9886 = vld [vmem:[#allocation7 + $0xfc] sm:$0xf]
        %v9887 = vld [vmem:[%s12] sm:$0x1]
        %v9889 = vlaneseq
        %v9890 = vshrl.u32 %v9889, 7
        %v9891 = vsub.s32 0, %v9890
        %v9892 = vrot.slane %v9887, %v9891
        %v9958 = vunpack.c.l.b16 %v9823
        %v9959 = vunpack.c.l.b16 %v9824
        %v9960 = vunpack.c.l.b16 %v9825
        %v9961 = vunpack.c.l.b16 %v9826
        %v9962 = vunpack.c.l.b16 %v9827
        %v9963 = vunpack.c.l.b16 %v9828
        %v9964 = vunpack.c.l.b16 %v9829
        %v9965 = vunpack.c.l.b16 %v9830
        %v9966 = vunpack.c.l.b16 %v9831
        %v9967 = vunpack.c.l.b16 %v9832
        %v9968 = vunpack.c.l.b16 %v9833
        %v9969 = vunpack.c.l.b16 %v9834
        %v9970 = vunpack.c.l.b16 %v9835
        %v9971 = vunpack.c.l.b16 %v9836
        %v9972 = vunpack.c.l.b16 %v9837
        %v9973 = vunpack.c.l.b16 %v9838
        %v9974 = vunpack.c.l.b16 %v9839
        %v9975 = vunpack.c.l.b16 %v9840
        %v9976 = vunpack.c.l.b16 %v9841
        %v9977 = vunpack.c.l.b16 %v9842
        %v9978 = vunpack.c.l.b16 %v9843
        %v9979 = vunpack.c.l.b16 %v9844
        %v9980 = vunpack.c.l.b16 %v9845
        %v9981 = vunpack.c.l.b16 %v9846
        %v9982 = vunpack.c.l.b16 %v9847
        %v9983 = vunpack.c.l.b16 %v9848
        %v9984 = vunpack.c.l.b16 %v9849
        %v9985 = vunpack.c.l.b16 %v9850
        %v9986 = vunpack.c.l.b16 %v9851
        %v9987 = vunpack.c.l.b16 %v9852
        %v9988 = vunpack.c.l.b16 %v9853
        %v9989 = vunpack.c.l.b16 %v9854
        %v9990 = vunpack.c.l.b16 %v9855
        %v9991 = vunpack.c.l.b16 %v9856
        %v9992 = vunpack.c.l.b16 %v9857
        %v9993 = vunpack.c.l.b16 %v9858
        %v9994 = vunpack.c.l.b16 %v9859
        %v9995 = vunpack.c.l.b16 %v9860
        %v9996 = vunpack.c.l.b16 %v9861
        %v9997 = vunpack.c.l.b16 %v9862
        %v9998 = vunpack.c.l.b16 %v9863
        %v9999 = vunpack.c.l.b16 %v9864
        %v10000 = vunpack.c.l.b16 %v9865
        %v10001 = vunpack.c.l.b16 %v9866
        %v10002 = vunpack.c.l.b16 %v9867
        %v10003 = vunpack.c.l.b16 %v9868
        %v10004 = vunpack.c.l.b16 %v9869
        %v10005 = vunpack.c.l.b16 %v9870
        %v10006 = vunpack.c.l.b16 %v9871
        %v10007 = vunpack.c.l.b16 %v9872
        %v10008 = vunpack.c.l.b16 %v9873
        %v10009 = vunpack.c.l.b16 %v9874
        %v10010 = vunpack.c.l.b16 %v9875
        %v10011 = vunpack.c.l.b16 %v9876
        %v10012 = vunpack.c.l.b16 %v9877
        %v10013 = vunpack.c.l.b16 %v9878
        %v10014 = vunpack.c.l.b16 %v9879
        %v10015 = vunpack.c.l.b16 %v9880
        %v10016 = vunpack.c.l.b16 %v9881
        %v10017 = vunpack.c.l.b16 %v9882
        %v10018 = vunpack.c.l.b16 %v9883
        %v10019 = vunpack.c.l.b16 %v9884
        %v10020 = vunpack.c.l.b16 %v9885
        %v10021 = vunpack.c.l.b16 %v9886
        %v10022 = vpack.c.b16 %v9959, %v9958
        %v10023 = vpack.c.b16 %v9961, %v9960
        %v10024 = vpack.c.b16 %v9963, %v9962
        %v10025 = vpack.c.b16 %v9965, %v9964
        %v10026 = vpack.c.b16 %v9967, %v9966
        %v10027 = vpack.c.b16 %v9969, %v9968
        %v10028 = vpack.c.b16 %v9971, %v9970
        %v10029 = vpack.c.b16 %v9973, %v9972
        %v10030 = vpack.c.b16 %v9975, %v9974
        %v10031 = vpack.c.b16 %v9977, %v9976
        %v10032 = vpack.c.b16 %v9979, %v9978
        %v10033 = vpack.c.b16 %v9981, %v9980
        %v10034 = vpack.c.b16 %v9983, %v9982
        %v10035 = vpack.c.b16 %v9985, %v9984
        %v10036 = vpack.c.b16 %v9987, %v9986
        %v10037 = vpack.c.b16 %v9989, %v9988
        %v10038 = vpack.c.b16 %v9991, %v9990
        %v10039 = vpack.c.b16 %v9993, %v9992
        %v10040 = vpack.c.b16 %v9995, %v9994
        %v10041 = vpack.c.b16 %v9997, %v9996
        %v10042 = vpack.c.b16 %v9999, %v9998
        %v10043 = vpack.c.b16 %v10001, %v10000
        %v10044 = vpack.c.b16 %v10003, %v10002
        %v10045 = vpack.c.b16 %v10005, %v10004
        %v10046 = vpack.c.b16 %v10007, %v10006
        %v10047 = vpack.c.b16 %v10009, %v10008
        %v10048 = vpack.c.b16 %v10011, %v10010
        %v10049 = vpack.c.b16 %v10013, %v10012
        %v10050 = vpack.c.b16 %v10015, %v10014
        %v10051 = vpack.c.b16 %v10017, %v10016
        %v10052 = vpack.c.b16 %v10019, %v10018
        %v10053 = vpack.c.b16 %v10021, %v10020
        %10086 = vmatprep.subr.bf16.mxu0 0
        %10087 = vmatpush1.bf16.msra.mxu0 %v10022
        %10088 = vmatprep.subr.bf16.mxu0 0
        %10089 = vmatpush1.bf16.msra.mxu0 %v10023
        %10090 = vmatprep.subr.bf16.mxu0 0
        %10091 = vmatpush1.bf16.msra.mxu0 %v10024
        %10092 = vmatprep.subr.bf16.mxu0 0
        %10093 = vmatpush1.bf16.msra.mxu0 %v10025
        %10094 = vmatprep.subr.bf16.mxu0 0
        %10095 = vmatpush1.bf16.msra.mxu0 %v10026
        %10096 = vmatprep.subr.bf16.mxu0 0
        %10097 = vmatpush1.bf16.msra.mxu0 %v10027
        %10098 = vmatprep.subr.bf16.mxu0 0
        %10099 = vmatpush1.bf16.msra.mxu0 %v10028
        %10100 = vmatprep.subr.bf16.mxu0 0
        %10101 = vmatpush1.bf16.msra.mxu0 %v10029
        %10102 = vmatprep.subr.bf16.mxu0 0
        %10103 = vmatpush1.bf16.msra.mxu0 %v10030
        %10104 = vmatprep.subr.bf16.mxu0 0
        %10105 = vmatpush1.bf16.msra.mxu0 %v10031
        %10106 = vmatprep.subr.bf16.mxu0 0
        %10107 = vmatpush1.bf16.msra.mxu0 %v10032
        %10108 = vmatprep.subr.bf16.mxu0 0
        %10109 = vmatpush1.bf16.msra.mxu0 %v10033
        %10110 = vmatprep.subr.bf16.mxu0 0
        %10111 = vmatpush1.bf16.msra.mxu0 %v10034
        %10112 = vmatprep.subr.bf16.mxu0 0
        %10113 = vmatpush1.bf16.msra.mxu0 %v10035
        %10114 = vmatprep.subr.bf16.mxu0 0
        %10115 = vmatpush1.bf16.msra.mxu0 %v10036
        %10116 = vmatprep.subr.bf16.mxu0 0
        %10117 = vmatpush1.bf16.msra.mxu0 %v10037
        %10118 = vmatprep.mubr.bf16.mxu0 %v9820
        %10119 = vmatmul.mubr.bf16.gmra.mrb[0].mxu0 %v9819
        %v10120 = vpop.f32.mrb[0].mxu0
        %v10121 = vadd.f32 %v9892, %v10120
        %v10122 = vpop.f32.mrb[0].mxu0
        %v10123 = vpop.f32.mrb[0].mxu0
        %v10124 = vpop.f32.mrb[0].mxu0
        %10125 = vdwg.mxu0
        %10126 = vmatprep.subr.bf16.mxu0 0
        %10127 = vmatpush1.bf16.msra.mxu0 %v10038
        %10128 = vmatprep.subr.bf16.mxu0 0
        %10129 = vmatpush1.bf16.msra.mxu0 %v10039
        %10130 = vmatprep.subr.bf16.mxu0 0
        %10131 = vmatpush1.bf16.msra.mxu0 %v10040
        %10132 = vmatprep.subr.bf16.mxu0 0
        %10133 = vmatpush1.bf16.msra.mxu0 %v10041
        %10134 = vmatprep.subr.bf16.mxu0 0
        %10135 = vmatpush1.bf16.msra.mxu0 %v10042
        %10136 = vmatprep.subr.bf16.mxu0 0
        %10137 = vmatpush1.bf16.msra.mxu0 %v10043
        %10138 = vmatprep.subr.bf16.mxu0 0
        %10139 = vmatpush1.bf16.msra.mxu0 %v10044
        %10140 = vmatprep.subr.bf16.mxu0 0
        %10141 = vmatpush1.bf16.msra.mxu0 %v10045
        %10142 = vmatprep.subr.bf16.mxu0 0
        %10143 = vmatpush1.bf16.msra.mxu0 %v10046
        %10144 = vmatprep.subr.bf16.mxu0 0
        %10145 = vmatpush1.bf16.msra.mxu0 %v10047
        %10146 = vmatprep.subr.bf16.mxu0 0
        %10147 = vmatpush1.bf16.msra.mxu0 %v10048
        %10148 = vmatprep.subr.bf16.mxu0 0
        %10149 = vmatpush1.bf16.msra.mxu0 %v10049
        %10150 = vmatprep.subr.bf16.mxu0 0
        %10151 = vmatpush1.bf16.msra.mxu0 %v10050
        %10152 = vmatprep.subr.bf16.mxu0 0
        %10153 = vmatpush1.bf16.msra.mxu0 %v10051
        %10154 = vmatprep.subr.bf16.mxu0 0
        %10155 = vmatpush1.bf16.msra.mxu0 %v10052
        %10156 = vmatprep.subr.bf16.mxu0 0
        %10157 = vmatpush1.bf16.msra.mxu0 %v10053
        %10158 = vmatprep.mubr.bf16.mxu0 %v9822
        %10159 = vmatmul.mubr.bf16.gmra.mrb[0].mxu0 %v9821
        %v10160 = vpop.f32.mrb[0].mxu0
        %v10161 = vadd.f32 %v10121, %v10160
        %v10162 = vpop.f32.mrb[0].mxu0
        %v10163 = vpop.f32.mrb[0].mxu0
        %v10164 = vpop.f32.mrb[0].mxu0
        %10165 = vdwg.mxu0
        %10166 = vst [vmem:[%s515] sm:$0x3] %v10161
        %p10167 = scmp.lt.s32.totalorder %s31, 1
        %s10168 = scalar_select %p10167, %s31, 1
        %s10169 = smul.addr %s10168, 4
        %s10170 = smul.addr %s10169, 2
        %s10171 = scalar_lea.vmem %s13, %s10170
        %s10172 = sand.u32 %s343, 1
        %s10173 = scalar_lea.sflag [#allocation4], %s10172
        %s10174 = sand.u32 %s343, 1
        %s10175 = smul.addr %s10174, 2
        %s10176 = scalar_lea.vmem [#allocation8], %s10175
        // Predicated region
        $region85: #{vgg_forward.1} parent=71 // pred_check
          %p10177 = pneg %p327
        $region86: #{vgg_forward.1} parent=71 // pred_check_branch
          %10179 = sbr.rel (%p10177) target = $region88
        $region87: #{vgg_forward.1} parent=71 // pred_region
          _
        $region88: #{vgg_forward.1} parent=71 // pred_fallthru
          _
        // Predicated region
        $region89: #{vgg_forward.1} parent=71 // pred_check
          %p10180 = pneg %p353
        $region90: #{vgg_forward.1} parent=71 // pred_check_branch
          %10182 = sbr.rel (%p10180) target = $region92
        $region91: #{vgg_forward.1} parent=71 // pred_region
          %s10184 = ssub.s32 32, 32
          %10185 = vsyncadd %s10173, %s10184
          %s10186 = smul.addr %s31, 32
          %s10187 = scalar_lea.hbm %s14, %s10186
          %s10189 = sshll.u32 %s10176, 4
          %s10190 = int_to_ptr.vmem [resolvable:$true] %s10189
          %10192 = dma.vmem_to_hbm [thread:$0]  %s10190, 32, %s10187, %s10173
        $region92: #{vgg_forward.1} parent=71 // pred_fallthru
          _
      $region72: #{vgg_forward.1} parent=5 // pred_fallthru
        _
      %p10193 = scmp.le.s32.totalorder 2, %s26
      // Predicated region
      $region93: #{vgg_forward.1} parent=5 // pred_check
        %p10194 = pneg %p10193
      $region94: #{vgg_forward.1} parent=5 // pred_check_branch
        %10196 = sbr.rel (%p10194) target = $region96
      $region95: #{vgg_forward.1} parent=5 // pred_region
        %s10197 = ssub.s32 %s26, 2
        // Predicated region
        $region97: #{vgg_forward.1} parent=95 // pred_check
          %p10198 = pneg %p333
        $region98: #{vgg_forward.1} parent=95 // pred_check_branch
          %10200 = sbr.rel (%p10198) target = $region100
        $region99: #{vgg_forward.1} parent=95 // pred_region
          %p10201 = scmp.lt.s32.totalorder %s32, 1
          %s10202 = scalar_select %p10201, %s32, 1
          %s10203 = smul.addr %s10202, 4
          %s10204 = smul.addr %s10203, 2
          %s10205 = scalar_lea.vmem %s13, %s10204
        $region100: #{vgg_forward.1} parent=95 // pred_fallthru
          _
        // Predicated region
        $region101: #{vgg_forward.1} parent=95 // pred_check
          %p10206 = pneg %p359
        $region102: #{vgg_forward.1} parent=95 // pred_check_branch
          %10208 = sbr.rel (%p10206) target = $region104
        $region103: #{vgg_forward.1} parent=95 // pred_region
          %s10209 = sand.u32 %s344, 1
          %s10210 = scalar_lea.sflag [#allocation4], %s10209
          %s10211 = sand.u32 %s344, 1
          %s10212 = smul.addr %s10211, 2
          %s10213 = scalar_lea.vmem [#allocation8], %s10212
          %10214 = dma.done %s10210, 32
        $region104: #{vgg_forward.1} parent=95 // pred_fallthru
          _
      $region96: #{vgg_forward.1} parent=5 // pred_fallthru
        _
    $region6: #{vgg_forward.1} parent=1 // loop_footer
      %s30 = sadd.s32 1, %s26
    $region7: #{vgg_forward.1} parent=1 // loop_footer_branch
      %25 = sbr.rel target = $region3
    $region8: #{vgg_forward.1} parent=1 // loop_exit
      _
    %10215 = vsyncpa [#allocation3], 1
    %s10216 = scalar_lea.sflag [#allocation3], 1
    %10217 = vsyncpa %s10216, 1
    %10218 = vsyncpa [#allocation6], 1
    %10219 = vsyncpa [#allocation4], 1
    %s10220 = scalar_lea.sflag [#allocation4], 1
    %10221 = vsyncpa %s10220, 1

</llo_original>
